<compile_context>
chip_gen: v6e
topology: v6e:2x2x1
jax: 0.10.0
libtpu: 0.0.40
codegen_flags: <defaults>
</compile_context>

<pallas_src>
import jax
import jax.numpy as jnp
from jax.experimental import pallas as pl
from jax.experimental.pallas import tpu as pltpu

LANES = 128                 # GEMM output lane width (conv/fc channels zero-padded)
GEMM_DTYPE = jnp.bfloat16   # MXU input dtype; epilogue math stays float32
N_PAD = 8                   # batch rows padded to one sublane tile for the FC head
K1P = 32                    # conv1 patch depth: 5*5*1 = 25 -> 32
K2P = 152                   # conv2 patch depth: 5*5*6 = 150 -> 152
HW2 = 25                    # 5*5 spatial positions after the second pool
VMEM_LIMIT = 32 * 1024 * 1024


def _sigmoid(y):
    # exp on the EUP; approximate reciprocal lowers to EUP vrcp (no VALU divide).
    return pl.reciprocal(1.0 + jnp.exp(-y), approx=True)


# ----------------------------------------------------------------------------
# Pallas kernels
# ----------------------------------------------------------------------------
def _conv1_kernel(p_ref, w_ref, b_ref, o_ref):
    """conv1-as-GEMM + folded BN + sigmoid + 2x2 avg-pool (single GEMM).

    p_ref: (4*M1, K1P)  four pool-offset patch slabs, identical row order.
    w_ref: (K1P, 128)   folded conv1/BN weights (bf16, zero-padded).
    b_ref: (1, 128)     folded bias (f32).
    o_ref: (M1, 128)    pooled activations, bf16 lane-dense store.   [R1][R3]
    """
    y = jnp.dot(p_ref[...], w_ref[...], preferred_element_type=jnp.float32) + b_ref[...]
    s = _sigmoid(y)
    m = o_ref.shape[0]                              # multiple of 8 -> aligned slices
    pooled = (s[0:m] + s[m:2 * m] + s[2 * m:3 * m] + s[3 * m:4 * m]) * 0.25
    o_ref[...] = pooled.astype(o_ref.dtype)


def _conv2_fc_kernel(p_ref, w2_ref, b2_ref, wf1_ref, bf1_ref,
                     wf2_ref, bf2_ref, wf3_ref, bf3_ref, o_ref):
    """conv2 GEMM + BN + sigmoid + pool, then the whole FC head, one launch. [R4]

    p_ref : (4*200, K2P)    conv2 patch slabs, rows = (pool offset, oh*5+ow, n).
    w2_ref: (K2P, 128)      folded conv2/BN weights.
    wf1_ref: (25, 128, 128) fc1(+BN) folded per-spatial-position blocks.
    o_ref : (8, 128)        lane/sublane dense logits; real data at [:N, :10]. [R7]
    """
    y2 = jnp.dot(p_ref[...], w2_ref[...], preferred_element_type=jnp.float32) + b2_ref[...]
    s2 = _sigmoid(y2)                               # (800, 128)
    m = HW2 * N_PAD                                 # 200, multiple of 8
    a2 = ((s2[0:m] + s2[m:2 * m] + s2[2 * m:3 * m] + s2[3 * m:4 * m]) * 0.25)
    a2 = a2.astype(GEMM_DTYPE)                      # rows = (oh*5+ow, n), lanes = cin

    # fc1 with the torch (C,H,W) flatten folded into 25 weight blocks: sum over
    # spatial positions of aligned (8,128)x(128,128) dots (static unroll).
    h = jnp.zeros((N_PAD, LANES), jnp.float32)
    for hw in range(HW2):
        h = h + jnp.dot(a2[hw * N_PAD:(hw + 1) * N_PAD, :], wf1_ref[hw],
                        preferred_element_type=jnp.float32)
    h = _sigmoid(h + bf1_ref[...]).astype(GEMM_DTYPE)
    h = _sigmoid(jnp.dot(h, wf2_ref[...], preferred_element_type=jnp.float32)
                 + bf2_ref[...]).astype(GEMM_DTYPE)
    o_ref[...] = jnp.dot(h, wf3_ref[...], preferred_element_type=jnp.float32) + bf3_ref[...]


# ----------------------------------------------------------------------------
# pallas_call wrappers
# ----------------------------------------------------------------------------
def _conv1_call(patches, w, b, m1p):
    rows, k = patches.shape
    return pl.pallas_call(
        _conv1_kernel,
        out_shape=jax.ShapeDtypeStruct((m1p, LANES), GEMM_DTYPE),
        grid=(1,),
        in_specs=[pl.BlockSpec((rows, k), lambda i: (0, 0)),
                  pl.BlockSpec((k, LANES), lambda i: (0, 0)),
                  pl.BlockSpec((1, LANES), lambda i: (0, 0))],
        out_specs=pl.BlockSpec((m1p, LANES), lambda i: (0, 0)),
        compiler_params=pltpu.CompilerParams(
            dimension_semantics=("arbitrary",), vmem_limit_bytes=VMEM_LIMIT),
    )(patches, w, b)


def _conv2_fc_call(patches, fp):
    rows, k = patches.shape
    return pl.pallas_call(
        _conv2_fc_kernel,
        out_shape=jax.ShapeDtypeStruct((N_PAD, LANES), jnp.float32),
        grid=(1,),
        in_specs=[pl.BlockSpec((rows, k), lambda i: (0, 0)),
                  pl.BlockSpec((k, LANES), lambda i: (0, 0)),
                  pl.BlockSpec((1, LANES), lambda i: (0, 0)),
                  pl.BlockSpec((HW2, LANES, LANES), lambda i: (0, 0, 0)),
                  pl.BlockSpec((1, LANES), lambda i: (0, 0)),
                  pl.BlockSpec((LANES, LANES), lambda i: (0, 0)),
                  pl.BlockSpec((1, LANES), lambda i: (0, 0)),
                  pl.BlockSpec((LANES, LANES), lambda i: (0, 0)),
                  pl.BlockSpec((1, LANES), lambda i: (0, 0))],
        out_specs=pl.BlockSpec((N_PAD, LANES), lambda i: (0, 0)),
        compiler_params=pltpu.CompilerParams(
            dimension_semantics=("arbitrary",), vmem_limit_bytes=VMEM_LIMIT),
    )(patches, fp["c2_w"], fp["c2_b"], fp["f1_w"], fp["f1_b"],
      fp["f2_w"], fp["f2_b"], fp["f3_w"], fp["f3_b"])


# ----------------------------------------------------------------------------
# Plain-JAX glue (patch extraction, one-time parameter folding)
# ----------------------------------------------------------------------------
def _conv1_patches(x_nhwc, m1p):
    """Raw 28x28x1 NHWC input -> (4*m1p, K1P) bf16 patch slab for the conv1 GEMM.

    Four pool-offset slabs of m1p rows each (row order (n, oh, ow), zero padded
    to a multiple of 8); columns in (kh, kw, cin) order, zero padded to K1P."""
    n, h, w, c = x_nhwc.shape
    x = jnp.pad(x_nhwc, ((0, 0), (2, 2), (2, 2), (0, 0)))            # padding=2
    cols = [x[:, ki:ki + 28, kj:kj + 28, :] for ki in range(5) for kj in range(5)]
    p = jnp.stack(cols, axis=3).reshape(n, 28, 28, 25 * c)
    p = p.reshape(n, 14, 2, 14, 2, 25 * c).transpose(2, 4, 0, 1, 3, 5)
    p = p.reshape(4, n * 196, 25 * c)
    p = jnp.pad(p, ((0, 0), (0, m1p - n * 196), (0, K1P - 25 * c)))
    return p.reshape(4 * m1p, K1P).astype(GEMM_DTYPE)


def _conv2_patches(a1_buf, n):
    """Pooled conv1 activations (m1p, 128) bf16 -> (4*200, K2P) conv2 patch slab.

    Channel selection (first 6 lanes) is part of this gather [R8]. Rows are
    ordered (pool offset, oh*5+ow, batch-row) so the conv2 kernel's pooled
    output lands directly in the order the folded fc1 blocks expect."""
    a1 = a1_buf[:n * 196].reshape(n, 14, 14, LANES)[..., :6]
    cols = [a1[:, ki:ki + 10, kj:kj + 10, :] for ki in range(5) for kj in range(5)]
    p = jnp.stack(cols, axis=3).reshape(n, 10, 10, 150)
    p = p.reshape(n, 5, 2, 5, 2, 150).transpose(2, 4, 1, 3, 0, 5)    # (pj1,pj2,oh,ow,n,K)
    p = p.reshape(4, HW2, n, 150)
    p = jnp.pad(p, ((0, 0), (0, 0), (0, N_PAD - n), (0, K2P - 150)))
    return p.reshape(4 * HW2 * N_PAD, K2P)                            # bf16


def fold_params(p, eps=1e-5):
    """One-time folding: BN(eval) into weights/bias, torch layouts -> padded
    (K, 128) GEMM matrices in bf16; torch (C,H,W) flatten folded into fc1."""
    def scale(g, var):
        return g / jnp.sqrt(var + eps)

    def fold_conv(w, b, g, beta, mean, var, kp):
        cout = w.shape[0]
        s = scale(g, var)
        wm = w.transpose(2, 3, 1, 0).reshape(-1, cout) * s[None, :]   # (kh*kw*cin, cout)
        bb = (b - mean) * s + beta
        wm = jnp.pad(wm, ((0, kp - wm.shape[0]), (0, LANES - cout))).astype(GEMM_DTYPE)
        bb = jnp.pad(bb, (0, LANES - cout)).reshape(1, LANES).astype(jnp.float32)
        return wm, bb

    def fold_fc(w, b, g=None, beta=None, mean=None, var=None):
        dout, din = w.shape
        wm = w.T                                    # torch Linear: y = x @ W.T + b
        bb = b
        if g is not None:
            s = scale(g, var)
            wm = wm * s[None, :]
            bb = (b - mean) * s + beta
        wm = jnp.pad(wm, ((0, LANES - din), (0, LANES - dout))).astype(GEMM_DTYPE)
        bb = jnp.pad(bb, (0, LANES - dout)).reshape(1, LANES).astype(jnp.float32)
        return wm, bb

    c1_w, c1_b = fold_conv(p["conv1_w"], p["conv1_b"], p["bn1_g"], p["bn1_b"],
                           p["bn1_mean"], p["bn1_var"], K1P)
    c2_w, c2_b = fold_conv(p["conv2_w"], p["conv2_b"], p["bn2_g"], p["bn2_b"],
                           p["bn2_mean"], p["bn2_var"], K2P)

    # fc1 + BatchNorm1d(120): torch Flatten order is (c, oh, ow) -> feature index
    # c*25 + oh*5 + ow.  Fold into 25 per-position (cin -> dout) blocks so the
    # kernel never has to transpose/flatten the pooled conv2 activations.
    s3 = scale(p["bn3_g"], p["bn3_var"])
    w1 = (p["fc1_w"] * s3[:, None]).reshape(120, 16, HW2).transpose(2, 1, 0)  # (hw,cin,dout)
    f1_w = jnp.pad(w1, ((0, 0), (0, LANES - 16), (0, LANES - 120))).astype(GEMM_DTYPE)
    f1_b = (p["fc1_b"] - p["bn3_mean"]) * s3 + p["bn3_b"]
    f1_b = jnp.pad(f1_b, (0, LANES - 120)).reshape(1, LANES).astype(jnp.float32)

    f2_w, f2_b = fold_fc(p["fc2_w"], p["fc2_b"], p["bn4_g"], p["bn4_b"],
                         p["bn4_mean"], p["bn4_var"])
    f3_w, f3_b = fold_fc(p["fc3_w"], p["fc3_b"])

    return {"c1_w": c1_w, "c1_b": c1_b, "c2_w": c2_w, "c2_b": c2_b,
            "f1_w": f1_w, "f1_b": f1_b, "f2_w": f2_w, "f2_b": f2_b,
            "f3_w": f3_w, "f3_b": f3_b}


# ----------------------------------------------------------------------------
# LeNet5 forward (2 Pallas launches)
# ----------------------------------------------------------------------------
def lenet5_forward(folded, x_nchw):
    n, c, h, w = x_nchw.shape
    assert (c, h, w) == (1, 28, 28), "LeNet5 geometry requires 1x28x28 inputs"
    assert n <= N_PAD, "toy batch only; see TODO for M-axis tiling at large batch"
    m1p = -(-(n * 196) // 8) * 8                         # conv1 pooled rows, 8-aligned

    x = x_nchw.transpose(0, 2, 3, 1)                     # NCHW -> NHWC
    p1 = _conv1_patches(x, m1p)                          # (4*m1p, 32) bf16
    a1 = _conv1_call(p1, folded["c1_w"], folded["c1_b"], m1p)   # (m1p, 128) bf16
    p2 = _conv2_patches(a1, n)                           # (800, 152) bf16
    out = _conv2_fc_call(p2, folded)                     # (8, 128) f32
    return out[:n, :10]


def init_params(key):
    ks = jax.random.split(key, 18)
    nrm = lambda k, shape, s=0.1: (s * jax.random.normal(k, shape)).astype(jnp.float32)
    ones = lambda m: jnp.ones((m,), jnp.float32)
    zeros = lambda m: jnp.zeros((m,), jnp.float32)
    return {
        # Conv2d(1, 6, 5, padding=2) + BatchNorm2d(6)
        "conv1_w": nrm(ks[0], (6, 1, 5, 5)), "conv1_b": nrm(ks[1], (6,)),
        "bn1_g": ones(6) + nrm(ks[2], (6,), 0.05), "bn1_b": nrm(ks[3], (6,), 0.05),
        "bn1_mean": zeros(6), "bn1_var": ones(6),
        # Conv2d(6, 16, 5) + BatchNorm2d(16)
        "conv2_w": nrm(ks[4], (16, 6, 5, 5)), "conv2_b": nrm(ks[5], (16,)),
        "bn2_g": ones(16) + nrm(ks[6], (16,), 0.05), "bn2_b": nrm(ks[7], (16,), 0.05),
        "bn2_mean": zeros(16), "bn2_var": ones(16),
        # Linear(400, 120) + BatchNorm1d(120)
        "fc1_w": nrm(ks[8], (120, 400)), "fc1_b": nrm(ks[9], (120,)),
        "bn3_g": ones(120) + nrm(ks[10], (120,), 0.05), "bn3_b": nrm(ks[11], (120,), 0.05),
        "bn3_mean": zeros(120), "bn3_var": ones(120),
        # Linear(120, 84) + BatchNorm1d(84)
        "fc2_w": nrm(ks[12], (84, 120)), "fc2_b": nrm(ks[13], (84,)),
        "bn4_g": ones(84) + nrm(ks[14], (84,), 0.05), "bn4_b": nrm(ks[15], (84,), 0.05),
        "bn4_mean": zeros(84), "bn4_var": ones(84),
        # Linear(84, 10)
        "fc3_w": nrm(ks[16], (10, 84)), "fc3_b": nrm(ks[17], (10,)),
    }


if __name__ == "__main__":
    key = jax.random.PRNGKey(0)
    pkey, xkey = jax.random.split(key)
    params = init_params(pkey)
    folded = fold_params(params)   # one-time BN fold / layout / lane padding
    # LeNet5 geometry requires 28x28 input (16*5*5 flatten); toy batch of 2.
    x = jax.random.normal(xkey, (2, 1, 28, 28), jnp.float32)

    out = jax.jit(lenet5_forward)(folded, x)
    out = jax.block_until_ready(out)

    assert out.shape == (2, 10), out.shape
    assert jnp.all(jnp.isfinite(out))
    print("KERNEL_OK")
</pallas_src>

<mosaic_0001>
module attributes {stable_mosaic.version = 11 : i64} {
  func.func @_conv1_kernel(%arg0: i32, %arg1: memref<1568x32xbf16, #tpu.memory_space<vmem>>, %arg2: memref<32x128xbf16, #tpu.memory_space<vmem>>, %arg3: memref<1x128xf32, #tpu.memory_space<vmem>>, %arg4: memref<392x128xbf16, #tpu.memory_space<vmem>>) attributes {dimension_semantics = [#tpu.dimension_semantics<arbitrary>], iteration_bounds = array<i64: 1>, scalar_prefetch = 0 : i64, scratch_operands = 0 : i64, tpu.core_type = #tpu.core_type<tc>, window_params = [{pipeline_mode = #tpu.pipeline_mode<synchronous>, transform_indices = @transform_0, window_bounds = array<i64: 1568, 32>}, {pipeline_mode = #tpu.pipeline_mode<synchronous>, transform_indices = @transform_1, window_bounds = array<i64: 32, 128>}, {pipeline_mode = #tpu.pipeline_mode<synchronous>, transform_indices = @transform_2, window_bounds = array<i64: 1, 128>}, {pipeline_mode = #tpu.pipeline_mode<synchronous>, transform_indices = @transform_3, window_bounds = array<i64: 392, 128>}]} {
    %c0 = arith.constant 0 : index
    %c0_0 = arith.constant 0 : index
    %0 = vector.load %arg1[%c0, %c0_0] : memref<1568x32xbf16, #tpu.memory_space<vmem>>, vector<1568x32xbf16>
    %c0_1 = arith.constant 0 : index
    %c0_2 = arith.constant 0 : index
    %1 = vector.load %arg2[%c0_1, %c0_2] : memref<32x128xbf16, #tpu.memory_space<vmem>>, vector<32x128xbf16>
    %cst = arith.constant dense<0.000000e+00> : vector<1568x128xf32>
    %2 = tpu.matmul %0, %1, %cst {dimension_numbers = #tpu.dot_dimension_numbers<[1], [0], [0], [1], [0, 0, 1, 1], [], []>} : vector<1568x32xbf16>, vector<32x128xbf16>, vector<1568x128xf32> -> vector<1568x128xf32>
    %c0_3 = arith.constant 0 : index
    %c0_4 = arith.constant 0 : index
    %3 = vector.load %arg3[%c0_3, %c0_4] : memref<1x128xf32, #tpu.memory_space<vmem>>, vector<1x128xf32>
    %4 = vector.broadcast %3 : vector<1x128xf32> to vector<1568x128xf32>
    %5 = arith.addf %2, %4 : vector<1568x128xf32>
    %cst_5 = arith.constant 0.000000e+00 : f32
    %6 = vector.broadcast %cst_5 : f32 to vector<1568x128xf32>
    %7 = arith.subf %6, %5 : vector<1568x128xf32>
    %8 = math.exp %7 : vector<1568x128xf32>
    %cst_6 = arith.constant 1.000000e+00 : f32
    %9 = vector.broadcast %cst_6 : f32 to vector<1568x128xf32>
    %10 = arith.addf %9, %8 : vector<1568x128xf32>
    %11 = tpu.reciprocal %10 {approx = true} : vector<1568x128xf32> -> vector<1568x128xf32>
    %12 = vector.extract_strided_slice %11 {offsets = [0, 0], sizes = [392, 128], strides = [1, 1]} : vector<1568x128xf32> to vector<392x128xf32>
    %13 = vector.extract_strided_slice %11 {offsets = [392, 0], sizes = [392, 128], strides = [1, 1]} : vector<1568x128xf32> to vector<392x128xf32>
    %14 = arith.addf %12, %13 : vector<392x128xf32>
    %15 = vector.extract_strided_slice %11 {offsets = [784, 0], sizes = [392, 128], strides = [1, 1]} : vector<1568x128xf32> to vector<392x128xf32>
    %16 = arith.addf %14, %15 : vector<392x128xf32>
    %17 = vector.extract_strided_slice %11 {offsets = [1176, 0], sizes = [392, 128], strides = [1, 1]} : vector<1568x128xf32> to vector<392x128xf32>
    %18 = arith.addf %16, %17 : vector<392x128xf32>
    %cst_7 = arith.constant 2.500000e-01 : f32
    %19 = vector.broadcast %cst_7 : f32 to vector<392x128xf32>
    %20 = arith.mulf %18, %19 : vector<392x128xf32>
    %21 = arith.truncf %20 : vector<392x128xf32> to vector<392x128xbf16>
    %c0_8 = arith.constant 0 : index
    %c0_9 = arith.constant 0 : index
    %22 = vector.load %arg4[%c0_8, %c0_9] : memref<392x128xbf16, #tpu.memory_space<vmem>>, vector<392x128xbf16>
    tpu.vector_store %arg4[%c0_8, %c0_9], %21 {strides = array<i32>} : memref<392x128xbf16, #tpu.memory_space<vmem>>, vector<392x128xbf16>,
    return
  }
  func.func @transform_0(%arg0: i32) -> (i32, i32) {
    %c0_i32 = arith.constant 0 : i32
    %c0_i32_0 = arith.constant 0 : i32
    %c0_i32_1 = arith.constant 0 : i32
    return %c0_i32, %c0_i32_0 : i32, i32
  }
  func.func @transform_1(%arg0: i32) -> (i32, i32) {
    %c0_i32 = arith.constant 0 : i32
    %c0_i32_0 = arith.constant 0 : i32
    %c0_i32_1 = arith.constant 0 : i32
    return %c0_i32, %c0_i32_0 : i32, i32
  }
  func.func @transform_2(%arg0: i32) -> (i32, i32) {
    %c0_i32 = arith.constant 0 : i32
    %c0_i32_0 = arith.constant 0 : i32
    %c0_i32_1 = arith.constant 0 : i32
    return %c0_i32, %c0_i32_0 : i32, i32
  }
  func.func @transform_3(%arg0: i32) -> (i32, i32) {
    %c0_i32 = arith.constant 0 : i32
    %c0_i32_0 = arith.constant 0 : i32
    %c0_i32_1 = arith.constant 0 : i32
    return %c0_i32, %c0_i32_0 : i32, i32
  }
}

module attributes {stable_mosaic.version = 11 : i64} {
  func.func @_conv2_fc_kernel(%arg0: i32, %arg1: memref<800x152xbf16, #tpu.memory_space<vmem>>, %arg2: memref<152x128xbf16, #tpu.memory_space<vmem>>, %arg3: memref<1x128xf32, #tpu.memory_space<vmem>>, %arg4: memref<25x128x128xbf16, #tpu.memory_space<vmem>>, %arg5: memref<1x128xf32, #tpu.memory_space<vmem>>, %arg6: memref<128x128xbf16, #tpu.memory_space<vmem>>, %arg7: memref<1x128xf32, #tpu.memory_space<vmem>>, %arg8: memref<128x128xbf16, #tpu.memory_space<vmem>>, %arg9: memref<1x128xf32, #tpu.memory_space<vmem>>, %arg10: memref<8x128xf32, #tpu.memory_space<vmem>>) attributes {dimension_semantics = [#tpu.dimension_semantics<arbitrary>], iteration_bounds = array<i64: 1>, scalar_prefetch = 0 : i64, scratch_operands = 0 : i64, tpu.core_type = #tpu.core_type<tc>, window_params = [{pipeline_mode = #tpu.pipeline_mode<synchronous>, transform_indices = @transform_0, window_bounds = array<i64: 800, 152>}, {pipeline_mode = #tpu.pipeline_mode<synchronous>, transform_indices = @transform_1, window_bounds = array<i64: 152, 128>}, {pipeline_mode = #tpu.pipeline_mode<synchronous>, transform_indices = @transform_2, window_bounds = array<i64: 1, 128>}, {pipeline_mode = #tpu.pipeline_mode<synchronous>, transform_indices = @transform_3, window_bounds = array<i64: 25, 128, 128>}, {pipeline_mode = #tpu.pipeline_mode<synchronous>, transform_indices = @transform_4, window_bounds = array<i64: 1, 128>}, {pipeline_mode = #tpu.pipeline_mode<synchronous>, transform_indices = @transform_5, window_bounds = array<i64: 128, 128>}, {pipeline_mode = #tpu.pipeline_mode<synchronous>, transform_indices = @transform_6, window_bounds = array<i64: 1, 128>}, {pipeline_mode = #tpu.pipeline_mode<synchronous>, transform_indices = @transform_7, window_bounds = array<i64: 128, 128>}, {pipeline_mode = #tpu.pipeline_mode<synchronous>, transform_indices = @transform_8, window_bounds = array<i64: 1, 128>}, {pipeline_mode = #tpu.pipeline_mode<synchronous>, transform_indices = @transform_9, window_bounds = array<i64: 8, 128>}]} {
    %c0 = arith.constant 0 : index
    %c0_0 = arith.constant 0 : index
    %0 = vector.load %arg1[%c0, %c0_0] : memref<800x152xbf16, #tpu.memory_space<vmem>>, vector<800x152xbf16>
    %c0_1 = arith.constant 0 : index
    %c0_2 = arith.constant 0 : index
    %1 = vector.load %arg2[%c0_1, %c0_2] : memref<152x128xbf16, #tpu.memory_space<vmem>>, vector<152x128xbf16>
    %cst = arith.constant dense<0.000000e+00> : vector<800x128xf32>
    %2 = tpu.matmul %0, %1, %cst {dimension_numbers = #tpu.dot_dimension_numbers<[1], [0], [0], [1], [0, 0, 1, 1], [], []>} : vector<800x152xbf16>, vector<152x128xbf16>, vector<800x128xf32> -> vector<800x128xf32>
    %c0_3 = arith.constant 0 : index
    %c0_4 = arith.constant 0 : index
    %3 = vector.load %arg3[%c0_3, %c0_4] : memref<1x128xf32, #tpu.memory_space<vmem>>, vector<1x128xf32>
    %4 = vector.broadcast %3 : vector<1x128xf32> to vector<800x128xf32>
    %5 = arith.addf %2, %4 : vector<800x128xf32>
    %cst_5 = arith.constant 0.000000e+00 : f32
    %6 = vector.broadcast %cst_5 : f32 to vector<800x128xf32>
    %7 = arith.subf %6, %5 : vector<800x128xf32>
    %8 = math.exp %7 : vector<800x128xf32>
    %cst_6 = arith.constant 1.000000e+00 : f32
    %9 = vector.broadcast %cst_6 : f32 to vector<800x128xf32>
    %10 = arith.addf %9, %8 : vector<800x128xf32>
    %11 = tpu.reciprocal %10 {approx = true} : vector<800x128xf32> -> vector<800x128xf32>
    %12 = vector.extract_strided_slice %11 {offsets = [0, 0], sizes = [200, 128], strides = [1, 1]} : vector<800x128xf32> to vector<200x128xf32>
    %13 = vector.extract_strided_slice %11 {offsets = [200, 0], sizes = [200, 128], strides = [1, 1]} : vector<800x128xf32> to vector<200x128xf32>
    %14 = arith.addf %12, %13 : vector<200x128xf32>
    %15 = vector.extract_strided_slice %11 {offsets = [400, 0], sizes = [200, 128], strides = [1, 1]} : vector<800x128xf32> to vector<200x128xf32>
    %16 = arith.addf %14, %15 : vector<200x128xf32>
    %17 = vector.extract_strided_slice %11 {offsets = [600, 0], sizes = [200, 128], strides = [1, 1]} : vector<800x128xf32> to vector<200x128xf32>
    %18 = arith.addf %16, %17 : vector<200x128xf32>
    %cst_7 = arith.constant 2.500000e-01 : f32
    %19 = vector.broadcast %cst_7 : f32 to vector<200x128xf32>
    %20 = arith.mulf %18, %19 : vector<200x128xf32>
    %21 = arith.truncf %20 : vector<200x128xf32> to vector<200x128xbf16>
    %cst_8 = arith.constant 0.000000e+00 : f32
    %22 = vector.broadcast %cst_8 : f32 to vector<8x128xf32>
    %23 = vector.extract_strided_slice %21 {offsets = [0, 0], sizes = [8, 128], strides = [1, 1]} : vector<200x128xbf16> to vector<8x128xbf16>
    %c0_9 = arith.constant 0 : index
    %c0_10 = arith.constant 0 : index
    %c0_11 = arith.constant 0 : index
    %24 = vector.load %arg4[%c0_9, %c0_10, %c0_11] : memref<25x128x128xbf16, #tpu.memory_space<vmem>>, vector<1x128x128xbf16>
    %25 = vector.shape_cast %24 : vector<1x128x128xbf16> to vector<128x128xbf16>
    %cst_12 = arith.constant dense<0.000000e+00> : vector<8x128xf32>
    %26 = tpu.matmul %23, %25, %cst_12 {dimension_numbers = #tpu.dot_dimension_numbers<[1], [0], [0], [1], [0, 0, 1, 1], [], []>} : vector<8x128xbf16>, vector<128x128xbf16>, vector<8x128xf32> -> vector<8x128xf32>
    %27 = arith.addf %22, %26 : vector<8x128xf32>
    %28 = vector.extract_strided_slice %21 {offsets = [8, 0], sizes = [8, 128], strides = [1, 1]} : vector<200x128xbf16> to vector<8x128xbf16>
    %c1 = arith.constant 1 : index
    %c0_13 = arith.constant 0 : index
    %c0_14 = arith.constant 0 : index
    %29 = vector.load %arg4[%c1, %c0_13, %c0_14] : memref<25x128x128xbf16, #tpu.memory_space<vmem>>, vector<1x128x128xbf16>
    %30 = vector.shape_cast %29 : vector<1x128x128xbf16> to vector<128x128xbf16>
    %cst_15 = arith.constant dense<0.000000e+00> : vector<8x128xf32>
    %31 = tpu.matmul %28, %30, %cst_15 {dimension_numbers = #tpu.dot_dimension_numbers<[1], [0], [0], [1], [0, 0, 1, 1], [], []>} : vector<8x128xbf16>, vector<128x128xbf16>, vector<8x128xf32> -> vector<8x128xf32>
    %32 = arith.addf %27, %31 : vector<8x128xf32>
    %33 = vector.extract_strided_slice %21 {offsets = [16, 0], sizes = [8, 128], strides = [1, 1]} : vector<200x128xbf16> to vector<8x128xbf16>
    %c2 = arith.constant 2 : index
    %c0_16 = arith.constant 0 : index
    %c0_17 = arith.constant 0 : index
    %34 = vector.load %arg4[%c2, %c0_16, %c0_17] : memref<25x128x128xbf16, #tpu.memory_space<vmem>>, vector<1x128x128xbf16>
    %35 = vector.shape_cast %34 : vector<1x128x128xbf16> to vector<128x128xbf16>
    %cst_18 = arith.constant dense<0.000000e+00> : vector<8x128xf32>
    %36 = tpu.matmul %33, %35, %cst_18 {dimension_numbers = #tpu.dot_dimension_numbers<[1], [0], [0], [1], [0, 0, 1, 1], [], []>} : vector<8x128xbf16>, vector<128x128xbf16>, vector<8x128xf32> -> vector<8x128xf32>
    %37 = arith.addf %32, %36 : vector<8x128xf32>
    %38 = vector.extract_strided_slice %21 {offsets = [24, 0], sizes = [8, 128], strides = [1, 1]} : vector<200x128xbf16> to vector<8x128xbf16>
    %c3 = arith.constant 3 : index
    %c0_19 = arith.constant 0 : index
    %c0_20 = arith.constant 0 : index
    %39 = vector.load %arg4[%c3, %c0_19, %c0_20] : memref<25x128x128xbf16, #tpu.memory_space<vmem>>, vector<1x128x128xbf16>
    %40 = vector.shape_cast %39 : vector<1x128x128xbf16> to vector<128x128xbf16>
    %cst_21 = arith.constant dense<0.000000e+00> : vector<8x128xf32>
    %41 = tpu.matmul %38, %40, %cst_21 {dimension_numbers = #tpu.dot_dimension_numbers<[1], [0], [0], [1], [0, 0, 1, 1], [], []>} : vector<8x128xbf16>, vector<128x128xbf16>, vector<8x128xf32> -> vector<8x128xf32>
    %42 = arith.addf %37, %41 : vector<8x128xf32>
    %43 = vector.extract_strided_slice %21 {offsets = [32, 0], sizes = [8, 128], strides = [1, 1]} : vector<200x128xbf16> to vector<8x128xbf16>
    %c4 = arith.constant 4 : index
    %c0_22 = arith.constant 0 : index
    %c0_23 = arith.constant 0 : index
    %44 = vector.load %arg4[%c4, %c0_22, %c0_23] : memref<25x128x128xbf16, #tpu.memory_space<vmem>>, vector<1x128x128xbf16>
    %45 = vector.shape_cast %44 : vector<1x128x128xbf16> to vector<128x128xbf16>
    %cst_24 = arith.constant dense<0.000000e+00> : vector<8x128xf32>
    %46 = tpu.matmul %43, %45, %cst_24 {dimension_numbers = #tpu.dot_dimension_numbers<[1], [0], [0], [1], [0, 0, 1, 1], [], []>} : vector<8x128xbf16>, vector<128x128xbf16>, vector<8x128xf32> -> vector<8x128xf32>
    %47 = arith.addf %42, %46 : vector<8x128xf32>
    %48 = vector.extract_strided_slice %21 {offsets = [40, 0], sizes = [8, 128], strides = [1, 1]} : vector<200x128xbf16> to vector<8x128xbf16>
    %c5 = arith.constant 5 : index
    %c0_25 = arith.constant 0 : index
    %c0_26 = arith.constant 0 : index
    %49 = vector.load %arg4[%c5, %c0_25, %c0_26] : memref<25x128x128xbf16, #tpu.memory_space<vmem>>, vector<1x128x128xbf16>
    %50 = vector.shape_cast %49 : vector<1x128x128xbf16> to vector<128x128xbf16>
    %cst_27 = arith.constant dense<0.000000e+00> : vector<8x128xf32>
    %51 = tpu.matmul %48, %50, %cst_27 {dimension_numbers = #tpu.dot_dimension_numbers<[1], [0], [0], [1], [0, 0, 1, 1], [], []>} : vector<8x128xbf16>, vector<128x128xbf16>, vector<8x128xf32> -> vector<8x128xf32>
    %52 = arith.addf %47, %51 : vector<8x128xf32>
    %53 = vector.extract_strided_slice %21 {offsets = [48, 0], sizes = [8, 128], strides = [1, 1]} : vector<200x128xbf16> to vector<8x128xbf16>
    %c6 = arith.constant 6 : index
    %c0_28 = arith.constant 0 : index
    %c0_29 = arith.constant 0 : index
    %54 = vector.load %arg4[%c6, %c0_28, %c0_29] : memref<25x128x128xbf16, #tpu.memory_space<vmem>>, vector<1x128x128xbf16>
    %55 = vector.shape_cast %54 : vector<1x128x128xbf16> to vector<128x128xbf16>
    %cst_30 = arith.constant dense<0.000000e+00> : vector<8x128xf32>
    %56 = tpu.matmul %53, %55, %cst_30 {dimension_numbers = #tpu.dot_dimension_numbers<[1], [0], [0], [1], [0, 0, 1, 1], [], []>} : vector<8x128xbf16>, vector<128x128xbf16>, vector<8x128xf32> -> vector<8x128xf32>
    %57 = arith.addf %52, %56 : vector<8x128xf32>
    %58 = vector.extract_strided_slice %21 {offsets = [56, 0], sizes = [8, 128], strides = [1, 1]} : vector<200x128xbf16> to vector<8x128xbf16>
    %c7 = arith.constant 7 : index
    %c0_31 = arith.constant 0 : index
    %c0_32 = arith.constant 0 : index
    %59 = vector.load %arg4[%c7, %c0_31, %c0_32] : memref<25x128x128xbf16, #tpu.memory_space<vmem>>, vector<1x128x128xbf16>
    %60 = vector.shape_cast %59 : vector<1x128x128xbf16> to vector<128x128xbf16>
    %cst_33 = arith.constant dense<0.000000e+00> : vector<8x128xf32>
    %61 = tpu.matmul %58, %60, %cst_33 {dimension_numbers = #tpu.dot_dimension_numbers<[1], [0], [0], [1], [0, 0, 1, 1], [], []>} : vector<8x128xbf16>, vector<128x128xbf16>, vector<8x128xf32> -> vector<8x128xf32>
    %62 = arith.addf %57, %61 : vector<8x128xf32>
    %63 = vector.extract_strided_slice %21 {offsets = [64, 0], sizes = [8, 128], strides = [1, 1]} : vector<200x128xbf16> to vector<8x128xbf16>
    %c8 = arith.constant 8 : index
    %c0_34 = arith.constant 0 : index
    %c0_35 = arith.constant 0 : index
    %64 = vector.load %arg4[%c8, %c0_34, %c0_35] : memref<25x128x128xbf16, #tpu.memory_space<vmem>>, vector<1x128x128xbf16>
    %65 = vector.shape_cast %64 : vector<1x128x128xbf16> to vector<128x128xbf16>
    %cst_36 = arith.constant dense<0.000000e+00> : vector<8x128xf32>
    %66 = tpu.matmul %63, %65, %cst_36 {dimension_numbers = #tpu.dot_dimension_numbers<[1], [0], [0], [1], [0, 0, 1, 1], [], []>} : vector<8x128xbf16>, vector<128x128xbf16>, vector<8x128xf32> -> vector<8x128xf32>
    %67 = arith.addf %62, %66 : vector<8x128xf32>
    %68 = vector.extract_strided_slice %21 {offsets = [72, 0], sizes = [8, 128], strides = [1, 1]} : vector<200x128xbf16> to vector<8x128xbf16>
    %c9 = arith.constant 9 : index
    %c0_37 = arith.constant 0 : index
    %c0_38 = arith.constant 0 : index
    %69 = vector.load %arg4[%c9, %c0_37, %c0_38] : memref<25x128x128xbf16, #tpu.memory_space<vmem>>, vector<1x128x128xbf16>
    %70 = vector.shape_cast %69 : vector<1x128x128xbf16> to vector<128x128xbf16>
    %cst_39 = arith.constant dense<0.000000e+00> : vector<8x128xf32>
    %71 = tpu.matmul %68, %70, %cst_39 {dimension_numbers = #tpu.dot_dimension_numbers<[1], [0], [0], [1], [0, 0, 1, 1], [], []>} : vector<8x128xbf16>, vector<128x128xbf16>, vector<8x128xf32> -> vector<8x128xf32>
    %72 = arith.addf %67, %71 : vector<8x128xf32>
    %73 = vector.extract_strided_slice %21 {offsets = [80, 0], sizes = [8, 128], strides = [1, 1]} : vector<200x128xbf16> to vector<8x128xbf16>
    %c10 = arith.constant 10 : index
    %c0_40 = arith.constant 0 : index
    %c0_41 = arith.constant 0 : index
    %74 = vector.load %arg4[%c10, %c0_40, %c0_41] : memref<25x128x128xbf16, #tpu.memory_space<vmem>>, vector<1x128x128xbf16>
    %75 = vector.shape_cast %74 : vector<1x128x128xbf16> to vector<128x128xbf16>
    %cst_42 = arith.constant dense<0.000000e+00> : vector<8x128xf32>
    %76 = tpu.matmul %73, %75, %cst_42 {dimension_numbers = #tpu.dot_dimension_numbers<[1], [0], [0], [1], [0, 0, 1, 1], [], []>} : vector<8x128xbf16>, vector<128x128xbf16>, vector<8x128xf32> -> vector<8x128xf32>
    %77 = arith.addf %72, %76 : vector<8x128xf32>
    %78 = vector.extract_strided_slice %21 {offsets = [88, 0], sizes = [8, 128], strides = [1, 1]} : vector<200x128xbf16> to vector<8x128xbf16>
    %c11 = arith.constant 11 : index
    %c0_43 = arith.constant 0 : index
    %c0_44 = arith.constant 0 : index
    %79 = vector.load %arg4[%c11, %c0_43, %c0_44] : memref<25x128x128xbf16, #tpu.memory_space<vmem>>, vector<1x128x128xbf16>
    %80 = vector.shape_cast %79 : vector<1x128x128xbf16> to vector<128x128xbf16>
    %cst_45 = arith.constant dense<0.000000e+00> : vector<8x128xf32>
    %81 = tpu.matmul %78, %80, %cst_45 {dimension_numbers = #tpu.dot_dimension_numbers<[1], [0], [0], [1], [0, 0, 1, 1], [], []>} : vector<8x128xbf16>, vector<128x128xbf16>, vector<8x128xf32> -> vector<8x128xf32>
    %82 = arith.addf %77, %81 : vector<8x128xf32>
    %83 = vector.extract_strided_slice %21 {offsets = [96, 0], sizes = [8, 128], strides = [1, 1]} : vector<200x128xbf16> to vector<8x128xbf16>
    %c12 = arith.constant 12 : index
    %c0_46 = arith.constant 0 : index
    %c0_47 = arith.constant 0 : index
    %84 = vector.load %arg4[%c12, %c0_46, %c0_47] : memref<25x128x128xbf16, #tpu.memory_space<vmem>>, vector<1x128x128xbf16>
    %85 = vector.shape_cast %84 : vector<1x128x128xbf16> to vector<128x128xbf16>
    %cst_48 = arith.constant dense<0.000000e+00> : vector<8x128xf32>
    %86 = tpu.matmul %83, %85, %cst_48 {dimension_numbers = #tpu.dot_dimension_numbers<[1], [0], [0], [1], [0, 0, 1, 1], [], []>} : vector<8x128xbf16>, vector<128x128xbf16>, vector<8x128xf32> -> vector<8x128xf32>
    %87 = arith.addf %82, %86 : vector<8x128xf32>
    %88 = vector.extract_strided_slice %21 {offsets = [104, 0], sizes = [8, 128], strides = [1, 1]} : vector<200x128xbf16> to vector<8x128xbf16>
    %c13 = arith.constant 13 : index
    %c0_49 = arith.constant 0 : index
    %c0_50 = arith.constant 0 : index
    %89 = vector.load %arg4[%c13, %c0_49, %c0_50] : memref<25x128x128xbf16, #tpu.memory_space<vmem>>, vector<1x128x128xbf16>
    %90 = vector.shape_cast %89 : vector<1x128x128xbf16> to vector<128x128xbf16>
    %cst_51 = arith.constant dense<0.000000e+00> : vector<8x128xf32>
    %91 = tpu.matmul %88, %90, %cst_51 {dimension_numbers = #tpu.dot_dimension_numbers<[1], [0], [0], [1], [0, 0, 1, 1], [], []>} : vector<8x128xbf16>, vector<128x128xbf16>, vector<8x128xf32> -> vector<8x128xf32>
    %92 = arith.addf %87, %91 : vector<8x128xf32>
    %93 = vector.extract_strided_slice %21 {offsets = [112, 0], sizes = [8, 128], strides = [1, 1]} : vector<200x128xbf16> to vector<8x128xbf16>
    %c14 = arith.constant 14 : index
    %c0_52 = arith.constant 0 : index
    %c0_53 = arith.constant 0 : index
    %94 = vector.load %arg4[%c14, %c0_52, %c0_53] : memref<25x128x128xbf16, #tpu.memory_space<vmem>>, vector<1x128x128xbf16>
    %95 = vector.shape_cast %94 : vector<1x128x128xbf16> to vector<128x128xbf16>
    %cst_54 = arith.constant dense<0.000000e+00> : vector<8x128xf32>
    %96 = tpu.matmul %93, %95, %cst_54 {dimension_numbers = #tpu.dot_dimension_numbers<[1], [0], [0], [1], [0, 0, 1, 1], [], []>} : vector<8x128xbf16>, vector<128x128xbf16>, vector<8x128xf32> -> vector<8x128xf32>
    %97 = arith.addf %92, %96 : vector<8x128xf32>
    %98 = vector.extract_strided_slice %21 {offsets = [120, 0], sizes = [8, 128], strides = [1, 1]} : vector<200x128xbf16> to vector<8x128xbf16>
    %c15 = arith.constant 15 : index
    %c0_55 = arith.constant 0 : index
    %c0_56 = arith.constant 0 : index
    %99 = vector.load %arg4[%c15, %c0_55, %c0_56] : memref<25x128x128xbf16, #tpu.memory_space<vmem>>, vector<1x128x128xbf16>
    %100 = vector.shape_cast %99 : vector<1x128x128xbf16> to vector<128x128xbf16>
    %cst_57 = arith.constant dense<0.000000e+00> : vector<8x128xf32>
    %101 = tpu.matmul %98, %100, %cst_57 {dimension_numbers = #tpu.dot_dimension_numbers<[1], [0], [0], [1], [0, 0, 1, 1], [], []>} : vector<8x128xbf16>, vector<128x128xbf16>, vector<8x128xf32> -> vector<8x128xf32>
    %102 = arith.addf %97, %101 : vector<8x128xf32>
    %103 = vector.extract_strided_slice %21 {offsets = [128, 0], sizes = [8, 128], strides = [1, 1]} : vector<200x128xbf16> to vector<8x128xbf16>
    %c16 = arith.constant 16 : index
    %c0_58 = arith.constant 0 : index
    %c0_59 = arith.constant 0 : index
    %104 = vector.load %arg4[%c16, %c0_58, %c0_59] : memref<25x128x128xbf16, #tpu.memory_space<vmem>>, vector<1x128x128xbf16>
    %105 = vector.shape_cast %104 : vector<1x128x128xbf16> to vector<128x128xbf16>
    %cst_60 = arith.constant dense<0.000000e+00> : vector<8x128xf32>
    %106 = tpu.matmul %103, %105, %cst_60 {dimension_numbers = #tpu.dot_dimension_numbers<[1], [0], [0], [1], [0, 0, 1, 1], [], []>} : vector<8x128xbf16>, vector<128x128xbf16>, vector<8x128xf32> -> vector<8x128xf32>
    %107 = arith.addf %102, %106 : vector<8x128xf32>
    %108 = vector.extract_strided_slice %21 {offsets = [136, 0], sizes = [8, 128], strides = [1, 1]} : vector<200x128xbf16> to vector<8x128xbf16>
    %c17 = arith.constant 17 : index
    %c0_61 = arith.constant 0 : index
    %c0_62 = arith.constant 0 : index
    %109 = vector.load %arg4[%c17, %c0_61, %c0_62] : memref<25x128x128xbf16, #tpu.memory_space<vmem>>, vector<1x128x128xbf16>
    %110 = vector.shape_cast %109 : vector<1x128x128xbf16> to vector<128x128xbf16>
    %cst_63 = arith.constant dense<0.000000e+00> : vector<8x128xf32>
    %111 = tpu.matmul %108, %110, %cst_63 {dimension_numbers = #tpu.dot_dimension_numbers<[1], [0], [0], [1], [0, 0, 1, 1], [], []>} : vector<8x128xbf16>, vector<128x128xbf16>, vector<8x128xf32> -> vector<8x128xf32>
    %112 = arith.addf %107, %111 : vector<8x128xf32>
    %113 = vector.extract_strided_slice %21 {offsets = [144, 0], sizes = [8, 128], strides = [1, 1]} : vector<200x128xbf16> to vector<8x128xbf16>
    %c18 = arith.constant 18 : index
    %c0_64 = arith.constant 0 : index
    %c0_65 = arith.constant 0 : index
    %114 = vector.load %arg4[%c18, %c0_64, %c0_65] : memref<25x128x128xbf16, #tpu.memory_space<vmem>>, vector<1x128x128xbf16>
    %115 = vector.shape_cast %114 : vector<1x128x128xbf16> to vector<128x128xbf16>
    %cst_66 = arith.constant dense<0.000000e+00> : vector<8x128xf32>
    %116 = tpu.matmul %113, %115, %cst_66 {dimension_numbers = #tpu.dot_dimension_numbers<[1], [0], [0], [1], [0, 0, 1, 1], [], []>} : vector<8x128xbf16>, vector<128x128xbf16>, vector<8x128xf32> -> vector<8x128xf32>
    %117 = arith.addf %112, %116 : vector<8x128xf32>
    %118 = vector.extract_strided_slice %21 {offsets = [152, 0], sizes = [8, 128], strides = [1, 1]} : vector<200x128xbf16> to vector<8x128xbf16>
    %c19 = arith.constant 19 : index
    %c0_67 = arith.constant 0 : index
    %c0_68 = arith.constant 0 : index
    %119 = vector.load %arg4[%c19, %c0_67, %c0_68] : memref<25x128x128xbf16, #tpu.memory_space<vmem>>, vector<1x128x128xbf16>
    %120 = vector.shape_cast %119 : vector<1x128x128xbf16> to vector<128x128xbf16>
    %cst_69 = arith.constant dense<0.000000e+00> : vector<8x128xf32>
    %121 = tpu.matmul %118, %120, %cst_69 {dimension_numbers = #tpu.dot_dimension_numbers<[1], [0], [0], [1], [0, 0, 1, 1], [], []>} : vector<8x128xbf16>, vector<128x128xbf16>, vector<8x128xf32> -> vector<8x128xf32>
    %122 = arith.addf %117, %121 : vector<8x128xf32>
    %123 = vector.extract_strided_slice %21 {offsets = [160, 0], sizes = [8, 128], strides = [1, 1]} : vector<200x128xbf16> to vector<8x128xbf16>
    %c20 = arith.constant 20 : index
    %c0_70 = arith.constant 0 : index
    %c0_71 = arith.constant 0 : index
    %124 = vector.load %arg4[%c20, %c0_70, %c0_71] : memref<25x128x128xbf16, #tpu.memory_space<vmem>>, vector<1x128x128xbf16>
    %125 = vector.shape_cast %124 : vector<1x128x128xbf16> to vector<128x128xbf16>
    %cst_72 = arith.constant dense<0.000000e+00> : vector<8x128xf32>
    %126 = tpu.matmul %123, %125, %cst_72 {dimension_numbers = #tpu.dot_dimension_numbers<[1], [0], [0], [1], [0, 0, 1, 1], [], []>} : vector<8x128xbf16>, vector<128x128xbf16>, vector<8x128xf32> -> vector<8x128xf32>
    %127 = arith.addf %122, %126 : vector<8x128xf32>
    %128 = vector.extract_strided_slice %21 {offsets = [168, 0], sizes = [8, 128], strides = [1, 1]} : vector<200x128xbf16> to vector<8x128xbf16>
    %c21 = arith.constant 21 : index
    %c0_73 = arith.constant 0 : index
    %c0_74 = arith.constant 0 : index
    %129 = vector.load %arg4[%c21, %c0_73, %c0_74] : memref<25x128x128xbf16, #tpu.memory_space<vmem>>, vector<1x128x128xbf16>
    %130 = vector.shape_cast %129 : vector<1x128x128xbf16> to vector<128x128xbf16>
    %cst_75 = arith.constant dense<0.000000e+00> : vector<8x128xf32>
    %131 = tpu.matmul %128, %130, %cst_75 {dimension_numbers = #tpu.dot_dimension_numbers<[1], [0], [0], [1], [0, 0, 1, 1], [], []>} : vector<8x128xbf16>, vector<128x128xbf16>, vector<8x128xf32> -> vector<8x128xf32>
    %132 = arith.addf %127, %131 : vector<8x128xf32>
    %133 = vector.extract_strided_slice %21 {offsets = [176, 0], sizes = [8, 128], strides = [1, 1]} : vector<200x128xbf16> to vector<8x128xbf16>
    %c22 = arith.constant 22 : index
    %c0_76 = arith.constant 0 : index
    %c0_77 = arith.constant 0 : index
    %134 = vector.load %arg4[%c22, %c0_76, %c0_77] : memref<25x128x128xbf16, #tpu.memory_space<vmem>>, vector<1x128x128xbf16>
    %135 = vector.shape_cast %134 : vector<1x128x128xbf16> to vector<128x128xbf16>
    %cst_78 = arith.constant dense<0.000000e+00> : vector<8x128xf32>
    %136 = tpu.matmul %133, %135, %cst_78 {dimension_numbers = #tpu.dot_dimension_numbers<[1], [0], [0], [1], [0, 0, 1, 1], [], []>} : vector<8x128xbf16>, vector<128x128xbf16>, vector<8x128xf32> -> vector<8x128xf32>
    %137 = arith.addf %132, %136 : vector<8x128xf32>
    %138 = vector.extract_strided_slice %21 {offsets = [184, 0], sizes = [8, 128], strides = [1, 1]} : vector<200x128xbf16> to vector<8x128xbf16>
    %c23 = arith.constant 23 : index
    %c0_79 = arith.constant 0 : index
    %c0_80 = arith.constant 0 : index
    %139 = vector.load %arg4[%c23, %c0_79, %c0_80] : memref<25x128x128xbf16, #tpu.memory_space<vmem>>, vector<1x128x128xbf16>
    %140 = vector.shape_cast %139 : vector<1x128x128xbf16> to vector<128x128xbf16>
    %cst_81 = arith.constant dense<0.000000e+00> : vector<8x128xf32>
    %141 = tpu.matmul %138, %140, %cst_81 {dimension_numbers = #tpu.dot_dimension_numbers<[1], [0], [0], [1], [0, 0, 1, 1], [], []>} : vector<8x128xbf16>, vector<128x128xbf16>, vector<8x128xf32> -> vector<8x128xf32>
    %142 = arith.addf %137, %141 : vector<8x128xf32>
    %143 = vector.extract_strided_slice %21 {offsets = [192, 0], sizes = [8, 128], strides = [1, 1]} : vector<200x128xbf16> to vector<8x128xbf16>
    %c24 = arith.constant 24 : index
    %c0_82 = arith.constant 0 : index
    %c0_83 = arith.constant 0 : index
    %144 = vector.load %arg4[%c24, %c0_82, %c0_83] : memref<25x128x128xbf16, #tpu.memory_space<vmem>>, vector<1x128x128xbf16>
    %145 = vector.shape_cast %144 : vector<1x128x128xbf16> to vector<128x128xbf16>
    %cst_84 = arith.constant dense<0.000000e+00> : vector<8x128xf32>
    %146 = tpu.matmul %143, %145, %cst_84 {dimension_numbers = #tpu.dot_dimension_numbers<[1], [0], [0], [1], [0, 0, 1, 1], [], []>} : vector<8x128xbf16>, vector<128x128xbf16>, vector<8x128xf32> -> vector<8x128xf32>
    %147 = arith.addf %142, %146 : vector<8x128xf32>
    %c0_85 = arith.constant 0 : index
    %c0_86 = arith.constant 0 : index
    %148 = vector.load %arg5[%c0_85, %c0_86] : memref<1x128xf32, #tpu.memory_space<vmem>>, vector<1x128xf32>
    %149 = vector.broadcast %148 : vector<1x128xf32> to vector<8x128xf32>
    %150 = arith.addf %147, %149 : vector<8x128xf32>
    %cst_87 = arith.constant 0.000000e+00 : f32
    %151 = vector.broadcast %cst_87 : f32 to vector<8x128xf32>
    %152 = arith.subf %151, %150 : vector<8x128xf32>
    %153 = math.exp %152 : vector<8x128xf32>
    %cst_88 = arith.constant 1.000000e+00 : f32
    %154 = vector.broadcast %cst_88 : f32 to vector<8x128xf32>
    %155 = arith.addf %154, %153 : vector<8x128xf32>
    %156 = tpu.reciprocal %155 {approx = true} : vector<8x128xf32> -> vector<8x128xf32>
    %157 = arith.truncf %156 : vector<8x128xf32> to vector<8x128xbf16>
    %c0_89 = arith.constant 0 : index
    %c0_90 = arith.constant 0 : index
    %158 = vector.load %arg6[%c0_89, %c0_90] : memref<128x128xbf16, #tpu.memory_space<vmem>>, vector<128x128xbf16>
    %cst_91 = arith.constant dense<0.000000e+00> : vector<8x128xf32>
    %159 = tpu.matmul %157, %158, %cst_91 {dimension_numbers = #tpu.dot_dimension_numbers<[1], [0], [0], [1], [0, 0, 1, 1], [], []>} : vector<8x128xbf16>, vector<128x128xbf16>, vector<8x128xf32> -> vector<8x128xf32>
    %c0_92 = arith.constant 0 : index
    %c0_93 = arith.constant 0 : index
    %160 = vector.load %arg7[%c0_92, %c0_93] : memref<1x128xf32, #tpu.memory_space<vmem>>, vector<1x128xf32>
    %161 = vector.broadcast %160 : vector<1x128xf32> to vector<8x128xf32>
    %162 = arith.addf %159, %161 : vector<8x128xf32>
    %cst_94 = arith.constant 0.000000e+00 : f32
    %163 = vector.broadcast %cst_94 : f32 to vector<8x128xf32>
    %164 = arith.subf %163, %162 : vector<8x128xf32>
    %165 = math.exp %164 : vector<8x128xf32>
    %cst_95 = arith.constant 1.000000e+00 : f32
    %166 = vector.broadcast %cst_95 : f32 to vector<8x128xf32>
    %167 = arith.addf %166, %165 : vector<8x128xf32>
    %168 = tpu.reciprocal %167 {approx = true} : vector<8x128xf32> -> vector<8x128xf32>
    %169 = arith.truncf %168 : vector<8x128xf32> to vector<8x128xbf16>
    %c0_96 = arith.constant 0 : index
    %c0_97 = arith.constant 0 : index
    %170 = vector.load %arg8[%c0_96, %c0_97] : memref<128x128xbf16, #tpu.memory_space<vmem>>, vector<128x128xbf16>
    %cst_98 = arith.constant dense<0.000000e+00> : vector<8x128xf32>
    %171 = tpu.matmul %169, %170, %cst_98 {dimension_numbers = #tpu.dot_dimension_numbers<[1], [0], [0], [1], [0, 0, 1, 1], [], []>} : vector<8x128xbf16>, vector<128x128xbf16>, vector<8x128xf32> -> vector<8x128xf32>
    %c0_99 = arith.constant 0 : index
    %c0_100 = arith.constant 0 : index
    %172 = vector.load %arg9[%c0_99, %c0_100] : memref<1x128xf32, #tpu.memory_space<vmem>>, vector<1x128xf32>
    %173 = vector.broadcast %172 : vector<1x128xf32> to vector<8x128xf32>
    %174 = arith.addf %171, %173 : vector<8x128xf32>
    %c0_101 = arith.constant 0 : index
    %c0_102 = arith.constant 0 : index
    %175 = vector.load %arg10[%c0_101, %c0_102] : memref<8x128xf32, #tpu.memory_space<vmem>>, vector<8x128xf32>
    tpu.vector_store %arg10[%c0_101, %c0_102], %174 {strides = array<i32>} : memref<8x128xf32, #tpu.memory_space<vmem>>, vector<8x128xf32>,
    return
  }
  func.func @transform_0(%arg0: i32) -> (i32, i32) {
    %c0_i32 = arith.constant 0 : i32
    %c0_i32_0 = arith.constant 0 : i32
    %c0_i32_1 = arith.constant 0 : i32
    return %c0_i32, %c0_i32_0 : i32, i32
  }
  func.func @transform_1(%arg0: i32) -> (i32, i32) {
    %c0_i32 = arith.constant 0 : i32
    %c0_i32_0 = arith.constant 0 : i32
    %c0_i32_1 = arith.constant 0 : i32
    return %c0_i32, %c0_i32_0 : i32, i32
  }
  func.func @transform_2(%arg0: i32) -> (i32, i32) {
    %c0_i32 = arith.constant 0 : i32
    %c0_i32_0 = arith.constant 0 : i32
    %c0_i32_1 = arith.constant 0 : i32
    return %c0_i32, %c0_i32_0 : i32, i32
  }
  func.func @transform_3(%arg0: i32) -> (i32, i32, i32) {
    %c0_i32 = arith.constant 0 : i32
    %c0_i32_0 = arith.constant 0 : i32
    %c0_i32_1 = arith.constant 0 : i32
    %c0_i32_2 = arith.constant 0 : i32
    return %c0_i32, %c0_i32_0, %c0_i32_1 : i32, i32, i32
  }
  func.func @transform_4(%arg0: i32) -> (i32, i32) {
    %c0_i32 = arith.constant 0 : i32
    %c0_i32_0 = arith.constant 0 : i32
    %c0_i32_1 = arith.constant 0 : i32
    return %c0_i32, %c0_i32_0 : i32, i32
  }
  func.func @transform_5(%arg0: i32) -> (i32, i32) {
    %c0_i32 = arith.constant 0 : i32
    %c0_i32_0 = arith.constant 0 : i32
    %c0_i32_1 = arith.constant 0 : i32
    return %c0_i32, %c0_i32_0 : i32, i32
  }
  func.func @transform_6(%arg0: i32) -> (i32, i32) {
    %c0_i32 = arith.constant 0 : i32
    %c0_i32_0 = arith.constant 0 : i32
    %c0_i32_1 = arith.constant 0 : i32
    return %c0_i32, %c0_i32_0 : i32, i32
  }
  func.func @transform_7(%arg0: i32) -> (i32, i32) {
    %c0_i32 = arith.constant 0 : i32
    %c0_i32_0 = arith.constant 0 : i32
    %c0_i32_1 = arith.constant 0 : i32
    return %c0_i32, %c0_i32_0 : i32, i32
  }
  func.func @transform_8(%arg0: i32) -> (i32, i32) {
    %c0_i32 = arith.constant 0 : i32
    %c0_i32_0 = arith.constant 0 : i32
    %c0_i32_1 = arith.constant 0 : i32
    return %c0_i32, %c0_i32_0 : i32, i32
  }
  func.func @transform_9(%arg0: i32) -> (i32, i32) {
    %c0_i32 = arith.constant 0 : i32
    %c0_i32_0 = arith.constant 0 : i32
    %c0_i32_1 = arith.constant 0 : i32
    return %c0_i32, %c0_i32_0 : i32, i32
  }
}

</mosaic_0001>

<llo_original>
// kernel: lenet5_forward.2
$region0: #{lenet5_forward.2}
  #allocation0 [shape = 'u32[]', space=smem, size = 0x4, offset = 0x4, fixed_abs, tag = 'smem constant byte address 0x4 - core index']
  #allocation1 [shape = 'u32[144,128]{1,0:T(1,128)}', space=vmem, size = 0x12000, scoped, tag = 'internal scratch']
  %s0 = inlined_call_operand.vmem [shape: bf16[1568,32], index: 0, kind: input, shape index: {}]
  %s1 = inlined_call_operand.vmem [shape: bf16[32,128], index: 1, kind: input, shape index: {}]
  %s2 = inlined_call_operand.vmem [shape: f32[1,128], index: 2, kind: input, shape index: {}]
  %s3 = inlined_call_operand.vmem [shape: bf16[392,128], index: 3, kind: output, shape index: {}]
  %s4 = sld [smem:[#allocation0]]
  $region22: #{lenet5_forward.2} parent=0
    _
  %s6 = ssub.s32 1, %s4
  %s7 = scalar_select 0, %s6, %s4
  // Predicated region
  $region2: #{lenet5_forward.2} parent=0 // pred_check
    _
  $region3: #{lenet5_forward.2} parent=0 // pred_check_branch
    %9 = sbr.rel (0) target = $region5
  $region4: #{lenet5_forward.2} parent=0 // pred_region
    _
  $region5: #{lenet5_forward.2} parent=0 // pred_fallthru
    _
  // Predicated region
  $region6: #{lenet5_forward.2} parent=0 // pred_check
    _
  $region7: #{lenet5_forward.2} parent=0 // pred_check_branch
    %11 = sbr.rel (0) target = $region9
  $region8: #{lenet5_forward.2} parent=0 // pred_region
    _
  $region9: #{lenet5_forward.2} parent=0 // pred_fallthru
    _
  // Predicated region
  $region10: #{lenet5_forward.2} parent=0 // pred_check
    _
  $region11: #{lenet5_forward.2} parent=0 // pred_check_branch
    %13 = sbr.rel (0) target = $region13
  $region12: #{lenet5_forward.2} parent=0 // pred_region
    _
  $region13: #{lenet5_forward.2} parent=0 // pred_fallthru
    _
  %v15 = vld [vmem:[%s0] sm:$0xf]
  %v16 = vld [vmem:[%s0 + $0x4] sm:$0xf]
  %v17 = vld [vmem:[%s0 + $0x8] sm:$0xf]
  %v18 = vld [vmem:[%s0 + $0xc] sm:$0xf]
  %v19 = vld [vmem:[%s0 + $0x10] sm:$0xf]
  %v20 = vld [vmem:[%s0 + $0x14] sm:$0xf]
  %v21 = vld [vmem:[%s0 + $0x18] sm:$0xf]
  %v22 = vld [vmem:[%s0 + $0x1c] sm:$0xf]
  %v23 = vld [vmem:[%s0 + $0x20] sm:$0xf]
  %v24 = vld [vmem:[%s0 + $0x24] sm:$0xf]
  %v25 = vld [vmem:[%s0 + $0x28] sm:$0xf]
  %v26 = vld [vmem:[%s0 + $0x2c] sm:$0xf]
  %v27 = vld [vmem:[%s0 + $0x30] sm:$0xf]
  %v28 = vld [vmem:[%s0 + $0x34] sm:$0xf]
  %v29 = vld [vmem:[%s0 + $0x38] sm:$0xf]
  %v30 = vld [vmem:[%s0 + $0x3c] sm:$0xf]
  %v31 = vld [vmem:[%s0 + $0x40] sm:$0xf]
  %v32 = vld [vmem:[%s0 + $0x44] sm:$0xf]
  %v33 = vld [vmem:[%s0 + $0x48] sm:$0xf]
  %v34 = vld [vmem:[%s0 + $0x4c] sm:$0xf]
  %v35 = vld [vmem:[%s0 + $0x50] sm:$0xf]
  %v36 = vld [vmem:[%s0 + $0x54] sm:$0xf]
  %v37 = vld [vmem:[%s0 + $0x58] sm:$0xf]
  %v38 = vld [vmem:[%s0 + $0x5c] sm:$0xf]
  %v39 = vld [vmem:[%s0 + $0x60] sm:$0xf]
  %v40 = vld [vmem:[%s0 + $0x64] sm:$0xf]
  %v41 = vld [vmem:[%s0 + $0x68] sm:$0xf]
  %v42 = vld [vmem:[%s0 + $0x6c] sm:$0xf]
  %v43 = vld [vmem:[%s0 + $0x70] sm:$0xf]
  %v44 = vld [vmem:[%s0 + $0x74] sm:$0xf]
  %v45 = vld [vmem:[%s0 + $0x78] sm:$0xf]
  %v46 = vld [vmem:[%s0 + $0x7c] sm:$0xf]
  %v47 = vld [vmem:[%s0 + $0x80] sm:$0xf]
  %v48 = vld [vmem:[%s0 + $0x84] sm:$0xf]
  %v49 = vld [vmem:[%s0 + $0x88] sm:$0xf]
  %v50 = vld [vmem:[%s0 + $0x8c] sm:$0xf]
  %v51 = vld [vmem:[%s0 + $0x90] sm:$0xf]
  %v52 = vld [vmem:[%s0 + $0x94] sm:$0xf]
  %v53 = vld [vmem:[%s0 + $0x98] sm:$0xf]
  %v54 = vld [vmem:[%s0 + $0x9c] sm:$0xf]
  %v55 = vld [vmem:[%s0 + $0xa0] sm:$0xf]
  %v56 = vld [vmem:[%s0 + $0xa4] sm:$0xf]
  %v57 = vld [vmem:[%s0 + $0xa8] sm:$0xf]
  %v58 = vld [vmem:[%s0 + $0xac] sm:$0xf]
  %v59 = vld [vmem:[%s0 + $0xb0] sm:$0xf]
  %v60 = vld [vmem:[%s0 + $0xb4] sm:$0xf]
  %v61 = vld [vmem:[%s0 + $0xb8] sm:$0xf]
  %v62 = vld [vmem:[%s0 + $0xbc] sm:$0xf]
  %v63 = vld [vmem:[%s0 + $0xc0] sm:$0xf]
  %v64 = vld [vmem:[%s0 + $0xc4] sm:$0xf]
  %v65 = vld [vmem:[%s0 + $0xc8] sm:$0xf]
  %v66 = vld [vmem:[%s0 + $0xcc] sm:$0xf]
  %v67 = vld [vmem:[%s0 + $0xd0] sm:$0xf]
  %v68 = vld [vmem:[%s0 + $0xd4] sm:$0xf]
  %v69 = vld [vmem:[%s0 + $0xd8] sm:$0xf]
  %v70 = vld [vmem:[%s0 + $0xdc] sm:$0xf]
  %v71 = vld [vmem:[%s0 + $0xe0] sm:$0xf]
  %v72 = vld [vmem:[%s0 + $0xe4] sm:$0xf]
  %v73 = vld [vmem:[%s0 + $0xe8] sm:$0xf]
  %v74 = vld [vmem:[%s0 + $0xec] sm:$0xf]
  %v75 = vld [vmem:[%s0 + $0xf0] sm:$0xf]
  %v76 = vld [vmem:[%s0 + $0xf4] sm:$0xf]
  %v77 = vld [vmem:[%s0 + $0xf8] sm:$0xf]
  %v78 = vld [vmem:[%s0 + $0xfc] sm:$0xf]
  %v79 = vld [vmem:[%s0 + $0x100] sm:$0xf]
  %v80 = vld [vmem:[%s0 + $0x104] sm:$0xf]
  %v81 = vld [vmem:[%s0 + $0x108] sm:$0xf]
  %v82 = vld [vmem:[%s0 + $0x10c] sm:$0xf]
  %v83 = vld [vmem:[%s0 + $0x110] sm:$0xf]
  %v84 = vld [vmem:[%s0 + $0x114] sm:$0xf]
  %v85 = vld [vmem:[%s0 + $0x118] sm:$0xf]
  %v86 = vld [vmem:[%s0 + $0x11c] sm:$0xf]
  %v87 = vld [vmem:[%s0 + $0x120] sm:$0xf]
  %v88 = vld [vmem:[%s0 + $0x124] sm:$0xf]
  %v89 = vld [vmem:[%s0 + $0x128] sm:$0xf]
  %v90 = vld [vmem:[%s0 + $0x12c] sm:$0xf]
  %v91 = vld [vmem:[%s0 + $0x130] sm:$0xf]
  %v92 = vld [vmem:[%s0 + $0x134] sm:$0xf]
  %v93 = vld [vmem:[%s0 + $0x138] sm:$0xf]
  %v94 = vld [vmem:[%s0 + $0x13c] sm:$0xf]
  %v95 = vld [vmem:[%s0 + $0x140] sm:$0xf]
  %v96 = vld [vmem:[%s0 + $0x144] sm:$0xf]
  %v97 = vld [vmem:[%s0 + $0x148] sm:$0xf]
  %v98 = vld [vmem:[%s0 + $0x14c] sm:$0xf]
  %v99 = vld [vmem:[%s0 + $0x150] sm:$0xf]
  %v100 = vld [vmem:[%s0 + $0x154] sm:$0xf]
  %v101 = vld [vmem:[%s0 + $0x158] sm:$0xf]
  %v102 = vld [vmem:[%s0 + $0x15c] sm:$0xf]
  %v103 = vld [vmem:[%s0 + $0x160] sm:$0xf]
  %v104 = vld [vmem:[%s0 + $0x164] sm:$0xf]
  %v105 = vld [vmem:[%s0 + $0x168] sm:$0xf]
  %v106 = vld [vmem:[%s0 + $0x16c] sm:$0xf]
  %v107 = vld [vmem:[%s0 + $0x170] sm:$0xf]
  %v108 = vld [vmem:[%s0 + $0x174] sm:$0xf]
  %v109 = vld [vmem:[%s0 + $0x178] sm:$0xf]
  %v110 = vld [vmem:[%s0 + $0x17c] sm:$0xf]
  %v111 = vld [vmem:[%s0 + $0x180] sm:$0xf]
  %v112 = vld [vmem:[%s0 + $0x184] sm:$0xf]
  %v113 = vld [vmem:[%s0 + $0x188] sm:$0xf]
  %v114 = vld [vmem:[%s0 + $0x18c] sm:$0xf]
  %v115 = vld [vmem:[%s0 + $0x190] sm:$0xf]
  %v116 = vld [vmem:[%s0 + $0x194] sm:$0xf]
  %v117 = vld [vmem:[%s0 + $0x198] sm:$0xf]
  %v118 = vld [vmem:[%s0 + $0x19c] sm:$0xf]
  %v119 = vld [vmem:[%s0 + $0x1a0] sm:$0xf]
  %v120 = vld [vmem:[%s0 + $0x1a4] sm:$0xf]
  %v121 = vld [vmem:[%s0 + $0x1a8] sm:$0xf]
  %v122 = vld [vmem:[%s0 + $0x1ac] sm:$0xf]
  %v123 = vld [vmem:[%s0 + $0x1b0] sm:$0xf]
  %v124 = vld [vmem:[%s0 + $0x1b4] sm:$0xf]
  %v125 = vld [vmem:[%s0 + $0x1b8] sm:$0xf]
  %v126 = vld [vmem:[%s0 + $0x1bc] sm:$0xf]
  %v127 = vld [vmem:[%s0 + $0x1c0] sm:$0xf]
  %v128 = vld [vmem:[%s0 + $0x1c4] sm:$0xf]
  %v129 = vld [vmem:[%s0 + $0x1c8] sm:$0xf]
  %v130 = vld [vmem:[%s0 + $0x1cc] sm:$0xf]
  %v131 = vld [vmem:[%s0 + $0x1d0] sm:$0xf]
  %v132 = vld [vmem:[%s0 + $0x1d4] sm:$0xf]
  %v133 = vld [vmem:[%s0 + $0x1d8] sm:$0xf]
  %v134 = vld [vmem:[%s0 + $0x1dc] sm:$0xf]
  %v135 = vld [vmem:[%s0 + $0x1e0] sm:$0xf]
  %v136 = vld [vmem:[%s0 + $0x1e4] sm:$0xf]
  %v137 = vld [vmem:[%s0 + $0x1e8] sm:$0xf]
  %v138 = vld [vmem:[%s0 + $0x1ec] sm:$0xf]
  %v139 = vld [vmem:[%s0 + $0x1f0] sm:$0xf]
  %v140 = vld [vmem:[%s0 + $0x1f4] sm:$0xf]
  %v141 = vld [vmem:[%s0 + $0x1f8] sm:$0xf]
  %v142 = vld [vmem:[%s0 + $0x1fc] sm:$0xf]
  %v143 = vld [vmem:[%s0 + $0x200] sm:$0xf]
  %v144 = vld [vmem:[%s0 + $0x204] sm:$0xf]
  %v145 = vld [vmem:[%s0 + $0x208] sm:$0xf]
  %v146 = vld [vmem:[%s0 + $0x20c] sm:$0xf]
  %v147 = vld [vmem:[%s0 + $0x210] sm:$0xf]
  %v148 = vld [vmem:[%s0 + $0x214] sm:$0xf]
  %v149 = vld [vmem:[%s0 + $0x218] sm:$0xf]
  %v150 = vld [vmem:[%s0 + $0x21c] sm:$0xf]
  %v151 = vld [vmem:[%s0 + $0x220] sm:$0xf]
  %v152 = vld [vmem:[%s0 + $0x224] sm:$0xf]
  %v153 = vld [vmem:[%s0 + $0x228] sm:$0xf]
  %v154 = vld [vmem:[%s0 + $0x22c] sm:$0xf]
  %v155 = vld [vmem:[%s0 + $0x230] sm:$0xf]
  %v156 = vld [vmem:[%s0 + $0x234] sm:$0xf]
  %v157 = vld [vmem:[%s0 + $0x238] sm:$0xf]
  %v158 = vld [vmem:[%s0 + $0x23c] sm:$0xf]
  %v159 = vld [vmem:[%s0 + $0x240] sm:$0xf]
  %v160 = vld [vmem:[%s0 + $0x244] sm:$0xf]
  %v161 = vld [vmem:[%s0 + $0x248] sm:$0xf]
  %v162 = vld [vmem:[%s0 + $0x24c] sm:$0xf]
  %v163 = vld [vmem:[%s0 + $0x250] sm:$0xf]
  %v164 = vld [vmem:[%s0 + $0x254] sm:$0xf]
  %v165 = vld [vmem:[%s0 + $0x258] sm:$0xf]
  %v166 = vld [vmem:[%s0 + $0x25c] sm:$0xf]
  %v167 = vld [vmem:[%s0 + $0x260] sm:$0xf]
  %v168 = vld [vmem:[%s0 + $0x264] sm:$0xf]
  %v169 = vld [vmem:[%s0 + $0x268] sm:$0xf]
  %v170 = vld [vmem:[%s0 + $0x26c] sm:$0xf]
  %v171 = vld [vmem:[%s0 + $0x270] sm:$0xf]
  %v172 = vld [vmem:[%s0 + $0x274] sm:$0xf]
  %v173 = vld [vmem:[%s0 + $0x278] sm:$0xf]
  %v174 = vld [vmem:[%s0 + $0x27c] sm:$0xf]
  %v175 = vld [vmem:[%s0 + $0x280] sm:$0xf]
  %v176 = vld [vmem:[%s0 + $0x284] sm:$0xf]
  %v177 = vld [vmem:[%s0 + $0x288] sm:$0xf]
  %v178 = vld [vmem:[%s0 + $0x28c] sm:$0xf]
  %v179 = vld [vmem:[%s0 + $0x290] sm:$0xf]
  %v180 = vld [vmem:[%s0 + $0x294] sm:$0xf]
  %v181 = vld [vmem:[%s0 + $0x298] sm:$0xf]
  %v182 = vld [vmem:[%s0 + $0x29c] sm:$0xf]
  %v183 = vld [vmem:[%s0 + $0x2a0] sm:$0xf]
  %v184 = vld [vmem:[%s0 + $0x2a4] sm:$0xf]
  %v185 = vld [vmem:[%s0 + $0x2a8] sm:$0xf]
  %v186 = vld [vmem:[%s0 + $0x2ac] sm:$0xf]
  %v187 = vld [vmem:[%s0 + $0x2b0] sm:$0xf]
  %v188 = vld [vmem:[%s0 + $0x2b4] sm:$0xf]
  %v189 = vld [vmem:[%s0 + $0x2b8] sm:$0xf]
  %v190 = vld [vmem:[%s0 + $0x2bc] sm:$0xf]
  %v191 = vld [vmem:[%s0 + $0x2c0] sm:$0xf]
  %v192 = vld [vmem:[%s0 + $0x2c4] sm:$0xf]
  %v193 = vld [vmem:[%s0 + $0x2c8] sm:$0xf]
  %v194 = vld [vmem:[%s0 + $0x2cc] sm:$0xf]
  %v195 = vld [vmem:[%s0 + $0x2d0] sm:$0xf]
  %v196 = vld [vmem:[%s0 + $0x2d4] sm:$0xf]
  %v197 = vld [vmem:[%s0 + $0x2d8] sm:$0xf]
  %v198 = vld [vmem:[%s0 + $0x2dc] sm:$0xf]
  %v199 = vld [vmem:[%s0 + $0x2e0] sm:$0xf]
  %v200 = vld [vmem:[%s0 + $0x2e4] sm:$0xf]
  %v201 = vld [vmem:[%s0 + $0x2e8] sm:$0xf]
  %v202 = vld [vmem:[%s0 + $0x2ec] sm:$0xf]
  %v203 = vld [vmem:[%s0 + $0x2f0] sm:$0xf]
  %v204 = vld [vmem:[%s0 + $0x2f4] sm:$0xf]
  %v205 = vld [vmem:[%s0 + $0x2f8] sm:$0xf]
  %v206 = vld [vmem:[%s0 + $0x2fc] sm:$0xf]
  %v207 = vld [vmem:[%s0 + $0x300] sm:$0xf]
  %v208 = vld [vmem:[%s0 + $0x304] sm:$0xf]
  %v209 = vld [vmem:[%s0 + $0x308] sm:$0xf]
  %v210 = vld [vmem:[%s0 + $0x30c] sm:$0xf]
  %v211 = vld [vmem:[%s1] sm:$0xf]
  %v212 = vld [vmem:[%s1 + $0x4] sm:$0xf]
  %v213 = vld [vmem:[%s1 + $0x8] sm:$0xf]
  %v214 = vld [vmem:[%s1 + $0xc] sm:$0xf]
  %v215 = vld [vmem:[%s2] sm:$0x1]
  %v217 = vlaneseq
  %v218 = vshrl.u32 %v217, 7
  %v219 = vsub.s32 0, %v218
  %v220 = vrot.slane %v215, %v219
  %v418 = vunpack.c.l.b16 %v15
  %v419 = vunpack.c.l.b16 %v16
  %v420 = vunpack.c.l.b16 %v17
  %v421 = vunpack.c.l.b16 %v18
  %v422 = vunpack.c.l.b16 %v19
  %v423 = vunpack.c.l.b16 %v20
  %v424 = vunpack.c.l.b16 %v21
  %v425 = vunpack.c.l.b16 %v22
  %v426 = vunpack.c.l.b16 %v23
  %v427 = vunpack.c.l.b16 %v24
  %v428 = vunpack.c.l.b16 %v25
  %v429 = vunpack.c.l.b16 %v26
  %v430 = vunpack.c.l.b16 %v27
  %v431 = vunpack.c.l.b16 %v28
  %v432 = vunpack.c.l.b16 %v29
  %v433 = vunpack.c.l.b16 %v30
  %v434 = vunpack.c.l.b16 %v31
  %v435 = vunpack.c.l.b16 %v32
  %v436 = vunpack.c.l.b16 %v33
  %v437 = vunpack.c.l.b16 %v34
  %v438 = vunpack.c.l.b16 %v35
  %v439 = vunpack.c.l.b16 %v36
  %v440 = vunpack.c.l.b16 %v37
  %v441 = vunpack.c.l.b16 %v38
  %v442 = vunpack.c.l.b16 %v39
  %v443 = vunpack.c.l.b16 %v40
  %v444 = vunpack.c.l.b16 %v41
  %v445 = vunpack.c.l.b16 %v42
  %v446 = vunpack.c.l.b16 %v43
  %v447 = vunpack.c.l.b16 %v44
  %v448 = vunpack.c.l.b16 %v45
  %v449 = vunpack.c.l.b16 %v46
  %v450 = vunpack.c.l.b16 %v47
  %v451 = vunpack.c.l.b16 %v48
  %v452 = vunpack.c.l.b16 %v49
  %v453 = vunpack.c.l.b16 %v50
  %v454 = vunpack.c.l.b16 %v51
  %v455 = vunpack.c.l.b16 %v52
  %v456 = vunpack.c.l.b16 %v53
  %v457 = vunpack.c.l.b16 %v54
  %v458 = vunpack.c.l.b16 %v55
  %v459 = vunpack.c.l.b16 %v56
  %v460 = vunpack.c.l.b16 %v57
  %v461 = vunpack.c.l.b16 %v58
  %v462 = vunpack.c.l.b16 %v59
  %v463 = vunpack.c.l.b16 %v60
  %v464 = vunpack.c.l.b16 %v61
  %v465 = vunpack.c.l.b16 %v62
  %v466 = vunpack.c.l.b16 %v63
  %v467 = vunpack.c.l.b16 %v64
  %v468 = vunpack.c.l.b16 %v65
  %v469 = vunpack.c.l.b16 %v66
  %v470 = vunpack.c.l.b16 %v67
  %v471 = vunpack.c.l.b16 %v68
  %v472 = vunpack.c.l.b16 %v69
  %v473 = vunpack.c.l.b16 %v70
  %v474 = vunpack.c.l.b16 %v71
  %v475 = vunpack.c.l.b16 %v72
  %v476 = vunpack.c.l.b16 %v73
  %v477 = vunpack.c.l.b16 %v74
  %v478 = vunpack.c.l.b16 %v75
  %v479 = vunpack.c.l.b16 %v76
  %v480 = vunpack.c.l.b16 %v77
  %v481 = vunpack.c.l.b16 %v78
  %v482 = vunpack.c.l.b16 %v79
  %v483 = vunpack.c.l.b16 %v80
  %v484 = vunpack.c.l.b16 %v81
  %v485 = vunpack.c.l.b16 %v82
  %v486 = vunpack.c.l.b16 %v83
  %v487 = vunpack.c.l.b16 %v84
  %v488 = vunpack.c.l.b16 %v85
  %v489 = vunpack.c.l.b16 %v86
  %v490 = vunpack.c.l.b16 %v87
  %v491 = vunpack.c.l.b16 %v88
  %v492 = vunpack.c.l.b16 %v89
  %v493 = vunpack.c.l.b16 %v90
  %v494 = vunpack.c.l.b16 %v91
  %v495 = vunpack.c.l.b16 %v92
  %v496 = vunpack.c.l.b16 %v93
  %v497 = vunpack.c.l.b16 %v94
  %v498 = vunpack.c.l.b16 %v95
  %v499 = vunpack.c.l.b16 %v96
  %v500 = vunpack.c.l.b16 %v97
  %v501 = vunpack.c.l.b16 %v98
  %v502 = vunpack.c.l.b16 %v99
  %v503 = vunpack.c.l.b16 %v100
  %v504 = vunpack.c.l.b16 %v101
  %v505 = vunpack.c.l.b16 %v102
  %v506 = vunpack.c.l.b16 %v103
  %v507 = vunpack.c.l.b16 %v104
  %v508 = vunpack.c.l.b16 %v105
  %v509 = vunpack.c.l.b16 %v106
  %v510 = vunpack.c.l.b16 %v107
  %v511 = vunpack.c.l.b16 %v108
  %v512 = vunpack.c.l.b16 %v109
  %v513 = vunpack.c.l.b16 %v110
  %v514 = vunpack.c.l.b16 %v111
  %v515 = vunpack.c.l.b16 %v112
  %v516 = vunpack.c.l.b16 %v113
  %v517 = vunpack.c.l.b16 %v114
  %v518 = vunpack.c.l.b16 %v115
  %v519 = vunpack.c.l.b16 %v116
  %v520 = vunpack.c.l.b16 %v117
  %v521 = vunpack.c.l.b16 %v118
  %v522 = vunpack.c.l.b16 %v119
  %v523 = vunpack.c.l.b16 %v120
  %v524 = vunpack.c.l.b16 %v121
  %v525 = vunpack.c.l.b16 %v122
  %v526 = vunpack.c.l.b16 %v123
  %v527 = vunpack.c.l.b16 %v124
  %v528 = vunpack.c.l.b16 %v125
  %v529 = vunpack.c.l.b16 %v126
  %v530 = vunpack.c.l.b16 %v127
  %v531 = vunpack.c.l.b16 %v128
  %v532 = vunpack.c.l.b16 %v129
  %v533 = vunpack.c.l.b16 %v130
  %v534 = vunpack.c.l.b16 %v131
  %v535 = vunpack.c.l.b16 %v132
  %v536 = vunpack.c.l.b16 %v133
  %v537 = vunpack.c.l.b16 %v134
  %v538 = vunpack.c.l.b16 %v135
  %v539 = vunpack.c.l.b16 %v136
  %v540 = vunpack.c.l.b16 %v137
  %v541 = vunpack.c.l.b16 %v138
  %v542 = vunpack.c.l.b16 %v139
  %v543 = vunpack.c.l.b16 %v140
  %v544 = vunpack.c.l.b16 %v141
  %v545 = vunpack.c.l.b16 %v142
  %v546 = vunpack.c.l.b16 %v143
  %v547 = vunpack.c.l.b16 %v144
  %v548 = vunpack.c.l.b16 %v145
  %v549 = vunpack.c.l.b16 %v146
  %v550 = vunpack.c.l.b16 %v147
  %v551 = vunpack.c.l.b16 %v148
  %v552 = vunpack.c.l.b16 %v149
  %v553 = vunpack.c.l.b16 %v150
  %v554 = vunpack.c.l.b16 %v151
  %v555 = vunpack.c.l.b16 %v152
  %v556 = vunpack.c.l.b16 %v153
  %v557 = vunpack.c.l.b16 %v154
  %v558 = vunpack.c.l.b16 %v155
  %v559 = vunpack.c.l.b16 %v156
  %v560 = vunpack.c.l.b16 %v157
  %v561 = vunpack.c.l.b16 %v158
  %v562 = vunpack.c.l.b16 %v159
  %v563 = vunpack.c.l.b16 %v160
  %v564 = vunpack.c.l.b16 %v161
  %v565 = vunpack.c.l.b16 %v162
  %v566 = vunpack.c.l.b16 %v163
  %v567 = vunpack.c.l.b16 %v164
  %v568 = vunpack.c.l.b16 %v165
  %v569 = vunpack.c.l.b16 %v166
  %v570 = vunpack.c.l.b16 %v167
  %v571 = vunpack.c.l.b16 %v168
  %v572 = vunpack.c.l.b16 %v169
  %v573 = vunpack.c.l.b16 %v170
  %v574 = vunpack.c.l.b16 %v171
  %v575 = vunpack.c.l.b16 %v172
  %v576 = vunpack.c.l.b16 %v173
  %v577 = vunpack.c.l.b16 %v174
  %v578 = vunpack.c.l.b16 %v175
  %v579 = vunpack.c.l.b16 %v176
  %v580 = vunpack.c.l.b16 %v177
  %v581 = vunpack.c.l.b16 %v178
  %v582 = vunpack.c.l.b16 %v179
  %v583 = vunpack.c.l.b16 %v180
  %v584 = vunpack.c.l.b16 %v181
  %v585 = vunpack.c.l.b16 %v182
  %v586 = vunpack.c.l.b16 %v183
  %v587 = vunpack.c.l.b16 %v184
  %v588 = vunpack.c.l.b16 %v185
  %v589 = vunpack.c.l.b16 %v186
  %v590 = vunpack.c.l.b16 %v187
  %v591 = vunpack.c.l.b16 %v188
  %v592 = vunpack.c.l.b16 %v189
  %v593 = vunpack.c.l.b16 %v190
  %v594 = vunpack.c.l.b16 %v191
  %v595 = vunpack.c.l.b16 %v192
  %v596 = vunpack.c.l.b16 %v193
  %v597 = vunpack.c.l.b16 %v194
  %v598 = vunpack.c.l.b16 %v195
  %v599 = vunpack.c.l.b16 %v196
  %v600 = vunpack.c.l.b16 %v197
  %v601 = vunpack.c.l.b16 %v198
  %v602 = vunpack.c.l.b16 %v199
  %v603 = vunpack.c.l.b16 %v200
  %v604 = vunpack.c.l.b16 %v201
  %v605 = vunpack.c.l.b16 %v202
  %v606 = vunpack.c.l.b16 %v203
  %v607 = vunpack.c.l.b16 %v204
  %v608 = vunpack.c.l.b16 %v205
  %v609 = vunpack.c.l.b16 %v206
  %v610 = vunpack.c.l.b16 %v207
  %v611 = vunpack.c.l.b16 %v208
  %v612 = vunpack.c.l.b16 %v209
  %v613 = vunpack.c.l.b16 %v210
  %v614 = vpack.c.b16 %v419, %v418
  %v615 = vpack.c.b16 %v421, %v420
  %v616 = vpack.c.b16 %v423, %v422
  %v617 = vpack.c.b16 %v425, %v424
  %v618 = vpack.c.b16 %v427, %v426
  %v619 = vpack.c.b16 %v429, %v428
  %v620 = vpack.c.b16 %v431, %v430
  %v621 = vpack.c.b16 %v433, %v432
  %v622 = vpack.c.b16 %v435, %v434
  %v623 = vpack.c.b16 %v437, %v436
  %v624 = vpack.c.b16 %v439, %v438
  %v625 = vpack.c.b16 %v441, %v440
  %v626 = vpack.c.b16 %v443, %v442
  %v627 = vpack.c.b16 %v445, %v444
  %v628 = vpack.c.b16 %v447, %v446
  %v629 = vpack.c.b16 %v449, %v448
  %v630 = vpack.c.b16 %v451, %v450
  %v631 = vpack.c.b16 %v453, %v452
  %v632 = vpack.c.b16 %v455, %v454
  %v633 = vpack.c.b16 %v457, %v456
  %v634 = vpack.c.b16 %v459, %v458
  %v635 = vpack.c.b16 %v461, %v460
  %v636 = vpack.c.b16 %v463, %v462
  %v637 = vpack.c.b16 %v465, %v464
  %v638 = vpack.c.b16 %v467, %v466
  %v639 = vpack.c.b16 %v469, %v468
  %v640 = vpack.c.b16 %v471, %v470
  %v641 = vpack.c.b16 %v473, %v472
  %v642 = vpack.c.b16 %v475, %v474
  %v643 = vpack.c.b16 %v477, %v476
  %v644 = vpack.c.b16 %v479, %v478
  %v645 = vpack.c.b16 %v481, %v480
  %v646 = vpack.c.b16 %v483, %v482
  %v647 = vpack.c.b16 %v485, %v484
  %v648 = vpack.c.b16 %v487, %v486
  %v649 = vpack.c.b16 %v489, %v488
  %v650 = vpack.c.b16 %v491, %v490
  %v651 = vpack.c.b16 %v493, %v492
  %v652 = vpack.c.b16 %v495, %v494
  %v653 = vpack.c.b16 %v497, %v496
  %v654 = vpack.c.b16 %v499, %v498
  %v655 = vpack.c.b16 %v501, %v500
  %v656 = vpack.c.b16 %v503, %v502
  %v657 = vpack.c.b16 %v505, %v504
  %v658 = vpack.c.b16 %v507, %v506
  %v659 = vpack.c.b16 %v509, %v508
  %v660 = vpack.c.b16 %v511, %v510
  %v661 = vpack.c.b16 %v513, %v512
  %v662 = vpack.c.b16 %v515, %v514
  %v663 = vpack.c.b16 %v517, %v516
  %v664 = vpack.c.b16 %v519, %v518
  %v665 = vpack.c.b16 %v521, %v520
  %v666 = vpack.c.b16 %v523, %v522
  %v667 = vpack.c.b16 %v525, %v524
  %v668 = vpack.c.b16 %v527, %v526
  %v669 = vpack.c.b16 %v529, %v528
  %v670 = vpack.c.b16 %v531, %v530
  %v671 = vpack.c.b16 %v533, %v532
  %v672 = vpack.c.b16 %v535, %v534
  %v673 = vpack.c.b16 %v537, %v536
  %v674 = vpack.c.b16 %v539, %v538
  %v675 = vpack.c.b16 %v541, %v540
  %v676 = vpack.c.b16 %v543, %v542
  %v677 = vpack.c.b16 %v545, %v544
  %v678 = vpack.c.b16 %v547, %v546
  %v679 = vpack.c.b16 %v549, %v548
  %v680 = vpack.c.b16 %v551, %v550
  %v681 = vpack.c.b16 %v553, %v552
  %v682 = vpack.c.b16 %v555, %v554
  %v683 = vpack.c.b16 %v557, %v556
  %v684 = vpack.c.b16 %v559, %v558
  %v685 = vpack.c.b16 %v561, %v560
  %v686 = vpack.c.b16 %v563, %v562
  %v687 = vpack.c.b16 %v565, %v564
  %v688 = vpack.c.b16 %v567, %v566
  %v689 = vpack.c.b16 %v569, %v568
  %v690 = vpack.c.b16 %v571, %v570
  %v691 = vpack.c.b16 %v573, %v572
  %v692 = vpack.c.b16 %v575, %v574
  %v693 = vpack.c.b16 %v577, %v576
  %v694 = vpack.c.b16 %v579, %v578
  %v695 = vpack.c.b16 %v581, %v580
  %v696 = vpack.c.b16 %v583, %v582
  %v697 = vpack.c.b16 %v585, %v584
  %v698 = vpack.c.b16 %v587, %v586
  %v699 = vpack.c.b16 %v589, %v588
  %v700 = vpack.c.b16 %v591, %v590
  %v701 = vpack.c.b16 %v593, %v592
  %v702 = vpack.c.b16 %v595, %v594
  %v703 = vpack.c.b16 %v597, %v596
  %v704 = vpack.c.b16 %v599, %v598
  %v705 = vpack.c.b16 %v601, %v600
  %v706 = vpack.c.b16 %v603, %v602
  %v707 = vpack.c.b16 %v605, %v604
  %v708 = vpack.c.b16 %v607, %v606
  %v709 = vpack.c.b16 %v609, %v608
  %v710 = vpack.c.b16 %v611, %v610
  %v711 = vpack.c.b16 %v613, %v612
  %v716 = vunpack.c.l.b16 %v211
  %v717 = vunpack.c.l.b16 %v212
  %v718 = vunpack.c.l.b16 %v213
  %v719 = vunpack.c.l.b16 %v214
  %v720 = vpack.c.b16 %v717, %v716
  %v721 = vpack.c.b16 %v719, %v718
  %vm724 = vcmask 261120
  %v726 = vsel %vm724, %v614, 0
  %v729 = vsel %vm724, %v615, 0
  %v732 = vsel %vm724, %v616, 0
  %v735 = vsel %vm724, %v617, 0
  %v738 = vsel %vm724, %v618, 0
  %v741 = vsel %vm724, %v619, 0
  %v744 = vsel %vm724, %v620, 0
  %v747 = vsel %vm724, %v621, 0
  %v750 = vsel %vm724, %v622, 0
  %v753 = vsel %vm724, %v623, 0
  %v756 = vsel %vm724, %v624, 0
  %v759 = vsel %vm724, %v625, 0
  %v762 = vsel %vm724, %v626, 0
  %v765 = vsel %vm724, %v627, 0
  %v768 = vsel %vm724, %v628, 0
  %v771 = vsel %vm724, %v629, 0
  %v774 = vsel %vm724, %v630, 0
  %v777 = vsel %vm724, %v631, 0
  %v780 = vsel %vm724, %v632, 0
  %v783 = vsel %vm724, %v633, 0
  %v786 = vsel %vm724, %v634, 0
  %v789 = vsel %vm724, %v635, 0
  %v792 = vsel %vm724, %v636, 0
  %v795 = vsel %vm724, %v637, 0
  %v798 = vsel %vm724, %v638, 0
  %v801 = vsel %vm724, %v639, 0
  %v804 = vsel %vm724, %v640, 0
  %v807 = vsel %vm724, %v641, 0
  %v810 = vsel %vm724, %v642, 0
  %v813 = vsel %vm724, %v643, 0
  %v816 = vsel %vm724, %v644, 0
  %v819 = vsel %vm724, %v645, 0
  %v822 = vsel %vm724, %v646, 0
  %v825 = vsel %vm724, %v647, 0
  %v828 = vsel %vm724, %v648, 0
  %v831 = vsel %vm724, %v649, 0
  %v834 = vsel %vm724, %v650, 0
  %v837 = vsel %vm724, %v651, 0
  %v840 = vsel %vm724, %v652, 0
  %v843 = vsel %vm724, %v653, 0
  %v846 = vsel %vm724, %v654, 0
  %v849 = vsel %vm724, %v655, 0
  %v852 = vsel %vm724, %v656, 0
  %v855 = vsel %vm724, %v657, 0
  %v858 = vsel %vm724, %v658, 0
  %v861 = vsel %vm724, %v659, 0
  %v864 = vsel %vm724, %v660, 0
  %v867 = vsel %vm724, %v661, 0
  %v870 = vsel %vm724, %v662, 0
  %v873 = vsel %vm724, %v663, 0
  %v876 = vsel %vm724, %v664, 0
  %v879 = vsel %vm724, %v665, 0
  %v882 = vsel %vm724, %v666, 0
  %v885 = vsel %vm724, %v667, 0
  %v888 = vsel %vm724, %v668, 0
  %v891 = vsel %vm724, %v669, 0
  %v894 = vsel %vm724, %v670, 0
  %v897 = vsel %vm724, %v671, 0
  %v900 = vsel %vm724, %v672, 0
  %v903 = vsel %vm724, %v673, 0
  %v906 = vsel %vm724, %v674, 0
  %v909 = vsel %vm724, %v675, 0
  %v912 = vsel %vm724, %v676, 0
  %v915 = vsel %vm724, %v677, 0
  %v918 = vsel %vm724, %v678, 0
  %v921 = vsel %vm724, %v679, 0
  %v924 = vsel %vm724, %v680, 0
  %v927 = vsel %vm724, %v681, 0
  %v930 = vsel %vm724, %v682, 0
  %v933 = vsel %vm724, %v683, 0
  %v936 = vsel %vm724, %v684, 0
  %v939 = vsel %vm724, %v685, 0
  %v942 = vsel %vm724, %v686, 0
  %v945 = vsel %vm724, %v687, 0
  %v948 = vsel %vm724, %v688, 0
  %v951 = vsel %vm724, %v689, 0
  %v954 = vsel %vm724, %v690, 0
  %v957 = vsel %vm724, %v691, 0
  %v960 = vsel %vm724, %v692, 0
  %v963 = vsel %vm724, %v693, 0
  %v966 = vsel %vm724, %v694, 0
  %v969 = vsel %vm724, %v695, 0
  %v972 = vsel %vm724, %v696, 0
  %v975 = vsel %vm724, %v697, 0
  %v978 = vsel %vm724, %v698, 0
  %v981 = vsel %vm724, %v699, 0
  %v984 = vsel %vm724, %v700, 0
  %v987 = vsel %vm724, %v701, 0
  %v990 = vsel %vm724, %v702, 0
  %v993 = vsel %vm724, %v703, 0
  %v996 = vsel %vm724, %v704, 0
  %v999 = vsel %vm724, %v705, 0
  %v1002 = vsel %vm724, %v706, 0
  %v1005 = vsel %vm724, %v707, 0
  %v1008 = vsel %vm724, %v708, 0
  %v1011 = vsel %vm724, %v709, 0
  %v1014 = vsel %vm724, %v710, 0
  %v1017 = vsel %vm724, %v711, 0
  %1019 = vmatprep.subr.bf16.mxu0 0
  %1020 = vmatpush1.bf16.msra.mxu0 0
  %1021 = vmatprep.subr.bf16.mxu0 0
  %1022 = vmatpush1.bf16.msra.mxu0 0
  %1023 = vmatprep.subr.bf16.mxu0 0
  %1024 = vmatpush1.bf16.msra.mxu0 0
  %1025 = vmatprep.subr.bf16.mxu0 0
  %1026 = vmatpush1.bf16.msra.mxu0 0
  %1027 = vmatprep.subr.bf16.mxu0 0
  %1028 = vmatpush1.bf16.msra.mxu0 0
  %1029 = vmatprep.subr.bf16.mxu0 0
  %1030 = vmatpush1.bf16.msra.mxu0 0
  %1031 = vmatprep.subr.bf16.mxu0 0
  %1032 = vmatpush1.bf16.msra.mxu0 %v721
  %1033 = vmatprep.subr.bf16.mxu0 0
  %1034 = vmatpush1.bf16.msra.mxu0 %v720
  %1035 = vmatprep.subr.bf16.mxu0 0
  %1036 = vmatpush2.bf16.msra.mxu0 0
  %1037 = vmatprep.subr.bf16.mxu0 0
  %1038 = vmatpush2.bf16.msra.mxu0 0
  %1039 = vmatprep.subr.bf16.mxu0 0
  %1040 = vmatpush2.bf16.msra.mxu0 0
  %1041 = vmatprep.subr.bf16.mxu0 0
  %1042 = vmatpush2.bf16.msra.mxu0 0
  %1043 = vmatprep.subr.bf16.mxu0 0
  %1044 = vmatpush2.bf16.msra.mxu0 0
  %1045 = vmatprep.subr.bf16.mxu0 0
  %1046 = vmatpush2.bf16.msra.mxu0 0
  %1047 = vmatprep.subr.bf16.mxu0 0
  %1048 = vmatpush2.bf16.msra.mxu0 0
  %1049 = vmatprep.subr.bf16.mxu0 0
  %1050 = vmatpush2.bf16.msra.mxu0 0
  %1051 = vmatprep.mubr.bf16.mxu0 0
  %1052 = vmatmul.mubr.bf16.gmra.mxu0 %v726
  %v1053 = vpop.f32.mrf.mxu0
  %v1054 = vadd.f32 %v220, %v1053
  %v1055 = vpop.f32.mrf.mxu0
  %v1056 = vpop.f32.mrf.mxu0
  %v1057 = vadd.f32 %v220, %v1056
  %v1058 = vpop.f32.mrf.mxu0
  %1059 = vmatprep.mubr.bf16.mxu0 0
  %1060 = vmatmul.mubr.bf16.gmra.mxu0 %v729
  %v1061 = vpop.f32.mrf.mxu0
  %v1062 = vadd.f32 %v220, %v1061
  %v1063 = vpop.f32.mrf.mxu0
  %v1064 = vpop.f32.mrf.mxu0
  %v1065 = vadd.f32 %v220, %v1064
  %v1066 = vpop.f32.mrf.mxu0
  %1067 = vmatprep.mubr.bf16.mxu0 0
  %1068 = vmatmul.mubr.bf16.gmra.mxu0 %v732
  %v1069 = vpop.f32.mrf.mxu0
  %v1070 = vadd.f32 %v220, %v1069
  %v1071 = vpop.f32.mrf.mxu0
  %v1072 = vpop.f32.mrf.mxu0
  %v1073 = vadd.f32 %v220, %v1072
  %v1074 = vpop.f32.mrf.mxu0
  %1075 = vmatprep.mubr.bf16.mxu0 0
  %1076 = vmatmul.mubr.bf16.gmra.mxu0 %v735
  %v1077 = vpop.f32.mrf.mxu0
  %v1078 = vadd.f32 %v220, %v1077
  %v1079 = vpop.f32.mrf.mxu0
  %v1080 = vpop.f32.mrf.mxu0
  %v1081 = vadd.f32 %v220, %v1080
  %v1082 = vpop.f32.mrf.mxu0
  %1083 = vmatprep.mubr.bf16.mxu0 0
  %1084 = vmatmul.mubr.bf16.gmra.mxu0 %v738
  %v1085 = vpop.f32.mrf.mxu0
  %v1086 = vadd.f32 %v220, %v1085
  %v1087 = vpop.f32.mrf.mxu0
  %v1088 = vpop.f32.mrf.mxu0
  %v1089 = vadd.f32 %v220, %v1088
  %v1090 = vpop.f32.mrf.mxu0
  %1091 = vmatprep.mubr.bf16.mxu0 0
  %1092 = vmatmul.mubr.bf16.gmra.mxu0 %v741
  %v1093 = vpop.f32.mrf.mxu0
  %v1094 = vadd.f32 %v220, %v1093
  %v1095 = vpop.f32.mrf.mxu0
  %v1096 = vpop.f32.mrf.mxu0
  %v1097 = vadd.f32 %v220, %v1096
  %v1098 = vpop.f32.mrf.mxu0
  %1099 = vmatprep.mubr.bf16.mxu0 0
  %1100 = vmatmul.mubr.bf16.gmra.mxu0 %v744
  %v1101 = vpop.f32.mrf.mxu0
  %v1102 = vadd.f32 %v220, %v1101
  %v1103 = vpop.f32.mrf.mxu0
  %v1104 = vpop.f32.mrf.mxu0
  %v1105 = vadd.f32 %v220, %v1104
  %v1106 = vpop.f32.mrf.mxu0
  %1107 = vmatprep.mubr.bf16.mxu0 0
  %1108 = vmatmul.mubr.bf16.gmra.mxu0 %v747
  %v1109 = vpop.f32.mrf.mxu0
  %v1110 = vadd.f32 %v220, %v1109
  %v1111 = vpop.f32.mrf.mxu0
  %v1112 = vpop.f32.mrf.mxu0
  %v1113 = vadd.f32 %v220, %v1112
  %v1114 = vpop.f32.mrf.mxu0
  %1115 = vmatprep.mubr.bf16.mxu0 0
  %1116 = vmatmul.mubr.bf16.gmra.mxu0 %v750
  %v1117 = vpop.f32.mrf.mxu0
  %v1118 = vadd.f32 %v220, %v1117
  %v1119 = vpop.f32.mrf.mxu0
  %v1120 = vpop.f32.mrf.mxu0
  %v1121 = vadd.f32 %v220, %v1120
  %v1122 = vpop.f32.mrf.mxu0
  %1123 = vmatprep.mubr.bf16.mxu0 0
  %1124 = vmatmul.mubr.bf16.gmra.mxu0 %v753
  %v1125 = vpop.f32.mrf.mxu0
  %v1126 = vadd.f32 %v220, %v1125
  %v1127 = vpop.f32.mrf.mxu0
  %v1128 = vpop.f32.mrf.mxu0
  %v1129 = vadd.f32 %v220, %v1128
  %v1130 = vpop.f32.mrf.mxu0
  %1131 = vmatprep.mubr.bf16.mxu0 0
  %1132 = vmatmul.mubr.bf16.gmra.mxu0 %v756
  %v1133 = vpop.f32.mrf.mxu0
  %v1134 = vadd.f32 %v220, %v1133
  %v1135 = vpop.f32.mrf.mxu0
  %v1136 = vpop.f32.mrf.mxu0
  %v1137 = vadd.f32 %v220, %v1136
  %v1138 = vpop.f32.mrf.mxu0
  %1139 = vmatprep.mubr.bf16.mxu0 0
  %1140 = vmatmul.mubr.bf16.gmra.mxu0 %v759
  %v1141 = vpop.f32.mrf.mxu0
  %v1142 = vadd.f32 %v220, %v1141
  %v1143 = vpop.f32.mrf.mxu0
  %v1144 = vpop.f32.mrf.mxu0
  %v1145 = vadd.f32 %v220, %v1144
  %v1146 = vpop.f32.mrf.mxu0
  %1147 = vmatprep.mubr.bf16.mxu0 0
  %1148 = vmatmul.mubr.bf16.gmra.mxu0 %v762
  %v1149 = vpop.f32.mrf.mxu0
  %v1150 = vadd.f32 %v220, %v1149
  %v1151 = vpop.f32.mrf.mxu0
  %v1152 = vpop.f32.mrf.mxu0
  %v1153 = vadd.f32 %v220, %v1152
  %v1154 = vpop.f32.mrf.mxu0
  %1155 = vmatprep.mubr.bf16.mxu0 0
  %1156 = vmatmul.mubr.bf16.gmra.mxu0 %v765
  %v1157 = vpop.f32.mrf.mxu0
  %v1158 = vadd.f32 %v220, %v1157
  %v1159 = vpop.f32.mrf.mxu0
  %v1160 = vpop.f32.mrf.mxu0
  %v1161 = vadd.f32 %v220, %v1160
  %v1162 = vpop.f32.mrf.mxu0
  %1163 = vmatprep.mubr.bf16.mxu0 0
  %1164 = vmatmul.mubr.bf16.gmra.mxu0 %v768
  %v1165 = vpop.f32.mrf.mxu0
  %v1166 = vadd.f32 %v220, %v1165
  %v1167 = vpop.f32.mrf.mxu0
  %v1168 = vpop.f32.mrf.mxu0
  %v1169 = vadd.f32 %v220, %v1168
  %v1170 = vpop.f32.mrf.mxu0
  %1171 = vmatprep.mubr.bf16.mxu0 0
  %1172 = vmatmul.mubr.bf16.gmra.mxu0 %v771
  %v1173 = vpop.f32.mrf.mxu0
  %v1174 = vadd.f32 %v220, %v1173
  %v1175 = vpop.f32.mrf.mxu0
  %v1176 = vpop.f32.mrf.mxu0
  %v1177 = vadd.f32 %v220, %v1176
  %v1178 = vpop.f32.mrf.mxu0
  %1179 = vmatprep.mubr.bf16.mxu0 0
  %1180 = vmatmul.mubr.bf16.gmra.mxu0 %v774
  %v1181 = vpop.f32.mrf.mxu0
  %v1182 = vadd.f32 %v220, %v1181
  %v1183 = vpop.f32.mrf.mxu0
  %v1184 = vpop.f32.mrf.mxu0
  %v1185 = vadd.f32 %v220, %v1184
  %v1186 = vpop.f32.mrf.mxu0
  %1187 = vmatprep.mubr.bf16.mxu0 0
  %1188 = vmatmul.mubr.bf16.gmra.mxu0 %v777
  %v1189 = vpop.f32.mrf.mxu0
  %v1190 = vadd.f32 %v220, %v1189
  %v1191 = vpop.f32.mrf.mxu0
  %v1192 = vpop.f32.mrf.mxu0
  %v1193 = vadd.f32 %v220, %v1192
  %v1194 = vpop.f32.mrf.mxu0
  %1195 = vmatprep.mubr.bf16.mxu0 0
  %1196 = vmatmul.mubr.bf16.gmra.mxu0 %v780
  %v1197 = vpop.f32.mrf.mxu0
  %v1198 = vadd.f32 %v220, %v1197
  %v1199 = vpop.f32.mrf.mxu0
  %v1200 = vpop.f32.mrf.mxu0
  %v1201 = vadd.f32 %v220, %v1200
  %v1202 = vpop.f32.mrf.mxu0
  %1203 = vmatprep.mubr.bf16.mxu0 0
  %1204 = vmatmul.mubr.bf16.gmra.mxu0 %v783
  %v1205 = vpop.f32.mrf.mxu0
  %v1206 = vadd.f32 %v220, %v1205
  %v1207 = vpop.f32.mrf.mxu0
  %v1208 = vpop.f32.mrf.mxu0
  %v1209 = vadd.f32 %v220, %v1208
  %v1210 = vpop.f32.mrf.mxu0
  %1211 = vmatprep.mubr.bf16.mxu0 0
  %1212 = vmatmul.mubr.bf16.gmra.mxu0 %v786
  %v1213 = vpop.f32.mrf.mxu0
  %v1214 = vadd.f32 %v220, %v1213
  %v1215 = vpop.f32.mrf.mxu0
  %v1216 = vpop.f32.mrf.mxu0
  %v1217 = vadd.f32 %v220, %v1216
  %v1218 = vpop.f32.mrf.mxu0
  %1219 = vmatprep.mubr.bf16.mxu0 0
  %1220 = vmatmul.mubr.bf16.gmra.mxu0 %v789
  %v1221 = vpop.f32.mrf.mxu0
  %v1222 = vadd.f32 %v220, %v1221
  %v1223 = vpop.f32.mrf.mxu0
  %v1224 = vpop.f32.mrf.mxu0
  %v1225 = vadd.f32 %v220, %v1224
  %v1226 = vpop.f32.mrf.mxu0
  %1227 = vmatprep.mubr.bf16.mxu0 0
  %1228 = vmatmul.mubr.bf16.gmra.mxu0 %v792
  %v1229 = vpop.f32.mrf.mxu0
  %v1230 = vadd.f32 %v220, %v1229
  %v1231 = vpop.f32.mrf.mxu0
  %v1232 = vpop.f32.mrf.mxu0
  %v1233 = vadd.f32 %v220, %v1232
  %v1234 = vpop.f32.mrf.mxu0
  %1235 = vmatprep.mubr.bf16.mxu0 0
  %1236 = vmatmul.mubr.bf16.gmra.mxu0 %v795
  %v1237 = vpop.f32.mrf.mxu0
  %v1238 = vadd.f32 %v220, %v1237
  %v1239 = vpop.f32.mrf.mxu0
  %v1240 = vpop.f32.mrf.mxu0
  %v1241 = vadd.f32 %v220, %v1240
  %v1242 = vpop.f32.mrf.mxu0
  %1243 = vmatprep.mubr.bf16.mxu0 0
  %1244 = vmatmul.mubr.bf16.gmra.mxu0 %v798
  %v1245 = vpop.f32.mrf.mxu0
  %v1246 = vadd.f32 %v220, %v1245
  %v1247 = vpop.f32.mrf.mxu0
  %v1248 = vpop.f32.mrf.mxu0
  %v1249 = vadd.f32 %v220, %v1248
  %v1250 = vpop.f32.mrf.mxu0
  %1251 = vmatprep.mubr.bf16.mxu0 0
  %1252 = vmatmul.mubr.bf16.gmra.mxu0 %v801
  %v1253 = vpop.f32.mrf.mxu0
  %v1254 = vadd.f32 %v220, %v1253
  %v1255 = vpop.f32.mrf.mxu0
  %v1256 = vpop.f32.mrf.mxu0
  %v1257 = vadd.f32 %v220, %v1256
  %v1258 = vpop.f32.mrf.mxu0
  %1259 = vmatprep.mubr.bf16.mxu0 0
  %1260 = vmatmul.mubr.bf16.gmra.mxu0 %v804
  %v1261 = vpop.f32.mrf.mxu0
  %v1262 = vadd.f32 %v220, %v1261
  %v1263 = vpop.f32.mrf.mxu0
  %v1264 = vpop.f32.mrf.mxu0
  %v1265 = vadd.f32 %v220, %v1264
  %v1266 = vpop.f32.mrf.mxu0
  %1267 = vmatprep.mubr.bf16.mxu0 0
  %1268 = vmatmul.mubr.bf16.gmra.mxu0 %v807
  %v1269 = vpop.f32.mrf.mxu0
  %v1270 = vadd.f32 %v220, %v1269
  %v1271 = vpop.f32.mrf.mxu0
  %v1272 = vpop.f32.mrf.mxu0
  %v1273 = vadd.f32 %v220, %v1272
  %v1274 = vpop.f32.mrf.mxu0
  %1275 = vmatprep.mubr.bf16.mxu0 0
  %1276 = vmatmul.mubr.bf16.gmra.mxu0 %v810
  %v1277 = vpop.f32.mrf.mxu0
  %v1278 = vadd.f32 %v220, %v1277
  %v1279 = vpop.f32.mrf.mxu0
  %v1280 = vpop.f32.mrf.mxu0
  %v1281 = vadd.f32 %v220, %v1280
  %v1282 = vpop.f32.mrf.mxu0
  %1283 = vmatprep.mubr.bf16.mxu0 0
  %1284 = vmatmul.mubr.bf16.gmra.mxu0 %v813
  %v1285 = vpop.f32.mrf.mxu0
  %v1286 = vadd.f32 %v220, %v1285
  %v1287 = vpop.f32.mrf.mxu0
  %v1288 = vpop.f32.mrf.mxu0
  %v1289 = vadd.f32 %v220, %v1288
  %v1290 = vpop.f32.mrf.mxu0
  %1291 = vmatprep.mubr.bf16.mxu0 0
  %1292 = vmatmul.mubr.bf16.gmra.mxu0 %v816
  %v1293 = vpop.f32.mrf.mxu0
  %v1294 = vadd.f32 %v220, %v1293
  %v1295 = vpop.f32.mrf.mxu0
  %v1296 = vpop.f32.mrf.mxu0
  %v1297 = vadd.f32 %v220, %v1296
  %v1298 = vpop.f32.mrf.mxu0
  %1299 = vmatprep.mubr.bf16.mxu0 0
  %1300 = vmatmul.mubr.bf16.gmra.mxu0 %v819
  %v1301 = vpop.f32.mrf.mxu0
  %v1302 = vadd.f32 %v220, %v1301
  %v1303 = vpop.f32.mrf.mxu0
  %v1304 = vpop.f32.mrf.mxu0
  %v1305 = vadd.f32 %v220, %v1304
  %v1306 = vpop.f32.mrf.mxu0
  %1307 = vmatprep.mubr.bf16.mxu0 0
  %1308 = vmatmul.mubr.bf16.gmra.mxu0 %v822
  %v1309 = vpop.f32.mrf.mxu0
  %v1310 = vadd.f32 %v220, %v1309
  %v1311 = vpop.f32.mrf.mxu0
  %v1312 = vpop.f32.mrf.mxu0
  %v1313 = vadd.f32 %v220, %v1312
  %v1314 = vpop.f32.mrf.mxu0
  %1315 = vmatprep.mubr.bf16.mxu0 0
  %1316 = vmatmul.mubr.bf16.gmra.mxu0 %v825
  %v1317 = vpop.f32.mrf.mxu0
  %v1318 = vadd.f32 %v220, %v1317
  %v1319 = vpop.f32.mrf.mxu0
  %v1320 = vpop.f32.mrf.mxu0
  %v1321 = vadd.f32 %v220, %v1320
  %v1322 = vpop.f32.mrf.mxu0
  %1323 = vmatprep.mubr.bf16.mxu0 0
  %1324 = vmatmul.mubr.bf16.gmra.mxu0 %v828
  %v1325 = vpop.f32.mrf.mxu0
  %v1326 = vadd.f32 %v220, %v1325
  %v1327 = vpop.f32.mrf.mxu0
  %v1328 = vpop.f32.mrf.mxu0
  %v1329 = vadd.f32 %v220, %v1328
  %v1330 = vpop.f32.mrf.mxu0
  %1331 = vmatprep.mubr.bf16.mxu0 0
  %1332 = vmatmul.mubr.bf16.gmra.mxu0 %v831
  %v1333 = vpop.f32.mrf.mxu0
  %v1334 = vadd.f32 %v220, %v1333
  %v1335 = vpop.f32.mrf.mxu0
  %v1336 = vpop.f32.mrf.mxu0
  %v1337 = vadd.f32 %v220, %v1336
  %v1338 = vpop.f32.mrf.mxu0
  %1339 = vmatprep.mubr.bf16.mxu0 0
  %1340 = vmatmul.mubr.bf16.gmra.mxu0 %v834
  %v1341 = vpop.f32.mrf.mxu0
  %v1342 = vadd.f32 %v220, %v1341
  %v1343 = vpop.f32.mrf.mxu0
  %v1344 = vpop.f32.mrf.mxu0
  %v1345 = vadd.f32 %v220, %v1344
  %v1346 = vpop.f32.mrf.mxu0
  %1347 = vmatprep.mubr.bf16.mxu0 0
  %1348 = vmatmul.mubr.bf16.gmra.mxu0 %v837
  %v1349 = vpop.f32.mrf.mxu0
  %v1350 = vadd.f32 %v220, %v1349
  %v1351 = vpop.f32.mrf.mxu0
  %v1352 = vpop.f32.mrf.mxu0
  %v1353 = vadd.f32 %v220, %v1352
  %v1354 = vpop.f32.mrf.mxu0
  %1355 = vmatprep.mubr.bf16.mxu0 0
  %1356 = vmatmul.mubr.bf16.gmra.mxu0 %v840
  %v1357 = vpop.f32.mrf.mxu0
  %v1358 = vadd.f32 %v220, %v1357
  %v1359 = vpop.f32.mrf.mxu0
  %v1360 = vpop.f32.mrf.mxu0
  %v1361 = vadd.f32 %v220, %v1360
  %v1362 = vpop.f32.mrf.mxu0
  %1363 = vmatprep.mubr.bf16.mxu0 0
  %1364 = vmatmul.mubr.bf16.gmra.mxu0 %v843
  %v1365 = vpop.f32.mrf.mxu0
  %v1366 = vadd.f32 %v220, %v1365
  %v1367 = vpop.f32.mrf.mxu0
  %v1368 = vpop.f32.mrf.mxu0
  %v1369 = vadd.f32 %v220, %v1368
  %v1370 = vpop.f32.mrf.mxu0
  %1371 = vmatprep.mubr.bf16.mxu0 0
  %1372 = vmatmul.mubr.bf16.gmra.mxu0 %v846
  %v1373 = vpop.f32.mrf.mxu0
  %v1374 = vadd.f32 %v220, %v1373
  %v1375 = vpop.f32.mrf.mxu0
  %v1376 = vpop.f32.mrf.mxu0
  %v1377 = vadd.f32 %v220, %v1376
  %v1378 = vpop.f32.mrf.mxu0
  %1379 = vmatprep.mubr.bf16.mxu0 0
  %1380 = vmatmul.mubr.bf16.gmra.mxu0 %v849
  %v1381 = vpop.f32.mrf.mxu0
  %v1382 = vadd.f32 %v220, %v1381
  %v1383 = vpop.f32.mrf.mxu0
  %v1384 = vpop.f32.mrf.mxu0
  %v1385 = vadd.f32 %v220, %v1384
  %v1386 = vpop.f32.mrf.mxu0
  %1387 = vmatprep.mubr.bf16.mxu0 0
  %1388 = vmatmul.mubr.bf16.gmra.mxu0 %v852
  %v1389 = vpop.f32.mrf.mxu0
  %v1390 = vadd.f32 %v220, %v1389
  %v1391 = vpop.f32.mrf.mxu0
  %v1392 = vpop.f32.mrf.mxu0
  %v1393 = vadd.f32 %v220, %v1392
  %v1394 = vpop.f32.mrf.mxu0
  %1395 = vmatprep.mubr.bf16.mxu0 0
  %1396 = vmatmul.mubr.bf16.gmra.mxu0 %v855
  %v1397 = vpop.f32.mrf.mxu0
  %v1398 = vadd.f32 %v220, %v1397
  %v1399 = vpop.f32.mrf.mxu0
  %v1400 = vpop.f32.mrf.mxu0
  %v1401 = vadd.f32 %v220, %v1400
  %v1402 = vpop.f32.mrf.mxu0
  %1403 = vmatprep.mubr.bf16.mxu0 0
  %1404 = vmatmul.mubr.bf16.gmra.mxu0 %v858
  %v1405 = vpop.f32.mrf.mxu0
  %v1406 = vadd.f32 %v220, %v1405
  %v1407 = vpop.f32.mrf.mxu0
  %v1408 = vpop.f32.mrf.mxu0
  %v1409 = vadd.f32 %v220, %v1408
  %v1410 = vpop.f32.mrf.mxu0
  %1411 = vmatprep.mubr.bf16.mxu0 0
  %1412 = vmatmul.mubr.bf16.gmra.mxu0 %v861
  %v1413 = vpop.f32.mrf.mxu0
  %v1414 = vadd.f32 %v220, %v1413
  %v1415 = vpop.f32.mrf.mxu0
  %v1416 = vpop.f32.mrf.mxu0
  %v1417 = vadd.f32 %v220, %v1416
  %v1418 = vpop.f32.mrf.mxu0
  %1419 = vmatprep.mubr.bf16.mxu0 0
  %1420 = vmatmul.mubr.bf16.gmra.mxu0 %v864
  %v1421 = vpop.f32.mrf.mxu0
  %v1422 = vadd.f32 %v220, %v1421
  %v1423 = vpop.f32.mrf.mxu0
  %v1424 = vpop.f32.mrf.mxu0
  %v1425 = vadd.f32 %v220, %v1424
  %v1426 = vpop.f32.mrf.mxu0
  %1427 = vmatprep.mubr.bf16.mxu0 0
  %1428 = vmatmul.mubr.bf16.gmra.mxu0 %v867
  %v1429 = vpop.f32.mrf.mxu0
  %v1430 = vadd.f32 %v220, %v1429
  %v1431 = vpop.f32.mrf.mxu0
  %v1432 = vpop.f32.mrf.mxu0
  %v1433 = vadd.f32 %v220, %v1432
  %v1434 = vpop.f32.mrf.mxu0
  %1435 = vmatprep.mubr.bf16.mxu0 0
  %1436 = vmatmul.mubr.bf16.gmra.mxu0 %v870
  %v1437 = vpop.f32.mrf.mxu0
  %v1438 = vadd.f32 %v220, %v1437
  %v1439 = vpop.f32.mrf.mxu0
  %v1440 = vpop.f32.mrf.mxu0
  %v1441 = vadd.f32 %v220, %v1440
  %v1442 = vpop.f32.mrf.mxu0
  %1443 = vmatprep.mubr.bf16.mxu0 0
  %1444 = vmatmul.mubr.bf16.gmra.mxu0 %v873
  %v1445 = vpop.f32.mrf.mxu0
  %v1446 = vadd.f32 %v220, %v1445
  %v1447 = vpop.f32.mrf.mxu0
  %v1448 = vpop.f32.mrf.mxu0
  %v1449 = vadd.f32 %v220, %v1448
  %v1450 = vpop.f32.mrf.mxu0
  %1451 = vmatprep.mubr.bf16.mxu0 0
  %1452 = vmatmul.mubr.bf16.gmra.mxu0 %v876
  %v1453 = vpop.f32.mrf.mxu0
  %v1454 = vadd.f32 %v220, %v1453
  %v1455 = vpop.f32.mrf.mxu0
  %v1456 = vpop.f32.mrf.mxu0
  %v1457 = vadd.f32 %v220, %v1456
  %v1458 = vpop.f32.mrf.mxu0
  %1459 = vmatprep.mubr.bf16.mxu0 0
  %1460 = vmatmul.mubr.bf16.gmra.mxu0 %v879
  %v1461 = vpop.f32.mrf.mxu0
  %v1462 = vadd.f32 %v220, %v1461
  %v1463 = vpop.f32.mrf.mxu0
  %v1464 = vpop.f32.mrf.mxu0
  %v1465 = vadd.f32 %v220, %v1464
  %v1466 = vpop.f32.mrf.mxu0
  %1467 = vmatprep.mubr.bf16.mxu0 0
  %1468 = vmatmul.mubr.bf16.gmra.mxu0 %v882
  %v1469 = vpop.f32.mrf.mxu0
  %v1470 = vadd.f32 %v220, %v1469
  %v1471 = vpop.f32.mrf.mxu0
  %v1472 = vpop.f32.mrf.mxu0
  %v1473 = vadd.f32 %v220, %v1472
  %v1474 = vpop.f32.mrf.mxu0
  %1475 = vmatprep.mubr.bf16.mxu0 0
  %1476 = vmatmul.mubr.bf16.gmra.mxu0 %v885
  %v1477 = vpop.f32.mrf.mxu0
  %v1478 = vadd.f32 %v220, %v1477
  %v1479 = vpop.f32.mrf.mxu0
  %v1480 = vpop.f32.mrf.mxu0
  %v1481 = vadd.f32 %v220, %v1480
  %v1482 = vpop.f32.mrf.mxu0
  %1483 = vmatprep.mubr.bf16.mxu0 0
  %1484 = vmatmul.mubr.bf16.gmra.mxu0 %v888
  %v1485 = vpop.f32.mrf.mxu0
  %v1486 = vadd.f32 %v220, %v1485
  %v1487 = vpop.f32.mrf.mxu0
  %v1488 = vpop.f32.mrf.mxu0
  %v1489 = vadd.f32 %v220, %v1488
  %v1490 = vpop.f32.mrf.mxu0
  %1491 = vmatprep.mubr.bf16.mxu0 0
  %1492 = vmatmul.mubr.bf16.gmra.mxu0 %v891
  %v1493 = vpop.f32.mrf.mxu0
  %v1494 = vadd.f32 %v220, %v1493
  %v1495 = vpop.f32.mrf.mxu0
  %v1496 = vpop.f32.mrf.mxu0
  %v1497 = vadd.f32 %v220, %v1496
  %v1498 = vpop.f32.mrf.mxu0
  %1499 = vmatprep.mubr.bf16.mxu0 0
  %1500 = vmatmul.mubr.bf16.gmra.mxu0 %v894
  %v1501 = vpop.f32.mrf.mxu0
  %v1502 = vadd.f32 %v220, %v1501
  %v1503 = vpop.f32.mrf.mxu0
  %v1504 = vpop.f32.mrf.mxu0
  %v1505 = vadd.f32 %v220, %v1504
  %v1506 = vpop.f32.mrf.mxu0
  %1507 = vmatprep.mubr.bf16.mxu0 0
  %1508 = vmatmul.mubr.bf16.gmra.mxu0 %v897
  %v1509 = vpop.f32.mrf.mxu0
  %v1510 = vadd.f32 %v220, %v1509
  %v1511 = vpop.f32.mrf.mxu0
  %v1512 = vpop.f32.mrf.mxu0
  %v1513 = vadd.f32 %v220, %v1512
  %v1514 = vpop.f32.mrf.mxu0
  %1515 = vmatprep.mubr.bf16.mxu0 0
  %1516 = vmatmul.mubr.bf16.gmra.mxu0 %v900
  %v1517 = vpop.f32.mrf.mxu0
  %v1518 = vadd.f32 %v220, %v1517
  %v1519 = vpop.f32.mrf.mxu0
  %v1520 = vpop.f32.mrf.mxu0
  %v1521 = vadd.f32 %v220, %v1520
  %v1522 = vpop.f32.mrf.mxu0
  %1523 = vmatprep.mubr.bf16.mxu0 0
  %1524 = vmatmul.mubr.bf16.gmra.mxu0 %v903
  %v1525 = vpop.f32.mrf.mxu0
  %v1526 = vadd.f32 %v220, %v1525
  %v1527 = vpop.f32.mrf.mxu0
  %v1528 = vpop.f32.mrf.mxu0
  %v1529 = vadd.f32 %v220, %v1528
  %v1530 = vpop.f32.mrf.mxu0
  %1531 = vmatprep.mubr.bf16.mxu0 0
  %1532 = vmatmul.mubr.bf16.gmra.mxu0 %v906
  %v1533 = vpop.f32.mrf.mxu0
  %v1534 = vadd.f32 %v220, %v1533
  %v1535 = vpop.f32.mrf.mxu0
  %v1536 = vpop.f32.mrf.mxu0
  %v1537 = vadd.f32 %v220, %v1536
  %v1538 = vpop.f32.mrf.mxu0
  %1539 = vmatprep.mubr.bf16.mxu0 0
  %1540 = vmatmul.mubr.bf16.gmra.mxu0 %v909
  %v1541 = vpop.f32.mrf.mxu0
  %v1542 = vadd.f32 %v220, %v1541
  %v1543 = vpop.f32.mrf.mxu0
  %v1544 = vpop.f32.mrf.mxu0
  %v1545 = vadd.f32 %v220, %v1544
  %v1546 = vpop.f32.mrf.mxu0
  %1547 = vmatprep.mubr.bf16.mxu0 0
  %1548 = vmatmul.mubr.bf16.gmra.mxu0 %v912
  %v1549 = vpop.f32.mrf.mxu0
  %v1550 = vadd.f32 %v220, %v1549
  %v1551 = vpop.f32.mrf.mxu0
  %v1552 = vpop.f32.mrf.mxu0
  %v1553 = vadd.f32 %v220, %v1552
  %v1554 = vpop.f32.mrf.mxu0
  %1555 = vmatprep.mubr.bf16.mxu0 0
  %1556 = vmatmul.mubr.bf16.gmra.mxu0 %v915
  %v1557 = vpop.f32.mrf.mxu0
  %v1558 = vadd.f32 %v220, %v1557
  %v1559 = vpop.f32.mrf.mxu0
  %v1560 = vpop.f32.mrf.mxu0
  %v1561 = vadd.f32 %v220, %v1560
  %v1562 = vpop.f32.mrf.mxu0
  %1563 = vmatprep.mubr.bf16.mxu0 0
  %1564 = vmatmul.mubr.bf16.gmra.mxu0 %v918
  %v1565 = vpop.f32.mrf.mxu0
  %v1566 = vadd.f32 %v220, %v1565
  %v1567 = vpop.f32.mrf.mxu0
  %v1568 = vpop.f32.mrf.mxu0
  %v1569 = vadd.f32 %v220, %v1568
  %v1570 = vpop.f32.mrf.mxu0
  %1571 = vmatprep.mubr.bf16.mxu0 0
  %1572 = vmatmul.mubr.bf16.gmra.mxu0 %v921
  %v1573 = vpop.f32.mrf.mxu0
  %v1574 = vadd.f32 %v220, %v1573
  %v1575 = vpop.f32.mrf.mxu0
  %v1576 = vpop.f32.mrf.mxu0
  %v1577 = vadd.f32 %v220, %v1576
  %v1578 = vpop.f32.mrf.mxu0
  %1579 = vmatprep.mubr.bf16.mxu0 0
  %1580 = vmatmul.mubr.bf16.gmra.mxu0 %v924
  %v1581 = vpop.f32.mrf.mxu0
  %v1582 = vadd.f32 %v220, %v1581
  %v1583 = vpop.f32.mrf.mxu0
  %v1584 = vpop.f32.mrf.mxu0
  %v1585 = vadd.f32 %v220, %v1584
  %v1586 = vpop.f32.mrf.mxu0
  %1587 = vmatprep.mubr.bf16.mxu0 0
  %1588 = vmatmul.mubr.bf16.gmra.mxu0 %v927
  %v1589 = vpop.f32.mrf.mxu0
  %v1590 = vadd.f32 %v220, %v1589
  %v1591 = vpop.f32.mrf.mxu0
  %v1592 = vpop.f32.mrf.mxu0
  %v1593 = vadd.f32 %v220, %v1592
  %v1594 = vpop.f32.mrf.mxu0
  %1595 = vmatprep.mubr.bf16.mxu0 0
  %1596 = vmatmul.mubr.bf16.gmra.mxu0 %v930
  %v1597 = vpop.f32.mrf.mxu0
  %v1598 = vadd.f32 %v220, %v1597
  %v1599 = vpop.f32.mrf.mxu0
  %v1600 = vpop.f32.mrf.mxu0
  %v1601 = vadd.f32 %v220, %v1600
  %v1602 = vpop.f32.mrf.mxu0
  %1603 = vmatprep.mubr.bf16.mxu0 0
  %1604 = vmatmul.mubr.bf16.gmra.mxu0 %v933
  %v1605 = vpop.f32.mrf.mxu0
  %v1606 = vadd.f32 %v220, %v1605
  %v1607 = vpop.f32.mrf.mxu0
  %v1608 = vpop.f32.mrf.mxu0
  %v1609 = vadd.f32 %v220, %v1608
  %v1610 = vpop.f32.mrf.mxu0
  %1611 = vmatprep.mubr.bf16.mxu0 0
  %1612 = vmatmul.mubr.bf16.gmra.mxu0 %v936
  %v1613 = vpop.f32.mrf.mxu0
  %v1614 = vadd.f32 %v220, %v1613
  %v1615 = vpop.f32.mrf.mxu0
  %v1616 = vpop.f32.mrf.mxu0
  %v1617 = vadd.f32 %v220, %v1616
  %v1618 = vpop.f32.mrf.mxu0
  %1619 = vmatprep.mubr.bf16.mxu0 0
  %1620 = vmatmul.mubr.bf16.gmra.mxu0 %v939
  %v1621 = vpop.f32.mrf.mxu0
  %v1622 = vadd.f32 %v220, %v1621
  %v1623 = vpop.f32.mrf.mxu0
  %v1624 = vpop.f32.mrf.mxu0
  %v1625 = vadd.f32 %v220, %v1624
  %v1626 = vpop.f32.mrf.mxu0
  %1627 = vmatprep.mubr.bf16.mxu0 0
  %1628 = vmatmul.mubr.bf16.gmra.mxu0 %v942
  %v1629 = vpop.f32.mrf.mxu0
  %v1630 = vadd.f32 %v220, %v1629
  %v1631 = vpop.f32.mrf.mxu0
  %v1632 = vpop.f32.mrf.mxu0
  %v1633 = vadd.f32 %v220, %v1632
  %v1634 = vpop.f32.mrf.mxu0
  %1635 = vmatprep.mubr.bf16.mxu0 0
  %1636 = vmatmul.mubr.bf16.gmra.mxu0 %v945
  %v1637 = vpop.f32.mrf.mxu0
  %v1638 = vadd.f32 %v220, %v1637
  %v1639 = vpop.f32.mrf.mxu0
  %v1640 = vpop.f32.mrf.mxu0
  %v1641 = vadd.f32 %v220, %v1640
  %v1642 = vpop.f32.mrf.mxu0
  %1643 = vmatprep.mubr.bf16.mxu0 0
  %1644 = vmatmul.mubr.bf16.gmra.mxu0 %v948
  %v1645 = vpop.f32.mrf.mxu0
  %v1646 = vadd.f32 %v220, %v1645
  %v1647 = vpop.f32.mrf.mxu0
  %v1648 = vpop.f32.mrf.mxu0
  %v1649 = vadd.f32 %v220, %v1648
  %v1650 = vpop.f32.mrf.mxu0
  %1651 = vmatprep.mubr.bf16.mxu0 0
  %1652 = vmatmul.mubr.bf16.gmra.mxu0 %v951
  %v1653 = vpop.f32.mrf.mxu0
  %v1654 = vadd.f32 %v220, %v1653
  %v1655 = vpop.f32.mrf.mxu0
  %v1656 = vpop.f32.mrf.mxu0
  %v1657 = vadd.f32 %v220, %v1656
  %v1658 = vpop.f32.mrf.mxu0
  %1659 = vmatprep.mubr.bf16.mxu0 0
  %1660 = vmatmul.mubr.bf16.gmra.mxu0 %v954
  %v1661 = vpop.f32.mrf.mxu0
  %v1662 = vadd.f32 %v220, %v1661
  %v1663 = vpop.f32.mrf.mxu0
  %v1664 = vpop.f32.mrf.mxu0
  %v1665 = vadd.f32 %v220, %v1664
  %v1666 = vpop.f32.mrf.mxu0
  %1667 = vmatprep.mubr.bf16.mxu0 0
  %1668 = vmatmul.mubr.bf16.gmra.mxu0 %v957
  %v1669 = vpop.f32.mrf.mxu0
  %v1670 = vadd.f32 %v220, %v1669
  %v1671 = vpop.f32.mrf.mxu0
  %v1672 = vpop.f32.mrf.mxu0
  %v1673 = vadd.f32 %v220, %v1672
  %v1674 = vpop.f32.mrf.mxu0
  %1675 = vmatprep.mubr.bf16.mxu0 0
  %1676 = vmatmul.mubr.bf16.gmra.mxu0 %v960
  %v1677 = vpop.f32.mrf.mxu0
  %v1678 = vadd.f32 %v220, %v1677
  %v1679 = vpop.f32.mrf.mxu0
  %v1680 = vpop.f32.mrf.mxu0
  %v1681 = vadd.f32 %v220, %v1680
  %v1682 = vpop.f32.mrf.mxu0
  %1683 = vmatprep.mubr.bf16.mxu0 0
  %1684 = vmatmul.mubr.bf16.gmra.mxu0 %v963
  %v1685 = vpop.f32.mrf.mxu0
  %v1686 = vadd.f32 %v220, %v1685
  %v1687 = vpop.f32.mrf.mxu0
  %v1688 = vpop.f32.mrf.mxu0
  %v1689 = vadd.f32 %v220, %v1688
  %v1690 = vpop.f32.mrf.mxu0
  %1691 = vmatprep.mubr.bf16.mxu0 0
  %1692 = vmatmul.mubr.bf16.gmra.mxu0 %v966
  %v1693 = vpop.f32.mrf.mxu0
  %v1694 = vadd.f32 %v220, %v1693
  %v1695 = vpop.f32.mrf.mxu0
  %v1696 = vpop.f32.mrf.mxu0
  %v1697 = vadd.f32 %v220, %v1696
  %v1698 = vpop.f32.mrf.mxu0
  %1699 = vmatprep.mubr.bf16.mxu0 0
  %1700 = vmatmul.mubr.bf16.gmra.mxu0 %v969
  %v1701 = vpop.f32.mrf.mxu0
  %v1702 = vadd.f32 %v220, %v1701
  %v1703 = vpop.f32.mrf.mxu0
  %v1704 = vpop.f32.mrf.mxu0
  %v1705 = vadd.f32 %v220, %v1704
  %v1706 = vpop.f32.mrf.mxu0
  %1707 = vmatprep.mubr.bf16.mxu0 0
  %1708 = vmatmul.mubr.bf16.gmra.mxu0 %v972
  %v1709 = vpop.f32.mrf.mxu0
  %v1710 = vadd.f32 %v220, %v1709
  %v1711 = vpop.f32.mrf.mxu0
  %v1712 = vpop.f32.mrf.mxu0
  %v1713 = vadd.f32 %v220, %v1712
  %v1714 = vpop.f32.mrf.mxu0
  %1715 = vmatprep.mubr.bf16.mxu0 0
  %1716 = vmatmul.mubr.bf16.gmra.mxu0 %v975
  %v1717 = vpop.f32.mrf.mxu0
  %v1718 = vadd.f32 %v220, %v1717
  %v1719 = vpop.f32.mrf.mxu0
  %v1720 = vpop.f32.mrf.mxu0
  %v1721 = vadd.f32 %v220, %v1720
  %v1722 = vpop.f32.mrf.mxu0
  %1723 = vmatprep.mubr.bf16.mxu0 0
  %1724 = vmatmul.mubr.bf16.gmra.mxu0 %v978
  %v1725 = vpop.f32.mrf.mxu0
  %v1726 = vadd.f32 %v220, %v1725
  %v1727 = vpop.f32.mrf.mxu0
  %v1728 = vpop.f32.mrf.mxu0
  %v1729 = vadd.f32 %v220, %v1728
  %v1730 = vpop.f32.mrf.mxu0
  %1731 = vmatprep.mubr.bf16.mxu0 0
  %1732 = vmatmul.mubr.bf16.gmra.mxu0 %v981
  %v1733 = vpop.f32.mrf.mxu0
  %v1734 = vadd.f32 %v220, %v1733
  %v1735 = vpop.f32.mrf.mxu0
  %v1736 = vpop.f32.mrf.mxu0
  %v1737 = vadd.f32 %v220, %v1736
  %v1738 = vpop.f32.mrf.mxu0
  %1739 = vmatprep.mubr.bf16.mxu0 0
  %1740 = vmatmul.mubr.bf16.gmra.mxu0 %v984
  %v1741 = vpop.f32.mrf.mxu0
  %v1742 = vadd.f32 %v220, %v1741
  %v1743 = vpop.f32.mrf.mxu0
  %v1744 = vpop.f32.mrf.mxu0
  %v1745 = vadd.f32 %v220, %v1744
  %v1746 = vpop.f32.mrf.mxu0
  %1747 = vmatprep.mubr.bf16.mxu0 0
  %1748 = vmatmul.mubr.bf16.gmra.mxu0 %v987
  %v1749 = vpop.f32.mrf.mxu0
  %v1750 = vadd.f32 %v220, %v1749
  %v1751 = vpop.f32.mrf.mxu0
  %v1752 = vpop.f32.mrf.mxu0
  %v1753 = vadd.f32 %v220, %v1752
  %v1754 = vpop.f32.mrf.mxu0
  %1755 = vmatprep.mubr.bf16.mxu0 0
  %1756 = vmatmul.mubr.bf16.gmra.mxu0 %v990
  %v1757 = vpop.f32.mrf.mxu0
  %v1758 = vadd.f32 %v220, %v1757
  %v1759 = vpop.f32.mrf.mxu0
  %v1760 = vpop.f32.mrf.mxu0
  %v1761 = vadd.f32 %v220, %v1760
  %v1762 = vpop.f32.mrf.mxu0
  %1763 = vmatprep.mubr.bf16.mxu0 0
  %1764 = vmatmul.mubr.bf16.gmra.mxu0 %v993
  %v1765 = vpop.f32.mrf.mxu0
  %v1766 = vadd.f32 %v220, %v1765
  %v1767 = vpop.f32.mrf.mxu0
  %v1768 = vpop.f32.mrf.mxu0
  %v1769 = vadd.f32 %v220, %v1768
  %v1770 = vpop.f32.mrf.mxu0
  %1771 = vmatprep.mubr.bf16.mxu0 0
  %1772 = vmatmul.mubr.bf16.gmra.mxu0 %v996
  %v1773 = vpop.f32.mrf.mxu0
  %v1774 = vadd.f32 %v220, %v1773
  %v1775 = vpop.f32.mrf.mxu0
  %v1776 = vpop.f32.mrf.mxu0
  %v1777 = vadd.f32 %v220, %v1776
  %v1778 = vpop.f32.mrf.mxu0
  %1779 = vmatprep.mubr.bf16.mxu0 0
  %1780 = vmatmul.mubr.bf16.gmra.mxu0 %v999
  %v1781 = vpop.f32.mrf.mxu0
  %v1782 = vadd.f32 %v220, %v1781
  %v1783 = vpop.f32.mrf.mxu0
  %v1784 = vpop.f32.mrf.mxu0
  %v1785 = vadd.f32 %v220, %v1784
  %v1786 = vpop.f32.mrf.mxu0
  %1787 = vmatprep.mubr.bf16.mxu0 0
  %1788 = vmatmul.mubr.bf16.gmra.mxu0 %v1002
  %v1789 = vpop.f32.mrf.mxu0
  %v1790 = vadd.f32 %v220, %v1789
  %v1791 = vpop.f32.mrf.mxu0
  %v1792 = vpop.f32.mrf.mxu0
  %v1793 = vadd.f32 %v220, %v1792
  %v1794 = vpop.f32.mrf.mxu0
  %1795 = vmatprep.mubr.bf16.mxu0 0
  %1796 = vmatmul.mubr.bf16.gmra.mxu0 %v1005
  %v1797 = vpop.f32.mrf.mxu0
  %v1798 = vadd.f32 %v220, %v1797
  %v1799 = vpop.f32.mrf.mxu0
  %v1800 = vpop.f32.mrf.mxu0
  %v1801 = vadd.f32 %v220, %v1800
  %v1802 = vpop.f32.mrf.mxu0
  %1803 = vmatprep.mubr.bf16.mxu0 0
  %1804 = vmatmul.mubr.bf16.gmra.mxu0 %v1008
  %v1805 = vpop.f32.mrf.mxu0
  %v1806 = vadd.f32 %v220, %v1805
  %v1807 = vpop.f32.mrf.mxu0
  %v1808 = vpop.f32.mrf.mxu0
  %v1809 = vadd.f32 %v220, %v1808
  %v1810 = vpop.f32.mrf.mxu0
  %1811 = vmatprep.mubr.bf16.mxu0 0
  %1812 = vmatmul.mubr.bf16.gmra.mxu0 %v1011
  %v1813 = vpop.f32.mrf.mxu0
  %v1814 = vadd.f32 %v220, %v1813
  %v1815 = vpop.f32.mrf.mxu0
  %v1816 = vpop.f32.mrf.mxu0
  %v1817 = vadd.f32 %v220, %v1816
  %v1818 = vpop.f32.mrf.mxu0
  %1819 = vmatprep.mubr.bf16.mxu0 0
  %1820 = vmatmul.mubr.bf16.gmra.mxu0 %v1014
  %v1821 = vpop.f32.mrf.mxu0
  %v1822 = vadd.f32 %v220, %v1821
  %v1823 = vpop.f32.mrf.mxu0
  %v1824 = vpop.f32.mrf.mxu0
  %v1825 = vadd.f32 %v220, %v1824
  %v1826 = vpop.f32.mrf.mxu0
  %1827 = vmatprep.mubr.bf16.mxu0 0
  %1828 = vmatmul.mubr.bf16.gmra.mxu0 %v1017
  %v1829 = vpop.f32.mrf.mxu0
  %v1830 = vadd.f32 %v220, %v1829
  %v1831 = vpop.f32.mrf.mxu0
  %v1832 = vpop.f32.mrf.mxu0
  %v1833 = vadd.f32 %v220, %v1832
  %v1834 = vpop.f32.mrf.mxu0
  %1835 = vdwg.mxu0
  %v1836 = vsub.f32 0.0, %v1054
  %v1837 = vsub.f32 0.0, %v1057
  %v1838 = vsub.f32 0.0, %v1062
  %v1839 = vsub.f32 0.0, %v1065
  %v1840 = vsub.f32 0.0, %v1070
  %v1841 = vsub.f32 0.0, %v1073
  %v1842 = vsub.f32 0.0, %v1078
  %v1843 = vsub.f32 0.0, %v1081
  %v1844 = vsub.f32 0.0, %v1086
  %v1845 = vsub.f32 0.0, %v1089
  %v1846 = vsub.f32 0.0, %v1094
  %v1847 = vsub.f32 0.0, %v1097
  %v1848 = vsub.f32 0.0, %v1102
  %v1849 = vsub.f32 0.0, %v1105
  %v1850 = vsub.f32 0.0, %v1110
  %v1851 = vsub.f32 0.0, %v1113
  %v1852 = vsub.f32 0.0, %v1118
  %v1853 = vsub.f32 0.0, %v1121
  %v1854 = vsub.f32 0.0, %v1126
  %v1855 = vsub.f32 0.0, %v1129
  %v1856 = vsub.f32 0.0, %v1134
  %v1857 = vsub.f32 0.0, %v1137
  %v1858 = vsub.f32 0.0, %v1142
  %v1859 = vsub.f32 0.0, %v1145
  %v1860 = vsub.f32 0.0, %v1150
  %v1861 = vsub.f32 0.0, %v1153
  %v1862 = vsub.f32 0.0, %v1158
  %v1863 = vsub.f32 0.0, %v1161
  %v1864 = vsub.f32 0.0, %v1166
  %v1865 = vsub.f32 0.0, %v1169
  %v1866 = vsub.f32 0.0, %v1174
  %v1867 = vsub.f32 0.0, %v1177
  %v1868 = vsub.f32 0.0, %v1182
  %v1869 = vsub.f32 0.0, %v1185
  %v1870 = vsub.f32 0.0, %v1190
  %v1871 = vsub.f32 0.0, %v1193
  %v1872 = vsub.f32 0.0, %v1198
  %v1873 = vsub.f32 0.0, %v1201
  %v1874 = vsub.f32 0.0, %v1206
  %v1875 = vsub.f32 0.0, %v1209
  %v1876 = vsub.f32 0.0, %v1214
  %v1877 = vsub.f32 0.0, %v1217
  %v1878 = vsub.f32 0.0, %v1222
  %v1879 = vsub.f32 0.0, %v1225
  %v1880 = vsub.f32 0.0, %v1230
  %v1881 = vsub.f32 0.0, %v1233
  %v1882 = vsub.f32 0.0, %v1238
  %v1883 = vsub.f32 0.0, %v1241
  %v1884 = vsub.f32 0.0, %v1246
  %v1885 = vsub.f32 0.0, %v1249
  %v1886 = vsub.f32 0.0, %v1254
  %v1887 = vsub.f32 0.0, %v1257
  %v1888 = vsub.f32 0.0, %v1262
  %v1889 = vsub.f32 0.0, %v1265
  %v1890 = vsub.f32 0.0, %v1270
  %v1891 = vsub.f32 0.0, %v1273
  %v1892 = vsub.f32 0.0, %v1278
  %v1893 = vsub.f32 0.0, %v1281
  %v1894 = vsub.f32 0.0, %v1286
  %v1895 = vsub.f32 0.0, %v1289
  %v1896 = vsub.f32 0.0, %v1294
  %v1897 = vsub.f32 0.0, %v1297
  %v1898 = vsub.f32 0.0, %v1302
  %v1899 = vsub.f32 0.0, %v1305
  %v1900 = vsub.f32 0.0, %v1310
  %v1901 = vsub.f32 0.0, %v1313
  %v1902 = vsub.f32 0.0, %v1318
  %v1903 = vsub.f32 0.0, %v1321
  %v1904 = vsub.f32 0.0, %v1326
  %v1905 = vsub.f32 0.0, %v1329
  %v1906 = vsub.f32 0.0, %v1334
  %v1907 = vsub.f32 0.0, %v1337
  %v1908 = vsub.f32 0.0, %v1342
  %v1909 = vsub.f32 0.0, %v1345
  %v1910 = vsub.f32 0.0, %v1350
  %v1911 = vsub.f32 0.0, %v1353
  %v1912 = vsub.f32 0.0, %v1358
  %v1913 = vsub.f32 0.0, %v1361
  %v1914 = vsub.f32 0.0, %v1366
  %v1915 = vsub.f32 0.0, %v1369
  %v1916 = vsub.f32 0.0, %v1374
  %v1917 = vsub.f32 0.0, %v1377
  %v1918 = vsub.f32 0.0, %v1382
  %v1919 = vsub.f32 0.0, %v1385
  %v1920 = vsub.f32 0.0, %v1390
  %v1921 = vsub.f32 0.0, %v1393
  %v1922 = vsub.f32 0.0, %v1398
  %v1923 = vsub.f32 0.0, %v1401
  %v1924 = vsub.f32 0.0, %v1406
  %v1925 = vsub.f32 0.0, %v1409
  %v1926 = vsub.f32 0.0, %v1414
  %v1927 = vsub.f32 0.0, %v1417
  %v1928 = vsub.f32 0.0, %v1422
  %v1929 = vsub.f32 0.0, %v1425
  %v1930 = vsub.f32 0.0, %v1430
  %v1931 = vsub.f32 0.0, %v1433
  %v1932 = vsub.f32 0.0, %v1438
  %v1933 = vsub.f32 0.0, %v1441
  %v1934 = vsub.f32 0.0, %v1446
  %v1935 = vsub.f32 0.0, %v1449
  %v1936 = vsub.f32 0.0, %v1454
  %v1937 = vsub.f32 0.0, %v1457
  %v1938 = vsub.f32 0.0, %v1462
  %v1939 = vsub.f32 0.0, %v1465
  %v1940 = vsub.f32 0.0, %v1470
  %v1941 = vsub.f32 0.0, %v1473
  %v1942 = vsub.f32 0.0, %v1478
  %v1943 = vsub.f32 0.0, %v1481
  %v1944 = vsub.f32 0.0, %v1486
  %v1945 = vsub.f32 0.0, %v1489
  %v1946 = vsub.f32 0.0, %v1494
  %v1947 = vsub.f32 0.0, %v1497
  %v1948 = vsub.f32 0.0, %v1502
  %v1949 = vsub.f32 0.0, %v1505
  %v1950 = vsub.f32 0.0, %v1510
  %v1951 = vsub.f32 0.0, %v1513
  %v1952 = vsub.f32 0.0, %v1518
  %v1953 = vsub.f32 0.0, %v1521
  %v1954 = vsub.f32 0.0, %v1526
  %v1955 = vsub.f32 0.0, %v1529
  %v1956 = vsub.f32 0.0, %v1534
  %v1957 = vsub.f32 0.0, %v1537
  %v1958 = vsub.f32 0.0, %v1542
  %v1959 = vsub.f32 0.0, %v1545
  %v1960 = vsub.f32 0.0, %v1550
  %v1961 = vsub.f32 0.0, %v1553
  %v1962 = vsub.f32 0.0, %v1558
  %v1963 = vsub.f32 0.0, %v1561
  %v1964 = vsub.f32 0.0, %v1566
  %v1965 = vsub.f32 0.0, %v1569
  %v1966 = vsub.f32 0.0, %v1574
  %v1967 = vsub.f32 0.0, %v1577
  %v1968 = vsub.f32 0.0, %v1582
  %v1969 = vsub.f32 0.0, %v1585
  %v1970 = vsub.f32 0.0, %v1590
  %v1971 = vsub.f32 0.0, %v1593
  %v1972 = vsub.f32 0.0, %v1598
  %v1973 = vsub.f32 0.0, %v1601
  %v1974 = vsub.f32 0.0, %v1606
  %v1975 = vsub.f32 0.0, %v1609
  %v1976 = vsub.f32 0.0, %v1614
  %v1977 = vsub.f32 0.0, %v1617
  %v1978 = vsub.f32 0.0, %v1622
  %v1979 = vsub.f32 0.0, %v1625
  %v1980 = vsub.f32 0.0, %v1630
  %v1981 = vsub.f32 0.0, %v1633
  %v1982 = vsub.f32 0.0, %v1638
  %v1983 = vsub.f32 0.0, %v1641
  %v1984 = vsub.f32 0.0, %v1646
  %v1985 = vsub.f32 0.0, %v1649
  %v1986 = vsub.f32 0.0, %v1654
  %v1987 = vsub.f32 0.0, %v1657
  %v1988 = vsub.f32 0.0, %v1662
  %v1989 = vsub.f32 0.0, %v1665
  %v1990 = vsub.f32 0.0, %v1670
  %v1991 = vsub.f32 0.0, %v1673
  %v1992 = vsub.f32 0.0, %v1678
  %v1993 = vsub.f32 0.0, %v1681
  %v1994 = vsub.f32 0.0, %v1686
  %v1995 = vsub.f32 0.0, %v1689
  %v1996 = vsub.f32 0.0, %v1694
  %v1997 = vsub.f32 0.0, %v1697
  %v1998 = vsub.f32 0.0, %v1702
  %v1999 = vsub.f32 0.0, %v1705
  %v2000 = vsub.f32 0.0, %v1710
  %v2001 = vsub.f32 0.0, %v1713
  %v2002 = vsub.f32 0.0, %v1718
  %v2003 = vsub.f32 0.0, %v1721
  %v2004 = vsub.f32 0.0, %v1726
  %v2005 = vsub.f32 0.0, %v1729
  %v2006 = vsub.f32 0.0, %v1734
  %v2007 = vsub.f32 0.0, %v1737
  %v2008 = vsub.f32 0.0, %v1742
  %v2009 = vsub.f32 0.0, %v1745
  %v2010 = vsub.f32 0.0, %v1750
  %v2011 = vsub.f32 0.0, %v1753
  %v2012 = vsub.f32 0.0, %v1758
  %v2013 = vsub.f32 0.0, %v1761
  %v2014 = vsub.f32 0.0, %v1766
  %v2015 = vsub.f32 0.0, %v1769
  %v2016 = vsub.f32 0.0, %v1774
  %v2017 = vsub.f32 0.0, %v1777
  %v2018 = vsub.f32 0.0, %v1782
  %v2019 = vsub.f32 0.0, %v1785
  %v2020 = vsub.f32 0.0, %v1790
  %v2021 = vsub.f32 0.0, %v1793
  %v2022 = vsub.f32 0.0, %v1798
  %v2023 = vsub.f32 0.0, %v1801
  %v2024 = vsub.f32 0.0, %v1806
  %v2025 = vsub.f32 0.0, %v1809
  %v2026 = vsub.f32 0.0, %v1814
  %v2027 = vsub.f32 0.0, %v1817
  %v2028 = vsub.f32 0.0, %v1822
  %v2029 = vsub.f32 0.0, %v1825
  %v2030 = vsub.f32 0.0, %v1830
  %v2031 = vsub.f32 0.0, %v1833
  %v2032 = vmul.f32 %v1836, 1.442695
  %v2033 = vpow.pop %v2032
  %v2034 = vmul.f32 %v1837, 1.442695
  %v2035 = vpow.pop %v2034
  %v2036 = vmul.f32 %v1838, 1.442695
  %v2037 = vpow.pop %v2036
  %v2038 = vmul.f32 %v1839, 1.442695
  %v2039 = vpow.pop %v2038
  %v2040 = vmul.f32 %v1840, 1.442695
  %v2041 = vpow.pop %v2040
  %v2042 = vmul.f32 %v1841, 1.442695
  %v2043 = vpow.pop %v2042
  %v2044 = vmul.f32 %v1842, 1.442695
  %v2045 = vpow.pop %v2044
  %v2046 = vmul.f32 %v1843, 1.442695
  %v2047 = vpow.pop %v2046
  %v2048 = vmul.f32 %v1844, 1.442695
  %v2049 = vpow.pop %v2048
  %v2050 = vmul.f32 %v1845, 1.442695
  %v2051 = vpow.pop %v2050
  %v2052 = vmul.f32 %v1846, 1.442695
  %v2053 = vpow.pop %v2052
  %v2054 = vmul.f32 %v1847, 1.442695
  %v2055 = vpow.pop %v2054
  %v2056 = vmul.f32 %v1848, 1.442695
  %v2057 = vpow.pop %v2056
  %v2058 = vmul.f32 %v1849, 1.442695
  %v2059 = vpow.pop %v2058
  %v2060 = vmul.f32 %v1850, 1.442695
  %v2061 = vpow.pop %v2060
  %v2062 = vmul.f32 %v1851, 1.442695
  %v2063 = vpow.pop %v2062
  %v2064 = vmul.f32 %v1852, 1.442695
  %v2065 = vpow.pop %v2064
  %v2066 = vmul.f32 %v1853, 1.442695
  %v2067 = vpow.pop %v2066
  %v2068 = vmul.f32 %v1854, 1.442695
  %v2069 = vpow.pop %v2068
  %v2070 = vmul.f32 %v1855, 1.442695
  %v2071 = vpow.pop %v2070
  %v2072 = vmul.f32 %v1856, 1.442695
  %v2073 = vpow.pop %v2072
  %v2074 = vmul.f32 %v1857, 1.442695
  %v2075 = vpow.pop %v2074
  %v2076 = vmul.f32 %v1858, 1.442695
  %v2077 = vpow.pop %v2076
  %v2078 = vmul.f32 %v1859, 1.442695
  %v2079 = vpow.pop %v2078
  %v2080 = vmul.f32 %v1860, 1.442695
  %v2081 = vpow.pop %v2080
  %v2082 = vmul.f32 %v1861, 1.442695
  %v2083 = vpow.pop %v2082
  %v2084 = vmul.f32 %v1862, 1.442695
  %v2085 = vpow.pop %v2084
  %v2086 = vmul.f32 %v1863, 1.442695
  %v2087 = vpow.pop %v2086
  %v2088 = vmul.f32 %v1864, 1.442695
  %v2089 = vpow.pop %v2088
  %v2090 = vmul.f32 %v1865, 1.442695
  %v2091 = vpow.pop %v2090
  %v2092 = vmul.f32 %v1866, 1.442695
  %v2093 = vpow.pop %v2092
  %v2094 = vmul.f32 %v1867, 1.442695
  %v2095 = vpow.pop %v2094
  %v2096 = vmul.f32 %v1868, 1.442695
  %v2097 = vpow.pop %v2096
  %v2098 = vmul.f32 %v1869, 1.442695
  %v2099 = vpow.pop %v2098
  %v2100 = vmul.f32 %v1870, 1.442695
  %v2101 = vpow.pop %v2100
  %v2102 = vmul.f32 %v1871, 1.442695
  %v2103 = vpow.pop %v2102
  %v2104 = vmul.f32 %v1872, 1.442695
  %v2105 = vpow.pop %v2104
  %v2106 = vmul.f32 %v1873, 1.442695
  %v2107 = vpow.pop %v2106
  %v2108 = vmul.f32 %v1874, 1.442695
  %v2109 = vpow.pop %v2108
  %v2110 = vmul.f32 %v1875, 1.442695
  %v2111 = vpow.pop %v2110
  %v2112 = vmul.f32 %v1876, 1.442695
  %v2113 = vpow.pop %v2112
  %v2114 = vmul.f32 %v1877, 1.442695
  %v2115 = vpow.pop %v2114
  %v2116 = vmul.f32 %v1878, 1.442695
  %v2117 = vpow.pop %v2116
  %v2118 = vmul.f32 %v1879, 1.442695
  %v2119 = vpow.pop %v2118
  %v2120 = vmul.f32 %v1880, 1.442695
  %v2121 = vpow.pop %v2120
  %v2122 = vmul.f32 %v1881, 1.442695
  %v2123 = vpow.pop %v2122
  %v2124 = vmul.f32 %v1882, 1.442695
  %v2125 = vpow.pop %v2124
  %v2126 = vmul.f32 %v1883, 1.442695
  %v2127 = vpow.pop %v2126
  %v2128 = vmul.f32 %v1884, 1.442695
  %v2129 = vpow.pop %v2128
  %v2130 = vmul.f32 %v1885, 1.442695
  %v2131 = vpow.pop %v2130
  %v2132 = vmul.f32 %v1886, 1.442695
  %v2133 = vpow.pop %v2132
  %v2134 = vmul.f32 %v1887, 1.442695
  %v2135 = vpow.pop %v2134
  %v2136 = vmul.f32 %v1888, 1.442695
  %v2137 = vpow.pop %v2136
  %v2138 = vmul.f32 %v1889, 1.442695
  %v2139 = vpow.pop %v2138
  %v2140 = vmul.f32 %v1890, 1.442695
  %v2141 = vpow.pop %v2140
  %v2142 = vmul.f32 %v1891, 1.442695
  %v2143 = vpow.pop %v2142
  %v2144 = vmul.f32 %v1892, 1.442695
  %v2145 = vpow.pop %v2144
  %v2146 = vmul.f32 %v1893, 1.442695
  %v2147 = vpow.pop %v2146
  %v2148 = vmul.f32 %v1894, 1.442695
  %v2149 = vpow.pop %v2148
  %v2150 = vmul.f32 %v1895, 1.442695
  %v2151 = vpow.pop %v2150
  %v2152 = vmul.f32 %v1896, 1.442695
  %v2153 = vpow.pop %v2152
  %v2154 = vmul.f32 %v1897, 1.442695
  %v2155 = vpow.pop %v2154
  %v2156 = vmul.f32 %v1898, 1.442695
  %v2157 = vpow.pop %v2156
  %v2158 = vmul.f32 %v1899, 1.442695
  %v2159 = vpow.pop %v2158
  %v2160 = vmul.f32 %v1900, 1.442695
  %v2161 = vpow.pop %v2160
  %v2162 = vmul.f32 %v1901, 1.442695
  %v2163 = vpow.pop %v2162
  %v2164 = vmul.f32 %v1902, 1.442695
  %v2165 = vpow.pop %v2164
  %v2166 = vmul.f32 %v1903, 1.442695
  %v2167 = vpow.pop %v2166
  %v2168 = vmul.f32 %v1904, 1.442695
  %v2169 = vpow.pop %v2168
  %v2170 = vmul.f32 %v1905, 1.442695
  %v2171 = vpow.pop %v2170
  %v2172 = vmul.f32 %v1906, 1.442695
  %v2173 = vpow.pop %v2172
  %v2174 = vmul.f32 %v1907, 1.442695
  %v2175 = vpow.pop %v2174
  %v2176 = vmul.f32 %v1908, 1.442695
  %v2177 = vpow.pop %v2176
  %v2178 = vmul.f32 %v1909, 1.442695
  %v2179 = vpow.pop %v2178
  %v2180 = vmul.f32 %v1910, 1.442695
  %v2181 = vpow.pop %v2180
  %v2182 = vmul.f32 %v1911, 1.442695
  %v2183 = vpow.pop %v2182
  %v2184 = vmul.f32 %v1912, 1.442695
  %v2185 = vpow.pop %v2184
  %v2186 = vmul.f32 %v1913, 1.442695
  %v2187 = vpow.pop %v2186
  %v2188 = vmul.f32 %v1914, 1.442695
  %v2189 = vpow.pop %v2188
  %v2190 = vmul.f32 %v1915, 1.442695
  %v2191 = vpow.pop %v2190
  %v2192 = vmul.f32 %v1916, 1.442695
  %v2193 = vpow.pop %v2192
  %v2194 = vmul.f32 %v1917, 1.442695
  %v2195 = vpow.pop %v2194
  %v2196 = vmul.f32 %v1918, 1.442695
  %v2197 = vpow.pop %v2196
  %v2198 = vmul.f32 %v1919, 1.442695
  %v2199 = vpow.pop %v2198
  %v2200 = vmul.f32 %v1920, 1.442695
  %v2201 = vpow.pop %v2200
  %v2202 = vmul.f32 %v1921, 1.442695
  %v2203 = vpow.pop %v2202
  %v2204 = vmul.f32 %v1922, 1.442695
  %v2205 = vpow.pop %v2204
  %v2206 = vmul.f32 %v1923, 1.442695
  %v2207 = vpow.pop %v2206
  %v2208 = vmul.f32 %v1924, 1.442695
  %v2209 = vpow.pop %v2208
  %v2210 = vmul.f32 %v1925, 1.442695
  %v2211 = vpow.pop %v2210
  %v2212 = vmul.f32 %v1926, 1.442695
  %v2213 = vpow.pop %v2212
  %v2214 = vmul.f32 %v1927, 1.442695
  %v2215 = vpow.pop %v2214
  %v2216 = vmul.f32 %v1928, 1.442695
  %v2217 = vpow.pop %v2216
  %v2218 = vmul.f32 %v1929, 1.442695
  %v2219 = vpow.pop %v2218
  %v2220 = vmul.f32 %v1930, 1.442695
  %v2221 = vpow.pop %v2220
  %v2222 = vmul.f32 %v1931, 1.442695
  %v2223 = vpow.pop %v2222
  %v2224 = vmul.f32 %v1932, 1.442695
  %v2225 = vpow.pop %v2224
  %v2226 = vmul.f32 %v1933, 1.442695
  %v2227 = vpow.pop %v2226
  %v2228 = vmul.f32 %v1934, 1.442695
  %v2229 = vpow.pop %v2228
  %v2230 = vmul.f32 %v1935, 1.442695
  %v2231 = vpow.pop %v2230
  %v2232 = vmul.f32 %v1936, 1.442695
  %v2233 = vpow.pop %v2232
  %v2234 = vmul.f32 %v1937, 1.442695
  %v2235 = vpow.pop %v2234
  %v2236 = vmul.f32 %v1938, 1.442695
  %v2237 = vpow.pop %v2236
  %v2238 = vmul.f32 %v1939, 1.442695
  %v2239 = vpow.pop %v2238
  %v2240 = vmul.f32 %v1940, 1.442695
  %v2241 = vpow.pop %v2240
  %v2242 = vmul.f32 %v1941, 1.442695
  %v2243 = vpow.pop %v2242
  %v2244 = vmul.f32 %v1942, 1.442695
  %v2245 = vpow.pop %v2244
  %v2246 = vmul.f32 %v1943, 1.442695
  %v2247 = vpow.pop %v2246
  %v2248 = vmul.f32 %v1944, 1.442695
  %v2249 = vpow.pop %v2248
  %v2250 = vmul.f32 %v1945, 1.442695
  %v2251 = vpow.pop %v2250
  %v2252 = vmul.f32 %v1946, 1.442695
  %v2253 = vpow.pop %v2252
  %v2254 = vmul.f32 %v1947, 1.442695
  %v2255 = vpow.pop %v2254
  %v2256 = vmul.f32 %v1948, 1.442695
  %v2257 = vpow.pop %v2256
  %v2258 = vmul.f32 %v1949, 1.442695
  %v2259 = vpow.pop %v2258
  %v2260 = vmul.f32 %v1950, 1.442695
  %v2261 = vpow.pop %v2260
  %v2262 = vmul.f32 %v1951, 1.442695
  %v2263 = vpow.pop %v2262
  %v2264 = vmul.f32 %v1952, 1.442695
  %v2265 = vpow.pop %v2264
  %v2266 = vmul.f32 %v1953, 1.442695
  %v2267 = vpow.pop %v2266
  %v2268 = vmul.f32 %v1954, 1.442695
  %v2269 = vpow.pop %v2268
  %v2270 = vmul.f32 %v1955, 1.442695
  %v2271 = vpow.pop %v2270
  %v2272 = vmul.f32 %v1956, 1.442695
  %v2273 = vpow.pop %v2272
  %v2274 = vmul.f32 %v1957, 1.442695
  %v2275 = vpow.pop %v2274
  %v2276 = vmul.f32 %v1958, 1.442695
  %v2277 = vpow.pop %v2276
  %v2278 = vmul.f32 %v1959, 1.442695
  %v2279 = vpow.pop %v2278
  %v2280 = vmul.f32 %v1960, 1.442695
  %v2281 = vpow.pop %v2280
  %v2282 = vmul.f32 %v1961, 1.442695
  %v2283 = vpow.pop %v2282
  %v2284 = vmul.f32 %v1962, 1.442695
  %v2285 = vpow.pop %v2284
  %v2286 = vmul.f32 %v1963, 1.442695
  %v2287 = vpow.pop %v2286
  %v2288 = vmul.f32 %v1964, 1.442695
  %v2289 = vpow.pop %v2288
  %v2290 = vmul.f32 %v1965, 1.442695
  %v2291 = vpow.pop %v2290
  %v2292 = vmul.f32 %v1966, 1.442695
  %v2293 = vpow.pop %v2292
  %v2294 = vmul.f32 %v1967, 1.442695
  %v2295 = vpow.pop %v2294
  %v2296 = vmul.f32 %v1968, 1.442695
  %v2297 = vpow.pop %v2296
  %v2298 = vmul.f32 %v1969, 1.442695
  %v2299 = vpow.pop %v2298
  %v2300 = vmul.f32 %v1970, 1.442695
  %v2301 = vpow.pop %v2300
  %v2302 = vmul.f32 %v1971, 1.442695
  %v2303 = vpow.pop %v2302
  %v2304 = vmul.f32 %v1972, 1.442695
  %v2305 = vpow.pop %v2304
  %v2306 = vmul.f32 %v1973, 1.442695
  %v2307 = vpow.pop %v2306
  %v2308 = vmul.f32 %v1974, 1.442695
  %v2309 = vpow.pop %v2308
  %v2310 = vmul.f32 %v1975, 1.442695
  %v2311 = vpow.pop %v2310
  %v2312 = vmul.f32 %v1976, 1.442695
  %v2313 = vpow.pop %v2312
  %v2314 = vmul.f32 %v1977, 1.442695
  %v2315 = vpow.pop %v2314
  %v2316 = vmul.f32 %v1978, 1.442695
  %v2317 = vpow.pop %v2316
  %v2318 = vmul.f32 %v1979, 1.442695
  %v2319 = vpow.pop %v2318
  %v2320 = vmul.f32 %v1980, 1.442695
  %v2321 = vpow.pop %v2320
  %v2322 = vmul.f32 %v1981, 1.442695
  %v2323 = vpow.pop %v2322
  %v2324 = vmul.f32 %v1982, 1.442695
  %v2325 = vpow.pop %v2324
  %v2326 = vmul.f32 %v1983, 1.442695
  %v2327 = vpow.pop %v2326
  %v2328 = vmul.f32 %v1984, 1.442695
  %v2329 = vpow.pop %v2328
  %v2330 = vmul.f32 %v1985, 1.442695
  %v2331 = vpow.pop %v2330
  %v2332 = vmul.f32 %v1986, 1.442695
  %v2333 = vpow.pop %v2332
  %v2334 = vmul.f32 %v1987, 1.442695
  %v2335 = vpow.pop %v2334
  %v2336 = vmul.f32 %v1988, 1.442695
  %v2337 = vpow.pop %v2336
  %v2338 = vmul.f32 %v1989, 1.442695
  %v2339 = vpow.pop %v2338
  %v2340 = vmul.f32 %v1990, 1.442695
  %v2341 = vpow.pop %v2340
  %v2342 = vmul.f32 %v1991, 1.442695
  %v2343 = vpow.pop %v2342
  %v2344 = vmul.f32 %v1992, 1.442695
  %v2345 = vpow.pop %v2344
  %v2346 = vmul.f32 %v1993, 1.442695
  %v2347 = vpow.pop %v2346
  %v2348 = vmul.f32 %v1994, 1.442695
  %v2349 = vpow.pop %v2348
  %v2350 = vmul.f32 %v1995, 1.442695
  %v2351 = vpow.pop %v2350
  %v2352 = vmul.f32 %v1996, 1.442695
  %v2353 = vpow.pop %v2352
  %v2354 = vmul.f32 %v1997, 1.442695
  %v2355 = vpow.pop %v2354
  %v2356 = vmul.f32 %v1998, 1.442695
  %v2357 = vpow.pop %v2356
  %v2358 = vmul.f32 %v1999, 1.442695
  %v2359 = vpow.pop %v2358
  %v2360 = vmul.f32 %v2000, 1.442695
  %v2361 = vpow.pop %v2360
  %v2362 = vmul.f32 %v2001, 1.442695
  %v2363 = vpow.pop %v2362
  %v2364 = vmul.f32 %v2002, 1.442695
  %v2365 = vpow.pop %v2364
  %v2366 = vmul.f32 %v2003, 1.442695
  %v2367 = vpow.pop %v2366
  %v2368 = vmul.f32 %v2004, 1.442695
  %v2369 = vpow.pop %v2368
  %v2370 = vmul.f32 %v2005, 1.442695
  %v2371 = vpow.pop %v2370
  %v2372 = vmul.f32 %v2006, 1.442695
  %v2373 = vpow.pop %v2372
  %v2374 = vmul.f32 %v2007, 1.442695
  %v2375 = vpow.pop %v2374
  %v2376 = vmul.f32 %v2008, 1.442695
  %v2377 = vpow.pop %v2376
  %v2378 = vmul.f32 %v2009, 1.442695
  %v2379 = vpow.pop %v2378
  %v2380 = vmul.f32 %v2010, 1.442695
  %v2381 = vpow.pop %v2380
  %v2382 = vmul.f32 %v2011, 1.442695
  %v2383 = vpow.pop %v2382
  %v2384 = vmul.f32 %v2012, 1.442695
  %v2385 = vpow.pop %v2384
  %v2386 = vmul.f32 %v2013, 1.442695
  %v2387 = vpow.pop %v2386
  %v2388 = vmul.f32 %v2014, 1.442695
  %v2389 = vpow.pop %v2388
  %v2390 = vmul.f32 %v2015, 1.442695
  %v2391 = vpow.pop %v2390
  %v2392 = vmul.f32 %v2016, 1.442695
  %v2393 = vpow.pop %v2392
  %v2394 = vmul.f32 %v2017, 1.442695
  %v2395 = vpow.pop %v2394
  %v2396 = vmul.f32 %v2018, 1.442695
  %v2397 = vpow.pop %v2396
  %v2398 = vmul.f32 %v2019, 1.442695
  %v2399 = vpow.pop %v2398
  %v2400 = vmul.f32 %v2020, 1.442695
  %v2401 = vpow.pop %v2400
  %v2402 = vmul.f32 %v2021, 1.442695
  %v2403 = vpow.pop %v2402
  %v2404 = vmul.f32 %v2022, 1.442695
  %v2405 = vpow.pop %v2404
  %v2406 = vmul.f32 %v2023, 1.442695
  %v2407 = vpow.pop %v2406
  %v2408 = vmul.f32 %v2024, 1.442695
  %v2409 = vpow.pop %v2408
  %v2410 = vmul.f32 %v2025, 1.442695
  %v2411 = vpow.pop %v2410
  %v2412 = vmul.f32 %v2026, 1.442695
  %v2413 = vpow.pop %v2412
  %v2414 = vmul.f32 %v2027, 1.442695
  %v2415 = vpow.pop %v2414
  %v2416 = vmul.f32 %v2028, 1.442695
  %v2417 = vpow.pop %v2416
  %v2418 = vmul.f32 %v2029, 1.442695
  %v2419 = vpow.pop %v2418
  %v2420 = vmul.f32 %v2030, 1.442695
  %v2421 = vpow.pop %v2420
  %v2422 = vmul.f32 %v2031, 1.442695
  %v2423 = vpow.pop %v2422
  %v2424 = vadd.f32 %v2033, 1.0
  %v2425 = vadd.f32 %v2035, 1.0
  %v2426 = vadd.f32 %v2037, 1.0
  %v2427 = vadd.f32 %v2039, 1.0
  %v2428 = vadd.f32 %v2041, 1.0
  %v2429 = vadd.f32 %v2043, 1.0
  %v2430 = vadd.f32 %v2045, 1.0
  %v2431 = vadd.f32 %v2047, 1.0
  %v2432 = vadd.f32 %v2049, 1.0
  %v2433 = vadd.f32 %v2051, 1.0
  %v2434 = vadd.f32 %v2053, 1.0
  %v2435 = vadd.f32 %v2055, 1.0
  %v2436 = vadd.f32 %v2057, 1.0
  %v2437 = vadd.f32 %v2059, 1.0
  %v2438 = vadd.f32 %v2061, 1.0
  %v2439 = vadd.f32 %v2063, 1.0
  %v2440 = vadd.f32 %v2065, 1.0
  %v2441 = vadd.f32 %v2067, 1.0
  %v2442 = vadd.f32 %v2069, 1.0
  %v2443 = vadd.f32 %v2071, 1.0
  %v2444 = vadd.f32 %v2073, 1.0
  %v2445 = vadd.f32 %v2075, 1.0
  %v2446 = vadd.f32 %v2077, 1.0
  %v2447 = vadd.f32 %v2079, 1.0
  %v2448 = vadd.f32 %v2081, 1.0
  %v2449 = vadd.f32 %v2083, 1.0
  %v2450 = vadd.f32 %v2085, 1.0
  %v2451 = vadd.f32 %v2087, 1.0
  %v2452 = vadd.f32 %v2089, 1.0
  %v2453 = vadd.f32 %v2091, 1.0
  %v2454 = vadd.f32 %v2093, 1.0
  %v2455 = vadd.f32 %v2095, 1.0
  %v2456 = vadd.f32 %v2097, 1.0
  %v2457 = vadd.f32 %v2099, 1.0
  %v2458 = vadd.f32 %v2101, 1.0
  %v2459 = vadd.f32 %v2103, 1.0
  %v2460 = vadd.f32 %v2105, 1.0
  %v2461 = vadd.f32 %v2107, 1.0
  %v2462 = vadd.f32 %v2109, 1.0
  %v2463 = vadd.f32 %v2111, 1.0
  %v2464 = vadd.f32 %v2113, 1.0
  %v2465 = vadd.f32 %v2115, 1.0
  %v2466 = vadd.f32 %v2117, 1.0
  %v2467 = vadd.f32 %v2119, 1.0
  %v2468 = vadd.f32 %v2121, 1.0
  %v2469 = vadd.f32 %v2123, 1.0
  %v2470 = vadd.f32 %v2125, 1.0
  %v2471 = vadd.f32 %v2127, 1.0
  %v2472 = vadd.f32 %v2129, 1.0
  %v2473 = vadd.f32 %v2131, 1.0
  %v2474 = vadd.f32 %v2133, 1.0
  %v2475 = vadd.f32 %v2135, 1.0
  %v2476 = vadd.f32 %v2137, 1.0
  %v2477 = vadd.f32 %v2139, 1.0
  %v2478 = vadd.f32 %v2141, 1.0
  %v2479 = vadd.f32 %v2143, 1.0
  %v2480 = vadd.f32 %v2145, 1.0
  %v2481 = vadd.f32 %v2147, 1.0
  %v2482 = vadd.f32 %v2149, 1.0
  %v2483 = vadd.f32 %v2151, 1.0
  %v2484 = vadd.f32 %v2153, 1.0
  %v2485 = vadd.f32 %v2155, 1.0
  %v2486 = vadd.f32 %v2157, 1.0
  %v2487 = vadd.f32 %v2159, 1.0
  %v2488 = vadd.f32 %v2161, 1.0
  %v2489 = vadd.f32 %v2163, 1.0
  %v2490 = vadd.f32 %v2165, 1.0
  %v2491 = vadd.f32 %v2167, 1.0
  %v2492 = vadd.f32 %v2169, 1.0
  %v2493 = vadd.f32 %v2171, 1.0
  %v2494 = vadd.f32 %v2173, 1.0
  %v2495 = vadd.f32 %v2175, 1.0
  %v2496 = vadd.f32 %v2177, 1.0
  %v2497 = vadd.f32 %v2179, 1.0
  %v2498 = vadd.f32 %v2181, 1.0
  %v2499 = vadd.f32 %v2183, 1.0
  %v2500 = vadd.f32 %v2185, 1.0
  %v2501 = vadd.f32 %v2187, 1.0
  %v2502 = vadd.f32 %v2189, 1.0
  %v2503 = vadd.f32 %v2191, 1.0
  %v2504 = vadd.f32 %v2193, 1.0
  %v2505 = vadd.f32 %v2195, 1.0
  %v2506 = vadd.f32 %v2197, 1.0
  %v2507 = vadd.f32 %v2199, 1.0
  %v2508 = vadd.f32 %v2201, 1.0
  %v2509 = vadd.f32 %v2203, 1.0
  %v2510 = vadd.f32 %v2205, 1.0
  %v2511 = vadd.f32 %v2207, 1.0
  %v2512 = vadd.f32 %v2209, 1.0
  %v2513 = vadd.f32 %v2211, 1.0
  %v2514 = vadd.f32 %v2213, 1.0
  %v2515 = vadd.f32 %v2215, 1.0
  %v2516 = vadd.f32 %v2217, 1.0
  %v2517 = vadd.f32 %v2219, 1.0
  %v2518 = vadd.f32 %v2221, 1.0
  %v2519 = vadd.f32 %v2223, 1.0
  %v2520 = vadd.f32 %v2225, 1.0
  %v2521 = vadd.f32 %v2227, 1.0
  %v2522 = vadd.f32 %v2229, 1.0
  %v2523 = vadd.f32 %v2231, 1.0
  %v2524 = vadd.f32 %v2233, 1.0
  %v2525 = vadd.f32 %v2235, 1.0
  %v2526 = vadd.f32 %v2237, 1.0
  %v2527 = vadd.f32 %v2239, 1.0
  %v2528 = vadd.f32 %v2241, 1.0
  %v2529 = vadd.f32 %v2243, 1.0
  %v2530 = vadd.f32 %v2245, 1.0
  %v2531 = vadd.f32 %v2247, 1.0
  %v2532 = vadd.f32 %v2249, 1.0
  %v2533 = vadd.f32 %v2251, 1.0
  %v2534 = vadd.f32 %v2253, 1.0
  %v2535 = vadd.f32 %v2255, 1.0
  %v2536 = vadd.f32 %v2257, 1.0
  %v2537 = vadd.f32 %v2259, 1.0
  %v2538 = vadd.f32 %v2261, 1.0
  %v2539 = vadd.f32 %v2263, 1.0
  %v2540 = vadd.f32 %v2265, 1.0
  %v2541 = vadd.f32 %v2267, 1.0
  %v2542 = vadd.f32 %v2269, 1.0
  %v2543 = vadd.f32 %v2271, 1.0
  %v2544 = vadd.f32 %v2273, 1.0
  %v2545 = vadd.f32 %v2275, 1.0
  %v2546 = vadd.f32 %v2277, 1.0
  %v2547 = vadd.f32 %v2279, 1.0
  %v2548 = vadd.f32 %v2281, 1.0
  %v2549 = vadd.f32 %v2283, 1.0
  %v2550 = vadd.f32 %v2285, 1.0
  %v2551 = vadd.f32 %v2287, 1.0
  %v2552 = vadd.f32 %v2289, 1.0
  %v2553 = vadd.f32 %v2291, 1.0
  %v2554 = vadd.f32 %v2293, 1.0
  %v2555 = vadd.f32 %v2295, 1.0
  %v2556 = vadd.f32 %v2297, 1.0
  %v2557 = vadd.f32 %v2299, 1.0
  %v2558 = vadd.f32 %v2301, 1.0
  %v2559 = vadd.f32 %v2303, 1.0
  %v2560 = vadd.f32 %v2305, 1.0
  %v2561 = vadd.f32 %v2307, 1.0
  %v2562 = vadd.f32 %v2309, 1.0
  %v2563 = vadd.f32 %v2311, 1.0
  %v2564 = vadd.f32 %v2313, 1.0
  %v2565 = vadd.f32 %v2315, 1.0
  %v2566 = vadd.f32 %v2317, 1.0
  %v2567 = vadd.f32 %v2319, 1.0
  %v2568 = vadd.f32 %v2321, 1.0
  %v2569 = vadd.f32 %v2323, 1.0
  %v2570 = vadd.f32 %v2325, 1.0
  %v2571 = vadd.f32 %v2327, 1.0
  %v2572 = vadd.f32 %v2329, 1.0
  %v2573 = vadd.f32 %v2331, 1.0
  %v2574 = vadd.f32 %v2333, 1.0
  %v2575 = vadd.f32 %v2335, 1.0
  %v2576 = vadd.f32 %v2337, 1.0
  %v2577 = vadd.f32 %v2339, 1.0
  %v2578 = vadd.f32 %v2341, 1.0
  %v2579 = vadd.f32 %v2343, 1.0
  %v2580 = vadd.f32 %v2345, 1.0
  %v2581 = vadd.f32 %v2347, 1.0
  %v2582 = vadd.f32 %v2349, 1.0
  %v2583 = vadd.f32 %v2351, 1.0
  %v2584 = vadd.f32 %v2353, 1.0
  %v2585 = vadd.f32 %v2355, 1.0
  %v2586 = vadd.f32 %v2357, 1.0
  %v2587 = vadd.f32 %v2359, 1.0
  %v2588 = vadd.f32 %v2361, 1.0
  %v2589 = vadd.f32 %v2363, 1.0
  %v2590 = vadd.f32 %v2365, 1.0
  %v2591 = vadd.f32 %v2367, 1.0
  %v2592 = vadd.f32 %v2369, 1.0
  %v2593 = vadd.f32 %v2371, 1.0
  %v2594 = vadd.f32 %v2373, 1.0
  %v2595 = vadd.f32 %v2375, 1.0
  %v2596 = vadd.f32 %v2377, 1.0
  %v2597 = vadd.f32 %v2379, 1.0
  %v2598 = vadd.f32 %v2381, 1.0
  %v2599 = vadd.f32 %v2383, 1.0
  %v2600 = vadd.f32 %v2385, 1.0
  %v2601 = vadd.f32 %v2387, 1.0
  %v2602 = vadd.f32 %v2389, 1.0
  %v2603 = vadd.f32 %v2391, 1.0
  %v2604 = vadd.f32 %v2393, 1.0
  %v2605 = vadd.f32 %v2395, 1.0
  %v2606 = vadd.f32 %v2397, 1.0
  %v2607 = vadd.f32 %v2399, 1.0
  %v2608 = vadd.f32 %v2401, 1.0
  %v2609 = vadd.f32 %v2403, 1.0
  %v2610 = vadd.f32 %v2405, 1.0
  %v2611 = vadd.f32 %v2407, 1.0
  %v2612 = vadd.f32 %v2409, 1.0
  %v2613 = vadd.f32 %v2411, 1.0
  %v2614 = vadd.f32 %v2413, 1.0
  %v2615 = vadd.f32 %v2415, 1.0
  %v2616 = vadd.f32 %v2417, 1.0
  %v2617 = vadd.f32 %v2419, 1.0
  %v2618 = vadd.f32 %v2421, 1.0
  %v2619 = vadd.f32 %v2423, 1.0
  %v2620 = vrcp.pop %v2424
  %v2621 = vrcp.pop %v2425
  %v2622 = vrcp.pop %v2426
  %v2623 = vrcp.pop %v2427
  %v2624 = vrcp.pop %v2428
  %v2625 = vrcp.pop %v2429
  %v2626 = vrcp.pop %v2430
  %v2627 = vrcp.pop %v2431
  %v2628 = vrcp.pop %v2432
  %v2629 = vrcp.pop %v2433
  %v2630 = vrcp.pop %v2434
  %v2631 = vrcp.pop %v2435
  %v2632 = vrcp.pop %v2436
  %v2633 = vrcp.pop %v2437
  %v2634 = vrcp.pop %v2438
  %v2635 = vrcp.pop %v2439
  %v2636 = vrcp.pop %v2440
  %v2637 = vrcp.pop %v2441
  %v2638 = vrcp.pop %v2442
  %v2639 = vrcp.pop %v2443
  %v2640 = vrcp.pop %v2444
  %v2641 = vrcp.pop %v2445
  %v2642 = vrcp.pop %v2446
  %v2643 = vrcp.pop %v2447
  %v2644 = vrcp.pop %v2448
  %v2645 = vrcp.pop %v2449
  %v2646 = vrcp.pop %v2450
  %v2647 = vrcp.pop %v2451
  %v2648 = vrcp.pop %v2452
  %v2649 = vrcp.pop %v2453
  %v2650 = vrcp.pop %v2454
  %v2651 = vrcp.pop %v2455
  %v2652 = vrcp.pop %v2456
  %v2653 = vrcp.pop %v2457
  %v2654 = vrcp.pop %v2458
  %v2655 = vrcp.pop %v2459
  %v2656 = vrcp.pop %v2460
  %v2657 = vrcp.pop %v2461
  %v2658 = vrcp.pop %v2462
  %v2659 = vrcp.pop %v2463
  %v2660 = vrcp.pop %v2464
  %v2661 = vrcp.pop %v2465
  %v2662 = vrcp.pop %v2466
  %v2663 = vrcp.pop %v2467
  %v2664 = vrcp.pop %v2468
  %v2665 = vrcp.pop %v2469
  %v2666 = vrcp.pop %v2470
  %v2667 = vrcp.pop %v2471
  %v2668 = vrcp.pop %v2472
  %v2669 = vrcp.pop %v2473
  %v2670 = vrcp.pop %v2474
  %v2671 = vrcp.pop %v2475
  %v2672 = vrcp.pop %v2476
  %v2673 = vrcp.pop %v2477
  %v2674 = vrcp.pop %v2478
  %v2675 = vrcp.pop %v2479
  %v2676 = vrcp.pop %v2480
  %v2677 = vrcp.pop %v2481
  %v2678 = vrcp.pop %v2482
  %v2679 = vrcp.pop %v2483
  %v2680 = vrcp.pop %v2484
  %v2681 = vrcp.pop %v2485
  %v2682 = vrcp.pop %v2486
  %v2683 = vrcp.pop %v2487
  %v2684 = vrcp.pop %v2488
  %v2685 = vrcp.pop %v2489
  %v2686 = vrcp.pop %v2490
  %v2687 = vrcp.pop %v2491
  %v2688 = vrcp.pop %v2492
  %v2689 = vrcp.pop %v2493
  %v2690 = vrcp.pop %v2494
  %v2691 = vrcp.pop %v2495
  %v2692 = vrcp.pop %v2496
  %v2693 = vrcp.pop %v2497
  %v2694 = vrcp.pop %v2498
  %v2695 = vrcp.pop %v2499
  %v2696 = vrcp.pop %v2500
  %v2697 = vrcp.pop %v2501
  %v2698 = vrcp.pop %v2502
  %v2699 = vrcp.pop %v2503
  %v2700 = vrcp.pop %v2504
  %v2701 = vrcp.pop %v2505
  %v2702 = vrcp.pop %v2506
  %v2703 = vrcp.pop %v2507
  %v2704 = vrcp.pop %v2508
  %v2705 = vrcp.pop %v2509
  %v2706 = vrcp.pop %v2510
  %v2707 = vrcp.pop %v2511
  %v2708 = vrcp.pop %v2512
  %v2709 = vrcp.pop %v2513
  %v2710 = vrcp.pop %v2514
  %v2711 = vrcp.pop %v2515
  %v2712 = vrcp.pop %v2516
  %v2713 = vrcp.pop %v2517
  %v2714 = vrcp.pop %v2518
  %v2715 = vrcp.pop %v2519
  %v2716 = vrcp.pop %v2520
  %v2717 = vrcp.pop %v2521
  %v2718 = vrcp.pop %v2522
  %v2719 = vrcp.pop %v2523
  %v2720 = vrcp.pop %v2524
  %v2721 = vrcp.pop %v2525
  %v2722 = vrcp.pop %v2526
  %v2723 = vrcp.pop %v2527
  %v2724 = vrcp.pop %v2528
  %v2725 = vrcp.pop %v2529
  %v2726 = vrcp.pop %v2530
  %v2727 = vrcp.pop %v2531
  %v2728 = vrcp.pop %v2532
  %v2729 = vrcp.pop %v2533
  %v2730 = vrcp.pop %v2534
  %v2731 = vrcp.pop %v2535
  %v2732 = vrcp.pop %v2536
  %v2733 = vrcp.pop %v2537
  %v2734 = vrcp.pop %v2538
  %v2735 = vrcp.pop %v2539
  %v2736 = vrcp.pop %v2540
  %v2737 = vrcp.pop %v2541
  %v2738 = vrcp.pop %v2542
  %v2739 = vrcp.pop %v2543
  %v2740 = vrcp.pop %v2544
  %v2741 = vrcp.pop %v2545
  %v2742 = vrcp.pop %v2546
  %v2743 = vrcp.pop %v2547
  %v2744 = vrcp.pop %v2548
  %v2745 = vrcp.pop %v2549
  %v2746 = vrcp.pop %v2550
  %v2747 = vrcp.pop %v2551
  %v2748 = vrcp.pop %v2552
  %v2749 = vrcp.pop %v2553
  %v2750 = vrcp.pop %v2554
  %v2751 = vrcp.pop %v2555
  %v2752 = vrcp.pop %v2556
  %v2753 = vrcp.pop %v2557
  %v2754 = vrcp.pop %v2558
  %v2755 = vrcp.pop %v2559
  %v2756 = vrcp.pop %v2560
  %v2757 = vrcp.pop %v2561
  %v2758 = vrcp.pop %v2562
  %v2759 = vrcp.pop %v2563
  %v2760 = vrcp.pop %v2564
  %v2761 = vrcp.pop %v2565
  %v2762 = vrcp.pop %v2566
  %v2763 = vrcp.pop %v2567
  %v2764 = vrcp.pop %v2568
  %v2765 = vrcp.pop %v2569
  %v2766 = vrcp.pop %v2570
  %v2767 = vrcp.pop %v2571
  %v2768 = vrcp.pop %v2572
  %v2769 = vrcp.pop %v2573
  %v2770 = vrcp.pop %v2574
  %v2771 = vrcp.pop %v2575
  %v2772 = vrcp.pop %v2576
  %v2773 = vrcp.pop %v2577
  %v2774 = vrcp.pop %v2578
  %v2775 = vrcp.pop %v2579
  %v2776 = vrcp.pop %v2580
  %v2777 = vrcp.pop %v2581
  %v2778 = vrcp.pop %v2582
  %v2779 = vrcp.pop %v2583
  %v2780 = vrcp.pop %v2584
  %v2781 = vrcp.pop %v2585
  %v2782 = vrcp.pop %v2586
  %v2783 = vrcp.pop %v2587
  %v2784 = vrcp.pop %v2588
  %v2785 = vrcp.pop %v2589
  %v2786 = vrcp.pop %v2590
  %v2787 = vrcp.pop %v2591
  %v2788 = vrcp.pop %v2592
  %v2789 = vrcp.pop %v2593
  %v2790 = vrcp.pop %v2594
  %v2791 = vrcp.pop %v2595
  %v2792 = vrcp.pop %v2596
  %v2793 = vrcp.pop %v2597
  %v2794 = vrcp.pop %v2598
  %v2795 = vrcp.pop %v2599
  %v2796 = vrcp.pop %v2600
  %v2797 = vrcp.pop %v2601
  %v2798 = vrcp.pop %v2602
  %v2799 = vrcp.pop %v2603
  %v2800 = vrcp.pop %v2604
  %v2801 = vrcp.pop %v2605
  %v2802 = vrcp.pop %v2606
  %v2803 = vrcp.pop %v2607
  %v2804 = vrcp.pop %v2608
  %v2805 = vrcp.pop %v2609
  %v2806 = vrcp.pop %v2610
  %v2807 = vrcp.pop %v2611
  %v2808 = vrcp.pop %v2612
  %v2809 = vrcp.pop %v2613
  %v2810 = vrcp.pop %v2614
  %v2811 = vrcp.pop %v2615
  %v2812 = vrcp.pop %v2616
  %v2813 = vrcp.pop %v2617
  %v2814 = vrcp.pop %v2618
  %v2815 = vrcp.pop %v2619
  %v2816 = vadd.f32 %v2620, %v2669
  %v2817 = vadd.f32 %v2621, %v2670
  %v2818 = vadd.f32 %v2622, %v2671
  %v2819 = vadd.f32 %v2623, %v2672
  %v2820 = vadd.f32 %v2624, %v2673
  %v2821 = vadd.f32 %v2625, %v2674
  %v2822 = vadd.f32 %v2626, %v2675
  %v2823 = vadd.f32 %v2627, %v2676
  %v2824 = vadd.f32 %v2628, %v2677
  %v2825 = vadd.f32 %v2629, %v2678
  %v2826 = vadd.f32 %v2630, %v2679
  %v2827 = vadd.f32 %v2631, %v2680
  %v2828 = vadd.f32 %v2632, %v2681
  %v2829 = vadd.f32 %v2633, %v2682
  %v2830 = vadd.f32 %v2634, %v2683
  %v2831 = vadd.f32 %v2635, %v2684
  %v2832 = vadd.f32 %v2636, %v2685
  %v2833 = vadd.f32 %v2637, %v2686
  %v2834 = vadd.f32 %v2638, %v2687
  %v2835 = vadd.f32 %v2639, %v2688
  %v2836 = vadd.f32 %v2640, %v2689
  %v2837 = vadd.f32 %v2641, %v2690
  %v2838 = vadd.f32 %v2642, %v2691
  %v2839 = vadd.f32 %v2643, %v2692
  %v2840 = vadd.f32 %v2644, %v2693
  %v2841 = vadd.f32 %v2645, %v2694
  %v2842 = vadd.f32 %v2646, %v2695
  %v2843 = vadd.f32 %v2647, %v2696
  %v2844 = vadd.f32 %v2648, %v2697
  %v2845 = vadd.f32 %v2649, %v2698
  %v2846 = vadd.f32 %v2650, %v2699
  %v2847 = vadd.f32 %v2651, %v2700
  %v2848 = vadd.f32 %v2652, %v2701
  %v2849 = vadd.f32 %v2653, %v2702
  %v2850 = vadd.f32 %v2654, %v2703
  %v2851 = vadd.f32 %v2655, %v2704
  %v2852 = vadd.f32 %v2656, %v2705
  %v2853 = vadd.f32 %v2657, %v2706
  %v2854 = vadd.f32 %v2658, %v2707
  %v2855 = vadd.f32 %v2659, %v2708
  %v2856 = vadd.f32 %v2660, %v2709
  %v2857 = vadd.f32 %v2661, %v2710
  %v2858 = vadd.f32 %v2662, %v2711
  %v2859 = vadd.f32 %v2663, %v2712
  %v2860 = vadd.f32 %v2664, %v2713
  %v2861 = vadd.f32 %v2665, %v2714
  %v2862 = vadd.f32 %v2666, %v2715
  %v2863 = vadd.f32 %v2667, %v2716
  %v2864 = vadd.f32 %v2668, %v2717
  %v2865 = vadd.f32 %v2816, %v2718
  %v2866 = vadd.f32 %v2817, %v2719
  %v2867 = vadd.f32 %v2818, %v2720
  %v2868 = vadd.f32 %v2819, %v2721
  %v2869 = vadd.f32 %v2820, %v2722
  %v2870 = vadd.f32 %v2821, %v2723
  %v2871 = vadd.f32 %v2822, %v2724
  %v2872 = vadd.f32 %v2823, %v2725
  %v2873 = vadd.f32 %v2824, %v2726
  %v2874 = vadd.f32 %v2825, %v2727
  %v2875 = vadd.f32 %v2826, %v2728
  %v2876 = vadd.f32 %v2827, %v2729
  %v2877 = vadd.f32 %v2828, %v2730
  %v2878 = vadd.f32 %v2829, %v2731
  %v2879 = vadd.f32 %v2830, %v2732
  %v2880 = vadd.f32 %v2831, %v2733
  %v2881 = vadd.f32 %v2832, %v2734
  %v2882 = vadd.f32 %v2833, %v2735
  %v2883 = vadd.f32 %v2834, %v2736
  %v2884 = vadd.f32 %v2835, %v2737
  %v2885 = vadd.f32 %v2836, %v2738
  %v2886 = vadd.f32 %v2837, %v2739
  %v2887 = vadd.f32 %v2838, %v2740
  %v2888 = vadd.f32 %v2839, %v2741
  %v2889 = vadd.f32 %v2840, %v2742
  %v2890 = vadd.f32 %v2841, %v2743
  %v2891 = vadd.f32 %v2842, %v2744
  %v2892 = vadd.f32 %v2843, %v2745
  %v2893 = vadd.f32 %v2844, %v2746
  %v2894 = vadd.f32 %v2845, %v2747
  %v2895 = vadd.f32 %v2846, %v2748
  %v2896 = vadd.f32 %v2847, %v2749
  %v2897 = vadd.f32 %v2848, %v2750
  %v2898 = vadd.f32 %v2849, %v2751
  %v2899 = vadd.f32 %v2850, %v2752
  %v2900 = vadd.f32 %v2851, %v2753
  %v2901 = vadd.f32 %v2852, %v2754
  %v2902 = vadd.f32 %v2853, %v2755
  %v2903 = vadd.f32 %v2854, %v2756
  %v2904 = vadd.f32 %v2855, %v2757
  %v2905 = vadd.f32 %v2856, %v2758
  %v2906 = vadd.f32 %v2857, %v2759
  %v2907 = vadd.f32 %v2858, %v2760
  %v2908 = vadd.f32 %v2859, %v2761
  %v2909 = vadd.f32 %v2860, %v2762
  %v2910 = vadd.f32 %v2861, %v2763
  %v2911 = vadd.f32 %v2862, %v2764
  %v2912 = vadd.f32 %v2863, %v2765
  %v2913 = vadd.f32 %v2864, %v2766
  %v2914 = vadd.f32 %v2865, %v2767
  %v2915 = vadd.f32 %v2866, %v2768
  %v2916 = vadd.f32 %v2867, %v2769
  %v2917 = vadd.f32 %v2868, %v2770
  %v2918 = vadd.f32 %v2869, %v2771
  %v2919 = vadd.f32 %v2870, %v2772
  %v2920 = vadd.f32 %v2871, %v2773
  %v2921 = vadd.f32 %v2872, %v2774
  %v2922 = vadd.f32 %v2873, %v2775
  %v2923 = vadd.f32 %v2874, %v2776
  %v2924 = vadd.f32 %v2875, %v2777
  %v2925 = vadd.f32 %v2876, %v2778
  %v2926 = vadd.f32 %v2877, %v2779
  %v2927 = vadd.f32 %v2878, %v2780
  %v2928 = vadd.f32 %v2879, %v2781
  %v2929 = vadd.f32 %v2880, %v2782
  %v2930 = vadd.f32 %v2881, %v2783
  %v2931 = vadd.f32 %v2882, %v2784
  %v2932 = vadd.f32 %v2883, %v2785
  %v2933 = vadd.f32 %v2884, %v2786
  %v2934 = vadd.f32 %v2885, %v2787
  %v2935 = vadd.f32 %v2886, %v2788
  %v2936 = vadd.f32 %v2887, %v2789
  %v2937 = vadd.f32 %v2888, %v2790
  %v2938 = vadd.f32 %v2889, %v2791
  %v2939 = vadd.f32 %v2890, %v2792
  %v2940 = vadd.f32 %v2891, %v2793
  %v2941 = vadd.f32 %v2892, %v2794
  %v2942 = vadd.f32 %v2893, %v2795
  %v2943 = vadd.f32 %v2894, %v2796
  %v2944 = vadd.f32 %v2895, %v2797
  %v2945 = vadd.f32 %v2896, %v2798
  %v2946 = vadd.f32 %v2897, %v2799
  %v2947 = vadd.f32 %v2898, %v2800
  %v2948 = vadd.f32 %v2899, %v2801
  %v2949 = vadd.f32 %v2900, %v2802
  %v2950 = vadd.f32 %v2901, %v2803
  %v2951 = vadd.f32 %v2902, %v2804
  %v2952 = vadd.f32 %v2903, %v2805
  %v2953 = vadd.f32 %v2904, %v2806
  %v2954 = vadd.f32 %v2905, %v2807
  %v2955 = vadd.f32 %v2906, %v2808
  %v2956 = vadd.f32 %v2907, %v2809
  %v2957 = vadd.f32 %v2908, %v2810
  %v2958 = vadd.f32 %v2909, %v2811
  %v2959 = vadd.f32 %v2910, %v2812
  %v2960 = vadd.f32 %v2911, %v2813
  %v2961 = vadd.f32 %v2912, %v2814
  %v2962 = vadd.f32 %v2913, %v2815
  %v2963 = vmul.f32 %v2914, 0.25
  %v2964 = vmul.f32 %v2915, 0.25
  %v2965 = vmul.f32 %v2916, 0.25
  %v2966 = vmul.f32 %v2917, 0.25
  %v2967 = vmul.f32 %v2918, 0.25
  %v2968 = vmul.f32 %v2919, 0.25
  %v2969 = vmul.f32 %v2920, 0.25
  %v2970 = vmul.f32 %v2921, 0.25
  %v2971 = vmul.f32 %v2922, 0.25
  %v2972 = vmul.f32 %v2923, 0.25
  %v2973 = vmul.f32 %v2924, 0.25
  %v2974 = vmul.f32 %v2925, 0.25
  %v2975 = vmul.f32 %v2926, 0.25
  %v2976 = vmul.f32 %v2927, 0.25
  %v2977 = vmul.f32 %v2928, 0.25
  %v2978 = vmul.f32 %v2929, 0.25
  %v2979 = vmul.f32 %v2930, 0.25
  %v2980 = vmul.f32 %v2931, 0.25
  %v2981 = vmul.f32 %v2932, 0.25
  %v2982 = vmul.f32 %v2933, 0.25
  %v2983 = vmul.f32 %v2934, 0.25
  %v2984 = vmul.f32 %v2935, 0.25
  %v2985 = vmul.f32 %v2936, 0.25
  %v2986 = vmul.f32 %v2937, 0.25
  %v2987 = vmul.f32 %v2938, 0.25
  %v2988 = vmul.f32 %v2939, 0.25
  %v2989 = vmul.f32 %v2940, 0.25
  %v2990 = vmul.f32 %v2941, 0.25
  %v2991 = vmul.f32 %v2942, 0.25
  %v2992 = vmul.f32 %v2943, 0.25
  %v2993 = vmul.f32 %v2944, 0.25
  %v2994 = vmul.f32 %v2945, 0.25
  %v2995 = vmul.f32 %v2946, 0.25
  %v2996 = vmul.f32 %v2947, 0.25
  %v2997 = vmul.f32 %v2948, 0.25
  %v2998 = vmul.f32 %v2949, 0.25
  %v2999 = vmul.f32 %v2950, 0.25
  %v3000 = vmul.f32 %v2951, 0.25
  %v3001 = vmul.f32 %v2952, 0.25
  %v3002 = vmul.f32 %v2953, 0.25
  %v3003 = vmul.f32 %v2954, 0.25
  %v3004 = vmul.f32 %v2955, 0.25
  %v3005 = vmul.f32 %v2956, 0.25
  %v3006 = vmul.f32 %v2957, 0.25
  %v3007 = vmul.f32 %v2958, 0.25
  %v3008 = vmul.f32 %v2959, 0.25
  %v3009 = vmul.f32 %v2960, 0.25
  %v3010 = vmul.f32 %v2961, 0.25
  %v3011 = vmul.f32 %v2962, 0.25
  %v3012 = vpack.c.bf16 %v2964, %v2963
  %v3013 = vpack.c.bf16 %v2966, %v2965
  %v3014 = vpack.c.bf16 %v2968, %v2967
  %v3015 = vpack.c.bf16 %v2970, %v2969
  %v3016 = vpack.c.bf16 %v2972, %v2971
  %v3017 = vpack.c.bf16 %v2974, %v2973
  %v3018 = vpack.c.bf16 %v2976, %v2975
  %v3019 = vpack.c.bf16 %v2978, %v2977
  %v3020 = vpack.c.bf16 %v2980, %v2979
  %v3021 = vpack.c.bf16 %v2982, %v2981
  %v3022 = vpack.c.bf16 %v2984, %v2983
  %v3023 = vpack.c.bf16 %v2986, %v2985
  %v3024 = vpack.c.bf16 %v2988, %v2987
  %v3025 = vpack.c.bf16 %v2990, %v2989
  %v3026 = vpack.c.bf16 %v2992, %v2991
  %v3027 = vpack.c.bf16 %v2994, %v2993
  %v3028 = vpack.c.bf16 %v2996, %v2995
  %v3029 = vpack.c.bf16 %v2998, %v2997
  %v3030 = vpack.c.bf16 %v3000, %v2999
  %v3031 = vpack.c.bf16 %v3002, %v3001
  %v3032 = vpack.c.bf16 %v3004, %v3003
  %v3033 = vpack.c.bf16 %v3006, %v3005
  %v3034 = vpack.c.bf16 %v3008, %v3007
  %v3035 = vpack.c.bf16 %v3010, %v3009
  %v3036 = vpack.c.bf16 %v3011, %v3011
  %v3062 = vunpack.c.l.b16 %v3012
  %v3063 = vunpack.c.h.b16 %v3012
  %v3064 = vunpack.c.l.b16 %v3013
  %v3065 = vunpack.c.h.b16 %v3013
  %v3066 = vunpack.c.l.b16 %v3014
  %v3067 = vunpack.c.h.b16 %v3014
  %v3068 = vunpack.c.l.b16 %v3015
  %v3069 = vunpack.c.h.b16 %v3015
  %v3070 = vunpack.c.l.b16 %v3016
  %v3071 = vunpack.c.h.b16 %v3016
  %v3072 = vunpack.c.l.b16 %v3017
  %v3073 = vunpack.c.h.b16 %v3017
  %v3074 = vunpack.c.l.b16 %v3018
  %v3075 = vunpack.c.h.b16 %v3018
  %v3076 = vunpack.c.l.b16 %v3019
  %v3077 = vunpack.c.h.b16 %v3019
  %v3078 = vunpack.c.l.b16 %v3020
  %v3079 = vunpack.c.h.b16 %v3020
  %v3080 = vunpack.c.l.b16 %v3021
  %v3081 = vunpack.c.h.b16 %v3021
  %v3082 = vunpack.c.l.b16 %v3022
  %v3083 = vunpack.c.h.b16 %v3022
  %v3084 = vunpack.c.l.b16 %v3023
  %v3085 = vunpack.c.h.b16 %v3023
  %v3086 = vunpack.c.l.b16 %v3024
  %v3087 = vunpack.c.h.b16 %v3024
  %v3088 = vunpack.c.l.b16 %v3025
  %v3089 = vunpack.c.h.b16 %v3025
  %v3090 = vunpack.c.l.b16 %v3026
  %v3091 = vunpack.c.h.b16 %v3026
  %v3092 = vunpack.c.l.b16 %v3027
  %v3093 = vunpack.c.h.b16 %v3027
  %v3094 = vunpack.c.l.b16 %v3028
  %v3095 = vunpack.c.h.b16 %v3028
  %v3096 = vunpack.c.l.b16 %v3029
  %v3097 = vunpack.c.h.b16 %v3029
  %v3098 = vunpack.c.l.b16 %v3030
  %v3099 = vunpack.c.h.b16 %v3030
  %v3100 = vunpack.c.l.b16 %v3031
  %v3101 = vunpack.c.h.b16 %v3031
  %v3102 = vunpack.c.l.b16 %v3032
  %v3103 = vunpack.c.h.b16 %v3032
  %v3104 = vunpack.c.l.b16 %v3033
  %v3105 = vunpack.c.h.b16 %v3033
  %v3106 = vunpack.c.l.b16 %v3034
  %v3107 = vunpack.c.h.b16 %v3034
  %v3108 = vunpack.c.l.b16 %v3035
  %v3109 = vunpack.c.h.b16 %v3035
  %v3110 = vunpack.c.l.b16 %v3036
  %v3111 = vpack.c.b16 %v3062, %v3062
  %v3112 = vpack.c.b16 %v3063, %v3063
  %v3113 = vpack.c.b16 %v3064, %v3064
  %v3114 = vpack.c.b16 %v3065, %v3065
  %v3115 = vpack.c.b16 %v3066, %v3066
  %v3116 = vpack.c.b16 %v3067, %v3067
  %v3117 = vpack.c.b16 %v3068, %v3068
  %v3118 = vpack.c.b16 %v3069, %v3069
  %v3119 = vpack.c.b16 %v3070, %v3070
  %v3120 = vpack.c.b16 %v3071, %v3071
  %v3121 = vpack.c.b16 %v3072, %v3072
  %v3122 = vpack.c.b16 %v3073, %v3073
  %v3123 = vpack.c.b16 %v3074, %v3074
  %v3124 = vpack.c.b16 %v3075, %v3075
  %v3125 = vpack.c.b16 %v3076, %v3076
  %v3126 = vpack.c.b16 %v3077, %v3077
  %v3127 = vpack.c.b16 %v3078, %v3078
  %v3128 = vpack.c.b16 %v3079, %v3079
  %v3129 = vpack.c.b16 %v3080, %v3080
  %v3130 = vpack.c.b16 %v3081, %v3081
  %v3131 = vpack.c.b16 %v3082, %v3082
  %v3132 = vpack.c.b16 %v3083, %v3083
  %v3133 = vpack.c.b16 %v3084, %v3084
  %v3134 = vpack.c.b16 %v3085, %v3085
  %v3135 = vpack.c.b16 %v3086, %v3086
  %v3136 = vpack.c.b16 %v3087, %v3087
  %v3137 = vpack.c.b16 %v3088, %v3088
  %v3138 = vpack.c.b16 %v3089, %v3089
  %v3139 = vpack.c.b16 %v3090, %v3090
  %v3140 = vpack.c.b16 %v3091, %v3091
  %v3141 = vpack.c.b16 %v3092, %v3092
  %v3142 = vpack.c.b16 %v3093, %v3093
  %v3143 = vpack.c.b16 %v3094, %v3094
  %v3144 = vpack.c.b16 %v3095, %v3095
  %v3145 = vpack.c.b16 %v3096, %v3096
  %v3146 = vpack.c.b16 %v3097, %v3097
  %v3147 = vpack.c.b16 %v3098, %v3098
  %v3148 = vpack.c.b16 %v3099, %v3099
  %v3149 = vpack.c.b16 %v3100, %v3100
  %v3150 = vpack.c.b16 %v3101, %v3101
  %v3151 = vpack.c.b16 %v3102, %v3102
  %v3152 = vpack.c.b16 %v3103, %v3103
  %v3153 = vpack.c.b16 %v3104, %v3104
  %v3154 = vpack.c.b16 %v3105, %v3105
  %v3155 = vpack.c.b16 %v3106, %v3106
  %v3156 = vpack.c.b16 %v3107, %v3107
  %v3157 = vpack.c.b16 %v3108, %v3108
  %v3158 = vpack.c.b16 %v3109, %v3109
  %v3159 = vpack.c.b16 %v3110, %v3110
  %3209 = vst [vmem:[%s3] sm:$0xf] %v3111
  %3210 = vst [vmem:[%s3 + $0x4] sm:$0xf] %v3112
  %3211 = vst [vmem:[%s3 + $0x8] sm:$0xf] %v3113
  %3212 = vst [vmem:[%s3 + $0xc] sm:$0xf] %v3114
  %3213 = vst [vmem:[%s3 + $0x10] sm:$0xf] %v3115
  %3214 = vst [vmem:[%s3 + $0x14] sm:$0xf] %v3116
  %3215 = vst [vmem:[%s3 + $0x18] sm:$0xf] %v3117
  %3216 = vst [vmem:[%s3 + $0x1c] sm:$0xf] %v3118
  %3217 = vst [vmem:[%s3 + $0x20] sm:$0xf] %v3119
  %3218 = vst [vmem:[%s3 + $0x24] sm:$0xf] %v3120
  %3219 = vst [vmem:[%s3 + $0x28] sm:$0xf] %v3121
  %3220 = vst [vmem:[%s3 + $0x2c] sm:$0xf] %v3122
  %3221 = vst [vmem:[%s3 + $0x30] sm:$0xf] %v3123
  %3222 = vst [vmem:[%s3 + $0x34] sm:$0xf] %v3124
  %3223 = vst [vmem:[%s3 + $0x38] sm:$0xf] %v3125
  %3224 = vst [vmem:[%s3 + $0x3c] sm:$0xf] %v3126
  %3225 = vst [vmem:[%s3 + $0x40] sm:$0xf] %v3127
  %3226 = vst [vmem:[%s3 + $0x44] sm:$0xf] %v3128
  %3227 = vst [vmem:[%s3 + $0x48] sm:$0xf] %v3129
  %3228 = vst [vmem:[%s3 + $0x4c] sm:$0xf] %v3130
  %3229 = vst [vmem:[%s3 + $0x50] sm:$0xf] %v3131
  %3230 = vst [vmem:[%s3 + $0x54] sm:$0xf] %v3132
  %3231 = vst [vmem:[%s3 + $0x58] sm:$0xf] %v3133
  %3232 = vst [vmem:[%s3 + $0x5c] sm:$0xf] %v3134
  %3233 = vst [vmem:[%s3 + $0x60] sm:$0xf] %v3135
  %3234 = vst [vmem:[%s3 + $0x64] sm:$0xf] %v3136
  %3235 = vst [vmem:[%s3 + $0x68] sm:$0xf] %v3137
  %3236 = vst [vmem:[%s3 + $0x6c] sm:$0xf] %v3138
  %3237 = vst [vmem:[%s3 + $0x70] sm:$0xf] %v3139
  %3238 = vst [vmem:[%s3 + $0x74] sm:$0xf] %v3140
  %3239 = vst [vmem:[%s3 + $0x78] sm:$0xf] %v3141
  %3240 = vst [vmem:[%s3 + $0x7c] sm:$0xf] %v3142
  %3241 = vst [vmem:[%s3 + $0x80] sm:$0xf] %v3143
  %3242 = vst [vmem:[%s3 + $0x84] sm:$0xf] %v3144
  %3243 = vst [vmem:[%s3 + $0x88] sm:$0xf] %v3145
  %3244 = vst [vmem:[%s3 + $0x8c] sm:$0xf] %v3146
  %3245 = vst [vmem:[%s3 + $0x90] sm:$0xf] %v3147
  %3246 = vst [vmem:[%s3 + $0x94] sm:$0xf] %v3148
  %3247 = vst [vmem:[%s3 + $0x98] sm:$0xf] %v3149
  %3248 = vst [vmem:[%s3 + $0x9c] sm:$0xf] %v3150
  %3249 = vst [vmem:[%s3 + $0xa0] sm:$0xf] %v3151
  %3250 = vst [vmem:[%s3 + $0xa4] sm:$0xf] %v3152
  %3251 = vst [vmem:[%s3 + $0xa8] sm:$0xf] %v3153
  %3252 = vst [vmem:[%s3 + $0xac] sm:$0xf] %v3154
  %3253 = vst [vmem:[%s3 + $0xb0] sm:$0xf] %v3155
  %3254 = vst [vmem:[%s3 + $0xb4] sm:$0xf] %v3156
  %3255 = vst [vmem:[%s3 + $0xb8] sm:$0xf] %v3157
  %3256 = vst [vmem:[%s3 + $0xbc] sm:$0xf] %v3158
  %3257 = vst [vmem:[%s3 + $0xc0] sm:$0xf] %v3159
  // Predicated region
  $region14: #{lenet5_forward.2} parent=0 // pred_check
    _
  $region15: #{lenet5_forward.2} parent=0 // pred_check_branch
    %3259 = sbr.rel (0) target = $region17
  $region16: #{lenet5_forward.2} parent=0 // pred_region
    _
  $region17: #{lenet5_forward.2} parent=0 // pred_fallthru
    _
  // Predicated region
  $region18: #{lenet5_forward.2} parent=0 // pred_check
    _
  $region19: #{lenet5_forward.2} parent=0 // pred_check_branch
    %3261 = sbr.rel (0) target = $region21
  $region20: #{lenet5_forward.2} parent=0 // pred_region
    _
  $region21: #{lenet5_forward.2} parent=0 // pred_fallthru
    _

// kernel: lenet5_forward.3
$region0: #{lenet5_forward.3}
  #allocation0 [shape = 'u32[]', space=smem, size = 0x4, offset = 0x4, fixed_abs, tag = 'smem constant byte address 0x4 - core index']
  #allocation1 [shape = 'u32[144,128]{1,0:T(1,128)}', space=vmem, size = 0x12000, scoped, tag = 'internal scratch']
  %s0 = inlined_call_operand.vmem [shape: bf16[800,152], index: 0, kind: input, shape index: {}]
  %s1 = inlined_call_operand.vmem [shape: bf16[152,128], index: 1, kind: input, shape index: {}]
  %s2 = inlined_call_operand.vmem [shape: f32[1,128], index: 2, kind: input, shape index: {}]
  %s3 = inlined_call_operand.vmem [shape: bf16[25,128,128], index: 3, kind: input, shape index: {}]
  %s4 = inlined_call_operand.vmem [shape: f32[1,128], index: 4, kind: input, shape index: {}]
  %s5 = inlined_call_operand.vmem [shape: bf16[128,128], index: 5, kind: input, shape index: {}]
  %s6 = inlined_call_operand.vmem [shape: f32[1,128], index: 6, kind: input, shape index: {}]
  %s7 = inlined_call_operand.vmem [shape: bf16[128,128], index: 7, kind: input, shape index: {}]
  %s8 = inlined_call_operand.vmem [shape: f32[1,128], index: 8, kind: input, shape index: {}]
  %s9 = inlined_call_operand.vmem [shape: f32[8,128], index: 9, kind: output, shape index: {}]
  %s10 = sld [smem:[#allocation0]]
  $region46: #{lenet5_forward.3} parent=0
    _
  %s12 = ssub.s32 1, %s10
  %s13 = scalar_select 0, %s12, %s10
  // Predicated region
  $region2: #{lenet5_forward.3} parent=0 // pred_check
    _
  $region3: #{lenet5_forward.3} parent=0 // pred_check_branch
    %15 = sbr.rel (0) target = $region5
  $region4: #{lenet5_forward.3} parent=0 // pred_region
    _
  $region5: #{lenet5_forward.3} parent=0 // pred_fallthru
    _
  // Predicated region
  $region6: #{lenet5_forward.3} parent=0 // pred_check
    _
  $region7: #{lenet5_forward.3} parent=0 // pred_check_branch
    %17 = sbr.rel (0) target = $region9
  $region8: #{lenet5_forward.3} parent=0 // pred_region
    _
  $region9: #{lenet5_forward.3} parent=0 // pred_fallthru
    _
  // Predicated region
  $region10: #{lenet5_forward.3} parent=0 // pred_check
    _
  $region11: #{lenet5_forward.3} parent=0 // pred_check_branch
    %19 = sbr.rel (0) target = $region13
  $region12: #{lenet5_forward.3} parent=0 // pred_region
    _
  $region13: #{lenet5_forward.3} parent=0 // pred_fallthru
    _
  // Predicated region
  $region14: #{lenet5_forward.3} parent=0 // pred_check
    _
  $region15: #{lenet5_forward.3} parent=0 // pred_check_branch
    %21 = sbr.rel (0) target = $region17
  $region16: #{lenet5_forward.3} parent=0 // pred_region
    _
  $region17: #{lenet5_forward.3} parent=0 // pred_fallthru
    _
  // Predicated region
  $region18: #{lenet5_forward.3} parent=0 // pred_check
    _
  $region19: #{lenet5_forward.3} parent=0 // pred_check_branch
    %23 = sbr.rel (0) target = $region21
  $region20: #{lenet5_forward.3} parent=0 // pred_region
    _
  $region21: #{lenet5_forward.3} parent=0 // pred_fallthru
    _
  // Predicated region
  $region22: #{lenet5_forward.3} parent=0 // pred_check
    _
  $region23: #{lenet5_forward.3} parent=0 // pred_check_branch
    %25 = sbr.rel (0) target = $region25
  $region24: #{lenet5_forward.3} parent=0 // pred_region
    _
  $region25: #{lenet5_forward.3} parent=0 // pred_fallthru
    _
  // Predicated region
  $region26: #{lenet5_forward.3} parent=0 // pred_check
    _
  $region27: #{lenet5_forward.3} parent=0 // pred_check_branch
    %27 = sbr.rel (0) target = $region29
  $region28: #{lenet5_forward.3} parent=0 // pred_region
    _
  $region29: #{lenet5_forward.3} parent=0 // pred_fallthru
    _
  // Predicated region
  $region30: #{lenet5_forward.3} parent=0 // pred_check
    _
  $region31: #{lenet5_forward.3} parent=0 // pred_check_branch
    %29 = sbr.rel (0) target = $region33
  $region32: #{lenet5_forward.3} parent=0 // pred_region
    _
  $region33: #{lenet5_forward.3} parent=0 // pred_fallthru
    _
  // Predicated region
  $region34: #{lenet5_forward.3} parent=0 // pred_check
    _
  $region35: #{lenet5_forward.3} parent=0 // pred_check_branch
    %31 = sbr.rel (0) target = $region37
  $region36: #{lenet5_forward.3} parent=0 // pred_region
    _
  $region37: #{lenet5_forward.3} parent=0 // pred_fallthru
    _
  %v33 = vld [vmem:[%s0] sm:$0xff]
  %v34 = vld [vmem:[%s0 + $0x8] sm:$0xff]
  %v35 = vld [vmem:[%s0 + $0x10] sm:$0xff]
  %v36 = vld [vmem:[%s0 + $0x18] sm:$0xff]
  %v37 = vld [vmem:[%s0 + $0x20] sm:$0xff]
  %v38 = vld [vmem:[%s0 + $0x28] sm:$0xff]
  %v39 = vld [vmem:[%s0 + $0x30] sm:$0xff]
  %v40 = vld [vmem:[%s0 + $0x38] sm:$0xff]
  %v41 = vld [vmem:[%s0 + $0x40] sm:$0xff]
  %v42 = vld [vmem:[%s0 + $0x48] sm:$0xff]
  %v43 = vld [vmem:[%s0 + $0x50] sm:$0xff]
  %v44 = vld [vmem:[%s0 + $0x58] sm:$0xff]
  %v45 = vld [vmem:[%s0 + $0x60] sm:$0xff]
  %v46 = vld [vmem:[%s0 + $0x68] sm:$0xff]
  %v47 = vld [vmem:[%s0 + $0x70] sm:$0xff]
  %v48 = vld [vmem:[%s0 + $0x78] sm:$0xff]
  %v49 = vld [vmem:[%s0 + $0x80] sm:$0xff]
  %v50 = vld [vmem:[%s0 + $0x88] sm:$0xff]
  %v51 = vld [vmem:[%s0 + $0x90] sm:$0xff]
  %v52 = vld [vmem:[%s0 + $0x98] sm:$0xff]
  %v53 = vld [vmem:[%s0 + $0xa0] sm:$0xff]
  %v54 = vld [vmem:[%s0 + $0xa8] sm:$0xff]
  %v55 = vld [vmem:[%s0 + $0xb0] sm:$0xff]
  %v56 = vld [vmem:[%s0 + $0xb8] sm:$0xff]
  %v57 = vld [vmem:[%s0 + $0xc0] sm:$0xff]
  %v58 = vld [vmem:[%s0 + $0xc8] sm:$0xff]
  %v59 = vld [vmem:[%s0 + $0xd0] sm:$0xff]
  %v60 = vld [vmem:[%s0 + $0xd8] sm:$0xff]
  %v61 = vld [vmem:[%s0 + $0xe0] sm:$0xff]
  %v62 = vld [vmem:[%s0 + $0xe8] sm:$0xff]
  %v63 = vld [vmem:[%s0 + $0xf0] sm:$0xff]
  %v64 = vld [vmem:[%s0 + $0xf8] sm:$0xff]
  %v65 = vld [vmem:[%s0 + $0x100] sm:$0xff]
  %v66 = vld [vmem:[%s0 + $0x108] sm:$0xff]
  %v67 = vld [vmem:[%s0 + $0x110] sm:$0xff]
  %v68 = vld [vmem:[%s0 + $0x118] sm:$0xff]
  %v69 = vld [vmem:[%s0 + $0x120] sm:$0xff]
  %v70 = vld [vmem:[%s0 + $0x128] sm:$0xff]
  %v71 = vld [vmem:[%s0 + $0x130] sm:$0xff]
  %v72 = vld [vmem:[%s0 + $0x138] sm:$0xff]
  %v73 = vld [vmem:[%s0 + $0x140] sm:$0xff]
  %v74 = vld [vmem:[%s0 + $0x148] sm:$0xff]
  %v75 = vld [vmem:[%s0 + $0x150] sm:$0xff]
  %v76 = vld [vmem:[%s0 + $0x158] sm:$0xff]
  %v77 = vld [vmem:[%s0 + $0x160] sm:$0xff]
  %v78 = vld [vmem:[%s0 + $0x168] sm:$0xff]
  %v79 = vld [vmem:[%s0 + $0x170] sm:$0xff]
  %v80 = vld [vmem:[%s0 + $0x178] sm:$0xff]
  %v81 = vld [vmem:[%s0 + $0x180] sm:$0xff]
  %v82 = vld [vmem:[%s0 + $0x188] sm:$0xff]
  %v83 = vld [vmem:[%s0 + $0x190] sm:$0xff]
  %v84 = vld [vmem:[%s0 + $0x198] sm:$0xff]
  %v85 = vld [vmem:[%s0 + $0x1a0] sm:$0xff]
  %v86 = vld [vmem:[%s0 + $0x1a8] sm:$0xff]
  %v87 = vld [vmem:[%s0 + $0x1b0] sm:$0xff]
  %v88 = vld [vmem:[%s0 + $0x1b8] sm:$0xff]
  %v89 = vld [vmem:[%s0 + $0x1c0] sm:$0xff]
  %v90 = vld [vmem:[%s0 + $0x1c8] sm:$0xff]
  %v91 = vld [vmem:[%s0 + $0x1d0] sm:$0xff]
  %v92 = vld [vmem:[%s0 + $0x1d8] sm:$0xff]
  %v93 = vld [vmem:[%s0 + $0x1e0] sm:$0xff]
  %v94 = vld [vmem:[%s0 + $0x1e8] sm:$0xff]
  %v95 = vld [vmem:[%s0 + $0x1f0] sm:$0xff]
  %v96 = vld [vmem:[%s0 + $0x1f8] sm:$0xff]
  %v97 = vld [vmem:[%s0 + $0x200] sm:$0xff]
  %v98 = vld [vmem:[%s0 + $0x208] sm:$0xff]
  %v99 = vld [vmem:[%s0 + $0x210] sm:$0xff]
  %v100 = vld [vmem:[%s0 + $0x218] sm:$0xff]
  %v101 = vld [vmem:[%s0 + $0x220] sm:$0xff]
  %v102 = vld [vmem:[%s0 + $0x228] sm:$0xff]
  %v103 = vld [vmem:[%s0 + $0x230] sm:$0xff]
  %v104 = vld [vmem:[%s0 + $0x238] sm:$0xff]
  %v105 = vld [vmem:[%s0 + $0x240] sm:$0xff]
  %v106 = vld [vmem:[%s0 + $0x248] sm:$0xff]
  %v107 = vld [vmem:[%s0 + $0x250] sm:$0xff]
  %v108 = vld [vmem:[%s0 + $0x258] sm:$0xff]
  %v109 = vld [vmem:[%s0 + $0x260] sm:$0xff]
  %v110 = vld [vmem:[%s0 + $0x268] sm:$0xff]
  %v111 = vld [vmem:[%s0 + $0x270] sm:$0xff]
  %v112 = vld [vmem:[%s0 + $0x278] sm:$0xff]
  %v113 = vld [vmem:[%s0 + $0x280] sm:$0xff]
  %v114 = vld [vmem:[%s0 + $0x288] sm:$0xff]
  %v115 = vld [vmem:[%s0 + $0x290] sm:$0xff]
  %v116 = vld [vmem:[%s0 + $0x298] sm:$0xff]
  %v117 = vld [vmem:[%s0 + $0x2a0] sm:$0xff]
  %v118 = vld [vmem:[%s0 + $0x2a8] sm:$0xff]
  %v119 = vld [vmem:[%s0 + $0x2b0] sm:$0xff]
  %v120 = vld [vmem:[%s0 + $0x2b8] sm:$0xff]
  %v121 = vld [vmem:[%s0 + $0x2c0] sm:$0xff]
  %v122 = vld [vmem:[%s0 + $0x2c8] sm:$0xff]
  %v123 = vld [vmem:[%s0 + $0x2d0] sm:$0xff]
  %v124 = vld [vmem:[%s0 + $0x2d8] sm:$0xff]
  %v125 = vld [vmem:[%s0 + $0x2e0] sm:$0xff]
  %v126 = vld [vmem:[%s0 + $0x2e8] sm:$0xff]
  %v127 = vld [vmem:[%s0 + $0x2f0] sm:$0xff]
  %v128 = vld [vmem:[%s0 + $0x2f8] sm:$0xff]
  %v129 = vld [vmem:[%s0 + $0x300] sm:$0xff]
  %v130 = vld [vmem:[%s0 + $0x308] sm:$0xff]
  %v131 = vld [vmem:[%s0 + $0x310] sm:$0xff]
  %v132 = vld [vmem:[%s0 + $0x318] sm:$0xff]
  %v133 = vld [vmem:[%s1] sm:$0xf]
  %v134 = vld [vmem:[%s1 + $0x4] sm:$0xf]
  %v135 = vld [vmem:[%s1 + $0x8] sm:$0xf]
  %v136 = vld [vmem:[%s1 + $0xc] sm:$0xf]
  %v137 = vld [vmem:[%s1 + $0x10] sm:$0xf]
  %v138 = vld [vmem:[%s1 + $0x14] sm:$0xf]
  %v139 = vld [vmem:[%s1 + $0x18] sm:$0xf]
  %v140 = vld [vmem:[%s1 + $0x1c] sm:$0xf]
  %v141 = vld [vmem:[%s1 + $0x20] sm:$0xf]
  %v142 = vld [vmem:[%s1 + $0x24] sm:$0xf]
  %v143 = vld [vmem:[%s1 + $0x28] sm:$0xf]
  %v144 = vld [vmem:[%s1 + $0x2c] sm:$0xf]
  %v145 = vld [vmem:[%s1 + $0x30] sm:$0xf]
  %v146 = vld [vmem:[%s1 + $0x34] sm:$0xf]
  %v147 = vld [vmem:[%s1 + $0x38] sm:$0xf]
  %v148 = vld [vmem:[%s1 + $0x3c] sm:$0xf]
  %v149 = vld [vmem:[%s1 + $0x40] sm:$0xf]
  %v150 = vld [vmem:[%s1 + $0x44] sm:$0xf]
  %v151 = vld [vmem:[%s1 + $0x48] sm:$0xf]
  %v152 = vld [vmem:[%s2] sm:$0x1]
  %v154 = vlaneseq
  %v155 = vshrl.u32 %v154, 7
  %v156 = vsub.s32 0, %v155
  %v157 = vrot.slane %v152, %v156
  %v259 = vunpack.c.l.b16 %v33
  %v260 = vunpack.c.h.b16 %v33
  %v261 = vunpack.c.l.b16 %v34
  %v262 = vunpack.c.h.b16 %v34
  %v263 = vunpack.c.l.b16 %v35
  %v264 = vunpack.c.h.b16 %v35
  %v265 = vunpack.c.l.b16 %v36
  %v266 = vunpack.c.h.b16 %v36
  %v267 = vunpack.c.l.b16 %v37
  %v268 = vunpack.c.h.b16 %v37
  %v269 = vunpack.c.l.b16 %v38
  %v270 = vunpack.c.h.b16 %v38
  %v271 = vunpack.c.l.b16 %v39
  %v272 = vunpack.c.h.b16 %v39
  %v273 = vunpack.c.l.b16 %v40
  %v274 = vunpack.c.h.b16 %v40
  %v275 = vunpack.c.l.b16 %v41
  %v276 = vunpack.c.h.b16 %v41
  %v277 = vunpack.c.l.b16 %v42
  %v278 = vunpack.c.h.b16 %v42
  %v279 = vunpack.c.l.b16 %v43
  %v280 = vunpack.c.h.b16 %v43
  %v281 = vunpack.c.l.b16 %v44
  %v282 = vunpack.c.h.b16 %v44
  %v283 = vunpack.c.l.b16 %v45
  %v284 = vunpack.c.h.b16 %v45
  %v285 = vunpack.c.l.b16 %v46
  %v286 = vunpack.c.h.b16 %v46
  %v287 = vunpack.c.l.b16 %v47
  %v288 = vunpack.c.h.b16 %v47
  %v289 = vunpack.c.l.b16 %v48
  %v290 = vunpack.c.h.b16 %v48
  %v291 = vunpack.c.l.b16 %v49
  %v292 = vunpack.c.h.b16 %v49
  %v293 = vunpack.c.l.b16 %v50
  %v294 = vunpack.c.h.b16 %v50
  %v295 = vunpack.c.l.b16 %v51
  %v296 = vunpack.c.h.b16 %v51
  %v297 = vunpack.c.l.b16 %v52
  %v298 = vunpack.c.h.b16 %v52
  %v299 = vunpack.c.l.b16 %v53
  %v300 = vunpack.c.h.b16 %v53
  %v301 = vunpack.c.l.b16 %v54
  %v302 = vunpack.c.h.b16 %v54
  %v303 = vunpack.c.l.b16 %v55
  %v304 = vunpack.c.h.b16 %v55
  %v305 = vunpack.c.l.b16 %v56
  %v306 = vunpack.c.h.b16 %v56
  %v307 = vunpack.c.l.b16 %v57
  %v308 = vunpack.c.h.b16 %v57
  %v309 = vunpack.c.l.b16 %v58
  %v310 = vunpack.c.h.b16 %v58
  %v311 = vunpack.c.l.b16 %v59
  %v312 = vunpack.c.h.b16 %v59
  %v313 = vunpack.c.l.b16 %v60
  %v314 = vunpack.c.h.b16 %v60
  %v315 = vunpack.c.l.b16 %v61
  %v316 = vunpack.c.h.b16 %v61
  %v317 = vunpack.c.l.b16 %v62
  %v318 = vunpack.c.h.b16 %v62
  %v319 = vunpack.c.l.b16 %v63
  %v320 = vunpack.c.h.b16 %v63
  %v321 = vunpack.c.l.b16 %v64
  %v322 = vunpack.c.h.b16 %v64
  %v323 = vunpack.c.l.b16 %v65
  %v324 = vunpack.c.h.b16 %v65
  %v325 = vunpack.c.l.b16 %v66
  %v326 = vunpack.c.h.b16 %v66
  %v327 = vunpack.c.l.b16 %v67
  %v328 = vunpack.c.h.b16 %v67
  %v329 = vunpack.c.l.b16 %v68
  %v330 = vunpack.c.h.b16 %v68
  %v331 = vunpack.c.l.b16 %v69
  %v332 = vunpack.c.h.b16 %v69
  %v333 = vunpack.c.l.b16 %v70
  %v334 = vunpack.c.h.b16 %v70
  %v335 = vunpack.c.l.b16 %v71
  %v336 = vunpack.c.h.b16 %v71
  %v337 = vunpack.c.l.b16 %v72
  %v338 = vunpack.c.h.b16 %v72
  %v339 = vunpack.c.l.b16 %v73
  %v340 = vunpack.c.h.b16 %v73
  %v341 = vunpack.c.l.b16 %v74
  %v342 = vunpack.c.h.b16 %v74
  %v343 = vunpack.c.l.b16 %v75
  %v344 = vunpack.c.h.b16 %v75
  %v345 = vunpack.c.l.b16 %v76
  %v346 = vunpack.c.h.b16 %v76
  %v347 = vunpack.c.l.b16 %v77
  %v348 = vunpack.c.h.b16 %v77
  %v349 = vunpack.c.l.b16 %v78
  %v350 = vunpack.c.h.b16 %v78
  %v351 = vunpack.c.l.b16 %v79
  %v352 = vunpack.c.h.b16 %v79
  %v353 = vunpack.c.l.b16 %v80
  %v354 = vunpack.c.h.b16 %v80
  %v355 = vunpack.c.l.b16 %v81
  %v356 = vunpack.c.h.b16 %v81
  %v357 = vunpack.c.l.b16 %v82
  %v358 = vunpack.c.h.b16 %v82
  %v359 = vunpack.c.l.b16 %v83
  %v360 = vunpack.c.h.b16 %v83
  %v361 = vunpack.c.l.b16 %v84
  %v362 = vunpack.c.h.b16 %v84
  %v363 = vunpack.c.l.b16 %v85
  %v364 = vunpack.c.h.b16 %v85
  %v365 = vunpack.c.l.b16 %v86
  %v366 = vunpack.c.h.b16 %v86
  %v367 = vunpack.c.l.b16 %v87
  %v368 = vunpack.c.h.b16 %v87
  %v369 = vunpack.c.l.b16 %v88
  %v370 = vunpack.c.h.b16 %v88
  %v371 = vunpack.c.l.b16 %v89
  %v372 = vunpack.c.h.b16 %v89
  %v373 = vunpack.c.l.b16 %v90
  %v374 = vunpack.c.h.b16 %v90
  %v375 = vunpack.c.l.b16 %v91
  %v376 = vunpack.c.h.b16 %v91
  %v377 = vunpack.c.l.b16 %v92
  %v378 = vunpack.c.h.b16 %v92
  %v379 = vunpack.c.l.b16 %v93
  %v380 = vunpack.c.h.b16 %v93
  %v381 = vunpack.c.l.b16 %v94
  %v382 = vunpack.c.h.b16 %v94
  %v383 = vunpack.c.l.b16 %v95
  %v384 = vunpack.c.h.b16 %v95
  %v385 = vunpack.c.l.b16 %v96
  %v386 = vunpack.c.h.b16 %v96
  %v387 = vunpack.c.l.b16 %v97
  %v388 = vunpack.c.h.b16 %v97
  %v389 = vunpack.c.l.b16 %v98
  %v390 = vunpack.c.h.b16 %v98
  %v391 = vunpack.c.l.b16 %v99
  %v392 = vunpack.c.h.b16 %v99
  %v393 = vunpack.c.l.b16 %v100
  %v394 = vunpack.c.h.b16 %v100
  %v395 = vunpack.c.l.b16 %v101
  %v396 = vunpack.c.h.b16 %v101
  %v397 = vunpack.c.l.b16 %v102
  %v398 = vunpack.c.h.b16 %v102
  %v399 = vunpack.c.l.b16 %v103
  %v400 = vunpack.c.h.b16 %v103
  %v401 = vunpack.c.l.b16 %v104
  %v402 = vunpack.c.h.b16 %v104
  %v403 = vunpack.c.l.b16 %v105
  %v404 = vunpack.c.h.b16 %v105
  %v405 = vunpack.c.l.b16 %v106
  %v406 = vunpack.c.h.b16 %v106
  %v407 = vunpack.c.l.b16 %v107
  %v408 = vunpack.c.h.b16 %v107
  %v409 = vunpack.c.l.b16 %v108
  %v410 = vunpack.c.h.b16 %v108
  %v411 = vunpack.c.l.b16 %v109
  %v412 = vunpack.c.h.b16 %v109
  %v413 = vunpack.c.l.b16 %v110
  %v414 = vunpack.c.h.b16 %v110
  %v415 = vunpack.c.l.b16 %v111
  %v416 = vunpack.c.h.b16 %v111
  %v417 = vunpack.c.l.b16 %v112
  %v418 = vunpack.c.h.b16 %v112
  %v419 = vunpack.c.l.b16 %v113
  %v420 = vunpack.c.h.b16 %v113
  %v421 = vunpack.c.l.b16 %v114
  %v422 = vunpack.c.h.b16 %v114
  %v423 = vunpack.c.l.b16 %v115
  %v424 = vunpack.c.h.b16 %v115
  %v425 = vunpack.c.l.b16 %v116
  %v426 = vunpack.c.h.b16 %v116
  %v427 = vunpack.c.l.b16 %v117
  %v428 = vunpack.c.h.b16 %v117
  %v429 = vunpack.c.l.b16 %v118
  %v430 = vunpack.c.h.b16 %v118
  %v431 = vunpack.c.l.b16 %v119
  %v432 = vunpack.c.h.b16 %v119
  %v433 = vunpack.c.l.b16 %v120
  %v434 = vunpack.c.h.b16 %v120
  %v435 = vunpack.c.l.b16 %v121
  %v436 = vunpack.c.h.b16 %v121
  %v437 = vunpack.c.l.b16 %v122
  %v438 = vunpack.c.h.b16 %v122
  %v439 = vunpack.c.l.b16 %v123
  %v440 = vunpack.c.h.b16 %v123
  %v441 = vunpack.c.l.b16 %v124
  %v442 = vunpack.c.h.b16 %v124
  %v443 = vunpack.c.l.b16 %v125
  %v444 = vunpack.c.h.b16 %v125
  %v445 = vunpack.c.l.b16 %v126
  %v446 = vunpack.c.h.b16 %v126
  %v447 = vunpack.c.l.b16 %v127
  %v448 = vunpack.c.h.b16 %v127
  %v449 = vunpack.c.l.b16 %v128
  %v450 = vunpack.c.h.b16 %v128
  %v451 = vunpack.c.l.b16 %v129
  %v452 = vunpack.c.h.b16 %v129
  %v453 = vunpack.c.l.b16 %v130
  %v454 = vunpack.c.h.b16 %v130
  %v455 = vunpack.c.l.b16 %v131
  %v456 = vunpack.c.h.b16 %v131
  %v457 = vunpack.c.l.b16 %v132
  %v458 = vunpack.c.h.b16 %v132
  %v459 = vpack.c.b16 %v261, %v259
  %v460 = vpack.c.b16 %v262, %v260
  %v461 = vpack.c.b16 %v265, %v263
  %v462 = vpack.c.b16 %v266, %v264
  %v463 = vpack.c.b16 %v269, %v267
  %v464 = vpack.c.b16 %v270, %v268
  %v465 = vpack.c.b16 %v273, %v271
  %v466 = vpack.c.b16 %v274, %v272
  %v467 = vpack.c.b16 %v277, %v275
  %v468 = vpack.c.b16 %v278, %v276
  %v469 = vpack.c.b16 %v281, %v279
  %v470 = vpack.c.b16 %v282, %v280
  %v471 = vpack.c.b16 %v285, %v283
  %v472 = vpack.c.b16 %v286, %v284
  %v473 = vpack.c.b16 %v289, %v287
  %v474 = vpack.c.b16 %v290, %v288
  %v475 = vpack.c.b16 %v293, %v291
  %v476 = vpack.c.b16 %v294, %v292
  %v477 = vpack.c.b16 %v297, %v295
  %v478 = vpack.c.b16 %v298, %v296
  %v479 = vpack.c.b16 %v301, %v299
  %v480 = vpack.c.b16 %v302, %v300
  %v481 = vpack.c.b16 %v305, %v303
  %v482 = vpack.c.b16 %v306, %v304
  %v483 = vpack.c.b16 %v309, %v307
  %v484 = vpack.c.b16 %v310, %v308
  %v485 = vpack.c.b16 %v313, %v311
  %v486 = vpack.c.b16 %v314, %v312
  %v487 = vpack.c.b16 %v317, %v315
  %v488 = vpack.c.b16 %v318, %v316
  %v489 = vpack.c.b16 %v321, %v319
  %v490 = vpack.c.b16 %v322, %v320
  %v491 = vpack.c.b16 %v325, %v323
  %v492 = vpack.c.b16 %v326, %v324
  %v493 = vpack.c.b16 %v329, %v327
  %v494 = vpack.c.b16 %v330, %v328
  %v495 = vpack.c.b16 %v333, %v331
  %v496 = vpack.c.b16 %v334, %v332
  %v497 = vpack.c.b16 %v337, %v335
  %v498 = vpack.c.b16 %v338, %v336
  %v499 = vpack.c.b16 %v341, %v339
  %v500 = vpack.c.b16 %v342, %v340
  %v501 = vpack.c.b16 %v345, %v343
  %v502 = vpack.c.b16 %v346, %v344
  %v503 = vpack.c.b16 %v349, %v347
  %v504 = vpack.c.b16 %v350, %v348
  %v505 = vpack.c.b16 %v353, %v351
  %v506 = vpack.c.b16 %v354, %v352
  %v507 = vpack.c.b16 %v357, %v355
  %v508 = vpack.c.b16 %v358, %v356
  %v509 = vpack.c.b16 %v361, %v359
  %v510 = vpack.c.b16 %v362, %v360
  %v511 = vpack.c.b16 %v365, %v363
  %v512 = vpack.c.b16 %v366, %v364
  %v513 = vpack.c.b16 %v369, %v367
  %v514 = vpack.c.b16 %v370, %v368
  %v515 = vpack.c.b16 %v373, %v371
  %v516 = vpack.c.b16 %v374, %v372
  %v517 = vpack.c.b16 %v377, %v375
  %v518 = vpack.c.b16 %v378, %v376
  %v519 = vpack.c.b16 %v381, %v379
  %v520 = vpack.c.b16 %v382, %v380
  %v521 = vpack.c.b16 %v385, %v383
  %v522 = vpack.c.b16 %v386, %v384
  %v523 = vpack.c.b16 %v389, %v387
  %v524 = vpack.c.b16 %v390, %v388
  %v525 = vpack.c.b16 %v393, %v391
  %v526 = vpack.c.b16 %v394, %v392
  %v527 = vpack.c.b16 %v397, %v395
  %v528 = vpack.c.b16 %v398, %v396
  %v529 = vpack.c.b16 %v401, %v399
  %v530 = vpack.c.b16 %v402, %v400
  %v531 = vpack.c.b16 %v405, %v403
  %v532 = vpack.c.b16 %v406, %v404
  %v533 = vpack.c.b16 %v409, %v407
  %v534 = vpack.c.b16 %v410, %v408
  %v535 = vpack.c.b16 %v413, %v411
  %v536 = vpack.c.b16 %v414, %v412
  %v537 = vpack.c.b16 %v417, %v415
  %v538 = vpack.c.b16 %v418, %v416
  %v539 = vpack.c.b16 %v421, %v419
  %v540 = vpack.c.b16 %v422, %v420
  %v541 = vpack.c.b16 %v425, %v423
  %v542 = vpack.c.b16 %v426, %v424
  %v543 = vpack.c.b16 %v429, %v427
  %v544 = vpack.c.b16 %v430, %v428
  %v545 = vpack.c.b16 %v433, %v431
  %v546 = vpack.c.b16 %v434, %v432
  %v547 = vpack.c.b16 %v437, %v435
  %v548 = vpack.c.b16 %v438, %v436
  %v549 = vpack.c.b16 %v441, %v439
  %v550 = vpack.c.b16 %v442, %v440
  %v551 = vpack.c.b16 %v445, %v443
  %v552 = vpack.c.b16 %v446, %v444
  %v553 = vpack.c.b16 %v449, %v447
  %v554 = vpack.c.b16 %v450, %v448
  %v555 = vpack.c.b16 %v453, %v451
  %v556 = vpack.c.b16 %v454, %v452
  %v557 = vpack.c.b16 %v457, %v455
  %v558 = vpack.c.b16 %v458, %v456
  %v628 = vunpack.c.l.b16 %v133
  %v629 = vunpack.c.l.b16 %v134
  %v630 = vunpack.c.l.b16 %v135
  %v631 = vunpack.c.l.b16 %v136
  %v632 = vunpack.c.l.b16 %v137
  %v633 = vunpack.c.l.b16 %v138
  %v634 = vunpack.c.l.b16 %v139
  %v635 = vunpack.c.l.b16 %v140
  %v636 = vunpack.c.l.b16 %v141
  %v637 = vunpack.c.l.b16 %v142
  %v638 = vunpack.c.l.b16 %v143
  %v639 = vunpack.c.l.b16 %v144
  %v640 = vunpack.c.l.b16 %v145
  %v641 = vunpack.c.l.b16 %v146
  %v642 = vunpack.c.l.b16 %v147
  %v643 = vunpack.c.l.b16 %v148
  %v644 = vunpack.c.l.b16 %v149
  %v645 = vunpack.c.l.b16 %v150
  %v646 = vunpack.c.l.b16 %v151
  %v647 = vpack.c.b16 %v629, %v628
  %v648 = vpack.c.b16 %v631, %v630
  %v649 = vpack.c.b16 %v633, %v632
  %v650 = vpack.c.b16 %v635, %v634
  %v651 = vpack.c.b16 %v637, %v636
  %v652 = vpack.c.b16 %v639, %v638
  %v653 = vpack.c.b16 %v641, %v640
  %v654 = vpack.c.b16 %v643, %v642
  %v655 = vpack.c.b16 %v645, %v644
  %v656 = vpack.c.b16 %v646, %v646
  %vm666 = vcmask 195584
  %v668 = vsel %vm666, %v460, 0
  %v671 = vsel %vm666, %v462, 0
  %v674 = vsel %vm666, %v464, 0
  %v677 = vsel %vm666, %v466, 0
  %v680 = vsel %vm666, %v468, 0
  %v683 = vsel %vm666, %v470, 0
  %v686 = vsel %vm666, %v472, 0
  %v689 = vsel %vm666, %v474, 0
  %v692 = vsel %vm666, %v476, 0
  %v695 = vsel %vm666, %v478, 0
  %v698 = vsel %vm666, %v480, 0
  %v701 = vsel %vm666, %v482, 0
  %v704 = vsel %vm666, %v484, 0
  %v707 = vsel %vm666, %v486, 0
  %v710 = vsel %vm666, %v488, 0
  %v713 = vsel %vm666, %v490, 0
  %v716 = vsel %vm666, %v492, 0
  %v719 = vsel %vm666, %v494, 0
  %v722 = vsel %vm666, %v496, 0
  %v725 = vsel %vm666, %v498, 0
  %v728 = vsel %vm666, %v500, 0
  %v731 = vsel %vm666, %v502, 0
  %v734 = vsel %vm666, %v504, 0
  %v737 = vsel %vm666, %v506, 0
  %v740 = vsel %vm666, %v508, 0
  %v743 = vsel %vm666, %v510, 0
  %v746 = vsel %vm666, %v512, 0
  %v749 = vsel %vm666, %v514, 0
  %v752 = vsel %vm666, %v516, 0
  %v755 = vsel %vm666, %v518, 0
  %v758 = vsel %vm666, %v520, 0
  %v761 = vsel %vm666, %v522, 0
  %v764 = vsel %vm666, %v524, 0
  %v767 = vsel %vm666, %v526, 0
  %v770 = vsel %vm666, %v528, 0
  %v773 = vsel %vm666, %v530, 0
  %v776 = vsel %vm666, %v532, 0
  %v779 = vsel %vm666, %v534, 0
  %v782 = vsel %vm666, %v536, 0
  %v785 = vsel %vm666, %v538, 0
  %v788 = vsel %vm666, %v540, 0
  %v791 = vsel %vm666, %v542, 0
  %v794 = vsel %vm666, %v544, 0
  %v797 = vsel %vm666, %v546, 0
  %v800 = vsel %vm666, %v548, 0
  %v803 = vsel %vm666, %v550, 0
  %v806 = vsel %vm666, %v552, 0
  %v809 = vsel %vm666, %v554, 0
  %v812 = vsel %vm666, %v556, 0
  %v815 = vsel %vm666, %v558, 0
  %vm817 = vcmask 1043456
  %v819 = vsel %vm817, %v656, 0
  %821 = vmatprep.subr.bf16.mxu0 0
  %822 = vmatpush1.bf16.msra.mxu0 %v654
  %823 = vmatprep.subr.bf16.mxu0 0
  %824 = vmatpush1.bf16.msra.mxu0 %v653
  %825 = vmatprep.subr.bf16.mxu0 0
  %826 = vmatpush1.bf16.msra.mxu0 %v652
  %827 = vmatprep.subr.bf16.mxu0 0
  %828 = vmatpush1.bf16.msra.mxu0 %v651
  %829 = vmatprep.subr.bf16.mxu0 0
  %830 = vmatpush1.bf16.msra.mxu0 %v650
  %831 = vmatprep.subr.bf16.mxu0 0
  %832 = vmatpush1.bf16.msra.mxu0 %v649
  %833 = vmatprep.subr.bf16.mxu0 0
  %834 = vmatpush1.bf16.msra.mxu0 %v648
  %835 = vmatprep.subr.bf16.mxu0 0
  %836 = vmatpush1.bf16.msra.mxu0 %v647
  %837 = vmatprep.subr.bf16.mxu0 0
  %838 = vmatpush2.bf16.msra.mxu0 0
  %839 = vmatprep.subr.bf16.mxu0 0
  %840 = vmatpush2.bf16.msra.mxu0 0
  %841 = vmatprep.subr.bf16.mxu0 0
  %842 = vmatpush2.bf16.msra.mxu0 0
  %843 = vmatprep.subr.bf16.mxu0 0
  %844 = vmatpush2.bf16.msra.mxu0 0
  %845 = vmatprep.subr.bf16.mxu0 0
  %846 = vmatpush2.bf16.msra.mxu0 0
  %847 = vmatprep.subr.bf16.mxu0 0
  %848 = vmatpush2.bf16.msra.mxu0 0
  %849 = vmatprep.subr.bf16.mxu0 0
  %850 = vmatpush2.bf16.msra.mxu0 %v819
  %851 = vmatprep.subr.bf16.mxu0 0
  %852 = vmatpush2.bf16.msra.mxu0 %v655
  %853 = vmatprep.mubr.bf16.mxu0 %v668
  %854 = vmatmul.mubr.bf16.gmra.mxu0 %v459
  %v855 = vpop.f32.mrf.mxu0
  %v856 = vadd.f32 %v157, %v855
  %v857 = vpop.f32.mrf.mxu0
  %v858 = vpop.f32.mrf.mxu0
  %v859 = vadd.f32 %v157, %v858
  %v860 = vpop.f32.mrf.mxu0
  %861 = vmatprep.mubr.bf16.mxu0 %v671
  %862 = vmatmul.mubr.bf16.gmra.mxu0 %v461
  %v863 = vpop.f32.mrf.mxu0
  %v864 = vadd.f32 %v157, %v863
  %v865 = vpop.f32.mrf.mxu0
  %v866 = vpop.f32.mrf.mxu0
  %v867 = vadd.f32 %v157, %v866
  %v868 = vpop.f32.mrf.mxu0
  %869 = vmatprep.mubr.bf16.mxu0 %v674
  %870 = vmatmul.mubr.bf16.gmra.mxu0 %v463
  %v871 = vpop.f32.mrf.mxu0
  %v872 = vadd.f32 %v157, %v871
  %v873 = vpop.f32.mrf.mxu0
  %v874 = vpop.f32.mrf.mxu0
  %v875 = vadd.f32 %v157, %v874
  %v876 = vpop.f32.mrf.mxu0
  %877 = vmatprep.mubr.bf16.mxu0 %v677
  %878 = vmatmul.mubr.bf16.gmra.mxu0 %v465
  %v879 = vpop.f32.mrf.mxu0
  %v880 = vadd.f32 %v157, %v879
  %v881 = vpop.f32.mrf.mxu0
  %v882 = vpop.f32.mrf.mxu0
  %v883 = vadd.f32 %v157, %v882
  %v884 = vpop.f32.mrf.mxu0
  %885 = vmatprep.mubr.bf16.mxu0 %v680
  %886 = vmatmul.mubr.bf16.gmra.mxu0 %v467
  %v887 = vpop.f32.mrf.mxu0
  %v888 = vadd.f32 %v157, %v887
  %v889 = vpop.f32.mrf.mxu0
  %v890 = vpop.f32.mrf.mxu0
  %v891 = vadd.f32 %v157, %v890
  %v892 = vpop.f32.mrf.mxu0
  %893 = vmatprep.mubr.bf16.mxu0 %v683
  %894 = vmatmul.mubr.bf16.gmra.mxu0 %v469
  %v895 = vpop.f32.mrf.mxu0
  %v896 = vadd.f32 %v157, %v895
  %v897 = vpop.f32.mrf.mxu0
  %v898 = vpop.f32.mrf.mxu0
  %v899 = vadd.f32 %v157, %v898
  %v900 = vpop.f32.mrf.mxu0
  %901 = vmatprep.mubr.bf16.mxu0 %v686
  %902 = vmatmul.mubr.bf16.gmra.mxu0 %v471
  %v903 = vpop.f32.mrf.mxu0
  %v904 = vadd.f32 %v157, %v903
  %v905 = vpop.f32.mrf.mxu0
  %v906 = vpop.f32.mrf.mxu0
  %v907 = vadd.f32 %v157, %v906
  %v908 = vpop.f32.mrf.mxu0
  %909 = vmatprep.mubr.bf16.mxu0 %v689
  %910 = vmatmul.mubr.bf16.gmra.mxu0 %v473
  %v911 = vpop.f32.mrf.mxu0
  %v912 = vadd.f32 %v157, %v911
  %v913 = vpop.f32.mrf.mxu0
  %v914 = vpop.f32.mrf.mxu0
  %v915 = vadd.f32 %v157, %v914
  %v916 = vpop.f32.mrf.mxu0
  %917 = vmatprep.mubr.bf16.mxu0 %v692
  %918 = vmatmul.mubr.bf16.gmra.mxu0 %v475
  %v919 = vpop.f32.mrf.mxu0
  %v920 = vadd.f32 %v157, %v919
  %v921 = vpop.f32.mrf.mxu0
  %v922 = vpop.f32.mrf.mxu0
  %v923 = vadd.f32 %v157, %v922
  %v924 = vpop.f32.mrf.mxu0
  %925 = vmatprep.mubr.bf16.mxu0 %v695
  %926 = vmatmul.mubr.bf16.gmra.mxu0 %v477
  %v927 = vpop.f32.mrf.mxu0
  %v928 = vadd.f32 %v157, %v927
  %v929 = vpop.f32.mrf.mxu0
  %v930 = vpop.f32.mrf.mxu0
  %v931 = vadd.f32 %v157, %v930
  %v932 = vpop.f32.mrf.mxu0
  %933 = vmatprep.mubr.bf16.mxu0 %v698
  %934 = vmatmul.mubr.bf16.gmra.mxu0 %v479
  %v935 = vpop.f32.mrf.mxu0
  %v936 = vadd.f32 %v157, %v935
  %v937 = vpop.f32.mrf.mxu0
  %v938 = vpop.f32.mrf.mxu0
  %v939 = vadd.f32 %v157, %v938
  %v940 = vpop.f32.mrf.mxu0
  %941 = vmatprep.mubr.bf16.mxu0 %v701
  %942 = vmatmul.mubr.bf16.gmra.mxu0 %v481
  %v943 = vpop.f32.mrf.mxu0
  %v944 = vadd.f32 %v157, %v943
  %v945 = vpop.f32.mrf.mxu0
  %v946 = vpop.f32.mrf.mxu0
  %v947 = vadd.f32 %v157, %v946
  %v948 = vpop.f32.mrf.mxu0
  %949 = vmatprep.mubr.bf16.mxu0 %v704
  %950 = vmatmul.mubr.bf16.gmra.mxu0 %v483
  %v951 = vpop.f32.mrf.mxu0
  %v952 = vadd.f32 %v157, %v951
  %v953 = vpop.f32.mrf.mxu0
  %v954 = vpop.f32.mrf.mxu0
  %v955 = vadd.f32 %v157, %v954
  %v956 = vpop.f32.mrf.mxu0
  %957 = vmatprep.mubr.bf16.mxu0 %v707
  %958 = vmatmul.mubr.bf16.gmra.mxu0 %v485
  %v959 = vpop.f32.mrf.mxu0
  %v960 = vadd.f32 %v157, %v959
  %v961 = vpop.f32.mrf.mxu0
  %v962 = vpop.f32.mrf.mxu0
  %v963 = vadd.f32 %v157, %v962
  %v964 = vpop.f32.mrf.mxu0
  %965 = vmatprep.mubr.bf16.mxu0 %v710
  %966 = vmatmul.mubr.bf16.gmra.mxu0 %v487
  %v967 = vpop.f32.mrf.mxu0
  %v968 = vadd.f32 %v157, %v967
  %v969 = vpop.f32.mrf.mxu0
  %v970 = vpop.f32.mrf.mxu0
  %v971 = vadd.f32 %v157, %v970
  %v972 = vpop.f32.mrf.mxu0
  %973 = vmatprep.mubr.bf16.mxu0 %v713
  %974 = vmatmul.mubr.bf16.gmra.mxu0 %v489
  %v975 = vpop.f32.mrf.mxu0
  %v976 = vadd.f32 %v157, %v975
  %v977 = vpop.f32.mrf.mxu0
  %v978 = vpop.f32.mrf.mxu0
  %v979 = vadd.f32 %v157, %v978
  %v980 = vpop.f32.mrf.mxu0
  %981 = vmatprep.mubr.bf16.mxu0 %v716
  %982 = vmatmul.mubr.bf16.gmra.mxu0 %v491
  %v983 = vpop.f32.mrf.mxu0
  %v984 = vadd.f32 %v157, %v983
  %v985 = vpop.f32.mrf.mxu0
  %v986 = vpop.f32.mrf.mxu0
  %v987 = vadd.f32 %v157, %v986
  %v988 = vpop.f32.mrf.mxu0
  %989 = vmatprep.mubr.bf16.mxu0 %v719
  %990 = vmatmul.mubr.bf16.gmra.mxu0 %v493
  %v991 = vpop.f32.mrf.mxu0
  %v992 = vadd.f32 %v157, %v991
  %v993 = vpop.f32.mrf.mxu0
  %v994 = vpop.f32.mrf.mxu0
  %v995 = vadd.f32 %v157, %v994
  %v996 = vpop.f32.mrf.mxu0
  %997 = vmatprep.mubr.bf16.mxu0 %v722
  %998 = vmatmul.mubr.bf16.gmra.mxu0 %v495
  %v999 = vpop.f32.mrf.mxu0
  %v1000 = vadd.f32 %v157, %v999
  %v1001 = vpop.f32.mrf.mxu0
  %v1002 = vpop.f32.mrf.mxu0
  %v1003 = vadd.f32 %v157, %v1002
  %v1004 = vpop.f32.mrf.mxu0
  %1005 = vmatprep.mubr.bf16.mxu0 %v725
  %1006 = vmatmul.mubr.bf16.gmra.mxu0 %v497
  %v1007 = vpop.f32.mrf.mxu0
  %v1008 = vadd.f32 %v157, %v1007
  %v1009 = vpop.f32.mrf.mxu0
  %v1010 = vpop.f32.mrf.mxu0
  %v1011 = vadd.f32 %v157, %v1010
  %v1012 = vpop.f32.mrf.mxu0
  %1013 = vmatprep.mubr.bf16.mxu0 %v728
  %1014 = vmatmul.mubr.bf16.gmra.mxu0 %v499
  %v1015 = vpop.f32.mrf.mxu0
  %v1016 = vadd.f32 %v157, %v1015
  %v1017 = vpop.f32.mrf.mxu0
  %v1018 = vpop.f32.mrf.mxu0
  %v1019 = vadd.f32 %v157, %v1018
  %v1020 = vpop.f32.mrf.mxu0
  %1021 = vmatprep.mubr.bf16.mxu0 %v731
  %1022 = vmatmul.mubr.bf16.gmra.mxu0 %v501
  %v1023 = vpop.f32.mrf.mxu0
  %v1024 = vadd.f32 %v157, %v1023
  %v1025 = vpop.f32.mrf.mxu0
  %v1026 = vpop.f32.mrf.mxu0
  %v1027 = vadd.f32 %v157, %v1026
  %v1028 = vpop.f32.mrf.mxu0
  %1029 = vmatprep.mubr.bf16.mxu0 %v734
  %1030 = vmatmul.mubr.bf16.gmra.mxu0 %v503
  %v1031 = vpop.f32.mrf.mxu0
  %v1032 = vadd.f32 %v157, %v1031
  %v1033 = vpop.f32.mrf.mxu0
  %v1034 = vpop.f32.mrf.mxu0
  %v1035 = vadd.f32 %v157, %v1034
  %v1036 = vpop.f32.mrf.mxu0
  %1037 = vmatprep.mubr.bf16.mxu0 %v737
  %1038 = vmatmul.mubr.bf16.gmra.mxu0 %v505
  %v1039 = vpop.f32.mrf.mxu0
  %v1040 = vadd.f32 %v157, %v1039
  %v1041 = vpop.f32.mrf.mxu0
  %v1042 = vpop.f32.mrf.mxu0
  %v1043 = vadd.f32 %v157, %v1042
  %v1044 = vpop.f32.mrf.mxu0
  %1045 = vmatprep.mubr.bf16.mxu0 %v740
  %1046 = vmatmul.mubr.bf16.gmra.mxu0 %v507
  %v1047 = vpop.f32.mrf.mxu0
  %v1048 = vadd.f32 %v157, %v1047
  %v1049 = vpop.f32.mrf.mxu0
  %v1050 = vpop.f32.mrf.mxu0
  %v1051 = vadd.f32 %v157, %v1050
  %v1052 = vpop.f32.mrf.mxu0
  %1053 = vmatprep.mubr.bf16.mxu0 %v743
  %1054 = vmatmul.mubr.bf16.gmra.mxu0 %v509
  %v1055 = vpop.f32.mrf.mxu0
  %v1056 = vadd.f32 %v157, %v1055
  %v1057 = vpop.f32.mrf.mxu0
  %v1058 = vpop.f32.mrf.mxu0
  %v1059 = vadd.f32 %v157, %v1058
  %v1060 = vpop.f32.mrf.mxu0
  %1061 = vmatprep.mubr.bf16.mxu0 %v746
  %1062 = vmatmul.mubr.bf16.gmra.mxu0 %v511
  %v1063 = vpop.f32.mrf.mxu0
  %v1064 = vadd.f32 %v157, %v1063
  %v1065 = vpop.f32.mrf.mxu0
  %v1066 = vpop.f32.mrf.mxu0
  %v1067 = vadd.f32 %v157, %v1066
  %v1068 = vpop.f32.mrf.mxu0
  %1069 = vmatprep.mubr.bf16.mxu0 %v749
  %1070 = vmatmul.mubr.bf16.gmra.mxu0 %v513
  %v1071 = vpop.f32.mrf.mxu0
  %v1072 = vadd.f32 %v157, %v1071
  %v1073 = vpop.f32.mrf.mxu0
  %v1074 = vpop.f32.mrf.mxu0
  %v1075 = vadd.f32 %v157, %v1074
  %v1076 = vpop.f32.mrf.mxu0
  %1077 = vmatprep.mubr.bf16.mxu0 %v752
  %1078 = vmatmul.mubr.bf16.gmra.mxu0 %v515
  %v1079 = vpop.f32.mrf.mxu0
  %v1080 = vadd.f32 %v157, %v1079
  %v1081 = vpop.f32.mrf.mxu0
  %v1082 = vpop.f32.mrf.mxu0
  %v1083 = vadd.f32 %v157, %v1082
  %v1084 = vpop.f32.mrf.mxu0
  %1085 = vmatprep.mubr.bf16.mxu0 %v755
  %1086 = vmatmul.mubr.bf16.gmra.mxu0 %v517
  %v1087 = vpop.f32.mrf.mxu0
  %v1088 = vadd.f32 %v157, %v1087
  %v1089 = vpop.f32.mrf.mxu0
  %v1090 = vpop.f32.mrf.mxu0
  %v1091 = vadd.f32 %v157, %v1090
  %v1092 = vpop.f32.mrf.mxu0
  %1093 = vmatprep.mubr.bf16.mxu0 %v758
  %1094 = vmatmul.mubr.bf16.gmra.mxu0 %v519
  %v1095 = vpop.f32.mrf.mxu0
  %v1096 = vadd.f32 %v157, %v1095
  %v1097 = vpop.f32.mrf.mxu0
  %v1098 = vpop.f32.mrf.mxu0
  %v1099 = vadd.f32 %v157, %v1098
  %v1100 = vpop.f32.mrf.mxu0
  %1101 = vmatprep.mubr.bf16.mxu0 %v761
  %1102 = vmatmul.mubr.bf16.gmra.mxu0 %v521
  %v1103 = vpop.f32.mrf.mxu0
  %v1104 = vadd.f32 %v157, %v1103
  %v1105 = vpop.f32.mrf.mxu0
  %v1106 = vpop.f32.mrf.mxu0
  %v1107 = vadd.f32 %v157, %v1106
  %v1108 = vpop.f32.mrf.mxu0
  %1109 = vmatprep.mubr.bf16.mxu0 %v764
  %1110 = vmatmul.mubr.bf16.gmra.mxu0 %v523
  %v1111 = vpop.f32.mrf.mxu0
  %v1112 = vadd.f32 %v157, %v1111
  %v1113 = vpop.f32.mrf.mxu0
  %v1114 = vpop.f32.mrf.mxu0
  %v1115 = vadd.f32 %v157, %v1114
  %v1116 = vpop.f32.mrf.mxu0
  %1117 = vmatprep.mubr.bf16.mxu0 %v767
  %1118 = vmatmul.mubr.bf16.gmra.mxu0 %v525
  %v1119 = vpop.f32.mrf.mxu0
  %v1120 = vadd.f32 %v157, %v1119
  %v1121 = vpop.f32.mrf.mxu0
  %v1122 = vpop.f32.mrf.mxu0
  %v1123 = vadd.f32 %v157, %v1122
  %v1124 = vpop.f32.mrf.mxu0
  %1125 = vmatprep.mubr.bf16.mxu0 %v770
  %1126 = vmatmul.mubr.bf16.gmra.mxu0 %v527
  %v1127 = vpop.f32.mrf.mxu0
  %v1128 = vadd.f32 %v157, %v1127
  %v1129 = vpop.f32.mrf.mxu0
  %v1130 = vpop.f32.mrf.mxu0
  %v1131 = vadd.f32 %v157, %v1130
  %v1132 = vpop.f32.mrf.mxu0
  %1133 = vmatprep.mubr.bf16.mxu0 %v773
  %1134 = vmatmul.mubr.bf16.gmra.mxu0 %v529
  %v1135 = vpop.f32.mrf.mxu0
  %v1136 = vadd.f32 %v157, %v1135
  %v1137 = vpop.f32.mrf.mxu0
  %v1138 = vpop.f32.mrf.mxu0
  %v1139 = vadd.f32 %v157, %v1138
  %v1140 = vpop.f32.mrf.mxu0
  %1141 = vmatprep.mubr.bf16.mxu0 %v776
  %1142 = vmatmul.mubr.bf16.gmra.mxu0 %v531
  %v1143 = vpop.f32.mrf.mxu0
  %v1144 = vadd.f32 %v157, %v1143
  %v1145 = vpop.f32.mrf.mxu0
  %v1146 = vpop.f32.mrf.mxu0
  %v1147 = vadd.f32 %v157, %v1146
  %v1148 = vpop.f32.mrf.mxu0
  %1149 = vmatprep.mubr.bf16.mxu0 %v779
  %1150 = vmatmul.mubr.bf16.gmra.mxu0 %v533
  %v1151 = vpop.f32.mrf.mxu0
  %v1152 = vadd.f32 %v157, %v1151
  %v1153 = vpop.f32.mrf.mxu0
  %v1154 = vpop.f32.mrf.mxu0
  %v1155 = vadd.f32 %v157, %v1154
  %v1156 = vpop.f32.mrf.mxu0
  %1157 = vmatprep.mubr.bf16.mxu0 %v782
  %1158 = vmatmul.mubr.bf16.gmra.mxu0 %v535
  %v1159 = vpop.f32.mrf.mxu0
  %v1160 = vadd.f32 %v157, %v1159
  %v1161 = vpop.f32.mrf.mxu0
  %v1162 = vpop.f32.mrf.mxu0
  %v1163 = vadd.f32 %v157, %v1162
  %v1164 = vpop.f32.mrf.mxu0
  %1165 = vmatprep.mubr.bf16.mxu0 %v785
  %1166 = vmatmul.mubr.bf16.gmra.mxu0 %v537
  %v1167 = vpop.f32.mrf.mxu0
  %v1168 = vadd.f32 %v157, %v1167
  %v1169 = vpop.f32.mrf.mxu0
  %v1170 = vpop.f32.mrf.mxu0
  %v1171 = vadd.f32 %v157, %v1170
  %v1172 = vpop.f32.mrf.mxu0
  %1173 = vmatprep.mubr.bf16.mxu0 %v788
  %1174 = vmatmul.mubr.bf16.gmra.mxu0 %v539
  %v1175 = vpop.f32.mrf.mxu0
  %v1176 = vadd.f32 %v157, %v1175
  %v1177 = vpop.f32.mrf.mxu0
  %v1178 = vpop.f32.mrf.mxu0
  %v1179 = vadd.f32 %v157, %v1178
  %v1180 = vpop.f32.mrf.mxu0
  %1181 = vmatprep.mubr.bf16.mxu0 %v791
  %1182 = vmatmul.mubr.bf16.gmra.mxu0 %v541
  %v1183 = vpop.f32.mrf.mxu0
  %v1184 = vadd.f32 %v157, %v1183
  %v1185 = vpop.f32.mrf.mxu0
  %v1186 = vpop.f32.mrf.mxu0
  %v1187 = vadd.f32 %v157, %v1186
  %v1188 = vpop.f32.mrf.mxu0
  %1189 = vmatprep.mubr.bf16.mxu0 %v794
  %1190 = vmatmul.mubr.bf16.gmra.mxu0 %v543
  %v1191 = vpop.f32.mrf.mxu0
  %v1192 = vadd.f32 %v157, %v1191
  %v1193 = vpop.f32.mrf.mxu0
  %v1194 = vpop.f32.mrf.mxu0
  %v1195 = vadd.f32 %v157, %v1194
  %v1196 = vpop.f32.mrf.mxu0
  %1197 = vmatprep.mubr.bf16.mxu0 %v797
  %1198 = vmatmul.mubr.bf16.gmra.mxu0 %v545
  %v1199 = vpop.f32.mrf.mxu0
  %v1200 = vadd.f32 %v157, %v1199
  %v1201 = vpop.f32.mrf.mxu0
  %v1202 = vpop.f32.mrf.mxu0
  %v1203 = vadd.f32 %v157, %v1202
  %v1204 = vpop.f32.mrf.mxu0
  %1205 = vmatprep.mubr.bf16.mxu0 %v800
  %1206 = vmatmul.mubr.bf16.gmra.mxu0 %v547
  %v1207 = vpop.f32.mrf.mxu0
  %v1208 = vadd.f32 %v157, %v1207
  %v1209 = vpop.f32.mrf.mxu0
  %v1210 = vpop.f32.mrf.mxu0
  %v1211 = vadd.f32 %v157, %v1210
  %v1212 = vpop.f32.mrf.mxu0
  %1213 = vmatprep.mubr.bf16.mxu0 %v803
  %1214 = vmatmul.mubr.bf16.gmra.mxu0 %v549
  %v1215 = vpop.f32.mrf.mxu0
  %v1216 = vadd.f32 %v157, %v1215
  %v1217 = vpop.f32.mrf.mxu0
  %v1218 = vpop.f32.mrf.mxu0
  %v1219 = vadd.f32 %v157, %v1218
  %v1220 = vpop.f32.mrf.mxu0
  %1221 = vmatprep.mubr.bf16.mxu0 %v806
  %1222 = vmatmul.mubr.bf16.gmra.mxu0 %v551
  %v1223 = vpop.f32.mrf.mxu0
  %v1224 = vadd.f32 %v157, %v1223
  %v1225 = vpop.f32.mrf.mxu0
  %v1226 = vpop.f32.mrf.mxu0
  %v1227 = vadd.f32 %v157, %v1226
  %v1228 = vpop.f32.mrf.mxu0
  %1229 = vmatprep.mubr.bf16.mxu0 %v809
  %1230 = vmatmul.mubr.bf16.gmra.mxu0 %v553
  %v1231 = vpop.f32.mrf.mxu0
  %v1232 = vadd.f32 %v157, %v1231
  %v1233 = vpop.f32.mrf.mxu0
  %v1234 = vpop.f32.mrf.mxu0
  %v1235 = vadd.f32 %v157, %v1234
  %v1236 = vpop.f32.mrf.mxu0
  %1237 = vmatprep.mubr.bf16.mxu0 %v812
  %1238 = vmatmul.mubr.bf16.gmra.mxu0 %v555
  %v1239 = vpop.f32.mrf.mxu0
  %v1240 = vadd.f32 %v157, %v1239
  %v1241 = vpop.f32.mrf.mxu0
  %v1242 = vpop.f32.mrf.mxu0
  %v1243 = vadd.f32 %v157, %v1242
  %v1244 = vpop.f32.mrf.mxu0
  %1245 = vmatprep.mubr.bf16.mxu0 %v815
  %1246 = vmatmul.mubr.bf16.gmra.mxu0 %v557
  %v1247 = vpop.f32.mrf.mxu0
  %v1248 = vadd.f32 %v157, %v1247
  %v1249 = vpop.f32.mrf.mxu0
  %v1250 = vpop.f32.mrf.mxu0
  %v1251 = vadd.f32 %v157, %v1250
  %v1252 = vpop.f32.mrf.mxu0
  %1253 = vdwg.mxu0
  %v1254 = vsub.f32 0.0, %v856
  %v1255 = vsub.f32 0.0, %v859
  %v1256 = vsub.f32 0.0, %v864
  %v1257 = vsub.f32 0.0, %v867
  %v1258 = vsub.f32 0.0, %v872
  %v1259 = vsub.f32 0.0, %v875
  %v1260 = vsub.f32 0.0, %v880
  %v1261 = vsub.f32 0.0, %v883
  %v1262 = vsub.f32 0.0, %v888
  %v1263 = vsub.f32 0.0, %v891
  %v1264 = vsub.f32 0.0, %v896
  %v1265 = vsub.f32 0.0, %v899
  %v1266 = vsub.f32 0.0, %v904
  %v1267 = vsub.f32 0.0, %v907
  %v1268 = vsub.f32 0.0, %v912
  %v1269 = vsub.f32 0.0, %v915
  %v1270 = vsub.f32 0.0, %v920
  %v1271 = vsub.f32 0.0, %v923
  %v1272 = vsub.f32 0.0, %v928
  %v1273 = vsub.f32 0.0, %v931
  %v1274 = vsub.f32 0.0, %v936
  %v1275 = vsub.f32 0.0, %v939
  %v1276 = vsub.f32 0.0, %v944
  %v1277 = vsub.f32 0.0, %v947
  %v1278 = vsub.f32 0.0, %v952
  %v1279 = vsub.f32 0.0, %v955
  %v1280 = vsub.f32 0.0, %v960
  %v1281 = vsub.f32 0.0, %v963
  %v1282 = vsub.f32 0.0, %v968
  %v1283 = vsub.f32 0.0, %v971
  %v1284 = vsub.f32 0.0, %v976
  %v1285 = vsub.f32 0.0, %v979
  %v1286 = vsub.f32 0.0, %v984
  %v1287 = vsub.f32 0.0, %v987
  %v1288 = vsub.f32 0.0, %v992
  %v1289 = vsub.f32 0.0, %v995
  %v1290 = vsub.f32 0.0, %v1000
  %v1291 = vsub.f32 0.0, %v1003
  %v1292 = vsub.f32 0.0, %v1008
  %v1293 = vsub.f32 0.0, %v1011
  %v1294 = vsub.f32 0.0, %v1016
  %v1295 = vsub.f32 0.0, %v1019
  %v1296 = vsub.f32 0.0, %v1024
  %v1297 = vsub.f32 0.0, %v1027
  %v1298 = vsub.f32 0.0, %v1032
  %v1299 = vsub.f32 0.0, %v1035
  %v1300 = vsub.f32 0.0, %v1040
  %v1301 = vsub.f32 0.0, %v1043
  %v1302 = vsub.f32 0.0, %v1048
  %v1303 = vsub.f32 0.0, %v1051
  %v1304 = vsub.f32 0.0, %v1056
  %v1305 = vsub.f32 0.0, %v1059
  %v1306 = vsub.f32 0.0, %v1064
  %v1307 = vsub.f32 0.0, %v1067
  %v1308 = vsub.f32 0.0, %v1072
  %v1309 = vsub.f32 0.0, %v1075
  %v1310 = vsub.f32 0.0, %v1080
  %v1311 = vsub.f32 0.0, %v1083
  %v1312 = vsub.f32 0.0, %v1088
  %v1313 = vsub.f32 0.0, %v1091
  %v1314 = vsub.f32 0.0, %v1096
  %v1315 = vsub.f32 0.0, %v1099
  %v1316 = vsub.f32 0.0, %v1104
  %v1317 = vsub.f32 0.0, %v1107
  %v1318 = vsub.f32 0.0, %v1112
  %v1319 = vsub.f32 0.0, %v1115
  %v1320 = vsub.f32 0.0, %v1120
  %v1321 = vsub.f32 0.0, %v1123
  %v1322 = vsub.f32 0.0, %v1128
  %v1323 = vsub.f32 0.0, %v1131
  %v1324 = vsub.f32 0.0, %v1136
  %v1325 = vsub.f32 0.0, %v1139
  %v1326 = vsub.f32 0.0, %v1144
  %v1327 = vsub.f32 0.0, %v1147
  %v1328 = vsub.f32 0.0, %v1152
  %v1329 = vsub.f32 0.0, %v1155
  %v1330 = vsub.f32 0.0, %v1160
  %v1331 = vsub.f32 0.0, %v1163
  %v1332 = vsub.f32 0.0, %v1168
  %v1333 = vsub.f32 0.0, %v1171
  %v1334 = vsub.f32 0.0, %v1176
  %v1335 = vsub.f32 0.0, %v1179
  %v1336 = vsub.f32 0.0, %v1184
  %v1337 = vsub.f32 0.0, %v1187
  %v1338 = vsub.f32 0.0, %v1192
  %v1339 = vsub.f32 0.0, %v1195
  %v1340 = vsub.f32 0.0, %v1200
  %v1341 = vsub.f32 0.0, %v1203
  %v1342 = vsub.f32 0.0, %v1208
  %v1343 = vsub.f32 0.0, %v1211
  %v1344 = vsub.f32 0.0, %v1216
  %v1345 = vsub.f32 0.0, %v1219
  %v1346 = vsub.f32 0.0, %v1224
  %v1347 = vsub.f32 0.0, %v1227
  %v1348 = vsub.f32 0.0, %v1232
  %v1349 = vsub.f32 0.0, %v1235
  %v1350 = vsub.f32 0.0, %v1240
  %v1351 = vsub.f32 0.0, %v1243
  %v1352 = vsub.f32 0.0, %v1248
  %v1353 = vsub.f32 0.0, %v1251
  %v1354 = vmul.f32 %v1254, 1.442695
  %v1355 = vpow.pop %v1354
  %v1356 = vmul.f32 %v1255, 1.442695
  %v1357 = vpow.pop %v1356
  %v1358 = vmul.f32 %v1256, 1.442695
  %v1359 = vpow.pop %v1358
  %v1360 = vmul.f32 %v1257, 1.442695
  %v1361 = vpow.pop %v1360
  %v1362 = vmul.f32 %v1258, 1.442695
  %v1363 = vpow.pop %v1362
  %v1364 = vmul.f32 %v1259, 1.442695
  %v1365 = vpow.pop %v1364
  %v1366 = vmul.f32 %v1260, 1.442695
  %v1367 = vpow.pop %v1366
  %v1368 = vmul.f32 %v1261, 1.442695
  %v1369 = vpow.pop %v1368
  %v1370 = vmul.f32 %v1262, 1.442695
  %v1371 = vpow.pop %v1370
  %v1372 = vmul.f32 %v1263, 1.442695
  %v1373 = vpow.pop %v1372
  %v1374 = vmul.f32 %v1264, 1.442695
  %v1375 = vpow.pop %v1374
  %v1376 = vmul.f32 %v1265, 1.442695
  %v1377 = vpow.pop %v1376
  %v1378 = vmul.f32 %v1266, 1.442695
  %v1379 = vpow.pop %v1378
  %v1380 = vmul.f32 %v1267, 1.442695
  %v1381 = vpow.pop %v1380
  %v1382 = vmul.f32 %v1268, 1.442695
  %v1383 = vpow.pop %v1382
  %v1384 = vmul.f32 %v1269, 1.442695
  %v1385 = vpow.pop %v1384
  %v1386 = vmul.f32 %v1270, 1.442695
  %v1387 = vpow.pop %v1386
  %v1388 = vmul.f32 %v1271, 1.442695
  %v1389 = vpow.pop %v1388
  %v1390 = vmul.f32 %v1272, 1.442695
  %v1391 = vpow.pop %v1390
  %v1392 = vmul.f32 %v1273, 1.442695
  %v1393 = vpow.pop %v1392
  %v1394 = vmul.f32 %v1274, 1.442695
  %v1395 = vpow.pop %v1394
  %v1396 = vmul.f32 %v1275, 1.442695
  %v1397 = vpow.pop %v1396
  %v1398 = vmul.f32 %v1276, 1.442695
  %v1399 = vpow.pop %v1398
  %v1400 = vmul.f32 %v1277, 1.442695
  %v1401 = vpow.pop %v1400
  %v1402 = vmul.f32 %v1278, 1.442695
  %v1403 = vpow.pop %v1402
  %v1404 = vmul.f32 %v1279, 1.442695
  %v1405 = vpow.pop %v1404
  %v1406 = vmul.f32 %v1280, 1.442695
  %v1407 = vpow.pop %v1406
  %v1408 = vmul.f32 %v1281, 1.442695
  %v1409 = vpow.pop %v1408
  %v1410 = vmul.f32 %v1282, 1.442695
  %v1411 = vpow.pop %v1410
  %v1412 = vmul.f32 %v1283, 1.442695
  %v1413 = vpow.pop %v1412
  %v1414 = vmul.f32 %v1284, 1.442695
  %v1415 = vpow.pop %v1414
  %v1416 = vmul.f32 %v1285, 1.442695
  %v1417 = vpow.pop %v1416
  %v1418 = vmul.f32 %v1286, 1.442695
  %v1419 = vpow.pop %v1418
  %v1420 = vmul.f32 %v1287, 1.442695
  %v1421 = vpow.pop %v1420
  %v1422 = vmul.f32 %v1288, 1.442695
  %v1423 = vpow.pop %v1422
  %v1424 = vmul.f32 %v1289, 1.442695
  %v1425 = vpow.pop %v1424
  %v1426 = vmul.f32 %v1290, 1.442695
  %v1427 = vpow.pop %v1426
  %v1428 = vmul.f32 %v1291, 1.442695
  %v1429 = vpow.pop %v1428
  %v1430 = vmul.f32 %v1292, 1.442695
  %v1431 = vpow.pop %v1430
  %v1432 = vmul.f32 %v1293, 1.442695
  %v1433 = vpow.pop %v1432
  %v1434 = vmul.f32 %v1294, 1.442695
  %v1435 = vpow.pop %v1434
  %v1436 = vmul.f32 %v1295, 1.442695
  %v1437 = vpow.pop %v1436
  %v1438 = vmul.f32 %v1296, 1.442695
  %v1439 = vpow.pop %v1438
  %v1440 = vmul.f32 %v1297, 1.442695
  %v1441 = vpow.pop %v1440
  %v1442 = vmul.f32 %v1298, 1.442695
  %v1443 = vpow.pop %v1442
  %v1444 = vmul.f32 %v1299, 1.442695
  %v1445 = vpow.pop %v1444
  %v1446 = vmul.f32 %v1300, 1.442695
  %v1447 = vpow.pop %v1446
  %v1448 = vmul.f32 %v1301, 1.442695
  %v1449 = vpow.pop %v1448
  %v1450 = vmul.f32 %v1302, 1.442695
  %v1451 = vpow.pop %v1450
  %v1452 = vmul.f32 %v1303, 1.442695
  %v1453 = vpow.pop %v1452
  %v1454 = vmul.f32 %v1304, 1.442695
  %v1455 = vpow.pop %v1454
  %v1456 = vmul.f32 %v1305, 1.442695
  %v1457 = vpow.pop %v1456
  %v1458 = vmul.f32 %v1306, 1.442695
  %v1459 = vpow.pop %v1458
  %v1460 = vmul.f32 %v1307, 1.442695
  %v1461 = vpow.pop %v1460
  %v1462 = vmul.f32 %v1308, 1.442695
  %v1463 = vpow.pop %v1462
  %v1464 = vmul.f32 %v1309, 1.442695
  %v1465 = vpow.pop %v1464
  %v1466 = vmul.f32 %v1310, 1.442695
  %v1467 = vpow.pop %v1466
  %v1468 = vmul.f32 %v1311, 1.442695
  %v1469 = vpow.pop %v1468
  %v1470 = vmul.f32 %v1312, 1.442695
  %v1471 = vpow.pop %v1470
  %v1472 = vmul.f32 %v1313, 1.442695
  %v1473 = vpow.pop %v1472
  %v1474 = vmul.f32 %v1314, 1.442695
  %v1475 = vpow.pop %v1474
  %v1476 = vmul.f32 %v1315, 1.442695
  %v1477 = vpow.pop %v1476
  %v1478 = vmul.f32 %v1316, 1.442695
  %v1479 = vpow.pop %v1478
  %v1480 = vmul.f32 %v1317, 1.442695
  %v1481 = vpow.pop %v1480
  %v1482 = vmul.f32 %v1318, 1.442695
  %v1483 = vpow.pop %v1482
  %v1484 = vmul.f32 %v1319, 1.442695
  %v1485 = vpow.pop %v1484
  %v1486 = vmul.f32 %v1320, 1.442695
  %v1487 = vpow.pop %v1486
  %v1488 = vmul.f32 %v1321, 1.442695
  %v1489 = vpow.pop %v1488
  %v1490 = vmul.f32 %v1322, 1.442695
  %v1491 = vpow.pop %v1490
  %v1492 = vmul.f32 %v1323, 1.442695
  %v1493 = vpow.pop %v1492
  %v1494 = vmul.f32 %v1324, 1.442695
  %v1495 = vpow.pop %v1494
  %v1496 = vmul.f32 %v1325, 1.442695
  %v1497 = vpow.pop %v1496
  %v1498 = vmul.f32 %v1326, 1.442695
  %v1499 = vpow.pop %v1498
  %v1500 = vmul.f32 %v1327, 1.442695
  %v1501 = vpow.pop %v1500
  %v1502 = vmul.f32 %v1328, 1.442695
  %v1503 = vpow.pop %v1502
  %v1504 = vmul.f32 %v1329, 1.442695
  %v1505 = vpow.pop %v1504
  %v1506 = vmul.f32 %v1330, 1.442695
  %v1507 = vpow.pop %v1506
  %v1508 = vmul.f32 %v1331, 1.442695
  %v1509 = vpow.pop %v1508
  %v1510 = vmul.f32 %v1332, 1.442695
  %v1511 = vpow.pop %v1510
  %v1512 = vmul.f32 %v1333, 1.442695
  %v1513 = vpow.pop %v1512
  %v1514 = vmul.f32 %v1334, 1.442695
  %v1515 = vpow.pop %v1514
  %v1516 = vmul.f32 %v1335, 1.442695
  %v1517 = vpow.pop %v1516
  %v1518 = vmul.f32 %v1336, 1.442695
  %v1519 = vpow.pop %v1518
  %v1520 = vmul.f32 %v1337, 1.442695
  %v1521 = vpow.pop %v1520
  %v1522 = vmul.f32 %v1338, 1.442695
  %v1523 = vpow.pop %v1522
  %v1524 = vmul.f32 %v1339, 1.442695
  %v1525 = vpow.pop %v1524
  %v1526 = vmul.f32 %v1340, 1.442695
  %v1527 = vpow.pop %v1526
  %v1528 = vmul.f32 %v1341, 1.442695
  %v1529 = vpow.pop %v1528
  %v1530 = vmul.f32 %v1342, 1.442695
  %v1531 = vpow.pop %v1530
  %v1532 = vmul.f32 %v1343, 1.442695
  %v1533 = vpow.pop %v1532
  %v1534 = vmul.f32 %v1344, 1.442695
  %v1535 = vpow.pop %v1534
  %v1536 = vmul.f32 %v1345, 1.442695
  %v1537 = vpow.pop %v1536
  %v1538 = vmul.f32 %v1346, 1.442695
  %v1539 = vpow.pop %v1538
  %v1540 = vmul.f32 %v1347, 1.442695
  %v1541 = vpow.pop %v1540
  %v1542 = vmul.f32 %v1348, 1.442695
  %v1543 = vpow.pop %v1542
  %v1544 = vmul.f32 %v1349, 1.442695
  %v1545 = vpow.pop %v1544
  %v1546 = vmul.f32 %v1350, 1.442695
  %v1547 = vpow.pop %v1546
  %v1548 = vmul.f32 %v1351, 1.442695
  %v1549 = vpow.pop %v1548
  %v1550 = vmul.f32 %v1352, 1.442695
  %v1551 = vpow.pop %v1550
  %v1552 = vmul.f32 %v1353, 1.442695
  %v1553 = vpow.pop %v1552
  %v1554 = vadd.f32 %v1355, 1.0
  %v1555 = vadd.f32 %v1357, 1.0
  %v1556 = vadd.f32 %v1359, 1.0
  %v1557 = vadd.f32 %v1361, 1.0
  %v1558 = vadd.f32 %v1363, 1.0
  %v1559 = vadd.f32 %v1365, 1.0
  %v1560 = vadd.f32 %v1367, 1.0
  %v1561 = vadd.f32 %v1369, 1.0
  %v1562 = vadd.f32 %v1371, 1.0
  %v1563 = vadd.f32 %v1373, 1.0
  %v1564 = vadd.f32 %v1375, 1.0
  %v1565 = vadd.f32 %v1377, 1.0
  %v1566 = vadd.f32 %v1379, 1.0
  %v1567 = vadd.f32 %v1381, 1.0
  %v1568 = vadd.f32 %v1383, 1.0
  %v1569 = vadd.f32 %v1385, 1.0
  %v1570 = vadd.f32 %v1387, 1.0
  %v1571 = vadd.f32 %v1389, 1.0
  %v1572 = vadd.f32 %v1391, 1.0
  %v1573 = vadd.f32 %v1393, 1.0
  %v1574 = vadd.f32 %v1395, 1.0
  %v1575 = vadd.f32 %v1397, 1.0
  %v1576 = vadd.f32 %v1399, 1.0
  %v1577 = vadd.f32 %v1401, 1.0
  %v1578 = vadd.f32 %v1403, 1.0
  %v1579 = vadd.f32 %v1405, 1.0
  %v1580 = vadd.f32 %v1407, 1.0
  %v1581 = vadd.f32 %v1409, 1.0
  %v1582 = vadd.f32 %v1411, 1.0
  %v1583 = vadd.f32 %v1413, 1.0
  %v1584 = vadd.f32 %v1415, 1.0
  %v1585 = vadd.f32 %v1417, 1.0
  %v1586 = vadd.f32 %v1419, 1.0
  %v1587 = vadd.f32 %v1421, 1.0
  %v1588 = vadd.f32 %v1423, 1.0
  %v1589 = vadd.f32 %v1425, 1.0
  %v1590 = vadd.f32 %v1427, 1.0
  %v1591 = vadd.f32 %v1429, 1.0
  %v1592 = vadd.f32 %v1431, 1.0
  %v1593 = vadd.f32 %v1433, 1.0
  %v1594 = vadd.f32 %v1435, 1.0
  %v1595 = vadd.f32 %v1437, 1.0
  %v1596 = vadd.f32 %v1439, 1.0
  %v1597 = vadd.f32 %v1441, 1.0
  %v1598 = vadd.f32 %v1443, 1.0
  %v1599 = vadd.f32 %v1445, 1.0
  %v1600 = vadd.f32 %v1447, 1.0
  %v1601 = vadd.f32 %v1449, 1.0
  %v1602 = vadd.f32 %v1451, 1.0
  %v1603 = vadd.f32 %v1453, 1.0
  %v1604 = vadd.f32 %v1455, 1.0
  %v1605 = vadd.f32 %v1457, 1.0
  %v1606 = vadd.f32 %v1459, 1.0
  %v1607 = vadd.f32 %v1461, 1.0
  %v1608 = vadd.f32 %v1463, 1.0
  %v1609 = vadd.f32 %v1465, 1.0
  %v1610 = vadd.f32 %v1467, 1.0
  %v1611 = vadd.f32 %v1469, 1.0
  %v1612 = vadd.f32 %v1471, 1.0
  %v1613 = vadd.f32 %v1473, 1.0
  %v1614 = vadd.f32 %v1475, 1.0
  %v1615 = vadd.f32 %v1477, 1.0
  %v1616 = vadd.f32 %v1479, 1.0
  %v1617 = vadd.f32 %v1481, 1.0
  %v1618 = vadd.f32 %v1483, 1.0
  %v1619 = vadd.f32 %v1485, 1.0
  %v1620 = vadd.f32 %v1487, 1.0
  %v1621 = vadd.f32 %v1489, 1.0
  %v1622 = vadd.f32 %v1491, 1.0
  %v1623 = vadd.f32 %v1493, 1.0
  %v1624 = vadd.f32 %v1495, 1.0
  %v1625 = vadd.f32 %v1497, 1.0
  %v1626 = vadd.f32 %v1499, 1.0
  %v1627 = vadd.f32 %v1501, 1.0
  %v1628 = vadd.f32 %v1503, 1.0
  %v1629 = vadd.f32 %v1505, 1.0
  %v1630 = vadd.f32 %v1507, 1.0
  %v1631 = vadd.f32 %v1509, 1.0
  %v1632 = vadd.f32 %v1511, 1.0
  %v1633 = vadd.f32 %v1513, 1.0
  %v1634 = vadd.f32 %v1515, 1.0
  %v1635 = vadd.f32 %v1517, 1.0
  %v1636 = vadd.f32 %v1519, 1.0
  %v1637 = vadd.f32 %v1521, 1.0
  %v1638 = vadd.f32 %v1523, 1.0
  %v1639 = vadd.f32 %v1525, 1.0
  %v1640 = vadd.f32 %v1527, 1.0
  %v1641 = vadd.f32 %v1529, 1.0
  %v1642 = vadd.f32 %v1531, 1.0
  %v1643 = vadd.f32 %v1533, 1.0
  %v1644 = vadd.f32 %v1535, 1.0
  %v1645 = vadd.f32 %v1537, 1.0
  %v1646 = vadd.f32 %v1539, 1.0
  %v1647 = vadd.f32 %v1541, 1.0
  %v1648 = vadd.f32 %v1543, 1.0
  %v1649 = vadd.f32 %v1545, 1.0
  %v1650 = vadd.f32 %v1547, 1.0
  %v1651 = vadd.f32 %v1549, 1.0
  %v1652 = vadd.f32 %v1551, 1.0
  %v1653 = vadd.f32 %v1553, 1.0
  %v1654 = vrcp.pop %v1554
  %v1655 = vrcp.pop %v1555
  %v1656 = vrcp.pop %v1556
  %v1657 = vrcp.pop %v1557
  %v1658 = vrcp.pop %v1558
  %v1659 = vrcp.pop %v1559
  %v1660 = vrcp.pop %v1560
  %v1661 = vrcp.pop %v1561
  %v1662 = vrcp.pop %v1562
  %v1663 = vrcp.pop %v1563
  %v1664 = vrcp.pop %v1564
  %v1665 = vrcp.pop %v1565
  %v1666 = vrcp.pop %v1566
  %v1667 = vrcp.pop %v1567
  %v1668 = vrcp.pop %v1568
  %v1669 = vrcp.pop %v1569
  %v1670 = vrcp.pop %v1570
  %v1671 = vrcp.pop %v1571
  %v1672 = vrcp.pop %v1572
  %v1673 = vrcp.pop %v1573
  %v1674 = vrcp.pop %v1574
  %v1675 = vrcp.pop %v1575
  %v1676 = vrcp.pop %v1576
  %v1677 = vrcp.pop %v1577
  %v1678 = vrcp.pop %v1578
  %v1679 = vrcp.pop %v1579
  %v1680 = vrcp.pop %v1580
  %v1681 = vrcp.pop %v1581
  %v1682 = vrcp.pop %v1582
  %v1683 = vrcp.pop %v1583
  %v1684 = vrcp.pop %v1584
  %v1685 = vrcp.pop %v1585
  %v1686 = vrcp.pop %v1586
  %v1687 = vrcp.pop %v1587
  %v1688 = vrcp.pop %v1588
  %v1689 = vrcp.pop %v1589
  %v1690 = vrcp.pop %v1590
  %v1691 = vrcp.pop %v1591
  %v1692 = vrcp.pop %v1592
  %v1693 = vrcp.pop %v1593
  %v1694 = vrcp.pop %v1594
  %v1695 = vrcp.pop %v1595
  %v1696 = vrcp.pop %v1596
  %v1697 = vrcp.pop %v1597
  %v1698 = vrcp.pop %v1598
  %v1699 = vrcp.pop %v1599
  %v1700 = vrcp.pop %v1600
  %v1701 = vrcp.pop %v1601
  %v1702 = vrcp.pop %v1602
  %v1703 = vrcp.pop %v1603
  %v1704 = vrcp.pop %v1604
  %v1705 = vrcp.pop %v1605
  %v1706 = vrcp.pop %v1606
  %v1707 = vrcp.pop %v1607
  %v1708 = vrcp.pop %v1608
  %v1709 = vrcp.pop %v1609
  %v1710 = vrcp.pop %v1610
  %v1711 = vrcp.pop %v1611
  %v1712 = vrcp.pop %v1612
  %v1713 = vrcp.pop %v1613
  %v1714 = vrcp.pop %v1614
  %v1715 = vrcp.pop %v1615
  %v1716 = vrcp.pop %v1616
  %v1717 = vrcp.pop %v1617
  %v1718 = vrcp.pop %v1618
  %v1719 = vrcp.pop %v1619
  %v1720 = vrcp.pop %v1620
  %v1721 = vrcp.pop %v1621
  %v1722 = vrcp.pop %v1622
  %v1723 = vrcp.pop %v1623
  %v1724 = vrcp.pop %v1624
  %v1725 = vrcp.pop %v1625
  %v1726 = vrcp.pop %v1626
  %v1727 = vrcp.pop %v1627
  %v1728 = vrcp.pop %v1628
  %v1729 = vrcp.pop %v1629
  %v1730 = vrcp.pop %v1630
  %v1731 = vrcp.pop %v1631
  %v1732 = vrcp.pop %v1632
  %v1733 = vrcp.pop %v1633
  %v1734 = vrcp.pop %v1634
  %v1735 = vrcp.pop %v1635
  %v1736 = vrcp.pop %v1636
  %v1737 = vrcp.pop %v1637
  %v1738 = vrcp.pop %v1638
  %v1739 = vrcp.pop %v1639
  %v1740 = vrcp.pop %v1640
  %v1741 = vrcp.pop %v1641
  %v1742 = vrcp.pop %v1642
  %v1743 = vrcp.pop %v1643
  %v1744 = vrcp.pop %v1644
  %v1745 = vrcp.pop %v1645
  %v1746 = vrcp.pop %v1646
  %v1747 = vrcp.pop %v1647
  %v1748 = vrcp.pop %v1648
  %v1749 = vrcp.pop %v1649
  %v1750 = vrcp.pop %v1650
  %v1751 = vrcp.pop %v1651
  %v1752 = vrcp.pop %v1652
  %v1753 = vrcp.pop %v1653
  %v1754 = vadd.f32 %v1654, %v1679
  %v1755 = vadd.f32 %v1655, %v1680
  %v1756 = vadd.f32 %v1656, %v1681
  %v1757 = vadd.f32 %v1657, %v1682
  %v1758 = vadd.f32 %v1658, %v1683
  %v1759 = vadd.f32 %v1659, %v1684
  %v1760 = vadd.f32 %v1660, %v1685
  %v1761 = vadd.f32 %v1661, %v1686
  %v1762 = vadd.f32 %v1662, %v1687
  %v1763 = vadd.f32 %v1663, %v1688
  %v1764 = vadd.f32 %v1664, %v1689
  %v1765 = vadd.f32 %v1665, %v1690
  %v1766 = vadd.f32 %v1666, %v1691
  %v1767 = vadd.f32 %v1667, %v1692
  %v1768 = vadd.f32 %v1668, %v1693
  %v1769 = vadd.f32 %v1669, %v1694
  %v1770 = vadd.f32 %v1670, %v1695
  %v1771 = vadd.f32 %v1671, %v1696
  %v1772 = vadd.f32 %v1672, %v1697
  %v1773 = vadd.f32 %v1673, %v1698
  %v1774 = vadd.f32 %v1674, %v1699
  %v1775 = vadd.f32 %v1675, %v1700
  %v1776 = vadd.f32 %v1676, %v1701
  %v1777 = vadd.f32 %v1677, %v1702
  %v1778 = vadd.f32 %v1678, %v1703
  %v1779 = vadd.f32 %v1754, %v1704
  %v1780 = vadd.f32 %v1755, %v1705
  %v1781 = vadd.f32 %v1756, %v1706
  %v1782 = vadd.f32 %v1757, %v1707
  %v1783 = vadd.f32 %v1758, %v1708
  %v1784 = vadd.f32 %v1759, %v1709
  %v1785 = vadd.f32 %v1760, %v1710
  %v1786 = vadd.f32 %v1761, %v1711
  %v1787 = vadd.f32 %v1762, %v1712
  %v1788 = vadd.f32 %v1763, %v1713
  %v1789 = vadd.f32 %v1764, %v1714
  %v1790 = vadd.f32 %v1765, %v1715
  %v1791 = vadd.f32 %v1766, %v1716
  %v1792 = vadd.f32 %v1767, %v1717
  %v1793 = vadd.f32 %v1768, %v1718
  %v1794 = vadd.f32 %v1769, %v1719
  %v1795 = vadd.f32 %v1770, %v1720
  %v1796 = vadd.f32 %v1771, %v1721
  %v1797 = vadd.f32 %v1772, %v1722
  %v1798 = vadd.f32 %v1773, %v1723
  %v1799 = vadd.f32 %v1774, %v1724
  %v1800 = vadd.f32 %v1775, %v1725
  %v1801 = vadd.f32 %v1776, %v1726
  %v1802 = vadd.f32 %v1777, %v1727
  %v1803 = vadd.f32 %v1778, %v1728
  %v1804 = vadd.f32 %v1779, %v1729
  %v1805 = vadd.f32 %v1780, %v1730
  %v1806 = vadd.f32 %v1781, %v1731
  %v1807 = vadd.f32 %v1782, %v1732
  %v1808 = vadd.f32 %v1783, %v1733
  %v1809 = vadd.f32 %v1784, %v1734
  %v1810 = vadd.f32 %v1785, %v1735
  %v1811 = vadd.f32 %v1786, %v1736
  %v1812 = vadd.f32 %v1787, %v1737
  %v1813 = vadd.f32 %v1788, %v1738
  %v1814 = vadd.f32 %v1789, %v1739
  %v1815 = vadd.f32 %v1790, %v1740
  %v1816 = vadd.f32 %v1791, %v1741
  %v1817 = vadd.f32 %v1792, %v1742
  %v1818 = vadd.f32 %v1793, %v1743
  %v1819 = vadd.f32 %v1794, %v1744
  %v1820 = vadd.f32 %v1795, %v1745
  %v1821 = vadd.f32 %v1796, %v1746
  %v1822 = vadd.f32 %v1797, %v1747
  %v1823 = vadd.f32 %v1798, %v1748
  %v1824 = vadd.f32 %v1799, %v1749
  %v1825 = vadd.f32 %v1800, %v1750
  %v1826 = vadd.f32 %v1801, %v1751
  %v1827 = vadd.f32 %v1802, %v1752
  %v1828 = vadd.f32 %v1803, %v1753
  %v1829 = vmul.f32 %v1804, 0.25
  %v1830 = vmul.f32 %v1805, 0.25
  %v1831 = vmul.f32 %v1806, 0.25
  %v1832 = vmul.f32 %v1807, 0.25
  %v1833 = vmul.f32 %v1808, 0.25
  %v1834 = vmul.f32 %v1809, 0.25
  %v1835 = vmul.f32 %v1810, 0.25
  %v1836 = vmul.f32 %v1811, 0.25
  %v1837 = vmul.f32 %v1812, 0.25
  %v1838 = vmul.f32 %v1813, 0.25
  %v1839 = vmul.f32 %v1814, 0.25
  %v1840 = vmul.f32 %v1815, 0.25
  %v1841 = vmul.f32 %v1816, 0.25
  %v1842 = vmul.f32 %v1817, 0.25
  %v1843 = vmul.f32 %v1818, 0.25
  %v1844 = vmul.f32 %v1819, 0.25
  %v1845 = vmul.f32 %v1820, 0.25
  %v1846 = vmul.f32 %v1821, 0.25
  %v1847 = vmul.f32 %v1822, 0.25
  %v1848 = vmul.f32 %v1823, 0.25
  %v1849 = vmul.f32 %v1824, 0.25
  %v1850 = vmul.f32 %v1825, 0.25
  %v1851 = vmul.f32 %v1826, 0.25
  %v1852 = vmul.f32 %v1827, 0.25
  %v1853 = vmul.f32 %v1828, 0.25
  %v1854 = vpack.c.bf16 %v1830, %v1829
  %v1855 = vpack.c.bf16 %v1832, %v1831
  %v1856 = vpack.c.bf16 %v1834, %v1833
  %v1857 = vpack.c.bf16 %v1836, %v1835
  %v1858 = vpack.c.bf16 %v1838, %v1837
  %v1859 = vpack.c.bf16 %v1840, %v1839
  %v1860 = vpack.c.bf16 %v1842, %v1841
  %v1861 = vpack.c.bf16 %v1844, %v1843
  %v1862 = vpack.c.bf16 %v1846, %v1845
  %v1863 = vpack.c.bf16 %v1848, %v1847
  %v1864 = vpack.c.bf16 %v1850, %v1849
  %v1865 = vpack.c.bf16 %v1852, %v1851
  %v1866 = vpack.c.bf16 %v1853, %v1853
  %v1867 = vld [vmem:[%s3] sm:$0xf]
  %v1868 = vld [vmem:[%s3 + $0x4] sm:$0xf]
  %v1869 = vld [vmem:[%s3 + $0x8] sm:$0xf]
  %v1870 = vld [vmem:[%s3 + $0xc] sm:$0xf]
  %v1871 = vld [vmem:[%s3 + $0x10] sm:$0xf]
  %v1872 = vld [vmem:[%s3 + $0x14] sm:$0xf]
  %v1873 = vld [vmem:[%s3 + $0x18] sm:$0xf]
  %v1874 = vld [vmem:[%s3 + $0x1c] sm:$0xf]
  %v1875 = vld [vmem:[%s3 + $0x20] sm:$0xf]
  %v1876 = vld [vmem:[%s3 + $0x24] sm:$0xf]
  %v1877 = vld [vmem:[%s3 + $0x28] sm:$0xf]
  %v1878 = vld [vmem:[%s3 + $0x2c] sm:$0xf]
  %v1879 = vld [vmem:[%s3 + $0x30] sm:$0xf]
  %v1880 = vld [vmem:[%s3 + $0x34] sm:$0xf]
  %v1881 = vld [vmem:[%s3 + $0x38] sm:$0xf]
  %v1882 = vld [vmem:[%s3 + $0x3c] sm:$0xf]
  %s1883 = scalar_lea.vmem %s3, 64
  %v1884 = vld [vmem:[%s1883] sm:$0xf]
  %v1885 = vld [vmem:[%s1883 + $0x4] sm:$0xf]
  %v1886 = vld [vmem:[%s1883 + $0x8] sm:$0xf]
  %v1887 = vld [vmem:[%s1883 + $0xc] sm:$0xf]
  %v1888 = vld [vmem:[%s1883 + $0x10] sm:$0xf]
  %v1889 = vld [vmem:[%s1883 + $0x14] sm:$0xf]
  %v1890 = vld [vmem:[%s1883 + $0x18] sm:$0xf]
  %v1891 = vld [vmem:[%s1883 + $0x1c] sm:$0xf]
  %v1892 = vld [vmem:[%s1883 + $0x20] sm:$0xf]
  %v1893 = vld [vmem:[%s1883 + $0x24] sm:$0xf]
  %v1894 = vld [vmem:[%s1883 + $0x28] sm:$0xf]
  %v1895 = vld [vmem:[%s1883 + $0x2c] sm:$0xf]
  %v1896 = vld [vmem:[%s1883 + $0x30] sm:$0xf]
  %v1897 = vld [vmem:[%s1883 + $0x34] sm:$0xf]
  %v1898 = vld [vmem:[%s1883 + $0x38] sm:$0xf]
  %v1899 = vld [vmem:[%s1883 + $0x3c] sm:$0xf]
  %v1901 = vrot.slane %v1854, 4
  %v1919 = vunpack.c.l.b16 %v1884
  %v1920 = vunpack.c.l.b16 %v1885
  %v1921 = vunpack.c.l.b16 %v1886
  %v1922 = vunpack.c.l.b16 %v1887
  %v1923 = vunpack.c.l.b16 %v1888
  %v1924 = vunpack.c.l.b16 %v1889
  %v1925 = vunpack.c.l.b16 %v1890
  %v1926 = vunpack.c.l.b16 %v1891
  %v1927 = vunpack.c.l.b16 %v1892
  %v1928 = vunpack.c.l.b16 %v1893
  %v1929 = vunpack.c.l.b16 %v1894
  %v1930 = vunpack.c.l.b16 %v1895
  %v1931 = vunpack.c.l.b16 %v1896
  %v1932 = vunpack.c.l.b16 %v1897
  %v1933 = vunpack.c.l.b16 %v1898
  %v1934 = vunpack.c.l.b16 %v1899
  %v1935 = vpack.c.b16 %v1920, %v1919
  %v1936 = vpack.c.b16 %v1922, %v1921
  %v1937 = vpack.c.b16 %v1924, %v1923
  %v1938 = vpack.c.b16 %v1926, %v1925
  %v1939 = vpack.c.b16 %v1928, %v1927
  %v1940 = vpack.c.b16 %v1930, %v1929
  %v1941 = vpack.c.b16 %v1932, %v1931
  %v1942 = vpack.c.b16 %v1934, %v1933
  %1951 = vmatprep.subr.bf16.mxu0 0
  %1952 = vmatpush1.bf16.msra.mxu0 %v1942
  %1953 = vmatprep.subr.bf16.mxu0 0
  %1954 = vmatpush1.bf16.msra.mxu0 %v1941
  %1955 = vmatprep.subr.bf16.mxu0 0
  %1956 = vmatpush1.bf16.msra.mxu0 %v1940
  %1957 = vmatprep.subr.bf16.mxu0 0
  %1958 = vmatpush1.bf16.msra.mxu0 %v1939
  %1959 = vmatprep.subr.bf16.mxu0 0
  %1960 = vmatpush1.bf16.msra.mxu0 %v1938
  %1961 = vmatprep.subr.bf16.mxu0 0
  %1962 = vmatpush1.bf16.msra.mxu0 %v1937
  %1963 = vmatprep.subr.bf16.mxu0 0
  %1964 = vmatpush1.bf16.msra.mxu0 %v1936
  %1965 = vmatprep.subr.bf16.mxu0 0
  %1966 = vmatpush1.bf16.msra.mxu0 %v1935
  %1967 = vmatprep.subr.bf16.mxu0 0
  %1968 = vmatpush2.bf16.msra.mxu0 0
  %1969 = vmatprep.subr.bf16.mxu0 0
  %1970 = vmatpush2.bf16.msra.mxu0 0
  %1971 = vmatprep.subr.bf16.mxu0 0
  %1972 = vmatpush2.bf16.msra.mxu0 0
  %1973 = vmatprep.subr.bf16.mxu0 0
  %1974 = vmatpush2.bf16.msra.mxu0 0
  %1975 = vmatprep.subr.bf16.mxu0 0
  %1976 = vmatpush2.bf16.msra.mxu0 0
  %1977 = vmatprep.subr.bf16.mxu0 0
  %1978 = vmatpush2.bf16.msra.mxu0 0
  %1979 = vmatprep.subr.bf16.mxu0 0
  %1980 = vmatpush2.bf16.msra.mxu0 0
  %1981 = vmatprep.subr.bf16.mxu0 0
  %1982 = vmatpush2.bf16.msra.mxu0 0
  %1983 = vmatprep.mubr.bf16.mxu0 0
  %1984 = vmatmul.mubr.bf16.gmra.mxu0 %v1901
  %v1985 = vpop.f32.mrf.mxu0
  %v1986 = vadd.f32 0.0, %v1985
  %v1987 = vpop.f32.mrf.mxu0
  %v1988 = vpop.f32.mrf.mxu0
  %v1989 = vpop.f32.mrf.mxu0
  %1990 = vdwg.mxu0
  %v2007 = vunpack.c.l.b16 %v1867
  %v2008 = vunpack.c.l.b16 %v1868
  %v2009 = vunpack.c.l.b16 %v1869
  %v2010 = vunpack.c.l.b16 %v1870
  %v2011 = vunpack.c.l.b16 %v1871
  %v2012 = vunpack.c.l.b16 %v1872
  %v2013 = vunpack.c.l.b16 %v1873
  %v2014 = vunpack.c.l.b16 %v1874
  %v2015 = vunpack.c.l.b16 %v1875
  %v2016 = vunpack.c.l.b16 %v1876
  %v2017 = vunpack.c.l.b16 %v1877
  %v2018 = vunpack.c.l.b16 %v1878
  %v2019 = vunpack.c.l.b16 %v1879
  %v2020 = vunpack.c.l.b16 %v1880
  %v2021 = vunpack.c.l.b16 %v1881
  %v2022 = vunpack.c.l.b16 %v1882
  %v2023 = vpack.c.b16 %v2008, %v2007
  %v2024 = vpack.c.b16 %v2010, %v2009
  %v2025 = vpack.c.b16 %v2012, %v2011
  %v2026 = vpack.c.b16 %v2014, %v2013
  %v2027 = vpack.c.b16 %v2016, %v2015
  %v2028 = vpack.c.b16 %v2018, %v2017
  %v2029 = vpack.c.b16 %v2020, %v2019
  %v2030 = vpack.c.b16 %v2022, %v2021
  %2039 = vmatprep.subr.bf16.mxu0 0
  %2040 = vmatpush1.bf16.msra.mxu0 %v2030
  %2041 = vmatprep.subr.bf16.mxu0 0
  %2042 = vmatpush1.bf16.msra.mxu0 %v2029
  %2043 = vmatprep.subr.bf16.mxu0 0
  %2044 = vmatpush1.bf16.msra.mxu0 %v2028
  %2045 = vmatprep.subr.bf16.mxu0 0
  %2046 = vmatpush1.bf16.msra.mxu0 %v2027
  %2047 = vmatprep.subr.bf16.mxu0 0
  %2048 = vmatpush1.bf16.msra.mxu0 %v2026
  %2049 = vmatprep.subr.bf16.mxu0 0
  %2050 = vmatpush1.bf16.msra.mxu0 %v2025
  %2051 = vmatprep.subr.bf16.mxu0 0
  %2052 = vmatpush1.bf16.msra.mxu0 %v2024
  %2053 = vmatprep.subr.bf16.mxu0 0
  %2054 = vmatpush1.bf16.msra.mxu0 %v2023
  %2055 = vmatprep.subr.bf16.mxu0 0
  %2056 = vmatpush2.bf16.msra.mxu0 0
  %2057 = vmatprep.subr.bf16.mxu0 0
  %2058 = vmatpush2.bf16.msra.mxu0 0
  %2059 = vmatprep.subr.bf16.mxu0 0
  %2060 = vmatpush2.bf16.msra.mxu0 0
  %2061 = vmatprep.subr.bf16.mxu0 0
  %2062 = vmatpush2.bf16.msra.mxu0 0
  %2063 = vmatprep.subr.bf16.mxu0 0
  %2064 = vmatpush2.bf16.msra.mxu0 0
  %2065 = vmatprep.subr.bf16.mxu0 0
  %2066 = vmatpush2.bf16.msra.mxu0 0
  %2067 = vmatprep.subr.bf16.mxu0 0
  %2068 = vmatpush2.bf16.msra.mxu0 0
  %2069 = vmatprep.subr.bf16.mxu0 0
  %2070 = vmatpush2.bf16.msra.mxu0 0
  %2071 = vmatprep.mubr.bf16.mxu0 0
  %2072 = vmatmul.mubr.bf16.gmra.mxu0 %v1854
  %v2073 = vpop.f32.mrf.mxu0
  %v2074 = vadd.f32 %v1986, %v2073
  %v2075 = vpop.f32.mrf.mxu0
  %v2076 = vpop.f32.mrf.mxu0
  %v2077 = vpop.f32.mrf.mxu0
  %2078 = vdwg.mxu0
  %s2079 = scalar_lea.vmem %s3, 128
  %v2080 = vld [vmem:[%s2079] sm:$0xf]
  %v2081 = vld [vmem:[%s2079 + $0x4] sm:$0xf]
  %v2082 = vld [vmem:[%s2079 + $0x8] sm:$0xf]
  %v2083 = vld [vmem:[%s2079 + $0xc] sm:$0xf]
  %v2084 = vld [vmem:[%s2079 + $0x10] sm:$0xf]
  %v2085 = vld [vmem:[%s2079 + $0x14] sm:$0xf]
  %v2086 = vld [vmem:[%s2079 + $0x18] sm:$0xf]
  %v2087 = vld [vmem:[%s2079 + $0x1c] sm:$0xf]
  %v2088 = vld [vmem:[%s2079 + $0x20] sm:$0xf]
  %v2089 = vld [vmem:[%s2079 + $0x24] sm:$0xf]
  %v2090 = vld [vmem:[%s2079 + $0x28] sm:$0xf]
  %v2091 = vld [vmem:[%s2079 + $0x2c] sm:$0xf]
  %v2092 = vld [vmem:[%s2079 + $0x30] sm:$0xf]
  %v2093 = vld [vmem:[%s2079 + $0x34] sm:$0xf]
  %v2094 = vld [vmem:[%s2079 + $0x38] sm:$0xf]
  %v2095 = vld [vmem:[%s2079 + $0x3c] sm:$0xf]
  %v2112 = vunpack.c.l.b16 %v2080
  %v2113 = vunpack.c.l.b16 %v2081
  %v2114 = vunpack.c.l.b16 %v2082
  %v2115 = vunpack.c.l.b16 %v2083
  %v2116 = vunpack.c.l.b16 %v2084
  %v2117 = vunpack.c.l.b16 %v2085
  %v2118 = vunpack.c.l.b16 %v2086
  %v2119 = vunpack.c.l.b16 %v2087
  %v2120 = vunpack.c.l.b16 %v2088
  %v2121 = vunpack.c.l.b16 %v2089
  %v2122 = vunpack.c.l.b16 %v2090
  %v2123 = vunpack.c.l.b16 %v2091
  %v2124 = vunpack.c.l.b16 %v2092
  %v2125 = vunpack.c.l.b16 %v2093
  %v2126 = vunpack.c.l.b16 %v2094
  %v2127 = vunpack.c.l.b16 %v2095
  %v2128 = vpack.c.b16 %v2113, %v2112
  %v2129 = vpack.c.b16 %v2115, %v2114
  %v2130 = vpack.c.b16 %v2117, %v2116
  %v2131 = vpack.c.b16 %v2119, %v2118
  %v2132 = vpack.c.b16 %v2121, %v2120
  %v2133 = vpack.c.b16 %v2123, %v2122
  %v2134 = vpack.c.b16 %v2125, %v2124
  %v2135 = vpack.c.b16 %v2127, %v2126
  %2144 = vmatprep.subr.bf16.mxu0 0
  %2145 = vmatpush1.bf16.msra.mxu0 %v2135
  %2146 = vmatprep.subr.bf16.mxu0 0
  %2147 = vmatpush1.bf16.msra.mxu0 %v2134
  %2148 = vmatprep.subr.bf16.mxu0 0
  %2149 = vmatpush1.bf16.msra.mxu0 %v2133
  %2150 = vmatprep.subr.bf16.mxu0 0
  %2151 = vmatpush1.bf16.msra.mxu0 %v2132
  %2152 = vmatprep.subr.bf16.mxu0 0
  %2153 = vmatpush1.bf16.msra.mxu0 %v2131
  %2154 = vmatprep.subr.bf16.mxu0 0
  %2155 = vmatpush1.bf16.msra.mxu0 %v2130
  %2156 = vmatprep.subr.bf16.mxu0 0
  %2157 = vmatpush1.bf16.msra.mxu0 %v2129
  %2158 = vmatprep.subr.bf16.mxu0 0
  %2159 = vmatpush1.bf16.msra.mxu0 %v2128
  %2160 = vmatprep.subr.bf16.mxu0 0
  %2161 = vmatpush2.bf16.msra.mxu0 0
  %2162 = vmatprep.subr.bf16.mxu0 0
  %2163 = vmatpush2.bf16.msra.mxu0 0
  %2164 = vmatprep.subr.bf16.mxu0 0
  %2165 = vmatpush2.bf16.msra.mxu0 0
  %2166 = vmatprep.subr.bf16.mxu0 0
  %2167 = vmatpush2.bf16.msra.mxu0 0
  %2168 = vmatprep.subr.bf16.mxu0 0
  %2169 = vmatpush2.bf16.msra.mxu0 0
  %2170 = vmatprep.subr.bf16.mxu0 0
  %2171 = vmatpush2.bf16.msra.mxu0 0
  %2172 = vmatprep.subr.bf16.mxu0 0
  %2173 = vmatpush2.bf16.msra.mxu0 0
  %2174 = vmatprep.subr.bf16.mxu0 0
  %2175 = vmatpush2.bf16.msra.mxu0 0
  %2176 = vmatprep.mubr.bf16.mxu0 0
  %2177 = vmatmul.mubr.bf16.gmra.mxu0 %v1855
  %v2178 = vpop.f32.mrf.mxu0
  %v2179 = vadd.f32 0.0, %v2178
  %v2180 = vpop.f32.mrf.mxu0
  %v2181 = vpop.f32.mrf.mxu0
  %v2182 = vpop.f32.mrf.mxu0
  %2183 = vdwg.mxu0
  %v2184 = vadd.f32 %v2074, %v2179
  %s2185 = scalar_lea.vmem %s3, 192
  %v2186 = vld [vmem:[%s2185] sm:$0xf]
  %v2187 = vld [vmem:[%s2185 + $0x4] sm:$0xf]
  %v2188 = vld [vmem:[%s2185 + $0x8] sm:$0xf]
  %v2189 = vld [vmem:[%s2185 + $0xc] sm:$0xf]
  %v2190 = vld [vmem:[%s2185 + $0x10] sm:$0xf]
  %v2191 = vld [vmem:[%s2185 + $0x14] sm:$0xf]
  %v2192 = vld [vmem:[%s2185 + $0x18] sm:$0xf]
  %v2193 = vld [vmem:[%s2185 + $0x1c] sm:$0xf]
  %v2194 = vld [vmem:[%s2185 + $0x20] sm:$0xf]
  %v2195 = vld [vmem:[%s2185 + $0x24] sm:$0xf]
  %v2196 = vld [vmem:[%s2185 + $0x28] sm:$0xf]
  %v2197 = vld [vmem:[%s2185 + $0x2c] sm:$0xf]
  %v2198 = vld [vmem:[%s2185 + $0x30] sm:$0xf]
  %v2199 = vld [vmem:[%s2185 + $0x34] sm:$0xf]
  %v2200 = vld [vmem:[%s2185 + $0x38] sm:$0xf]
  %v2201 = vld [vmem:[%s2185 + $0x3c] sm:$0xf]
  %v2203 = vrot.slane %v1855, 4
  %v2221 = vunpack.c.l.b16 %v2186
  %v2222 = vunpack.c.l.b16 %v2187
  %v2223 = vunpack.c.l.b16 %v2188
  %v2224 = vunpack.c.l.b16 %v2189
  %v2225 = vunpack.c.l.b16 %v2190
  %v2226 = vunpack.c.l.b16 %v2191
  %v2227 = vunpack.c.l.b16 %v2192
  %v2228 = vunpack.c.l.b16 %v2193
  %v2229 = vunpack.c.l.b16 %v2194
  %v2230 = vunpack.c.l.b16 %v2195
  %v2231 = vunpack.c.l.b16 %v2196
  %v2232 = vunpack.c.l.b16 %v2197
  %v2233 = vunpack.c.l.b16 %v2198
  %v2234 = vunpack.c.l.b16 %v2199
  %v2235 = vunpack.c.l.b16 %v2200
  %v2236 = vunpack.c.l.b16 %v2201
  %v2237 = vpack.c.b16 %v2222, %v2221
  %v2238 = vpack.c.b16 %v2224, %v2223
  %v2239 = vpack.c.b16 %v2226, %v2225
  %v2240 = vpack.c.b16 %v2228, %v2227
  %v2241 = vpack.c.b16 %v2230, %v2229
  %v2242 = vpack.c.b16 %v2232, %v2231
  %v2243 = vpack.c.b16 %v2234, %v2233
  %v2244 = vpack.c.b16 %v2236, %v2235
  %2253 = vmatprep.subr.bf16.mxu0 0
  %2254 = vmatpush1.bf16.msra.mxu0 %v2244
  %2255 = vmatprep.subr.bf16.mxu0 0
  %2256 = vmatpush1.bf16.msra.mxu0 %v2243
  %2257 = vmatprep.subr.bf16.mxu0 0
  %2258 = vmatpush1.bf16.msra.mxu0 %v2242
  %2259 = vmatprep.subr.bf16.mxu0 0
  %2260 = vmatpush1.bf16.msra.mxu0 %v2241
  %2261 = vmatprep.subr.bf16.mxu0 0
  %2262 = vmatpush1.bf16.msra.mxu0 %v2240
  %2263 = vmatprep.subr.bf16.mxu0 0
  %2264 = vmatpush1.bf16.msra.mxu0 %v2239
  %2265 = vmatprep.subr.bf16.mxu0 0
  %2266 = vmatpush1.bf16.msra.mxu0 %v2238
  %2267 = vmatprep.subr.bf16.mxu0 0
  %2268 = vmatpush1.bf16.msra.mxu0 %v2237
  %2269 = vmatprep.subr.bf16.mxu0 0
  %2270 = vmatpush2.bf16.msra.mxu0 0
  %2271 = vmatprep.subr.bf16.mxu0 0
  %2272 = vmatpush2.bf16.msra.mxu0 0
  %2273 = vmatprep.subr.bf16.mxu0 0
  %2274 = vmatpush2.bf16.msra.mxu0 0
  %2275 = vmatprep.subr.bf16.mxu0 0
  %2276 = vmatpush2.bf16.msra.mxu0 0
  %2277 = vmatprep.subr.bf16.mxu0 0
  %2278 = vmatpush2.bf16.msra.mxu0 0
  %2279 = vmatprep.subr.bf16.mxu0 0
  %2280 = vmatpush2.bf16.msra.mxu0 0
  %2281 = vmatprep.subr.bf16.mxu0 0
  %2282 = vmatpush2.bf16.msra.mxu0 0
  %2283 = vmatprep.subr.bf16.mxu0 0
  %2284 = vmatpush2.bf16.msra.mxu0 0
  %2285 = vmatprep.mubr.bf16.mxu0 0
  %2286 = vmatmul.mubr.bf16.gmra.mxu0 %v2203
  %v2287 = vpop.f32.mrf.mxu0
  %v2288 = vadd.f32 0.0, %v2287
  %v2289 = vpop.f32.mrf.mxu0
  %v2290 = vpop.f32.mrf.mxu0
  %v2291 = vpop.f32.mrf.mxu0
  %2292 = vdwg.mxu0
  %v2293 = vadd.f32 %v2184, %v2288
  %s2294 = scalar_lea.vmem %s3, 256
  %v2295 = vld [vmem:[%s2294] sm:$0xf]
  %v2296 = vld [vmem:[%s2294 + $0x4] sm:$0xf]
  %v2297 = vld [vmem:[%s2294 + $0x8] sm:$0xf]
  %v2298 = vld [vmem:[%s2294 + $0xc] sm:$0xf]
  %v2299 = vld [vmem:[%s2294 + $0x10] sm:$0xf]
  %v2300 = vld [vmem:[%s2294 + $0x14] sm:$0xf]
  %v2301 = vld [vmem:[%s2294 + $0x18] sm:$0xf]
  %v2302 = vld [vmem:[%s2294 + $0x1c] sm:$0xf]
  %v2303 = vld [vmem:[%s2294 + $0x20] sm:$0xf]
  %v2304 = vld [vmem:[%s2294 + $0x24] sm:$0xf]
  %v2305 = vld [vmem:[%s2294 + $0x28] sm:$0xf]
  %v2306 = vld [vmem:[%s2294 + $0x2c] sm:$0xf]
  %v2307 = vld [vmem:[%s2294 + $0x30] sm:$0xf]
  %v2308 = vld [vmem:[%s2294 + $0x34] sm:$0xf]
  %v2309 = vld [vmem:[%s2294 + $0x38] sm:$0xf]
  %v2310 = vld [vmem:[%s2294 + $0x3c] sm:$0xf]
  %v2327 = vunpack.c.l.b16 %v2295
  %v2328 = vunpack.c.l.b16 %v2296
  %v2329 = vunpack.c.l.b16 %v2297
  %v2330 = vunpack.c.l.b16 %v2298
  %v2331 = vunpack.c.l.b16 %v2299
  %v2332 = vunpack.c.l.b16 %v2300
  %v2333 = vunpack.c.l.b16 %v2301
  %v2334 = vunpack.c.l.b16 %v2302
  %v2335 = vunpack.c.l.b16 %v2303
  %v2336 = vunpack.c.l.b16 %v2304
  %v2337 = vunpack.c.l.b16 %v2305
  %v2338 = vunpack.c.l.b16 %v2306
  %v2339 = vunpack.c.l.b16 %v2307
  %v2340 = vunpack.c.l.b16 %v2308
  %v2341 = vunpack.c.l.b16 %v2309
  %v2342 = vunpack.c.l.b16 %v2310
  %v2343 = vpack.c.b16 %v2328, %v2327
  %v2344 = vpack.c.b16 %v2330, %v2329
  %v2345 = vpack.c.b16 %v2332, %v2331
  %v2346 = vpack.c.b16 %v2334, %v2333
  %v2347 = vpack.c.b16 %v2336, %v2335
  %v2348 = vpack.c.b16 %v2338, %v2337
  %v2349 = vpack.c.b16 %v2340, %v2339
  %v2350 = vpack.c.b16 %v2342, %v2341
  %2359 = vmatprep.subr.bf16.mxu0 0
  %2360 = vmatpush1.bf16.msra.mxu0 %v2350
  %2361 = vmatprep.subr.bf16.mxu0 0
  %2362 = vmatpush1.bf16.msra.mxu0 %v2349
  %2363 = vmatprep.subr.bf16.mxu0 0
  %2364 = vmatpush1.bf16.msra.mxu0 %v2348
  %2365 = vmatprep.subr.bf16.mxu0 0
  %2366 = vmatpush1.bf16.msra.mxu0 %v2347
  %2367 = vmatprep.subr.bf16.mxu0 0
  %2368 = vmatpush1.bf16.msra.mxu0 %v2346
  %2369 = vmatprep.subr.bf16.mxu0 0
  %2370 = vmatpush1.bf16.msra.mxu0 %v2345
  %2371 = vmatprep.subr.bf16.mxu0 0
  %2372 = vmatpush1.bf16.msra.mxu0 %v2344
  %2373 = vmatprep.subr.bf16.mxu0 0
  %2374 = vmatpush1.bf16.msra.mxu0 %v2343
  %2375 = vmatprep.subr.bf16.mxu0 0
  %2376 = vmatpush2.bf16.msra.mxu0 0
  %2377 = vmatprep.subr.bf16.mxu0 0
  %2378 = vmatpush2.bf16.msra.mxu0 0
  %2379 = vmatprep.subr.bf16.mxu0 0
  %2380 = vmatpush2.bf16.msra.mxu0 0
  %2381 = vmatprep.subr.bf16.mxu0 0
  %2382 = vmatpush2.bf16.msra.mxu0 0
  %2383 = vmatprep.subr.bf16.mxu0 0
  %2384 = vmatpush2.bf16.msra.mxu0 0
  %2385 = vmatprep.subr.bf16.mxu0 0
  %2386 = vmatpush2.bf16.msra.mxu0 0
  %2387 = vmatprep.subr.bf16.mxu0 0
  %2388 = vmatpush2.bf16.msra.mxu0 0
  %2389 = vmatprep.subr.bf16.mxu0 0
  %2390 = vmatpush2.bf16.msra.mxu0 0
  %2391 = vmatprep.mubr.bf16.mxu0 0
  %2392 = vmatmul.mubr.bf16.gmra.mxu0 %v1856
  %v2393 = vpop.f32.mrf.mxu0
  %v2394 = vadd.f32 0.0, %v2393
  %v2395 = vpop.f32.mrf.mxu0
  %v2396 = vpop.f32.mrf.mxu0
  %v2397 = vpop.f32.mrf.mxu0
  %2398 = vdwg.mxu0
  %v2399 = vadd.f32 %v2293, %v2394
  %s2400 = scalar_lea.vmem %s3, 320
  %v2401 = vld [vmem:[%s2400] sm:$0xf]
  %v2402 = vld [vmem:[%s2400 + $0x4] sm:$0xf]
  %v2403 = vld [vmem:[%s2400 + $0x8] sm:$0xf]
  %v2404 = vld [vmem:[%s2400 + $0xc] sm:$0xf]
  %v2405 = vld [vmem:[%s2400 + $0x10] sm:$0xf]
  %v2406 = vld [vmem:[%s2400 + $0x14] sm:$0xf]
  %v2407 = vld [vmem:[%s2400 + $0x18] sm:$0xf]
  %v2408 = vld [vmem:[%s2400 + $0x1c] sm:$0xf]
  %v2409 = vld [vmem:[%s2400 + $0x20] sm:$0xf]
  %v2410 = vld [vmem:[%s2400 + $0x24] sm:$0xf]
  %v2411 = vld [vmem:[%s2400 + $0x28] sm:$0xf]
  %v2412 = vld [vmem:[%s2400 + $0x2c] sm:$0xf]
  %v2413 = vld [vmem:[%s2400 + $0x30] sm:$0xf]
  %v2414 = vld [vmem:[%s2400 + $0x34] sm:$0xf]
  %v2415 = vld [vmem:[%s2400 + $0x38] sm:$0xf]
  %v2416 = vld [vmem:[%s2400 + $0x3c] sm:$0xf]
  %v2418 = vrot.slane %v1856, 4
  %v2436 = vunpack.c.l.b16 %v2401
  %v2437 = vunpack.c.l.b16 %v2402
  %v2438 = vunpack.c.l.b16 %v2403
  %v2439 = vunpack.c.l.b16 %v2404
  %v2440 = vunpack.c.l.b16 %v2405
  %v2441 = vunpack.c.l.b16 %v2406
  %v2442 = vunpack.c.l.b16 %v2407
  %v2443 = vunpack.c.l.b16 %v2408
  %v2444 = vunpack.c.l.b16 %v2409
  %v2445 = vunpack.c.l.b16 %v2410
  %v2446 = vunpack.c.l.b16 %v2411
  %v2447 = vunpack.c.l.b16 %v2412
  %v2448 = vunpack.c.l.b16 %v2413
  %v2449 = vunpack.c.l.b16 %v2414
  %v2450 = vunpack.c.l.b16 %v2415
  %v2451 = vunpack.c.l.b16 %v2416
  %v2452 = vpack.c.b16 %v2437, %v2436
  %v2453 = vpack.c.b16 %v2439, %v2438
  %v2454 = vpack.c.b16 %v2441, %v2440
  %v2455 = vpack.c.b16 %v2443, %v2442
  %v2456 = vpack.c.b16 %v2445, %v2444
  %v2457 = vpack.c.b16 %v2447, %v2446
  %v2458 = vpack.c.b16 %v2449, %v2448
  %v2459 = vpack.c.b16 %v2451, %v2450
  %2468 = vmatprep.subr.bf16.mxu0 0
  %2469 = vmatpush1.bf16.msra.mxu0 %v2459
  %2470 = vmatprep.subr.bf16.mxu0 0
  %2471 = vmatpush1.bf16.msra.mxu0 %v2458
  %2472 = vmatprep.subr.bf16.mxu0 0
  %2473 = vmatpush1.bf16.msra.mxu0 %v2457
  %2474 = vmatprep.subr.bf16.mxu0 0
  %2475 = vmatpush1.bf16.msra.mxu0 %v2456
  %2476 = vmatprep.subr.bf16.mxu0 0
  %2477 = vmatpush1.bf16.msra.mxu0 %v2455
  %2478 = vmatprep.subr.bf16.mxu0 0
  %2479 = vmatpush1.bf16.msra.mxu0 %v2454
  %2480 = vmatprep.subr.bf16.mxu0 0
  %2481 = vmatpush1.bf16.msra.mxu0 %v2453
  %2482 = vmatprep.subr.bf16.mxu0 0
  %2483 = vmatpush1.bf16.msra.mxu0 %v2452
  %2484 = vmatprep.subr.bf16.mxu0 0
  %2485 = vmatpush2.bf16.msra.mxu0 0
  %2486 = vmatprep.subr.bf16.mxu0 0
  %2487 = vmatpush2.bf16.msra.mxu0 0
  %2488 = vmatprep.subr.bf16.mxu0 0
  %2489 = vmatpush2.bf16.msra.mxu0 0
  %2490 = vmatprep.subr.bf16.mxu0 0
  %2491 = vmatpush2.bf16.msra.mxu0 0
  %2492 = vmatprep.subr.bf16.mxu0 0
  %2493 = vmatpush2.bf16.msra.mxu0 0
  %2494 = vmatprep.subr.bf16.mxu0 0
  %2495 = vmatpush2.bf16.msra.mxu0 0
  %2496 = vmatprep.subr.bf16.mxu0 0
  %2497 = vmatpush2.bf16.msra.mxu0 0
  %2498 = vmatprep.subr.bf16.mxu0 0
  %2499 = vmatpush2.bf16.msra.mxu0 0
  %2500 = vmatprep.mubr.bf16.mxu0 0
  %2501 = vmatmul.mubr.bf16.gmra.mxu0 %v2418
  %v2502 = vpop.f32.mrf.mxu0
  %v2503 = vadd.f32 0.0, %v2502
  %v2504 = vpop.f32.mrf.mxu0
  %v2505 = vpop.f32.mrf.mxu0
  %v2506 = vpop.f32.mrf.mxu0
  %2507 = vdwg.mxu0
  %v2508 = vadd.f32 %v2399, %v2503
  %s2509 = scalar_lea.vmem %s3, 384
  %v2510 = vld [vmem:[%s2509] sm:$0xf]
  %v2511 = vld [vmem:[%s2509 + $0x4] sm:$0xf]
  %v2512 = vld [vmem:[%s2509 + $0x8] sm:$0xf]
  %v2513 = vld [vmem:[%s2509 + $0xc] sm:$0xf]
  %v2514 = vld [vmem:[%s2509 + $0x10] sm:$0xf]
  %v2515 = vld [vmem:[%s2509 + $0x14] sm:$0xf]
  %v2516 = vld [vmem:[%s2509 + $0x18] sm:$0xf]
  %v2517 = vld [vmem:[%s2509 + $0x1c] sm:$0xf]
  %v2518 = vld [vmem:[%s2509 + $0x20] sm:$0xf]
  %v2519 = vld [vmem:[%s2509 + $0x24] sm:$0xf]
  %v2520 = vld [vmem:[%s2509 + $0x28] sm:$0xf]
  %v2521 = vld [vmem:[%s2509 + $0x2c] sm:$0xf]
  %v2522 = vld [vmem:[%s2509 + $0x30] sm:$0xf]
  %v2523 = vld [vmem:[%s2509 + $0x34] sm:$0xf]
  %v2524 = vld [vmem:[%s2509 + $0x38] sm:$0xf]
  %v2525 = vld [vmem:[%s2509 + $0x3c] sm:$0xf]
  %v2542 = vunpack.c.l.b16 %v2510
  %v2543 = vunpack.c.l.b16 %v2511
  %v2544 = vunpack.c.l.b16 %v2512
  %v2545 = vunpack.c.l.b16 %v2513
  %v2546 = vunpack.c.l.b16 %v2514
  %v2547 = vunpack.c.l.b16 %v2515
  %v2548 = vunpack.c.l.b16 %v2516
  %v2549 = vunpack.c.l.b16 %v2517
  %v2550 = vunpack.c.l.b16 %v2518
  %v2551 = vunpack.c.l.b16 %v2519
  %v2552 = vunpack.c.l.b16 %v2520
  %v2553 = vunpack.c.l.b16 %v2521
  %v2554 = vunpack.c.l.b16 %v2522
  %v2555 = vunpack.c.l.b16 %v2523
  %v2556 = vunpack.c.l.b16 %v2524
  %v2557 = vunpack.c.l.b16 %v2525
  %v2558 = vpack.c.b16 %v2543, %v2542
  %v2559 = vpack.c.b16 %v2545, %v2544
  %v2560 = vpack.c.b16 %v2547, %v2546
  %v2561 = vpack.c.b16 %v2549, %v2548
  %v2562 = vpack.c.b16 %v2551, %v2550
  %v2563 = vpack.c.b16 %v2553, %v2552
  %v2564 = vpack.c.b16 %v2555, %v2554
  %v2565 = vpack.c.b16 %v2557, %v2556
  %2574 = vmatprep.subr.bf16.mxu0 0
  %2575 = vmatpush1.bf16.msra.mxu0 %v2565
  %2576 = vmatprep.subr.bf16.mxu0 0
  %2577 = vmatpush1.bf16.msra.mxu0 %v2564
  %2578 = vmatprep.subr.bf16.mxu0 0
  %2579 = vmatpush1.bf16.msra.mxu0 %v2563
  %2580 = vmatprep.subr.bf16.mxu0 0
  %2581 = vmatpush1.bf16.msra.mxu0 %v2562
  %2582 = vmatprep.subr.bf16.mxu0 0
  %2583 = vmatpush1.bf16.msra.mxu0 %v2561
  %2584 = vmatprep.subr.bf16.mxu0 0
  %2585 = vmatpush1.bf16.msra.mxu0 %v2560
  %2586 = vmatprep.subr.bf16.mxu0 0
  %2587 = vmatpush1.bf16.msra.mxu0 %v2559
  %2588 = vmatprep.subr.bf16.mxu0 0
  %2589 = vmatpush1.bf16.msra.mxu0 %v2558
  %2590 = vmatprep.subr.bf16.mxu0 0
  %2591 = vmatpush2.bf16.msra.mxu0 0
  %2592 = vmatprep.subr.bf16.mxu0 0
  %2593 = vmatpush2.bf16.msra.mxu0 0
  %2594 = vmatprep.subr.bf16.mxu0 0
  %2595 = vmatpush2.bf16.msra.mxu0 0
  %2596 = vmatprep.subr.bf16.mxu0 0
  %2597 = vmatpush2.bf16.msra.mxu0 0
  %2598 = vmatprep.subr.bf16.mxu0 0
  %2599 = vmatpush2.bf16.msra.mxu0 0
  %2600 = vmatprep.subr.bf16.mxu0 0
  %2601 = vmatpush2.bf16.msra.mxu0 0
  %2602 = vmatprep.subr.bf16.mxu0 0
  %2603 = vmatpush2.bf16.msra.mxu0 0
  %2604 = vmatprep.subr.bf16.mxu0 0
  %2605 = vmatpush2.bf16.msra.mxu0 0
  %2606 = vmatprep.mubr.bf16.mxu0 0
  %2607 = vmatmul.mubr.bf16.gmra.mxu0 %v1857
  %v2608 = vpop.f32.mrf.mxu0
  %v2609 = vadd.f32 0.0, %v2608
  %v2610 = vpop.f32.mrf.mxu0
  %v2611 = vpop.f32.mrf.mxu0
  %v2612 = vpop.f32.mrf.mxu0
  %2613 = vdwg.mxu0
  %v2614 = vadd.f32 %v2508, %v2609
  %s2615 = scalar_lea.vmem %s3, 448
  %v2616 = vld [vmem:[%s2615] sm:$0xf]
  %v2617 = vld [vmem:[%s2615 + $0x4] sm:$0xf]
  %v2618 = vld [vmem:[%s2615 + $0x8] sm:$0xf]
  %v2619 = vld [vmem:[%s2615 + $0xc] sm:$0xf]
  %v2620 = vld [vmem:[%s2615 + $0x10] sm:$0xf]
  %v2621 = vld [vmem:[%s2615 + $0x14] sm:$0xf]
  %v2622 = vld [vmem:[%s2615 + $0x18] sm:$0xf]
  %v2623 = vld [vmem:[%s2615 + $0x1c] sm:$0xf]
  %v2624 = vld [vmem:[%s2615 + $0x20] sm:$0xf]
  %v2625 = vld [vmem:[%s2615 + $0x24] sm:$0xf]
  %v2626 = vld [vmem:[%s2615 + $0x28] sm:$0xf]
  %v2627 = vld [vmem:[%s2615 + $0x2c] sm:$0xf]
  %v2628 = vld [vmem:[%s2615 + $0x30] sm:$0xf]
  %v2629 = vld [vmem:[%s2615 + $0x34] sm:$0xf]
  %v2630 = vld [vmem:[%s2615 + $0x38] sm:$0xf]
  %v2631 = vld [vmem:[%s2615 + $0x3c] sm:$0xf]
  %v2633 = vrot.slane %v1857, 4
  %v2651 = vunpack.c.l.b16 %v2616
  %v2652 = vunpack.c.l.b16 %v2617
  %v2653 = vunpack.c.l.b16 %v2618
  %v2654 = vunpack.c.l.b16 %v2619
  %v2655 = vunpack.c.l.b16 %v2620
  %v2656 = vunpack.c.l.b16 %v2621
  %v2657 = vunpack.c.l.b16 %v2622
  %v2658 = vunpack.c.l.b16 %v2623
  %v2659 = vunpack.c.l.b16 %v2624
  %v2660 = vunpack.c.l.b16 %v2625
  %v2661 = vunpack.c.l.b16 %v2626
  %v2662 = vunpack.c.l.b16 %v2627
  %v2663 = vunpack.c.l.b16 %v2628
  %v2664 = vunpack.c.l.b16 %v2629
  %v2665 = vunpack.c.l.b16 %v2630
  %v2666 = vunpack.c.l.b16 %v2631
  %v2667 = vpack.c.b16 %v2652, %v2651
  %v2668 = vpack.c.b16 %v2654, %v2653
  %v2669 = vpack.c.b16 %v2656, %v2655
  %v2670 = vpack.c.b16 %v2658, %v2657
  %v2671 = vpack.c.b16 %v2660, %v2659
  %v2672 = vpack.c.b16 %v2662, %v2661
  %v2673 = vpack.c.b16 %v2664, %v2663
  %v2674 = vpack.c.b16 %v2666, %v2665
  %2683 = vmatprep.subr.bf16.mxu0 0
  %2684 = vmatpush1.bf16.msra.mxu0 %v2674
  %2685 = vmatprep.subr.bf16.mxu0 0
  %2686 = vmatpush1.bf16.msra.mxu0 %v2673
  %2687 = vmatprep.subr.bf16.mxu0 0
  %2688 = vmatpush1.bf16.msra.mxu0 %v2672
  %2689 = vmatprep.subr.bf16.mxu0 0
  %2690 = vmatpush1.bf16.msra.mxu0 %v2671
  %2691 = vmatprep.subr.bf16.mxu0 0
  %2692 = vmatpush1.bf16.msra.mxu0 %v2670
  %2693 = vmatprep.subr.bf16.mxu0 0
  %2694 = vmatpush1.bf16.msra.mxu0 %v2669
  %2695 = vmatprep.subr.bf16.mxu0 0
  %2696 = vmatpush1.bf16.msra.mxu0 %v2668
  %2697 = vmatprep.subr.bf16.mxu0 0
  %2698 = vmatpush1.bf16.msra.mxu0 %v2667
  %2699 = vmatprep.subr.bf16.mxu0 0
  %2700 = vmatpush2.bf16.msra.mxu0 0
  %2701 = vmatprep.subr.bf16.mxu0 0
  %2702 = vmatpush2.bf16.msra.mxu0 0
  %2703 = vmatprep.subr.bf16.mxu0 0
  %2704 = vmatpush2.bf16.msra.mxu0 0
  %2705 = vmatprep.subr.bf16.mxu0 0
  %2706 = vmatpush2.bf16.msra.mxu0 0
  %2707 = vmatprep.subr.bf16.mxu0 0
  %2708 = vmatpush2.bf16.msra.mxu0 0
  %2709 = vmatprep.subr.bf16.mxu0 0
  %2710 = vmatpush2.bf16.msra.mxu0 0
  %2711 = vmatprep.subr.bf16.mxu0 0
  %2712 = vmatpush2.bf16.msra.mxu0 0
  %2713 = vmatprep.subr.bf16.mxu0 0
  %2714 = vmatpush2.bf16.msra.mxu0 0
  %2715 = vmatprep.mubr.bf16.mxu0 0
  %2716 = vmatmul.mubr.bf16.gmra.mxu0 %v2633
  %v2717 = vpop.f32.mrf.mxu0
  %v2718 = vadd.f32 0.0, %v2717
  %v2719 = vpop.f32.mrf.mxu0
  %v2720 = vpop.f32.mrf.mxu0
  %v2721 = vpop.f32.mrf.mxu0
  %2722 = vdwg.mxu0
  %v2723 = vadd.f32 %v2614, %v2718
  %s2724 = scalar_lea.vmem %s3, 512
  %v2725 = vld [vmem:[%s2724] sm:$0xf]
  %v2726 = vld [vmem:[%s2724 + $0x4] sm:$0xf]
  %v2727 = vld [vmem:[%s2724 + $0x8] sm:$0xf]
  %v2728 = vld [vmem:[%s2724 + $0xc] sm:$0xf]
  %v2729 = vld [vmem:[%s2724 + $0x10] sm:$0xf]
  %v2730 = vld [vmem:[%s2724 + $0x14] sm:$0xf]
  %v2731 = vld [vmem:[%s2724 + $0x18] sm:$0xf]
  %v2732 = vld [vmem:[%s2724 + $0x1c] sm:$0xf]
  %v2733 = vld [vmem:[%s2724 + $0x20] sm:$0xf]
  %v2734 = vld [vmem:[%s2724 + $0x24] sm:$0xf]
  %v2735 = vld [vmem:[%s2724 + $0x28] sm:$0xf]
  %v2736 = vld [vmem:[%s2724 + $0x2c] sm:$0xf]
  %v2737 = vld [vmem:[%s2724 + $0x30] sm:$0xf]
  %v2738 = vld [vmem:[%s2724 + $0x34] sm:$0xf]
  %v2739 = vld [vmem:[%s2724 + $0x38] sm:$0xf]
  %v2740 = vld [vmem:[%s2724 + $0x3c] sm:$0xf]
  %v2757 = vunpack.c.l.b16 %v2725
  %v2758 = vunpack.c.l.b16 %v2726
  %v2759 = vunpack.c.l.b16 %v2727
  %v2760 = vunpack.c.l.b16 %v2728
  %v2761 = vunpack.c.l.b16 %v2729
  %v2762 = vunpack.c.l.b16 %v2730
  %v2763 = vunpack.c.l.b16 %v2731
  %v2764 = vunpack.c.l.b16 %v2732
  %v2765 = vunpack.c.l.b16 %v2733
  %v2766 = vunpack.c.l.b16 %v2734
  %v2767 = vunpack.c.l.b16 %v2735
  %v2768 = vunpack.c.l.b16 %v2736
  %v2769 = vunpack.c.l.b16 %v2737
  %v2770 = vunpack.c.l.b16 %v2738
  %v2771 = vunpack.c.l.b16 %v2739
  %v2772 = vunpack.c.l.b16 %v2740
  %v2773 = vpack.c.b16 %v2758, %v2757
  %v2774 = vpack.c.b16 %v2760, %v2759
  %v2775 = vpack.c.b16 %v2762, %v2761
  %v2776 = vpack.c.b16 %v2764, %v2763
  %v2777 = vpack.c.b16 %v2766, %v2765
  %v2778 = vpack.c.b16 %v2768, %v2767
  %v2779 = vpack.c.b16 %v2770, %v2769
  %v2780 = vpack.c.b16 %v2772, %v2771
  %2789 = vmatprep.subr.bf16.mxu0 0
  %2790 = vmatpush1.bf16.msra.mxu0 %v2780
  %2791 = vmatprep.subr.bf16.mxu0 0
  %2792 = vmatpush1.bf16.msra.mxu0 %v2779
  %2793 = vmatprep.subr.bf16.mxu0 0
  %2794 = vmatpush1.bf16.msra.mxu0 %v2778
  %2795 = vmatprep.subr.bf16.mxu0 0
  %2796 = vmatpush1.bf16.msra.mxu0 %v2777
  %2797 = vmatprep.subr.bf16.mxu0 0
  %2798 = vmatpush1.bf16.msra.mxu0 %v2776
  %2799 = vmatprep.subr.bf16.mxu0 0
  %2800 = vmatpush1.bf16.msra.mxu0 %v2775
  %2801 = vmatprep.subr.bf16.mxu0 0
  %2802 = vmatpush1.bf16.msra.mxu0 %v2774
  %2803 = vmatprep.subr.bf16.mxu0 0
  %2804 = vmatpush1.bf16.msra.mxu0 %v2773
  %2805 = vmatprep.subr.bf16.mxu0 0
  %2806 = vmatpush2.bf16.msra.mxu0 0
  %2807 = vmatprep.subr.bf16.mxu0 0
  %2808 = vmatpush2.bf16.msra.mxu0 0
  %2809 = vmatprep.subr.bf16.mxu0 0
  %2810 = vmatpush2.bf16.msra.mxu0 0
  %2811 = vmatprep.subr.bf16.mxu0 0
  %2812 = vmatpush2.bf16.msra.mxu0 0
  %2813 = vmatprep.subr.bf16.mxu0 0
  %2814 = vmatpush2.bf16.msra.mxu0 0
  %2815 = vmatprep.subr.bf16.mxu0 0
  %2816 = vmatpush2.bf16.msra.mxu0 0
  %2817 = vmatprep.subr.bf16.mxu0 0
  %2818 = vmatpush2.bf16.msra.mxu0 0
  %2819 = vmatprep.subr.bf16.mxu0 0
  %2820 = vmatpush2.bf16.msra.mxu0 0
  %2821 = vmatprep.mubr.bf16.mxu0 0
  %2822 = vmatmul.mubr.bf16.gmra.mxu0 %v1858
  %v2823 = vpop.f32.mrf.mxu0
  %v2824 = vadd.f32 0.0, %v2823
  %v2825 = vpop.f32.mrf.mxu0
  %v2826 = vpop.f32.mrf.mxu0
  %v2827 = vpop.f32.mrf.mxu0
  %2828 = vdwg.mxu0
  %v2829 = vadd.f32 %v2723, %v2824
  %s2830 = scalar_lea.vmem %s3, 576
  %v2831 = vld [vmem:[%s2830] sm:$0xf]
  %v2832 = vld [vmem:[%s2830 + $0x4] sm:$0xf]
  %v2833 = vld [vmem:[%s2830 + $0x8] sm:$0xf]
  %v2834 = vld [vmem:[%s2830 + $0xc] sm:$0xf]
  %v2835 = vld [vmem:[%s2830 + $0x10] sm:$0xf]
  %v2836 = vld [vmem:[%s2830 + $0x14] sm:$0xf]
  %v2837 = vld [vmem:[%s2830 + $0x18] sm:$0xf]
  %v2838 = vld [vmem:[%s2830 + $0x1c] sm:$0xf]
  %v2839 = vld [vmem:[%s2830 + $0x20] sm:$0xf]
  %v2840 = vld [vmem:[%s2830 + $0x24] sm:$0xf]
  %v2841 = vld [vmem:[%s2830 + $0x28] sm:$0xf]
  %v2842 = vld [vmem:[%s2830 + $0x2c] sm:$0xf]
  %v2843 = vld [vmem:[%s2830 + $0x30] sm:$0xf]
  %v2844 = vld [vmem:[%s2830 + $0x34] sm:$0xf]
  %v2845 = vld [vmem:[%s2830 + $0x38] sm:$0xf]
  %v2846 = vld [vmem:[%s2830 + $0x3c] sm:$0xf]
  %v2848 = vrot.slane %v1858, 4
  %v2866 = vunpack.c.l.b16 %v2831
  %v2867 = vunpack.c.l.b16 %v2832
  %v2868 = vunpack.c.l.b16 %v2833
  %v2869 = vunpack.c.l.b16 %v2834
  %v2870 = vunpack.c.l.b16 %v2835
  %v2871 = vunpack.c.l.b16 %v2836
  %v2872 = vunpack.c.l.b16 %v2837
  %v2873 = vunpack.c.l.b16 %v2838
  %v2874 = vunpack.c.l.b16 %v2839
  %v2875 = vunpack.c.l.b16 %v2840
  %v2876 = vunpack.c.l.b16 %v2841
  %v2877 = vunpack.c.l.b16 %v2842
  %v2878 = vunpack.c.l.b16 %v2843
  %v2879 = vunpack.c.l.b16 %v2844
  %v2880 = vunpack.c.l.b16 %v2845
  %v2881 = vunpack.c.l.b16 %v2846
  %v2882 = vpack.c.b16 %v2867, %v2866
  %v2883 = vpack.c.b16 %v2869, %v2868
  %v2884 = vpack.c.b16 %v2871, %v2870
  %v2885 = vpack.c.b16 %v2873, %v2872
  %v2886 = vpack.c.b16 %v2875, %v2874
  %v2887 = vpack.c.b16 %v2877, %v2876
  %v2888 = vpack.c.b16 %v2879, %v2878
  %v2889 = vpack.c.b16 %v2881, %v2880
  %2898 = vmatprep.subr.bf16.mxu0 0
  %2899 = vmatpush1.bf16.msra.mxu0 %v2889
  %2900 = vmatprep.subr.bf16.mxu0 0
  %2901 = vmatpush1.bf16.msra.mxu0 %v2888
  %2902 = vmatprep.subr.bf16.mxu0 0
  %2903 = vmatpush1.bf16.msra.mxu0 %v2887
  %2904 = vmatprep.subr.bf16.mxu0 0
  %2905 = vmatpush1.bf16.msra.mxu0 %v2886
  %2906 = vmatprep.subr.bf16.mxu0 0
  %2907 = vmatpush1.bf16.msra.mxu0 %v2885
  %2908 = vmatprep.subr.bf16.mxu0 0
  %2909 = vmatpush1.bf16.msra.mxu0 %v2884
  %2910 = vmatprep.subr.bf16.mxu0 0
  %2911 = vmatpush1.bf16.msra.mxu0 %v2883
  %2912 = vmatprep.subr.bf16.mxu0 0
  %2913 = vmatpush1.bf16.msra.mxu0 %v2882
  %2914 = vmatprep.subr.bf16.mxu0 0
  %2915 = vmatpush2.bf16.msra.mxu0 0
  %2916 = vmatprep.subr.bf16.mxu0 0
  %2917 = vmatpush2.bf16.msra.mxu0 0
  %2918 = vmatprep.subr.bf16.mxu0 0
  %2919 = vmatpush2.bf16.msra.mxu0 0
  %2920 = vmatprep.subr.bf16.mxu0 0
  %2921 = vmatpush2.bf16.msra.mxu0 0
  %2922 = vmatprep.subr.bf16.mxu0 0
  %2923 = vmatpush2.bf16.msra.mxu0 0
  %2924 = vmatprep.subr.bf16.mxu0 0
  %2925 = vmatpush2.bf16.msra.mxu0 0
  %2926 = vmatprep.subr.bf16.mxu0 0
  %2927 = vmatpush2.bf16.msra.mxu0 0
  %2928 = vmatprep.subr.bf16.mxu0 0
  %2929 = vmatpush2.bf16.msra.mxu0 0
  %2930 = vmatprep.mubr.bf16.mxu0 0
  %2931 = vmatmul.mubr.bf16.gmra.mxu0 %v2848
  %v2932 = vpop.f32.mrf.mxu0
  %v2933 = vadd.f32 0.0, %v2932
  %v2934 = vpop.f32.mrf.mxu0
  %v2935 = vpop.f32.mrf.mxu0
  %v2936 = vpop.f32.mrf.mxu0
  %2937 = vdwg.mxu0
  %v2938 = vadd.f32 %v2829, %v2933
  %s2939 = scalar_lea.vmem %s3, 640
  %v2940 = vld [vmem:[%s2939] sm:$0xf]
  %v2941 = vld [vmem:[%s2939 + $0x4] sm:$0xf]
  %v2942 = vld [vmem:[%s2939 + $0x8] sm:$0xf]
  %v2943 = vld [vmem:[%s2939 + $0xc] sm:$0xf]
  %v2944 = vld [vmem:[%s2939 + $0x10] sm:$0xf]
  %v2945 = vld [vmem:[%s2939 + $0x14] sm:$0xf]
  %v2946 = vld [vmem:[%s2939 + $0x18] sm:$0xf]
  %v2947 = vld [vmem:[%s2939 + $0x1c] sm:$0xf]
  %v2948 = vld [vmem:[%s2939 + $0x20] sm:$0xf]
  %v2949 = vld [vmem:[%s2939 + $0x24] sm:$0xf]
  %v2950 = vld [vmem:[%s2939 + $0x28] sm:$0xf]
  %v2951 = vld [vmem:[%s2939 + $0x2c] sm:$0xf]
  %v2952 = vld [vmem:[%s2939 + $0x30] sm:$0xf]
  %v2953 = vld [vmem:[%s2939 + $0x34] sm:$0xf]
  %v2954 = vld [vmem:[%s2939 + $0x38] sm:$0xf]
  %v2955 = vld [vmem:[%s2939 + $0x3c] sm:$0xf]
  %v2972 = vunpack.c.l.b16 %v2940
  %v2973 = vunpack.c.l.b16 %v2941
  %v2974 = vunpack.c.l.b16 %v2942
  %v2975 = vunpack.c.l.b16 %v2943
  %v2976 = vunpack.c.l.b16 %v2944
  %v2977 = vunpack.c.l.b16 %v2945
  %v2978 = vunpack.c.l.b16 %v2946
  %v2979 = vunpack.c.l.b16 %v2947
  %v2980 = vunpack.c.l.b16 %v2948
  %v2981 = vunpack.c.l.b16 %v2949
  %v2982 = vunpack.c.l.b16 %v2950
  %v2983 = vunpack.c.l.b16 %v2951
  %v2984 = vunpack.c.l.b16 %v2952
  %v2985 = vunpack.c.l.b16 %v2953
  %v2986 = vunpack.c.l.b16 %v2954
  %v2987 = vunpack.c.l.b16 %v2955
  %v2988 = vpack.c.b16 %v2973, %v2972
  %v2989 = vpack.c.b16 %v2975, %v2974
  %v2990 = vpack.c.b16 %v2977, %v2976
  %v2991 = vpack.c.b16 %v2979, %v2978
  %v2992 = vpack.c.b16 %v2981, %v2980
  %v2993 = vpack.c.b16 %v2983, %v2982
  %v2994 = vpack.c.b16 %v2985, %v2984
  %v2995 = vpack.c.b16 %v2987, %v2986
  %3004 = vmatprep.subr.bf16.mxu0 0
  %3005 = vmatpush1.bf16.msra.mxu0 %v2995
  %3006 = vmatprep.subr.bf16.mxu0 0
  %3007 = vmatpush1.bf16.msra.mxu0 %v2994
  %3008 = vmatprep.subr.bf16.mxu0 0
  %3009 = vmatpush1.bf16.msra.mxu0 %v2993
  %3010 = vmatprep.subr.bf16.mxu0 0
  %3011 = vmatpush1.bf16.msra.mxu0 %v2992
  %3012 = vmatprep.subr.bf16.mxu0 0
  %3013 = vmatpush1.bf16.msra.mxu0 %v2991
  %3014 = vmatprep.subr.bf16.mxu0 0
  %3015 = vmatpush1.bf16.msra.mxu0 %v2990
  %3016 = vmatprep.subr.bf16.mxu0 0
  %3017 = vmatpush1.bf16.msra.mxu0 %v2989
  %3018 = vmatprep.subr.bf16.mxu0 0
  %3019 = vmatpush1.bf16.msra.mxu0 %v2988
  %3020 = vmatprep.subr.bf16.mxu0 0
  %3021 = vmatpush2.bf16.msra.mxu0 0
  %3022 = vmatprep.subr.bf16.mxu0 0
  %3023 = vmatpush2.bf16.msra.mxu0 0
  %3024 = vmatprep.subr.bf16.mxu0 0
  %3025 = vmatpush2.bf16.msra.mxu0 0
  %3026 = vmatprep.subr.bf16.mxu0 0
  %3027 = vmatpush2.bf16.msra.mxu0 0
  %3028 = vmatprep.subr.bf16.mxu0 0
  %3029 = vmatpush2.bf16.msra.mxu0 0
  %3030 = vmatprep.subr.bf16.mxu0 0
  %3031 = vmatpush2.bf16.msra.mxu0 0
  %3032 = vmatprep.subr.bf16.mxu0 0
  %3033 = vmatpush2.bf16.msra.mxu0 0
  %3034 = vmatprep.subr.bf16.mxu0 0
  %3035 = vmatpush2.bf16.msra.mxu0 0
  %3036 = vmatprep.mubr.bf16.mxu0 0
  %3037 = vmatmul.mubr.bf16.gmra.mxu0 %v1859
  %v3038 = vpop.f32.mrf.mxu0
  %v3039 = vadd.f32 0.0, %v3038
  %v3040 = vpop.f32.mrf.mxu0
  %v3041 = vpop.f32.mrf.mxu0
  %v3042 = vpop.f32.mrf.mxu0
  %3043 = vdwg.mxu0
  %v3044 = vadd.f32 %v2938, %v3039
  %s3045 = scalar_lea.vmem %s3, 704
  %v3046 = vld [vmem:[%s3045] sm:$0xf]
  %v3047 = vld [vmem:[%s3045 + $0x4] sm:$0xf]
  %v3048 = vld [vmem:[%s3045 + $0x8] sm:$0xf]
  %v3049 = vld [vmem:[%s3045 + $0xc] sm:$0xf]
  %v3050 = vld [vmem:[%s3045 + $0x10] sm:$0xf]
  %v3051 = vld [vmem:[%s3045 + $0x14] sm:$0xf]
  %v3052 = vld [vmem:[%s3045 + $0x18] sm:$0xf]
  %v3053 = vld [vmem:[%s3045 + $0x1c] sm:$0xf]
  %v3054 = vld [vmem:[%s3045 + $0x20] sm:$0xf]
  %v3055 = vld [vmem:[%s3045 + $0x24] sm:$0xf]
  %v3056 = vld [vmem:[%s3045 + $0x28] sm:$0xf]
  %v3057 = vld [vmem:[%s3045 + $0x2c] sm:$0xf]
  %v3058 = vld [vmem:[%s3045 + $0x30] sm:$0xf]
  %v3059 = vld [vmem:[%s3045 + $0x34] sm:$0xf]
  %v3060 = vld [vmem:[%s3045 + $0x38] sm:$0xf]
  %v3061 = vld [vmem:[%s3045 + $0x3c] sm:$0xf]
  %v3063 = vrot.slane %v1859, 4
  %v3081 = vunpack.c.l.b16 %v3046
  %v3082 = vunpack.c.l.b16 %v3047
  %v3083 = vunpack.c.l.b16 %v3048
  %v3084 = vunpack.c.l.b16 %v3049
  %v3085 = vunpack.c.l.b16 %v3050
  %v3086 = vunpack.c.l.b16 %v3051
  %v3087 = vunpack.c.l.b16 %v3052
  %v3088 = vunpack.c.l.b16 %v3053
  %v3089 = vunpack.c.l.b16 %v3054
  %v3090 = vunpack.c.l.b16 %v3055
  %v3091 = vunpack.c.l.b16 %v3056
  %v3092 = vunpack.c.l.b16 %v3057
  %v3093 = vunpack.c.l.b16 %v3058
  %v3094 = vunpack.c.l.b16 %v3059
  %v3095 = vunpack.c.l.b16 %v3060
  %v3096 = vunpack.c.l.b16 %v3061
  %v3097 = vpack.c.b16 %v3082, %v3081
  %v3098 = vpack.c.b16 %v3084, %v3083
  %v3099 = vpack.c.b16 %v3086, %v3085
  %v3100 = vpack.c.b16 %v3088, %v3087
  %v3101 = vpack.c.b16 %v3090, %v3089
  %v3102 = vpack.c.b16 %v3092, %v3091
  %v3103 = vpack.c.b16 %v3094, %v3093
  %v3104 = vpack.c.b16 %v3096, %v3095
  %3113 = vmatprep.subr.bf16.mxu0 0
  %3114 = vmatpush1.bf16.msra.mxu0 %v3104
  %3115 = vmatprep.subr.bf16.mxu0 0
  %3116 = vmatpush1.bf16.msra.mxu0 %v3103
  %3117 = vmatprep.subr.bf16.mxu0 0
  %3118 = vmatpush1.bf16.msra.mxu0 %v3102
  %3119 = vmatprep.subr.bf16.mxu0 0
  %3120 = vmatpush1.bf16.msra.mxu0 %v3101
  %3121 = vmatprep.subr.bf16.mxu0 0
  %3122 = vmatpush1.bf16.msra.mxu0 %v3100
  %3123 = vmatprep.subr.bf16.mxu0 0
  %3124 = vmatpush1.bf16.msra.mxu0 %v3099
  %3125 = vmatprep.subr.bf16.mxu0 0
  %3126 = vmatpush1.bf16.msra.mxu0 %v3098
  %3127 = vmatprep.subr.bf16.mxu0 0
  %3128 = vmatpush1.bf16.msra.mxu0 %v3097
  %3129 = vmatprep.subr.bf16.mxu0 0
  %3130 = vmatpush2.bf16.msra.mxu0 0
  %3131 = vmatprep.subr.bf16.mxu0 0
  %3132 = vmatpush2.bf16.msra.mxu0 0
  %3133 = vmatprep.subr.bf16.mxu0 0
  %3134 = vmatpush2.bf16.msra.mxu0 0
  %3135 = vmatprep.subr.bf16.mxu0 0
  %3136 = vmatpush2.bf16.msra.mxu0 0
  %3137 = vmatprep.subr.bf16.mxu0 0
  %3138 = vmatpush2.bf16.msra.mxu0 0
  %3139 = vmatprep.subr.bf16.mxu0 0
  %3140 = vmatpush2.bf16.msra.mxu0 0
  %3141 = vmatprep.subr.bf16.mxu0 0
  %3142 = vmatpush2.bf16.msra.mxu0 0
  %3143 = vmatprep.subr.bf16.mxu0 0
  %3144 = vmatpush2.bf16.msra.mxu0 0
  %3145 = vmatprep.mubr.bf16.mxu0 0
  %3146 = vmatmul.mubr.bf16.gmra.mxu0 %v3063
  %v3147 = vpop.f32.mrf.mxu0
  %v3148 = vadd.f32 0.0, %v3147
  %v3149 = vpop.f32.mrf.mxu0
  %v3150 = vpop.f32.mrf.mxu0
  %v3151 = vpop.f32.mrf.mxu0
  %3152 = vdwg.mxu0
  %v3153 = vadd.f32 %v3044, %v3148
  %s3154 = scalar_lea.vmem %s3, 768
  %v3155 = vld [vmem:[%s3154] sm:$0xf]
  %v3156 = vld [vmem:[%s3154 + $0x4] sm:$0xf]
  %v3157 = vld [vmem:[%s3154 + $0x8] sm:$0xf]
  %v3158 = vld [vmem:[%s3154 + $0xc] sm:$0xf]
  %v3159 = vld [vmem:[%s3154 + $0x10] sm:$0xf]
  %v3160 = vld [vmem:[%s3154 + $0x14] sm:$0xf]
  %v3161 = vld [vmem:[%s3154 + $0x18] sm:$0xf]
  %v3162 = vld [vmem:[%s3154 + $0x1c] sm:$0xf]
  %v3163 = vld [vmem:[%s3154 + $0x20] sm:$0xf]
  %v3164 = vld [vmem:[%s3154 + $0x24] sm:$0xf]
  %v3165 = vld [vmem:[%s3154 + $0x28] sm:$0xf]
  %v3166 = vld [vmem:[%s3154 + $0x2c] sm:$0xf]
  %v3167 = vld [vmem:[%s3154 + $0x30] sm:$0xf]
  %v3168 = vld [vmem:[%s3154 + $0x34] sm:$0xf]
  %v3169 = vld [vmem:[%s3154 + $0x38] sm:$0xf]
  %v3170 = vld [vmem:[%s3154 + $0x3c] sm:$0xf]
  %v3187 = vunpack.c.l.b16 %v3155
  %v3188 = vunpack.c.l.b16 %v3156
  %v3189 = vunpack.c.l.b16 %v3157
  %v3190 = vunpack.c.l.b16 %v3158
  %v3191 = vunpack.c.l.b16 %v3159
  %v3192 = vunpack.c.l.b16 %v3160
  %v3193 = vunpack.c.l.b16 %v3161
  %v3194 = vunpack.c.l.b16 %v3162
  %v3195 = vunpack.c.l.b16 %v3163
  %v3196 = vunpack.c.l.b16 %v3164
  %v3197 = vunpack.c.l.b16 %v3165
  %v3198 = vunpack.c.l.b16 %v3166
  %v3199 = vunpack.c.l.b16 %v3167
  %v3200 = vunpack.c.l.b16 %v3168
  %v3201 = vunpack.c.l.b16 %v3169
  %v3202 = vunpack.c.l.b16 %v3170
  %v3203 = vpack.c.b16 %v3188, %v3187
  %v3204 = vpack.c.b16 %v3190, %v3189
  %v3205 = vpack.c.b16 %v3192, %v3191
  %v3206 = vpack.c.b16 %v3194, %v3193
  %v3207 = vpack.c.b16 %v3196, %v3195
  %v3208 = vpack.c.b16 %v3198, %v3197
  %v3209 = vpack.c.b16 %v3200, %v3199
  %v3210 = vpack.c.b16 %v3202, %v3201
  %3219 = vmatprep.subr.bf16.mxu0 0
  %3220 = vmatpush1.bf16.msra.mxu0 %v3210
  %3221 = vmatprep.subr.bf16.mxu0 0
  %3222 = vmatpush1.bf16.msra.mxu0 %v3209
  %3223 = vmatprep.subr.bf16.mxu0 0
  %3224 = vmatpush1.bf16.msra.mxu0 %v3208
  %3225 = vmatprep.subr.bf16.mxu0 0
  %3226 = vmatpush1.bf16.msra.mxu0 %v3207
  %3227 = vmatprep.subr.bf16.mxu0 0
  %3228 = vmatpush1.bf16.msra.mxu0 %v3206
  %3229 = vmatprep.subr.bf16.mxu0 0
  %3230 = vmatpush1.bf16.msra.mxu0 %v3205
  %3231 = vmatprep.subr.bf16.mxu0 0
  %3232 = vmatpush1.bf16.msra.mxu0 %v3204
  %3233 = vmatprep.subr.bf16.mxu0 0
  %3234 = vmatpush1.bf16.msra.mxu0 %v3203
  %3235 = vmatprep.subr.bf16.mxu0 0
  %3236 = vmatpush2.bf16.msra.mxu0 0
  %3237 = vmatprep.subr.bf16.mxu0 0
  %3238 = vmatpush2.bf16.msra.mxu0 0
  %3239 = vmatprep.subr.bf16.mxu0 0
  %3240 = vmatpush2.bf16.msra.mxu0 0
  %3241 = vmatprep.subr.bf16.mxu0 0
  %3242 = vmatpush2.bf16.msra.mxu0 0
  %3243 = vmatprep.subr.bf16.mxu0 0
  %3244 = vmatpush2.bf16.msra.mxu0 0
  %3245 = vmatprep.subr.bf16.mxu0 0
  %3246 = vmatpush2.bf16.msra.mxu0 0
  %3247 = vmatprep.subr.bf16.mxu0 0
  %3248 = vmatpush2.bf16.msra.mxu0 0
  %3249 = vmatprep.subr.bf16.mxu0 0
  %3250 = vmatpush2.bf16.msra.mxu0 0
  %3251 = vmatprep.mubr.bf16.mxu0 0
  %3252 = vmatmul.mubr.bf16.gmra.mxu0 %v1860
  %v3253 = vpop.f32.mrf.mxu0
  %v3254 = vadd.f32 0.0, %v3253
  %v3255 = vpop.f32.mrf.mxu0
  %v3256 = vpop.f32.mrf.mxu0
  %v3257 = vpop.f32.mrf.mxu0
  %3258 = vdwg.mxu0
  %v3259 = vadd.f32 %v3153, %v3254
  %s3260 = scalar_lea.vmem %s3, 832
  %v3261 = vld [vmem:[%s3260] sm:$0xf]
  %v3262 = vld [vmem:[%s3260 + $0x4] sm:$0xf]
  %v3263 = vld [vmem:[%s3260 + $0x8] sm:$0xf]
  %v3264 = vld [vmem:[%s3260 + $0xc] sm:$0xf]
  %v3265 = vld [vmem:[%s3260 + $0x10] sm:$0xf]
  %v3266 = vld [vmem:[%s3260 + $0x14] sm:$0xf]
  %v3267 = vld [vmem:[%s3260 + $0x18] sm:$0xf]
  %v3268 = vld [vmem:[%s3260 + $0x1c] sm:$0xf]
  %v3269 = vld [vmem:[%s3260 + $0x20] sm:$0xf]
  %v3270 = vld [vmem:[%s3260 + $0x24] sm:$0xf]
  %v3271 = vld [vmem:[%s3260 + $0x28] sm:$0xf]
  %v3272 = vld [vmem:[%s3260 + $0x2c] sm:$0xf]
  %v3273 = vld [vmem:[%s3260 + $0x30] sm:$0xf]
  %v3274 = vld [vmem:[%s3260 + $0x34] sm:$0xf]
  %v3275 = vld [vmem:[%s3260 + $0x38] sm:$0xf]
  %v3276 = vld [vmem:[%s3260 + $0x3c] sm:$0xf]
  %v3278 = vrot.slane %v1860, 4
  %v3296 = vunpack.c.l.b16 %v3261
  %v3297 = vunpack.c.l.b16 %v3262
  %v3298 = vunpack.c.l.b16 %v3263
  %v3299 = vunpack.c.l.b16 %v3264
  %v3300 = vunpack.c.l.b16 %v3265
  %v3301 = vunpack.c.l.b16 %v3266
  %v3302 = vunpack.c.l.b16 %v3267
  %v3303 = vunpack.c.l.b16 %v3268
  %v3304 = vunpack.c.l.b16 %v3269
  %v3305 = vunpack.c.l.b16 %v3270
  %v3306 = vunpack.c.l.b16 %v3271
  %v3307 = vunpack.c.l.b16 %v3272
  %v3308 = vunpack.c.l.b16 %v3273
  %v3309 = vunpack.c.l.b16 %v3274
  %v3310 = vunpack.c.l.b16 %v3275
  %v3311 = vunpack.c.l.b16 %v3276
  %v3312 = vpack.c.b16 %v3297, %v3296
  %v3313 = vpack.c.b16 %v3299, %v3298
  %v3314 = vpack.c.b16 %v3301, %v3300
  %v3315 = vpack.c.b16 %v3303, %v3302
  %v3316 = vpack.c.b16 %v3305, %v3304
  %v3317 = vpack.c.b16 %v3307, %v3306
  %v3318 = vpack.c.b16 %v3309, %v3308
  %v3319 = vpack.c.b16 %v3311, %v3310
  %3328 = vmatprep.subr.bf16.mxu0 0
  %3329 = vmatpush1.bf16.msra.mxu0 %v3319
  %3330 = vmatprep.subr.bf16.mxu0 0
  %3331 = vmatpush1.bf16.msra.mxu0 %v3318
  %3332 = vmatprep.subr.bf16.mxu0 0
  %3333 = vmatpush1.bf16.msra.mxu0 %v3317
  %3334 = vmatprep.subr.bf16.mxu0 0
  %3335 = vmatpush1.bf16.msra.mxu0 %v3316
  %3336 = vmatprep.subr.bf16.mxu0 0
  %3337 = vmatpush1.bf16.msra.mxu0 %v3315
  %3338 = vmatprep.subr.bf16.mxu0 0
  %3339 = vmatpush1.bf16.msra.mxu0 %v3314
  %3340 = vmatprep.subr.bf16.mxu0 0
  %3341 = vmatpush1.bf16.msra.mxu0 %v3313
  %3342 = vmatprep.subr.bf16.mxu0 0
  %3343 = vmatpush1.bf16.msra.mxu0 %v3312
  %3344 = vmatprep.subr.bf16.mxu0 0
  %3345 = vmatpush2.bf16.msra.mxu0 0
  %3346 = vmatprep.subr.bf16.mxu0 0
  %3347 = vmatpush2.bf16.msra.mxu0 0
  %3348 = vmatprep.subr.bf16.mxu0 0
  %3349 = vmatpush2.bf16.msra.mxu0 0
  %3350 = vmatprep.subr.bf16.mxu0 0
  %3351 = vmatpush2.bf16.msra.mxu0 0
  %3352 = vmatprep.subr.bf16.mxu0 0
  %3353 = vmatpush2.bf16.msra.mxu0 0
  %3354 = vmatprep.subr.bf16.mxu0 0
  %3355 = vmatpush2.bf16.msra.mxu0 0
  %3356 = vmatprep.subr.bf16.mxu0 0
  %3357 = vmatpush2.bf16.msra.mxu0 0
  %3358 = vmatprep.subr.bf16.mxu0 0
  %3359 = vmatpush2.bf16.msra.mxu0 0
  %3360 = vmatprep.mubr.bf16.mxu0 0
  %3361 = vmatmul.mubr.bf16.gmra.mxu0 %v3278
  %v3362 = vpop.f32.mrf.mxu0
  %v3363 = vadd.f32 0.0, %v3362
  %v3364 = vpop.f32.mrf.mxu0
  %v3365 = vpop.f32.mrf.mxu0
  %v3366 = vpop.f32.mrf.mxu0
  %3367 = vdwg.mxu0
  %v3368 = vadd.f32 %v3259, %v3363
  %s3369 = scalar_lea.vmem %s3, 896
  %v3370 = vld [vmem:[%s3369] sm:$0xf]
  %v3371 = vld [vmem:[%s3369 + $0x4] sm:$0xf]
  %v3372 = vld [vmem:[%s3369 + $0x8] sm:$0xf]
  %v3373 = vld [vmem:[%s3369 + $0xc] sm:$0xf]
  %v3374 = vld [vmem:[%s3369 + $0x10] sm:$0xf]
  %v3375 = vld [vmem:[%s3369 + $0x14] sm:$0xf]
  %v3376 = vld [vmem:[%s3369 + $0x18] sm:$0xf]
  %v3377 = vld [vmem:[%s3369 + $0x1c] sm:$0xf]
  %v3378 = vld [vmem:[%s3369 + $0x20] sm:$0xf]
  %v3379 = vld [vmem:[%s3369 + $0x24] sm:$0xf]
  %v3380 = vld [vmem:[%s3369 + $0x28] sm:$0xf]
  %v3381 = vld [vmem:[%s3369 + $0x2c] sm:$0xf]
  %v3382 = vld [vmem:[%s3369 + $0x30] sm:$0xf]
  %v3383 = vld [vmem:[%s3369 + $0x34] sm:$0xf]
  %v3384 = vld [vmem:[%s3369 + $0x38] sm:$0xf]
  %v3385 = vld [vmem:[%s3369 + $0x3c] sm:$0xf]
  %v3402 = vunpack.c.l.b16 %v3370
  %v3403 = vunpack.c.l.b16 %v3371
  %v3404 = vunpack.c.l.b16 %v3372
  %v3405 = vunpack.c.l.b16 %v3373
  %v3406 = vunpack.c.l.b16 %v3374
  %v3407 = vunpack.c.l.b16 %v3375
  %v3408 = vunpack.c.l.b16 %v3376
  %v3409 = vunpack.c.l.b16 %v3377
  %v3410 = vunpack.c.l.b16 %v3378
  %v3411 = vunpack.c.l.b16 %v3379
  %v3412 = vunpack.c.l.b16 %v3380
  %v3413 = vunpack.c.l.b16 %v3381
  %v3414 = vunpack.c.l.b16 %v3382
  %v3415 = vunpack.c.l.b16 %v3383
  %v3416 = vunpack.c.l.b16 %v3384
  %v3417 = vunpack.c.l.b16 %v3385
  %v3418 = vpack.c.b16 %v3403, %v3402
  %v3419 = vpack.c.b16 %v3405, %v3404
  %v3420 = vpack.c.b16 %v3407, %v3406
  %v3421 = vpack.c.b16 %v3409, %v3408
  %v3422 = vpack.c.b16 %v3411, %v3410
  %v3423 = vpack.c.b16 %v3413, %v3412
  %v3424 = vpack.c.b16 %v3415, %v3414
  %v3425 = vpack.c.b16 %v3417, %v3416
  %3434 = vmatprep.subr.bf16.mxu0 0
  %3435 = vmatpush1.bf16.msra.mxu0 %v3425
  %3436 = vmatprep.subr.bf16.mxu0 0
  %3437 = vmatpush1.bf16.msra.mxu0 %v3424
  %3438 = vmatprep.subr.bf16.mxu0 0
  %3439 = vmatpush1.bf16.msra.mxu0 %v3423
  %3440 = vmatprep.subr.bf16.mxu0 0
  %3441 = vmatpush1.bf16.msra.mxu0 %v3422
  %3442 = vmatprep.subr.bf16.mxu0 0
  %3443 = vmatpush1.bf16.msra.mxu0 %v3421
  %3444 = vmatprep.subr.bf16.mxu0 0
  %3445 = vmatpush1.bf16.msra.mxu0 %v3420
  %3446 = vmatprep.subr.bf16.mxu0 0
  %3447 = vmatpush1.bf16.msra.mxu0 %v3419
  %3448 = vmatprep.subr.bf16.mxu0 0
  %3449 = vmatpush1.bf16.msra.mxu0 %v3418
  %3450 = vmatprep.subr.bf16.mxu0 0
  %3451 = vmatpush2.bf16.msra.mxu0 0
  %3452 = vmatprep.subr.bf16.mxu0 0
  %3453 = vmatpush2.bf16.msra.mxu0 0
  %3454 = vmatprep.subr.bf16.mxu0 0
  %3455 = vmatpush2.bf16.msra.mxu0 0
  %3456 = vmatprep.subr.bf16.mxu0 0
  %3457 = vmatpush2.bf16.msra.mxu0 0
  %3458 = vmatprep.subr.bf16.mxu0 0
  %3459 = vmatpush2.bf16.msra.mxu0 0
  %3460 = vmatprep.subr.bf16.mxu0 0
  %3461 = vmatpush2.bf16.msra.mxu0 0
  %3462 = vmatprep.subr.bf16.mxu0 0
  %3463 = vmatpush2.bf16.msra.mxu0 0
  %3464 = vmatprep.subr.bf16.mxu0 0
  %3465 = vmatpush2.bf16.msra.mxu0 0
  %3466 = vmatprep.mubr.bf16.mxu0 0
  %3467 = vmatmul.mubr.bf16.gmra.mxu0 %v1861
  %v3468 = vpop.f32.mrf.mxu0
  %v3469 = vadd.f32 0.0, %v3468
  %v3470 = vpop.f32.mrf.mxu0
  %v3471 = vpop.f32.mrf.mxu0
  %v3472 = vpop.f32.mrf.mxu0
  %3473 = vdwg.mxu0
  %v3474 = vadd.f32 %v3368, %v3469
  %s3475 = scalar_lea.vmem %s3, 960
  %v3476 = vld [vmem:[%s3475] sm:$0xf]
  %v3477 = vld [vmem:[%s3475 + $0x4] sm:$0xf]
  %v3478 = vld [vmem:[%s3475 + $0x8] sm:$0xf]
  %v3479 = vld [vmem:[%s3475 + $0xc] sm:$0xf]
  %v3480 = vld [vmem:[%s3475 + $0x10] sm:$0xf]
  %v3481 = vld [vmem:[%s3475 + $0x14] sm:$0xf]
  %v3482 = vld [vmem:[%s3475 + $0x18] sm:$0xf]
  %v3483 = vld [vmem:[%s3475 + $0x1c] sm:$0xf]
  %v3484 = vld [vmem:[%s3475 + $0x20] sm:$0xf]
  %v3485 = vld [vmem:[%s3475 + $0x24] sm:$0xf]
  %v3486 = vld [vmem:[%s3475 + $0x28] sm:$0xf]
  %v3487 = vld [vmem:[%s3475 + $0x2c] sm:$0xf]
  %v3488 = vld [vmem:[%s3475 + $0x30] sm:$0xf]
  %v3489 = vld [vmem:[%s3475 + $0x34] sm:$0xf]
  %v3490 = vld [vmem:[%s3475 + $0x38] sm:$0xf]
  %v3491 = vld [vmem:[%s3475 + $0x3c] sm:$0xf]
  %v3493 = vrot.slane %v1861, 4
  %v3511 = vunpack.c.l.b16 %v3476
  %v3512 = vunpack.c.l.b16 %v3477
  %v3513 = vunpack.c.l.b16 %v3478
  %v3514 = vunpack.c.l.b16 %v3479
  %v3515 = vunpack.c.l.b16 %v3480
  %v3516 = vunpack.c.l.b16 %v3481
  %v3517 = vunpack.c.l.b16 %v3482
  %v3518 = vunpack.c.l.b16 %v3483
  %v3519 = vunpack.c.l.b16 %v3484
  %v3520 = vunpack.c.l.b16 %v3485
  %v3521 = vunpack.c.l.b16 %v3486
  %v3522 = vunpack.c.l.b16 %v3487
  %v3523 = vunpack.c.l.b16 %v3488
  %v3524 = vunpack.c.l.b16 %v3489
  %v3525 = vunpack.c.l.b16 %v3490
  %v3526 = vunpack.c.l.b16 %v3491
  %v3527 = vpack.c.b16 %v3512, %v3511
  %v3528 = vpack.c.b16 %v3514, %v3513
  %v3529 = vpack.c.b16 %v3516, %v3515
  %v3530 = vpack.c.b16 %v3518, %v3517
  %v3531 = vpack.c.b16 %v3520, %v3519
  %v3532 = vpack.c.b16 %v3522, %v3521
  %v3533 = vpack.c.b16 %v3524, %v3523
  %v3534 = vpack.c.b16 %v3526, %v3525
  %3543 = vmatprep.subr.bf16.mxu0 0
  %3544 = vmatpush1.bf16.msra.mxu0 %v3534
  %3545 = vmatprep.subr.bf16.mxu0 0
  %3546 = vmatpush1.bf16.msra.mxu0 %v3533
  %3547 = vmatprep.subr.bf16.mxu0 0
  %3548 = vmatpush1.bf16.msra.mxu0 %v3532
  %3549 = vmatprep.subr.bf16.mxu0 0
  %3550 = vmatpush1.bf16.msra.mxu0 %v3531
  %3551 = vmatprep.subr.bf16.mxu0 0
  %3552 = vmatpush1.bf16.msra.mxu0 %v3530
  %3553 = vmatprep.subr.bf16.mxu0 0
  %3554 = vmatpush1.bf16.msra.mxu0 %v3529
  %3555 = vmatprep.subr.bf16.mxu0 0
  %3556 = vmatpush1.bf16.msra.mxu0 %v3528
  %3557 = vmatprep.subr.bf16.mxu0 0
  %3558 = vmatpush1.bf16.msra.mxu0 %v3527
  %3559 = vmatprep.subr.bf16.mxu0 0
  %3560 = vmatpush2.bf16.msra.mxu0 0
  %3561 = vmatprep.subr.bf16.mxu0 0
  %3562 = vmatpush2.bf16.msra.mxu0 0
  %3563 = vmatprep.subr.bf16.mxu0 0
  %3564 = vmatpush2.bf16.msra.mxu0 0
  %3565 = vmatprep.subr.bf16.mxu0 0
  %3566 = vmatpush2.bf16.msra.mxu0 0
  %3567 = vmatprep.subr.bf16.mxu0 0
  %3568 = vmatpush2.bf16.msra.mxu0 0
  %3569 = vmatprep.subr.bf16.mxu0 0
  %3570 = vmatpush2.bf16.msra.mxu0 0
  %3571 = vmatprep.subr.bf16.mxu0 0
  %3572 = vmatpush2.bf16.msra.mxu0 0
  %3573 = vmatprep.subr.bf16.mxu0 0
  %3574 = vmatpush2.bf16.msra.mxu0 0
  %3575 = vmatprep.mubr.bf16.mxu0 0
  %3576 = vmatmul.mubr.bf16.gmra.mxu0 %v3493
  %v3577 = vpop.f32.mrf.mxu0
  %v3578 = vadd.f32 0.0, %v3577
  %v3579 = vpop.f32.mrf.mxu0
  %v3580 = vpop.f32.mrf.mxu0
  %v3581 = vpop.f32.mrf.mxu0
  %3582 = vdwg.mxu0
  %v3583 = vadd.f32 %v3474, %v3578
  %s3584 = scalar_lea.vmem %s3, 1024
  %v3585 = vld [vmem:[%s3584] sm:$0xf]
  %v3586 = vld [vmem:[%s3584 + $0x4] sm:$0xf]
  %v3587 = vld [vmem:[%s3584 + $0x8] sm:$0xf]
  %v3588 = vld [vmem:[%s3584 + $0xc] sm:$0xf]
  %v3589 = vld [vmem:[%s3584 + $0x10] sm:$0xf]
  %v3590 = vld [vmem:[%s3584 + $0x14] sm:$0xf]
  %v3591 = vld [vmem:[%s3584 + $0x18] sm:$0xf]
  %v3592 = vld [vmem:[%s3584 + $0x1c] sm:$0xf]
  %v3593 = vld [vmem:[%s3584 + $0x20] sm:$0xf]
  %v3594 = vld [vmem:[%s3584 + $0x24] sm:$0xf]
  %v3595 = vld [vmem:[%s3584 + $0x28] sm:$0xf]
  %v3596 = vld [vmem:[%s3584 + $0x2c] sm:$0xf]
  %v3597 = vld [vmem:[%s3584 + $0x30] sm:$0xf]
  %v3598 = vld [vmem:[%s3584 + $0x34] sm:$0xf]
  %v3599 = vld [vmem:[%s3584 + $0x38] sm:$0xf]
  %v3600 = vld [vmem:[%s3584 + $0x3c] sm:$0xf]
  %v3617 = vunpack.c.l.b16 %v3585
  %v3618 = vunpack.c.l.b16 %v3586
  %v3619 = vunpack.c.l.b16 %v3587
  %v3620 = vunpack.c.l.b16 %v3588
  %v3621 = vunpack.c.l.b16 %v3589
  %v3622 = vunpack.c.l.b16 %v3590
  %v3623 = vunpack.c.l.b16 %v3591
  %v3624 = vunpack.c.l.b16 %v3592
  %v3625 = vunpack.c.l.b16 %v3593
  %v3626 = vunpack.c.l.b16 %v3594
  %v3627 = vunpack.c.l.b16 %v3595
  %v3628 = vunpack.c.l.b16 %v3596
  %v3629 = vunpack.c.l.b16 %v3597
  %v3630 = vunpack.c.l.b16 %v3598
  %v3631 = vunpack.c.l.b16 %v3599
  %v3632 = vunpack.c.l.b16 %v3600
  %v3633 = vpack.c.b16 %v3618, %v3617
  %v3634 = vpack.c.b16 %v3620, %v3619
  %v3635 = vpack.c.b16 %v3622, %v3621
  %v3636 = vpack.c.b16 %v3624, %v3623
  %v3637 = vpack.c.b16 %v3626, %v3625
  %v3638 = vpack.c.b16 %v3628, %v3627
  %v3639 = vpack.c.b16 %v3630, %v3629
  %v3640 = vpack.c.b16 %v3632, %v3631
  %3649 = vmatprep.subr.bf16.mxu0 0
  %3650 = vmatpush1.bf16.msra.mxu0 %v3640
  %3651 = vmatprep.subr.bf16.mxu0 0
  %3652 = vmatpush1.bf16.msra.mxu0 %v3639
  %3653 = vmatprep.subr.bf16.mxu0 0
  %3654 = vmatpush1.bf16.msra.mxu0 %v3638
  %3655 = vmatprep.subr.bf16.mxu0 0
  %3656 = vmatpush1.bf16.msra.mxu0 %v3637
  %3657 = vmatprep.subr.bf16.mxu0 0
  %3658 = vmatpush1.bf16.msra.mxu0 %v3636
  %3659 = vmatprep.subr.bf16.mxu0 0
  %3660 = vmatpush1.bf16.msra.mxu0 %v3635
  %3661 = vmatprep.subr.bf16.mxu0 0
  %3662 = vmatpush1.bf16.msra.mxu0 %v3634
  %3663 = vmatprep.subr.bf16.mxu0 0
  %3664 = vmatpush1.bf16.msra.mxu0 %v3633
  %3665 = vmatprep.subr.bf16.mxu0 0
  %3666 = vmatpush2.bf16.msra.mxu0 0
  %3667 = vmatprep.subr.bf16.mxu0 0
  %3668 = vmatpush2.bf16.msra.mxu0 0
  %3669 = vmatprep.subr.bf16.mxu0 0
  %3670 = vmatpush2.bf16.msra.mxu0 0
  %3671 = vmatprep.subr.bf16.mxu0 0
  %3672 = vmatpush2.bf16.msra.mxu0 0
  %3673 = vmatprep.subr.bf16.mxu0 0
  %3674 = vmatpush2.bf16.msra.mxu0 0
  %3675 = vmatprep.subr.bf16.mxu0 0
  %3676 = vmatpush2.bf16.msra.mxu0 0
  %3677 = vmatprep.subr.bf16.mxu0 0
  %3678 = vmatpush2.bf16.msra.mxu0 0
  %3679 = vmatprep.subr.bf16.mxu0 0
  %3680 = vmatpush2.bf16.msra.mxu0 0
  %3681 = vmatprep.mubr.bf16.mxu0 0
  %3682 = vmatmul.mubr.bf16.gmra.mxu0 %v1862
  %v3683 = vpop.f32.mrf.mxu0
  %v3684 = vadd.f32 0.0, %v3683
  %v3685 = vpop.f32.mrf.mxu0
  %v3686 = vpop.f32.mrf.mxu0
  %v3687 = vpop.f32.mrf.mxu0
  %3688 = vdwg.mxu0
  %v3689 = vadd.f32 %v3583, %v3684
  %s3690 = scalar_lea.vmem %s3, 1088
  %v3691 = vld [vmem:[%s3690] sm:$0xf]
  %v3692 = vld [vmem:[%s3690 + $0x4] sm:$0xf]
  %v3693 = vld [vmem:[%s3690 + $0x8] sm:$0xf]
  %v3694 = vld [vmem:[%s3690 + $0xc] sm:$0xf]
  %v3695 = vld [vmem:[%s3690 + $0x10] sm:$0xf]
  %v3696 = vld [vmem:[%s3690 + $0x14] sm:$0xf]
  %v3697 = vld [vmem:[%s3690 + $0x18] sm:$0xf]
  %v3698 = vld [vmem:[%s3690 + $0x1c] sm:$0xf]
  %v3699 = vld [vmem:[%s3690 + $0x20] sm:$0xf]
  %v3700 = vld [vmem:[%s3690 + $0x24] sm:$0xf]
  %v3701 = vld [vmem:[%s3690 + $0x28] sm:$0xf]
  %v3702 = vld [vmem:[%s3690 + $0x2c] sm:$0xf]
  %v3703 = vld [vmem:[%s3690 + $0x30] sm:$0xf]
  %v3704 = vld [vmem:[%s3690 + $0x34] sm:$0xf]
  %v3705 = vld [vmem:[%s3690 + $0x38] sm:$0xf]
  %v3706 = vld [vmem:[%s3690 + $0x3c] sm:$0xf]
  %v3708 = vrot.slane %v1862, 4
  %v3726 = vunpack.c.l.b16 %v3691
  %v3727 = vunpack.c.l.b16 %v3692
  %v3728 = vunpack.c.l.b16 %v3693
  %v3729 = vunpack.c.l.b16 %v3694
  %v3730 = vunpack.c.l.b16 %v3695
  %v3731 = vunpack.c.l.b16 %v3696
  %v3732 = vunpack.c.l.b16 %v3697
  %v3733 = vunpack.c.l.b16 %v3698
  %v3734 = vunpack.c.l.b16 %v3699
  %v3735 = vunpack.c.l.b16 %v3700
  %v3736 = vunpack.c.l.b16 %v3701
  %v3737 = vunpack.c.l.b16 %v3702
  %v3738 = vunpack.c.l.b16 %v3703
  %v3739 = vunpack.c.l.b16 %v3704
  %v3740 = vunpack.c.l.b16 %v3705
  %v3741 = vunpack.c.l.b16 %v3706
  %v3742 = vpack.c.b16 %v3727, %v3726
  %v3743 = vpack.c.b16 %v3729, %v3728
  %v3744 = vpack.c.b16 %v3731, %v3730
  %v3745 = vpack.c.b16 %v3733, %v3732
  %v3746 = vpack.c.b16 %v3735, %v3734
  %v3747 = vpack.c.b16 %v3737, %v3736
  %v3748 = vpack.c.b16 %v3739, %v3738
  %v3749 = vpack.c.b16 %v3741, %v3740
  %3758 = vmatprep.subr.bf16.mxu0 0
  %3759 = vmatpush1.bf16.msra.mxu0 %v3749
  %3760 = vmatprep.subr.bf16.mxu0 0
  %3761 = vmatpush1.bf16.msra.mxu0 %v3748
  %3762 = vmatprep.subr.bf16.mxu0 0
  %3763 = vmatpush1.bf16.msra.mxu0 %v3747
  %3764 = vmatprep.subr.bf16.mxu0 0
  %3765 = vmatpush1.bf16.msra.mxu0 %v3746
  %3766 = vmatprep.subr.bf16.mxu0 0
  %3767 = vmatpush1.bf16.msra.mxu0 %v3745
  %3768 = vmatprep.subr.bf16.mxu0 0
  %3769 = vmatpush1.bf16.msra.mxu0 %v3744
  %3770 = vmatprep.subr.bf16.mxu0 0
  %3771 = vmatpush1.bf16.msra.mxu0 %v3743
  %3772 = vmatprep.subr.bf16.mxu0 0
  %3773 = vmatpush1.bf16.msra.mxu0 %v3742
  %3774 = vmatprep.subr.bf16.mxu0 0
  %3775 = vmatpush2.bf16.msra.mxu0 0
  %3776 = vmatprep.subr.bf16.mxu0 0
  %3777 = vmatpush2.bf16.msra.mxu0 0
  %3778 = vmatprep.subr.bf16.mxu0 0
  %3779 = vmatpush2.bf16.msra.mxu0 0
  %3780 = vmatprep.subr.bf16.mxu0 0
  %3781 = vmatpush2.bf16.msra.mxu0 0
  %3782 = vmatprep.subr.bf16.mxu0 0
  %3783 = vmatpush2.bf16.msra.mxu0 0
  %3784 = vmatprep.subr.bf16.mxu0 0
  %3785 = vmatpush2.bf16.msra.mxu0 0
  %3786 = vmatprep.subr.bf16.mxu0 0
  %3787 = vmatpush2.bf16.msra.mxu0 0
  %3788 = vmatprep.subr.bf16.mxu0 0
  %3789 = vmatpush2.bf16.msra.mxu0 0
  %3790 = vmatprep.mubr.bf16.mxu0 0
  %3791 = vmatmul.mubr.bf16.gmra.mxu0 %v3708
  %v3792 = vpop.f32.mrf.mxu0
  %v3793 = vadd.f32 0.0, %v3792
  %v3794 = vpop.f32.mrf.mxu0
  %v3795 = vpop.f32.mrf.mxu0
  %v3796 = vpop.f32.mrf.mxu0
  %3797 = vdwg.mxu0
  %v3798 = vadd.f32 %v3689, %v3793
  %s3799 = scalar_lea.vmem %s3, 1152
  %v3800 = vld [vmem:[%s3799] sm:$0xf]
  %v3801 = vld [vmem:[%s3799 + $0x4] sm:$0xf]
  %v3802 = vld [vmem:[%s3799 + $0x8] sm:$0xf]
  %v3803 = vld [vmem:[%s3799 + $0xc] sm:$0xf]
  %v3804 = vld [vmem:[%s3799 + $0x10] sm:$0xf]
  %v3805 = vld [vmem:[%s3799 + $0x14] sm:$0xf]
  %v3806 = vld [vmem:[%s3799 + $0x18] sm:$0xf]
  %v3807 = vld [vmem:[%s3799 + $0x1c] sm:$0xf]
  %v3808 = vld [vmem:[%s3799 + $0x20] sm:$0xf]
  %v3809 = vld [vmem:[%s3799 + $0x24] sm:$0xf]
  %v3810 = vld [vmem:[%s3799 + $0x28] sm:$0xf]
  %v3811 = vld [vmem:[%s3799 + $0x2c] sm:$0xf]
  %v3812 = vld [vmem:[%s3799 + $0x30] sm:$0xf]
  %v3813 = vld [vmem:[%s3799 + $0x34] sm:$0xf]
  %v3814 = vld [vmem:[%s3799 + $0x38] sm:$0xf]
  %v3815 = vld [vmem:[%s3799 + $0x3c] sm:$0xf]
  %v3832 = vunpack.c.l.b16 %v3800
  %v3833 = vunpack.c.l.b16 %v3801
  %v3834 = vunpack.c.l.b16 %v3802
  %v3835 = vunpack.c.l.b16 %v3803
  %v3836 = vunpack.c.l.b16 %v3804
  %v3837 = vunpack.c.l.b16 %v3805
  %v3838 = vunpack.c.l.b16 %v3806
  %v3839 = vunpack.c.l.b16 %v3807
  %v3840 = vunpack.c.l.b16 %v3808
  %v3841 = vunpack.c.l.b16 %v3809
  %v3842 = vunpack.c.l.b16 %v3810
  %v3843 = vunpack.c.l.b16 %v3811
  %v3844 = vunpack.c.l.b16 %v3812
  %v3845 = vunpack.c.l.b16 %v3813
  %v3846 = vunpack.c.l.b16 %v3814
  %v3847 = vunpack.c.l.b16 %v3815
  %v3848 = vpack.c.b16 %v3833, %v3832
  %v3849 = vpack.c.b16 %v3835, %v3834
  %v3850 = vpack.c.b16 %v3837, %v3836
  %v3851 = vpack.c.b16 %v3839, %v3838
  %v3852 = vpack.c.b16 %v3841, %v3840
  %v3853 = vpack.c.b16 %v3843, %v3842
  %v3854 = vpack.c.b16 %v3845, %v3844
  %v3855 = vpack.c.b16 %v3847, %v3846
  %3864 = vmatprep.subr.bf16.mxu0 0
  %3865 = vmatpush1.bf16.msra.mxu0 %v3855
  %3866 = vmatprep.subr.bf16.mxu0 0
  %3867 = vmatpush1.bf16.msra.mxu0 %v3854
  %3868 = vmatprep.subr.bf16.mxu0 0
  %3869 = vmatpush1.bf16.msra.mxu0 %v3853
  %3870 = vmatprep.subr.bf16.mxu0 0
  %3871 = vmatpush1.bf16.msra.mxu0 %v3852
  %3872 = vmatprep.subr.bf16.mxu0 0
  %3873 = vmatpush1.bf16.msra.mxu0 %v3851
  %3874 = vmatprep.subr.bf16.mxu0 0
  %3875 = vmatpush1.bf16.msra.mxu0 %v3850
  %3876 = vmatprep.subr.bf16.mxu0 0
  %3877 = vmatpush1.bf16.msra.mxu0 %v3849
  %3878 = vmatprep.subr.bf16.mxu0 0
  %3879 = vmatpush1.bf16.msra.mxu0 %v3848
  %3880 = vmatprep.subr.bf16.mxu0 0
  %3881 = vmatpush2.bf16.msra.mxu0 0
  %3882 = vmatprep.subr.bf16.mxu0 0
  %3883 = vmatpush2.bf16.msra.mxu0 0
  %3884 = vmatprep.subr.bf16.mxu0 0
  %3885 = vmatpush2.bf16.msra.mxu0 0
  %3886 = vmatprep.subr.bf16.mxu0 0
  %3887 = vmatpush2.bf16.msra.mxu0 0
  %3888 = vmatprep.subr.bf16.mxu0 0
  %3889 = vmatpush2.bf16.msra.mxu0 0
  %3890 = vmatprep.subr.bf16.mxu0 0
  %3891 = vmatpush2.bf16.msra.mxu0 0
  %3892 = vmatprep.subr.bf16.mxu0 0
  %3893 = vmatpush2.bf16.msra.mxu0 0
  %3894 = vmatprep.subr.bf16.mxu0 0
  %3895 = vmatpush2.bf16.msra.mxu0 0
  %3896 = vmatprep.mubr.bf16.mxu0 0
  %3897 = vmatmul.mubr.bf16.gmra.mxu0 %v1863
  %v3898 = vpop.f32.mrf.mxu0
  %v3899 = vadd.f32 0.0, %v3898
  %v3900 = vpop.f32.mrf.mxu0
  %v3901 = vpop.f32.mrf.mxu0
  %v3902 = vpop.f32.mrf.mxu0
  %3903 = vdwg.mxu0
  %v3904 = vadd.f32 %v3798, %v3899
  %s3905 = scalar_lea.vmem %s3, 1216
  %v3906 = vld [vmem:[%s3905] sm:$0xf]
  %v3907 = vld [vmem:[%s3905 + $0x4] sm:$0xf]
  %v3908 = vld [vmem:[%s3905 + $0x8] sm:$0xf]
  %v3909 = vld [vmem:[%s3905 + $0xc] sm:$0xf]
  %v3910 = vld [vmem:[%s3905 + $0x10] sm:$0xf]
  %v3911 = vld [vmem:[%s3905 + $0x14] sm:$0xf]
  %v3912 = vld [vmem:[%s3905 + $0x18] sm:$0xf]
  %v3913 = vld [vmem:[%s3905 + $0x1c] sm:$0xf]
  %v3914 = vld [vmem:[%s3905 + $0x20] sm:$0xf]
  %v3915 = vld [vmem:[%s3905 + $0x24] sm:$0xf]
  %v3916 = vld [vmem:[%s3905 + $0x28] sm:$0xf]
  %v3917 = vld [vmem:[%s3905 + $0x2c] sm:$0xf]
  %v3918 = vld [vmem:[%s3905 + $0x30] sm:$0xf]
  %v3919 = vld [vmem:[%s3905 + $0x34] sm:$0xf]
  %v3920 = vld [vmem:[%s3905 + $0x38] sm:$0xf]
  %v3921 = vld [vmem:[%s3905 + $0x3c] sm:$0xf]
  %v3923 = vrot.slane %v1863, 4
  %v3941 = vunpack.c.l.b16 %v3906
  %v3942 = vunpack.c.l.b16 %v3907
  %v3943 = vunpack.c.l.b16 %v3908
  %v3944 = vunpack.c.l.b16 %v3909
  %v3945 = vunpack.c.l.b16 %v3910
  %v3946 = vunpack.c.l.b16 %v3911
  %v3947 = vunpack.c.l.b16 %v3912
  %v3948 = vunpack.c.l.b16 %v3913
  %v3949 = vunpack.c.l.b16 %v3914
  %v3950 = vunpack.c.l.b16 %v3915
  %v3951 = vunpack.c.l.b16 %v3916
  %v3952 = vunpack.c.l.b16 %v3917
  %v3953 = vunpack.c.l.b16 %v3918
  %v3954 = vunpack.c.l.b16 %v3919
  %v3955 = vunpack.c.l.b16 %v3920
  %v3956 = vunpack.c.l.b16 %v3921
  %v3957 = vpack.c.b16 %v3942, %v3941
  %v3958 = vpack.c.b16 %v3944, %v3943
  %v3959 = vpack.c.b16 %v3946, %v3945
  %v3960 = vpack.c.b16 %v3948, %v3947
  %v3961 = vpack.c.b16 %v3950, %v3949
  %v3962 = vpack.c.b16 %v3952, %v3951
  %v3963 = vpack.c.b16 %v3954, %v3953
  %v3964 = vpack.c.b16 %v3956, %v3955
  %3973 = vmatprep.subr.bf16.mxu0 0
  %3974 = vmatpush1.bf16.msra.mxu0 %v3964
  %3975 = vmatprep.subr.bf16.mxu0 0
  %3976 = vmatpush1.bf16.msra.mxu0 %v3963
  %3977 = vmatprep.subr.bf16.mxu0 0
  %3978 = vmatpush1.bf16.msra.mxu0 %v3962
  %3979 = vmatprep.subr.bf16.mxu0 0
  %3980 = vmatpush1.bf16.msra.mxu0 %v3961
  %3981 = vmatprep.subr.bf16.mxu0 0
  %3982 = vmatpush1.bf16.msra.mxu0 %v3960
  %3983 = vmatprep.subr.bf16.mxu0 0
  %3984 = vmatpush1.bf16.msra.mxu0 %v3959
  %3985 = vmatprep.subr.bf16.mxu0 0
  %3986 = vmatpush1.bf16.msra.mxu0 %v3958
  %3987 = vmatprep.subr.bf16.mxu0 0
  %3988 = vmatpush1.bf16.msra.mxu0 %v3957
  %3989 = vmatprep.subr.bf16.mxu0 0
  %3990 = vmatpush2.bf16.msra.mxu0 0
  %3991 = vmatprep.subr.bf16.mxu0 0
  %3992 = vmatpush2.bf16.msra.mxu0 0
  %3993 = vmatprep.subr.bf16.mxu0 0
  %3994 = vmatpush2.bf16.msra.mxu0 0
  %3995 = vmatprep.subr.bf16.mxu0 0
  %3996 = vmatpush2.bf16.msra.mxu0 0
  %3997 = vmatprep.subr.bf16.mxu0 0
  %3998 = vmatpush2.bf16.msra.mxu0 0
  %3999 = vmatprep.subr.bf16.mxu0 0
  %4000 = vmatpush2.bf16.msra.mxu0 0
  %4001 = vmatprep.subr.bf16.mxu0 0
  %4002 = vmatpush2.bf16.msra.mxu0 0
  %4003 = vmatprep.subr.bf16.mxu0 0
  %4004 = vmatpush2.bf16.msra.mxu0 0
  %4005 = vmatprep.mubr.bf16.mxu0 0
  %4006 = vmatmul.mubr.bf16.gmra.mxu0 %v3923
  %v4007 = vpop.f32.mrf.mxu0
  %v4008 = vadd.f32 0.0, %v4007
  %v4009 = vpop.f32.mrf.mxu0
  %v4010 = vpop.f32.mrf.mxu0
  %v4011 = vpop.f32.mrf.mxu0
  %4012 = vdwg.mxu0
  %v4013 = vadd.f32 %v3904, %v4008
  %s4014 = scalar_lea.vmem %s3, 1280
  %v4015 = vld [vmem:[%s4014] sm:$0xf]
  %v4016 = vld [vmem:[%s4014 + $0x4] sm:$0xf]
  %v4017 = vld [vmem:[%s4014 + $0x8] sm:$0xf]
  %v4018 = vld [vmem:[%s4014 + $0xc] sm:$0xf]
  %v4019 = vld [vmem:[%s4014 + $0x10] sm:$0xf]
  %v4020 = vld [vmem:[%s4014 + $0x14] sm:$0xf]
  %v4021 = vld [vmem:[%s4014 + $0x18] sm:$0xf]
  %v4022 = vld [vmem:[%s4014 + $0x1c] sm:$0xf]
  %v4023 = vld [vmem:[%s4014 + $0x20] sm:$0xf]
  %v4024 = vld [vmem:[%s4014 + $0x24] sm:$0xf]
  %v4025 = vld [vmem:[%s4014 + $0x28] sm:$0xf]
  %v4026 = vld [vmem:[%s4014 + $0x2c] sm:$0xf]
  %v4027 = vld [vmem:[%s4014 + $0x30] sm:$0xf]
  %v4028 = vld [vmem:[%s4014 + $0x34] sm:$0xf]
  %v4029 = vld [vmem:[%s4014 + $0x38] sm:$0xf]
  %v4030 = vld [vmem:[%s4014 + $0x3c] sm:$0xf]
  %v4047 = vunpack.c.l.b16 %v4015
  %v4048 = vunpack.c.l.b16 %v4016
  %v4049 = vunpack.c.l.b16 %v4017
  %v4050 = vunpack.c.l.b16 %v4018
  %v4051 = vunpack.c.l.b16 %v4019
  %v4052 = vunpack.c.l.b16 %v4020
  %v4053 = vunpack.c.l.b16 %v4021
  %v4054 = vunpack.c.l.b16 %v4022
  %v4055 = vunpack.c.l.b16 %v4023
  %v4056 = vunpack.c.l.b16 %v4024
  %v4057 = vunpack.c.l.b16 %v4025
  %v4058 = vunpack.c.l.b16 %v4026
  %v4059 = vunpack.c.l.b16 %v4027
  %v4060 = vunpack.c.l.b16 %v4028
  %v4061 = vunpack.c.l.b16 %v4029
  %v4062 = vunpack.c.l.b16 %v4030
  %v4063 = vpack.c.b16 %v4048, %v4047
  %v4064 = vpack.c.b16 %v4050, %v4049
  %v4065 = vpack.c.b16 %v4052, %v4051
  %v4066 = vpack.c.b16 %v4054, %v4053
  %v4067 = vpack.c.b16 %v4056, %v4055
  %v4068 = vpack.c.b16 %v4058, %v4057
  %v4069 = vpack.c.b16 %v4060, %v4059
  %v4070 = vpack.c.b16 %v4062, %v4061
  %4079 = vmatprep.subr.bf16.mxu0 0
  %4080 = vmatpush1.bf16.msra.mxu0 %v4070
  %4081 = vmatprep.subr.bf16.mxu0 0
  %4082 = vmatpush1.bf16.msra.mxu0 %v4069
  %4083 = vmatprep.subr.bf16.mxu0 0
  %4084 = vmatpush1.bf16.msra.mxu0 %v4068
  %4085 = vmatprep.subr.bf16.mxu0 0
  %4086 = vmatpush1.bf16.msra.mxu0 %v4067
  %4087 = vmatprep.subr.bf16.mxu0 0
  %4088 = vmatpush1.bf16.msra.mxu0 %v4066
  %4089 = vmatprep.subr.bf16.mxu0 0
  %4090 = vmatpush1.bf16.msra.mxu0 %v4065
  %4091 = vmatprep.subr.bf16.mxu0 0
  %4092 = vmatpush1.bf16.msra.mxu0 %v4064
  %4093 = vmatprep.subr.bf16.mxu0 0
  %4094 = vmatpush1.bf16.msra.mxu0 %v4063
  %4095 = vmatprep.subr.bf16.mxu0 0
  %4096 = vmatpush2.bf16.msra.mxu0 0
  %4097 = vmatprep.subr.bf16.mxu0 0
  %4098 = vmatpush2.bf16.msra.mxu0 0
  %4099 = vmatprep.subr.bf16.mxu0 0
  %4100 = vmatpush2.bf16.msra.mxu0 0
  %4101 = vmatprep.subr.bf16.mxu0 0
  %4102 = vmatpush2.bf16.msra.mxu0 0
  %4103 = vmatprep.subr.bf16.mxu0 0
  %4104 = vmatpush2.bf16.msra.mxu0 0
  %4105 = vmatprep.subr.bf16.mxu0 0
  %4106 = vmatpush2.bf16.msra.mxu0 0
  %4107 = vmatprep.subr.bf16.mxu0 0
  %4108 = vmatpush2.bf16.msra.mxu0 0
  %4109 = vmatprep.subr.bf16.mxu0 0
  %4110 = vmatpush2.bf16.msra.mxu0 0
  %4111 = vmatprep.mubr.bf16.mxu0 0
  %4112 = vmatmul.mubr.bf16.gmra.mxu0 %v1864
  %v4113 = vpop.f32.mrf.mxu0
  %v4114 = vadd.f32 0.0, %v4113
  %v4115 = vpop.f32.mrf.mxu0
  %v4116 = vpop.f32.mrf.mxu0
  %v4117 = vpop.f32.mrf.mxu0
  %4118 = vdwg.mxu0
  %v4119 = vadd.f32 %v4013, %v4114
  %s4120 = scalar_lea.vmem %s3, 1344
  %v4121 = vld [vmem:[%s4120] sm:$0xf]
  %v4122 = vld [vmem:[%s4120 + $0x4] sm:$0xf]
  %v4123 = vld [vmem:[%s4120 + $0x8] sm:$0xf]
  %v4124 = vld [vmem:[%s4120 + $0xc] sm:$0xf]
  %v4125 = vld [vmem:[%s4120 + $0x10] sm:$0xf]
  %v4126 = vld [vmem:[%s4120 + $0x14] sm:$0xf]
  %v4127 = vld [vmem:[%s4120 + $0x18] sm:$0xf]
  %v4128 = vld [vmem:[%s4120 + $0x1c] sm:$0xf]
  %v4129 = vld [vmem:[%s4120 + $0x20] sm:$0xf]
  %v4130 = vld [vmem:[%s4120 + $0x24] sm:$0xf]
  %v4131 = vld [vmem:[%s4120 + $0x28] sm:$0xf]
  %v4132 = vld [vmem:[%s4120 + $0x2c] sm:$0xf]
  %v4133 = vld [vmem:[%s4120 + $0x30] sm:$0xf]
  %v4134 = vld [vmem:[%s4120 + $0x34] sm:$0xf]
  %v4135 = vld [vmem:[%s4120 + $0x38] sm:$0xf]
  %v4136 = vld [vmem:[%s4120 + $0x3c] sm:$0xf]
  %v4138 = vrot.slane %v1864, 4
  %v4156 = vunpack.c.l.b16 %v4121
  %v4157 = vunpack.c.l.b16 %v4122
  %v4158 = vunpack.c.l.b16 %v4123
  %v4159 = vunpack.c.l.b16 %v4124
  %v4160 = vunpack.c.l.b16 %v4125
  %v4161 = vunpack.c.l.b16 %v4126
  %v4162 = vunpack.c.l.b16 %v4127
  %v4163 = vunpack.c.l.b16 %v4128
  %v4164 = vunpack.c.l.b16 %v4129
  %v4165 = vunpack.c.l.b16 %v4130
  %v4166 = vunpack.c.l.b16 %v4131
  %v4167 = vunpack.c.l.b16 %v4132
  %v4168 = vunpack.c.l.b16 %v4133
  %v4169 = vunpack.c.l.b16 %v4134
  %v4170 = vunpack.c.l.b16 %v4135
  %v4171 = vunpack.c.l.b16 %v4136
  %v4172 = vpack.c.b16 %v4157, %v4156
  %v4173 = vpack.c.b16 %v4159, %v4158
  %v4174 = vpack.c.b16 %v4161, %v4160
  %v4175 = vpack.c.b16 %v4163, %v4162
  %v4176 = vpack.c.b16 %v4165, %v4164
  %v4177 = vpack.c.b16 %v4167, %v4166
  %v4178 = vpack.c.b16 %v4169, %v4168
  %v4179 = vpack.c.b16 %v4171, %v4170
  %4188 = vmatprep.subr.bf16.mxu0 0
  %4189 = vmatpush1.bf16.msra.mxu0 %v4179
  %4190 = vmatprep.subr.bf16.mxu0 0
  %4191 = vmatpush1.bf16.msra.mxu0 %v4178
  %4192 = vmatprep.subr.bf16.mxu0 0
  %4193 = vmatpush1.bf16.msra.mxu0 %v4177
  %4194 = vmatprep.subr.bf16.mxu0 0
  %4195 = vmatpush1.bf16.msra.mxu0 %v4176
  %4196 = vmatprep.subr.bf16.mxu0 0
  %4197 = vmatpush1.bf16.msra.mxu0 %v4175
  %4198 = vmatprep.subr.bf16.mxu0 0
  %4199 = vmatpush1.bf16.msra.mxu0 %v4174
  %4200 = vmatprep.subr.bf16.mxu0 0
  %4201 = vmatpush1.bf16.msra.mxu0 %v4173
  %4202 = vmatprep.subr.bf16.mxu0 0
  %4203 = vmatpush1.bf16.msra.mxu0 %v4172
  %4204 = vmatprep.subr.bf16.mxu0 0
  %4205 = vmatpush2.bf16.msra.mxu0 0
  %4206 = vmatprep.subr.bf16.mxu0 0
  %4207 = vmatpush2.bf16.msra.mxu0 0
  %4208 = vmatprep.subr.bf16.mxu0 0
  %4209 = vmatpush2.bf16.msra.mxu0 0
  %4210 = vmatprep.subr.bf16.mxu0 0
  %4211 = vmatpush2.bf16.msra.mxu0 0
  %4212 = vmatprep.subr.bf16.mxu0 0
  %4213 = vmatpush2.bf16.msra.mxu0 0
  %4214 = vmatprep.subr.bf16.mxu0 0
  %4215 = vmatpush2.bf16.msra.mxu0 0
  %4216 = vmatprep.subr.bf16.mxu0 0
  %4217 = vmatpush2.bf16.msra.mxu0 0
  %4218 = vmatprep.subr.bf16.mxu0 0
  %4219 = vmatpush2.bf16.msra.mxu0 0
  %4220 = vmatprep.mubr.bf16.mxu0 0
  %4221 = vmatmul.mubr.bf16.gmra.mxu0 %v4138
  %v4222 = vpop.f32.mrf.mxu0
  %v4223 = vadd.f32 0.0, %v4222
  %v4224 = vpop.f32.mrf.mxu0
  %v4225 = vpop.f32.mrf.mxu0
  %v4226 = vpop.f32.mrf.mxu0
  %4227 = vdwg.mxu0
  %v4228 = vadd.f32 %v4119, %v4223
  %s4229 = scalar_lea.vmem %s3, 1408
  %v4230 = vld [vmem:[%s4229] sm:$0xf]
  %v4231 = vld [vmem:[%s4229 + $0x4] sm:$0xf]
  %v4232 = vld [vmem:[%s4229 + $0x8] sm:$0xf]
  %v4233 = vld [vmem:[%s4229 + $0xc] sm:$0xf]
  %v4234 = vld [vmem:[%s4229 + $0x10] sm:$0xf]
  %v4235 = vld [vmem:[%s4229 + $0x14] sm:$0xf]
  %v4236 = vld [vmem:[%s4229 + $0x18] sm:$0xf]
  %v4237 = vld [vmem:[%s4229 + $0x1c] sm:$0xf]
  %v4238 = vld [vmem:[%s4229 + $0x20] sm:$0xf]
  %v4239 = vld [vmem:[%s4229 + $0x24] sm:$0xf]
  %v4240 = vld [vmem:[%s4229 + $0x28] sm:$0xf]
  %v4241 = vld [vmem:[%s4229 + $0x2c] sm:$0xf]
  %v4242 = vld [vmem:[%s4229 + $0x30] sm:$0xf]
  %v4243 = vld [vmem:[%s4229 + $0x34] sm:$0xf]
  %v4244 = vld [vmem:[%s4229 + $0x38] sm:$0xf]
  %v4245 = vld [vmem:[%s4229 + $0x3c] sm:$0xf]
  %v4262 = vunpack.c.l.b16 %v4230
  %v4263 = vunpack.c.l.b16 %v4231
  %v4264 = vunpack.c.l.b16 %v4232
  %v4265 = vunpack.c.l.b16 %v4233
  %v4266 = vunpack.c.l.b16 %v4234
  %v4267 = vunpack.c.l.b16 %v4235
  %v4268 = vunpack.c.l.b16 %v4236
  %v4269 = vunpack.c.l.b16 %v4237
  %v4270 = vunpack.c.l.b16 %v4238
  %v4271 = vunpack.c.l.b16 %v4239
  %v4272 = vunpack.c.l.b16 %v4240
  %v4273 = vunpack.c.l.b16 %v4241
  %v4274 = vunpack.c.l.b16 %v4242
  %v4275 = vunpack.c.l.b16 %v4243
  %v4276 = vunpack.c.l.b16 %v4244
  %v4277 = vunpack.c.l.b16 %v4245
  %v4278 = vpack.c.b16 %v4263, %v4262
  %v4279 = vpack.c.b16 %v4265, %v4264
  %v4280 = vpack.c.b16 %v4267, %v4266
  %v4281 = vpack.c.b16 %v4269, %v4268
  %v4282 = vpack.c.b16 %v4271, %v4270
  %v4283 = vpack.c.b16 %v4273, %v4272
  %v4284 = vpack.c.b16 %v4275, %v4274
  %v4285 = vpack.c.b16 %v4277, %v4276
  %4294 = vmatprep.subr.bf16.mxu0 0
  %4295 = vmatpush1.bf16.msra.mxu0 %v4285
  %4296 = vmatprep.subr.bf16.mxu0 0
  %4297 = vmatpush1.bf16.msra.mxu0 %v4284
  %4298 = vmatprep.subr.bf16.mxu0 0
  %4299 = vmatpush1.bf16.msra.mxu0 %v4283
  %4300 = vmatprep.subr.bf16.mxu0 0
  %4301 = vmatpush1.bf16.msra.mxu0 %v4282
  %4302 = vmatprep.subr.bf16.mxu0 0
  %4303 = vmatpush1.bf16.msra.mxu0 %v4281
  %4304 = vmatprep.subr.bf16.mxu0 0
  %4305 = vmatpush1.bf16.msra.mxu0 %v4280
  %4306 = vmatprep.subr.bf16.mxu0 0
  %4307 = vmatpush1.bf16.msra.mxu0 %v4279
  %4308 = vmatprep.subr.bf16.mxu0 0
  %4309 = vmatpush1.bf16.msra.mxu0 %v4278
  %4310 = vmatprep.subr.bf16.mxu0 0
  %4311 = vmatpush2.bf16.msra.mxu0 0
  %4312 = vmatprep.subr.bf16.mxu0 0
  %4313 = vmatpush2.bf16.msra.mxu0 0
  %4314 = vmatprep.subr.bf16.mxu0 0
  %4315 = vmatpush2.bf16.msra.mxu0 0
  %4316 = vmatprep.subr.bf16.mxu0 0
  %4317 = vmatpush2.bf16.msra.mxu0 0
  %4318 = vmatprep.subr.bf16.mxu0 0
  %4319 = vmatpush2.bf16.msra.mxu0 0
  %4320 = vmatprep.subr.bf16.mxu0 0
  %4321 = vmatpush2.bf16.msra.mxu0 0
  %4322 = vmatprep.subr.bf16.mxu0 0
  %4323 = vmatpush2.bf16.msra.mxu0 0
  %4324 = vmatprep.subr.bf16.mxu0 0
  %4325 = vmatpush2.bf16.msra.mxu0 0
  %4326 = vmatprep.mubr.bf16.mxu0 0
  %4327 = vmatmul.mubr.bf16.gmra.mxu0 %v1865
  %v4328 = vpop.f32.mrf.mxu0
  %v4329 = vadd.f32 0.0, %v4328
  %v4330 = vpop.f32.mrf.mxu0
  %v4331 = vpop.f32.mrf.mxu0
  %v4332 = vpop.f32.mrf.mxu0
  %4333 = vdwg.mxu0
  %v4334 = vadd.f32 %v4228, %v4329
  %s4335 = scalar_lea.vmem %s3, 1472
  %v4336 = vld [vmem:[%s4335] sm:$0xf]
  %v4337 = vld [vmem:[%s4335 + $0x4] sm:$0xf]
  %v4338 = vld [vmem:[%s4335 + $0x8] sm:$0xf]
  %v4339 = vld [vmem:[%s4335 + $0xc] sm:$0xf]
  %v4340 = vld [vmem:[%s4335 + $0x10] sm:$0xf]
  %v4341 = vld [vmem:[%s4335 + $0x14] sm:$0xf]
  %v4342 = vld [vmem:[%s4335 + $0x18] sm:$0xf]
  %v4343 = vld [vmem:[%s4335 + $0x1c] sm:$0xf]
  %v4344 = vld [vmem:[%s4335 + $0x20] sm:$0xf]
  %v4345 = vld [vmem:[%s4335 + $0x24] sm:$0xf]
  %v4346 = vld [vmem:[%s4335 + $0x28] sm:$0xf]
  %v4347 = vld [vmem:[%s4335 + $0x2c] sm:$0xf]
  %v4348 = vld [vmem:[%s4335 + $0x30] sm:$0xf]
  %v4349 = vld [vmem:[%s4335 + $0x34] sm:$0xf]
  %v4350 = vld [vmem:[%s4335 + $0x38] sm:$0xf]
  %v4351 = vld [vmem:[%s4335 + $0x3c] sm:$0xf]
  %v4353 = vrot.slane %v1865, 4
  %v4371 = vunpack.c.l.b16 %v4336
  %v4372 = vunpack.c.l.b16 %v4337
  %v4373 = vunpack.c.l.b16 %v4338
  %v4374 = vunpack.c.l.b16 %v4339
  %v4375 = vunpack.c.l.b16 %v4340
  %v4376 = vunpack.c.l.b16 %v4341
  %v4377 = vunpack.c.l.b16 %v4342
  %v4378 = vunpack.c.l.b16 %v4343
  %v4379 = vunpack.c.l.b16 %v4344
  %v4380 = vunpack.c.l.b16 %v4345
  %v4381 = vunpack.c.l.b16 %v4346
  %v4382 = vunpack.c.l.b16 %v4347
  %v4383 = vunpack.c.l.b16 %v4348
  %v4384 = vunpack.c.l.b16 %v4349
  %v4385 = vunpack.c.l.b16 %v4350
  %v4386 = vunpack.c.l.b16 %v4351
  %v4387 = vpack.c.b16 %v4372, %v4371
  %v4388 = vpack.c.b16 %v4374, %v4373
  %v4389 = vpack.c.b16 %v4376, %v4375
  %v4390 = vpack.c.b16 %v4378, %v4377
  %v4391 = vpack.c.b16 %v4380, %v4379
  %v4392 = vpack.c.b16 %v4382, %v4381
  %v4393 = vpack.c.b16 %v4384, %v4383
  %v4394 = vpack.c.b16 %v4386, %v4385
  %4403 = vmatprep.subr.bf16.mxu0 0
  %4404 = vmatpush1.bf16.msra.mxu0 %v4394
  %4405 = vmatprep.subr.bf16.mxu0 0
  %4406 = vmatpush1.bf16.msra.mxu0 %v4393
  %4407 = vmatprep.subr.bf16.mxu0 0
  %4408 = vmatpush1.bf16.msra.mxu0 %v4392
  %4409 = vmatprep.subr.bf16.mxu0 0
  %4410 = vmatpush1.bf16.msra.mxu0 %v4391
  %4411 = vmatprep.subr.bf16.mxu0 0
  %4412 = vmatpush1.bf16.msra.mxu0 %v4390
  %4413 = vmatprep.subr.bf16.mxu0 0
  %4414 = vmatpush1.bf16.msra.mxu0 %v4389
  %4415 = vmatprep.subr.bf16.mxu0 0
  %4416 = vmatpush1.bf16.msra.mxu0 %v4388
  %4417 = vmatprep.subr.bf16.mxu0 0
  %4418 = vmatpush1.bf16.msra.mxu0 %v4387
  %4419 = vmatprep.subr.bf16.mxu0 0
  %4420 = vmatpush2.bf16.msra.mxu0 0
  %4421 = vmatprep.subr.bf16.mxu0 0
  %4422 = vmatpush2.bf16.msra.mxu0 0
  %4423 = vmatprep.subr.bf16.mxu0 0
  %4424 = vmatpush2.bf16.msra.mxu0 0
  %4425 = vmatprep.subr.bf16.mxu0 0
  %4426 = vmatpush2.bf16.msra.mxu0 0
  %4427 = vmatprep.subr.bf16.mxu0 0
  %4428 = vmatpush2.bf16.msra.mxu0 0
  %4429 = vmatprep.subr.bf16.mxu0 0
  %4430 = vmatpush2.bf16.msra.mxu0 0
  %4431 = vmatprep.subr.bf16.mxu0 0
  %4432 = vmatpush2.bf16.msra.mxu0 0
  %4433 = vmatprep.subr.bf16.mxu0 0
  %4434 = vmatpush2.bf16.msra.mxu0 0
  %4435 = vmatprep.mubr.bf16.mxu0 0
  %4436 = vmatmul.mubr.bf16.gmra.mxu0 %v4353
  %v4437 = vpop.f32.mrf.mxu0
  %v4438 = vadd.f32 0.0, %v4437
  %v4439 = vpop.f32.mrf.mxu0
  %v4440 = vpop.f32.mrf.mxu0
  %v4441 = vpop.f32.mrf.mxu0
  %4442 = vdwg.mxu0
  %v4443 = vadd.f32 %v4334, %v4438
  %s4444 = scalar_lea.vmem %s3, 1536
  %v4445 = vld [vmem:[%s4444] sm:$0xf]
  %v4446 = vld [vmem:[%s4444 + $0x4] sm:$0xf]
  %v4447 = vld [vmem:[%s4444 + $0x8] sm:$0xf]
  %v4448 = vld [vmem:[%s4444 + $0xc] sm:$0xf]
  %v4449 = vld [vmem:[%s4444 + $0x10] sm:$0xf]
  %v4450 = vld [vmem:[%s4444 + $0x14] sm:$0xf]
  %v4451 = vld [vmem:[%s4444 + $0x18] sm:$0xf]
  %v4452 = vld [vmem:[%s4444 + $0x1c] sm:$0xf]
  %v4453 = vld [vmem:[%s4444 + $0x20] sm:$0xf]
  %v4454 = vld [vmem:[%s4444 + $0x24] sm:$0xf]
  %v4455 = vld [vmem:[%s4444 + $0x28] sm:$0xf]
  %v4456 = vld [vmem:[%s4444 + $0x2c] sm:$0xf]
  %v4457 = vld [vmem:[%s4444 + $0x30] sm:$0xf]
  %v4458 = vld [vmem:[%s4444 + $0x34] sm:$0xf]
  %v4459 = vld [vmem:[%s4444 + $0x38] sm:$0xf]
  %v4460 = vld [vmem:[%s4444 + $0x3c] sm:$0xf]
  %v4477 = vunpack.c.l.b16 %v4445
  %v4478 = vunpack.c.l.b16 %v4446
  %v4479 = vunpack.c.l.b16 %v4447
  %v4480 = vunpack.c.l.b16 %v4448
  %v4481 = vunpack.c.l.b16 %v4449
  %v4482 = vunpack.c.l.b16 %v4450
  %v4483 = vunpack.c.l.b16 %v4451
  %v4484 = vunpack.c.l.b16 %v4452
  %v4485 = vunpack.c.l.b16 %v4453
  %v4486 = vunpack.c.l.b16 %v4454
  %v4487 = vunpack.c.l.b16 %v4455
  %v4488 = vunpack.c.l.b16 %v4456
  %v4489 = vunpack.c.l.b16 %v4457
  %v4490 = vunpack.c.l.b16 %v4458
  %v4491 = vunpack.c.l.b16 %v4459
  %v4492 = vunpack.c.l.b16 %v4460
  %v4493 = vpack.c.b16 %v4478, %v4477
  %v4494 = vpack.c.b16 %v4480, %v4479
  %v4495 = vpack.c.b16 %v4482, %v4481
  %v4496 = vpack.c.b16 %v4484, %v4483
  %v4497 = vpack.c.b16 %v4486, %v4485
  %v4498 = vpack.c.b16 %v4488, %v4487
  %v4499 = vpack.c.b16 %v4490, %v4489
  %v4500 = vpack.c.b16 %v4492, %v4491
  %4509 = vmatprep.subr.bf16.mxu0 0
  %4510 = vmatpush1.bf16.msra.mxu0 %v4500
  %4511 = vmatprep.subr.bf16.mxu0 0
  %4512 = vmatpush1.bf16.msra.mxu0 %v4499
  %4513 = vmatprep.subr.bf16.mxu0 0
  %4514 = vmatpush1.bf16.msra.mxu0 %v4498
  %4515 = vmatprep.subr.bf16.mxu0 0
  %4516 = vmatpush1.bf16.msra.mxu0 %v4497
  %4517 = vmatprep.subr.bf16.mxu0 0
  %4518 = vmatpush1.bf16.msra.mxu0 %v4496
  %4519 = vmatprep.subr.bf16.mxu0 0
  %4520 = vmatpush1.bf16.msra.mxu0 %v4495
  %4521 = vmatprep.subr.bf16.mxu0 0
  %4522 = vmatpush1.bf16.msra.mxu0 %v4494
  %4523 = vmatprep.subr.bf16.mxu0 0
  %4524 = vmatpush1.bf16.msra.mxu0 %v4493
  %4525 = vmatprep.subr.bf16.mxu0 0
  %4526 = vmatpush2.bf16.msra.mxu0 0
  %4527 = vmatprep.subr.bf16.mxu0 0
  %4528 = vmatpush2.bf16.msra.mxu0 0
  %4529 = vmatprep.subr.bf16.mxu0 0
  %4530 = vmatpush2.bf16.msra.mxu0 0
  %4531 = vmatprep.subr.bf16.mxu0 0
  %4532 = vmatpush2.bf16.msra.mxu0 0
  %4533 = vmatprep.subr.bf16.mxu0 0
  %4534 = vmatpush2.bf16.msra.mxu0 0
  %4535 = vmatprep.subr.bf16.mxu0 0
  %4536 = vmatpush2.bf16.msra.mxu0 0
  %4537 = vmatprep.subr.bf16.mxu0 0
  %4538 = vmatpush2.bf16.msra.mxu0 0
  %4539 = vmatprep.subr.bf16.mxu0 0
  %4540 = vmatpush2.bf16.msra.mxu0 0
  %4541 = vmatprep.mubr.bf16.mxu0 0
  %4542 = vmatmul.mubr.bf16.gmra.mxu0 %v1866
  %v4543 = vpop.f32.mrf.mxu0
  %v4544 = vadd.f32 0.0, %v4543
  %v4545 = vpop.f32.mrf.mxu0
  %v4546 = vpop.f32.mrf.mxu0
  %v4547 = vpop.f32.mrf.mxu0
  %4548 = vdwg.mxu0
  %v4549 = vadd.f32 %v4443, %v4544
  %v4550 = vld [vmem:[%s4] sm:$0x1]
  %v4552 = vlaneseq
  %v4553 = vshrl.u32 %v4552, 7
  %v4554 = vsub.s32 0, %v4553
  %v4555 = vrot.slane %v4550, %v4554
  %v4557 = vadd.f32 %v4549, %v4555
  %v4558 = vsub.f32 0.0, %v4557
  %v4559 = vmul.f32 %v4558, 1.442695
  %v4560 = vpow.pop %v4559
  %v4561 = vadd.f32 %v4560, 1.0
  %v4562 = vrcp.pop %v4561
  %v4563 = vpack.c.bf16 %v4562, %v4562
  %v4564 = vld [vmem:[%s5] sm:$0xf]
  %v4565 = vld [vmem:[%s5 + $0x4] sm:$0xf]
  %v4566 = vld [vmem:[%s5 + $0x8] sm:$0xf]
  %v4567 = vld [vmem:[%s5 + $0xc] sm:$0xf]
  %v4568 = vld [vmem:[%s5 + $0x10] sm:$0xf]
  %v4569 = vld [vmem:[%s5 + $0x14] sm:$0xf]
  %v4570 = vld [vmem:[%s5 + $0x18] sm:$0xf]
  %v4571 = vld [vmem:[%s5 + $0x1c] sm:$0xf]
  %v4572 = vld [vmem:[%s5 + $0x20] sm:$0xf]
  %v4573 = vld [vmem:[%s5 + $0x24] sm:$0xf]
  %v4574 = vld [vmem:[%s5 + $0x28] sm:$0xf]
  %v4575 = vld [vmem:[%s5 + $0x2c] sm:$0xf]
  %v4576 = vld [vmem:[%s5 + $0x30] sm:$0xf]
  %v4577 = vld [vmem:[%s5 + $0x34] sm:$0xf]
  %v4578 = vld [vmem:[%s5 + $0x38] sm:$0xf]
  %v4579 = vld [vmem:[%s5 + $0x3c] sm:$0xf]
  %v4580 = vld [vmem:[%s6] sm:$0x1]
  %v4582 = vlaneseq
  %v4583 = vshrl.u32 %v4582, 7
  %v4584 = vsub.s32 0, %v4583
  %v4585 = vrot.slane %v4580, %v4584
  %v4603 = vunpack.c.l.b16 %v4564
  %v4604 = vunpack.c.l.b16 %v4565
  %v4605 = vunpack.c.l.b16 %v4566
  %v4606 = vunpack.c.l.b16 %v4567
  %v4607 = vunpack.c.l.b16 %v4568
  %v4608 = vunpack.c.l.b16 %v4569
  %v4609 = vunpack.c.l.b16 %v4570
  %v4610 = vunpack.c.l.b16 %v4571
  %v4611 = vunpack.c.l.b16 %v4572
  %v4612 = vunpack.c.l.b16 %v4573
  %v4613 = vunpack.c.l.b16 %v4574
  %v4614 = vunpack.c.l.b16 %v4575
  %v4615 = vunpack.c.l.b16 %v4576
  %v4616 = vunpack.c.l.b16 %v4577
  %v4617 = vunpack.c.l.b16 %v4578
  %v4618 = vunpack.c.l.b16 %v4579
  %v4619 = vpack.c.b16 %v4604, %v4603
  %v4620 = vpack.c.b16 %v4606, %v4605
  %v4621 = vpack.c.b16 %v4608, %v4607
  %v4622 = vpack.c.b16 %v4610, %v4609
  %v4623 = vpack.c.b16 %v4612, %v4611
  %v4624 = vpack.c.b16 %v4614, %v4613
  %v4625 = vpack.c.b16 %v4616, %v4615
  %v4626 = vpack.c.b16 %v4618, %v4617
  %4635 = vmatprep.subr.bf16.mxu0 0
  %4636 = vmatpush1.bf16.msra.mxu0 %v4626
  %4637 = vmatprep.subr.bf16.mxu0 0
  %4638 = vmatpush1.bf16.msra.mxu0 %v4625
  %4639 = vmatprep.subr.bf16.mxu0 0
  %4640 = vmatpush1.bf16.msra.mxu0 %v4624
  %4641 = vmatprep.subr.bf16.mxu0 0
  %4642 = vmatpush1.bf16.msra.mxu0 %v4623
  %4643 = vmatprep.subr.bf16.mxu0 0
  %4644 = vmatpush1.bf16.msra.mxu0 %v4622
  %4645 = vmatprep.subr.bf16.mxu0 0
  %4646 = vmatpush1.bf16.msra.mxu0 %v4621
  %4647 = vmatprep.subr.bf16.mxu0 0
  %4648 = vmatpush1.bf16.msra.mxu0 %v4620
  %4649 = vmatprep.subr.bf16.mxu0 0
  %4650 = vmatpush1.bf16.msra.mxu0 %v4619
  %4651 = vmatprep.subr.bf16.mxu0 0
  %4652 = vmatpush2.bf16.msra.mxu0 0
  %4653 = vmatprep.subr.bf16.mxu0 0
  %4654 = vmatpush2.bf16.msra.mxu0 0
  %4655 = vmatprep.subr.bf16.mxu0 0
  %4656 = vmatpush2.bf16.msra.mxu0 0
  %4657 = vmatprep.subr.bf16.mxu0 0
  %4658 = vmatpush2.bf16.msra.mxu0 0
  %4659 = vmatprep.subr.bf16.mxu0 0
  %4660 = vmatpush2.bf16.msra.mxu0 0
  %4661 = vmatprep.subr.bf16.mxu0 0
  %4662 = vmatpush2.bf16.msra.mxu0 0
  %4663 = vmatprep.subr.bf16.mxu0 0
  %4664 = vmatpush2.bf16.msra.mxu0 0
  %4665 = vmatprep.subr.bf16.mxu0 0
  %4666 = vmatpush2.bf16.msra.mxu0 0
  %4667 = vmatprep.mubr.bf16.mxu0 0
  %4668 = vmatmul.mubr.bf16.gmra.mxu0 %v4563
  %v4669 = vpop.f32.mrf.mxu0
  %v4670 = vadd.f32 %v4585, %v4669
  %v4671 = vpop.f32.mrf.mxu0
  %v4672 = vpop.f32.mrf.mxu0
  %v4673 = vpop.f32.mrf.mxu0
  %4674 = vdwg.mxu0
  %v4675 = vsub.f32 0.0, %v4670
  %v4676 = vmul.f32 %v4675, 1.442695
  %v4677 = vpow.pop %v4676
  %v4678 = vadd.f32 %v4677, 1.0
  %v4679 = vrcp.pop %v4678
  %v4680 = vpack.c.bf16 %v4679, %v4679
  %v4681 = vld [vmem:[%s7] sm:$0xf]
  %v4682 = vld [vmem:[%s7 + $0x4] sm:$0xf]
  %v4683 = vld [vmem:[%s7 + $0x8] sm:$0xf]
  %v4684 = vld [vmem:[%s7 + $0xc] sm:$0xf]
  %v4685 = vld [vmem:[%s7 + $0x10] sm:$0xf]
  %v4686 = vld [vmem:[%s7 + $0x14] sm:$0xf]
  %v4687 = vld [vmem:[%s7 + $0x18] sm:$0xf]
  %v4688 = vld [vmem:[%s7 + $0x1c] sm:$0xf]
  %v4689 = vld [vmem:[%s7 + $0x20] sm:$0xf]
  %v4690 = vld [vmem:[%s7 + $0x24] sm:$0xf]
  %v4691 = vld [vmem:[%s7 + $0x28] sm:$0xf]
  %v4692 = vld [vmem:[%s7 + $0x2c] sm:$0xf]
  %v4693 = vld [vmem:[%s7 + $0x30] sm:$0xf]
  %v4694 = vld [vmem:[%s7 + $0x34] sm:$0xf]
  %v4695 = vld [vmem:[%s7 + $0x38] sm:$0xf]
  %v4696 = vld [vmem:[%s7 + $0x3c] sm:$0xf]
  %v4697 = vld [vmem:[%s8] sm:$0x1]
  %v4699 = vlaneseq
  %v4700 = vshrl.u32 %v4699, 7
  %v4701 = vsub.s32 0, %v4700
  %v4702 = vrot.slane %v4697, %v4701
  %v4720 = vunpack.c.l.b16 %v4681
  %v4721 = vunpack.c.l.b16 %v4682
  %v4722 = vunpack.c.l.b16 %v4683
  %v4723 = vunpack.c.l.b16 %v4684
  %v4724 = vunpack.c.l.b16 %v4685
  %v4725 = vunpack.c.l.b16 %v4686
  %v4726 = vunpack.c.l.b16 %v4687
  %v4727 = vunpack.c.l.b16 %v4688
  %v4728 = vunpack.c.l.b16 %v4689
  %v4729 = vunpack.c.l.b16 %v4690
  %v4730 = vunpack.c.l.b16 %v4691
  %v4731 = vunpack.c.l.b16 %v4692
  %v4732 = vunpack.c.l.b16 %v4693
  %v4733 = vunpack.c.l.b16 %v4694
  %v4734 = vunpack.c.l.b16 %v4695
  %v4735 = vunpack.c.l.b16 %v4696
  %v4736 = vpack.c.b16 %v4721, %v4720
  %v4737 = vpack.c.b16 %v4723, %v4722
  %v4738 = vpack.c.b16 %v4725, %v4724
  %v4739 = vpack.c.b16 %v4727, %v4726
  %v4740 = vpack.c.b16 %v4729, %v4728
  %v4741 = vpack.c.b16 %v4731, %v4730
  %v4742 = vpack.c.b16 %v4733, %v4732
  %v4743 = vpack.c.b16 %v4735, %v4734
  %4752 = vmatprep.subr.bf16.mxu0 0
  %4753 = vmatpush1.bf16.msra.mxu0 %v4743
  %4754 = vmatprep.subr.bf16.mxu0 0
  %4755 = vmatpush1.bf16.msra.mxu0 %v4742
  %4756 = vmatprep.subr.bf16.mxu0 0
  %4757 = vmatpush1.bf16.msra.mxu0 %v4741
  %4758 = vmatprep.subr.bf16.mxu0 0
  %4759 = vmatpush1.bf16.msra.mxu0 %v4740
  %4760 = vmatprep.subr.bf16.mxu0 0
  %4761 = vmatpush1.bf16.msra.mxu0 %v4739
  %4762 = vmatprep.subr.bf16.mxu0 0
  %4763 = vmatpush1.bf16.msra.mxu0 %v4738
  %4764 = vmatprep.subr.bf16.mxu0 0
  %4765 = vmatpush1.bf16.msra.mxu0 %v4737
  %4766 = vmatprep.subr.bf16.mxu0 0
  %4767 = vmatpush1.bf16.msra.mxu0 %v4736
  %4768 = vmatprep.subr.bf16.mxu0 0
  %4769 = vmatpush2.bf16.msra.mxu0 0
  %4770 = vmatprep.subr.bf16.mxu0 0
  %4771 = vmatpush2.bf16.msra.mxu0 0
  %4772 = vmatprep.subr.bf16.mxu0 0
  %4773 = vmatpush2.bf16.msra.mxu0 0
  %4774 = vmatprep.subr.bf16.mxu0 0
  %4775 = vmatpush2.bf16.msra.mxu0 0
  %4776 = vmatprep.subr.bf16.mxu0 0
  %4777 = vmatpush2.bf16.msra.mxu0 0
  %4778 = vmatprep.subr.bf16.mxu0 0
  %4779 = vmatpush2.bf16.msra.mxu0 0
  %4780 = vmatprep.subr.bf16.mxu0 0
  %4781 = vmatpush2.bf16.msra.mxu0 0
  %4782 = vmatprep.subr.bf16.mxu0 0
  %4783 = vmatpush2.bf16.msra.mxu0 0
  %4784 = vmatprep.mubr.bf16.mxu0 0
  %4785 = vmatmul.mubr.bf16.gmra.mxu0 %v4680
  %v4786 = vpop.f32.mrf.mxu0
  %v4787 = vadd.f32 %v4702, %v4786
  %v4788 = vpop.f32.mrf.mxu0
  %v4789 = vpop.f32.mrf.mxu0
  %v4790 = vpop.f32.mrf.mxu0
  %4791 = vdwg.mxu0
  %4792 = vst [vmem:[%s9] sm:$0xff] %v4787
  // Predicated region
  $region38: #{lenet5_forward.3} parent=0 // pred_check
    _
  $region39: #{lenet5_forward.3} parent=0 // pred_check_branch
    %4794 = sbr.rel (0) target = $region41
  $region40: #{lenet5_forward.3} parent=0 // pred_region
    _
  $region41: #{lenet5_forward.3} parent=0 // pred_fallthru
    _
  // Predicated region
  $region42: #{lenet5_forward.3} parent=0 // pred_check
    _
  $region43: #{lenet5_forward.3} parent=0 // pred_check_branch
    %4796 = sbr.rel (0) target = $region45
  $region44: #{lenet5_forward.3} parent=0 // pred_region
    _
  $region45: #{lenet5_forward.3} parent=0 // pred_fallthru
    _

</llo_original>
